<compile_context>
chip_gen: v5e
topology: v5e:2x2
jax: 0.10.0
libtpu: 0.0.40
codegen_flags: <defaults>
</compile_context>

<pallas_src>
import functools

import jax
import jax.numpy as jnp
from jax.experimental import pallas as pl
from jax.experimental.pallas import tpu as pltpu


_SQRT_HALF = 0.7071067811865476

# Set True on v6e/v7x to feed bf16 operands to the MXU (f32 accumulation): ~2x MXU
# throughput and half the weight DMA bytes.  Off by default for f32 parity.
MXU_BF16 = False


# ----------------------------- in-kernel math helpers -----------------------------

def _mm(a, b):
    """2-D MXU matmul with f32 accumulation (optionally bf16 operands)."""
    if MXU_BF16:
        a = a.astype(jnp.bfloat16)
        b = b.astype(jnp.bfloat16)
    return jnp.dot(a, b, preferred_element_type=jnp.float32)


def _gelu(x):
    # exact-erf GELU (nn.GELU default) via Abramowitz-Stegun 7.1.26 (|erf err| < 1.5e-7);
    # the 1/(1 + p|u|) term goes through pl.reciprocal instead of a plain VPU divide.
    p = 0.3275911
    a1, a2, a3, a4, a5 = 0.254829592, -0.284496736, 1.421413741, -1.453152027, 1.061405429
    u = x * _SQRT_HALF
    au = jnp.abs(u)
    t = pl.reciprocal(1.0 + p * au, approx=False)
    poly = ((((a5 * t + a4) * t + a3) * t + a2) * t + a1) * t
    erf = jnp.where(u >= 0.0, 1.0, -1.0) * (1.0 - poly * jnp.exp(-au * au))
    return 0.5 * x * (1.0 + erf)


# ----------------------------- in-kernel building blocks -----------------------------

def _conv_causal(src, w_ref, tap_offs, b_off, pad_ref, *, B, T, K, dil, cin, cout, padb):
    """Dilated causal conv on a t-major (T*B, cin) slab (whole batch in one M dim)."""
    TB = T * B
    pad_ref[padb:padb + TB, :] = src                 # rows [0, padb) stay zero (causal pad)
    acc = None
    for k in range(K):
        s = (K - 1 - k) * dil                        # causal left shift of tap k
        if s >= T:                                   # tap only ever sees the zero pad
            continue
        xs = pad_ref[padb - s * B: padb - s * B + TB, :]
        dk = _mm(xs, w_ref[tap_offs[k]: tap_offs[k] + cin, :])
        acc = dk if acc is None else acc + dk
    if acc is None:
        acc = jnp.zeros((TB, cout), jnp.float32)
    return acc + w_ref[b_off: b_off + 1, :]


def _tcn_stack(slab, w_ref, layout, pads, *, B, T, K, padb):
    """TemporalConvNet stack on a t-major slab; weights come from one packed buffer."""
    for lvl, L in enumerate(layout):
        dil = 2 ** lvl
        cin, cout = L["cin"], L["cout"]
        h1 = jnp.maximum(
            _conv_causal(slab, w_ref, L["w1"], L["b1"], pads[cin],
                         B=B, T=T, K=K, dil=dil, cin=cin, cout=cout, padb=padb), 0.0)
        h2 = jnp.maximum(
            _conv_causal(h1, w_ref, L["w2"], L["b2"], pads[cout],
                         B=B, T=T, K=K, dil=dil, cin=cout, cout=cout, padb=padb), 0.0)
        if L["wd"] >= 0:                             # 1x1 residual only when Cin != Cout
            res = _mm(slab, w_ref[L["wd"]: L["wd"] + cin, :]) + w_ref[L["bd"]: L["bd"] + 1, :]
        else:
            res = slab
        slab = jnp.maximum(h2 + res, 0.0)
    return slab


def _mlp(slab, m_ref, lay):
    """down -> GELU -> up (no residual), params read from the packed misc buffer."""
    din, dmid, dout = lay["din"], lay["dmid"], lay["dout"]
    h = _gelu(_mm(slab, m_ref[lay["wd"]: lay["wd"] + din, 0:dmid])
              + m_ref[lay["bd"]: lay["bd"] + 1, 0:dmid])
    return (_mm(h, m_ref[lay["wu"]: lay["wu"] + dmid, 0:dout])
            + m_ref[lay["bu"]: lay["bu"] + 1, 0:dout])


def _flatten_head(slab, m_ref, lay, *, B, T, H):
    """Linear over the t-major flatten of `slab` ((B, T*H) @ (T*H, N)) as 3 wide dots:
       Q = slab @ W_lane ; keep only the t'==t lane blocks ; fold lanes t*N+n -> n ;
       fold rows t*B+b -> b.  Mask / fold matrices are host-built constants in misc."""
    TB, N, TN = T * B, lay["n"], lay["tn"]
    q = _mm(slab, m_ref[lay["w"]: lay["w"] + H, 0:TN])               # (T*B, T*N)
    q = q * m_ref[lay["mask"]: lay["mask"] + TB, 0:TN]               # block-diag (t'==t)
    p = _mm(q, m_ref[lay["g"]: lay["g"] + TN, 0:N])                  # (T*B, N)
    out = _mm(m_ref[lay["selT"]: lay["selT"] + B, 0:TB], p)          # (B, N)
    return out + m_ref[lay["b"]: lay["b"] + 1, 0:N]


# ----------------------------- fused kernel body -----------------------------

def _lcsn_kernel(x_ref, gen_ref, chara_ref, deccls_ref, decreg_ref, misc_ref,
                 ypred_ref, yc_ref, xhatc_ref, xhatr_ref, *pad_refs,
                 B, T, H, K, classnum, joint, padb, pad_widths,
                 gen_lay, chara_lay, deccls_lay, decreg_lay, ML):
    TB = T * B
    pads = {w: r for w, r in zip(pad_widths, pad_refs)}
    # zero the causal-pad scratches ONCE; rows >= padb are always rewritten before reads.
    for r in pad_refs:
        r[...] = jnp.zeros(r.shape, jnp.float32)

    xs = x_ref[...]                                                   # (T*B, emg_ch)

    # --- RegressionEncoder / ClassificationEncoder TCNs (whole batch per dot) ---
    zb = _tcn_stack(xs, gen_ref, gen_lay, pads, B=B, T=T, K=K, padb=padb)      # (T*B, H)
    zc = _tcn_stack(xs, chara_ref, chara_lay, pads, B=B, T=T, K=K, padb=padb)  # (T*B, H)

    # --- all class capsules fused: 1 down dot + 1 GELU + 1 block-diagonal up dot ---
    caps_delta = _mlp(zb, misc_ref, ML["caps"])                       # (T*B, classnum*H)

    # --- SharedClassificationHead: Adapter -> flatten -> Linear -> Softmax ---
    ab = zc + _mlp(zc, misc_ref, ML["head_ad"])
    logits = _flatten_head(ab, misc_ref, ML["head"], B=B, T=T, H=H)   # (B, classnum)
    m = jnp.max(logits, axis=-1, keepdims=True)
    e = jnp.exp(logits - m)
    ycb = e / jnp.sum(e, axis=-1, keepdims=True)                      # exact softmax
    yc_ref[...] = ycb

    # --- soft-label capsule mixing: z_r = (sum_c y_c)*z + sum_c y_c * delta_c ---
    ymat = _mm(misc_ref[ML["sel"]: ML["sel"] + TB, 0:B], ycb)         # y tiled over time rows
    zr = zb * jnp.sum(ymat, axis=-1, keepdims=True)
    for c in range(classnum):
        zr = zr + ymat[:, c:c + 1] * caps_delta[:, c * H:(c + 1) * H]

    # --- Regressor: Adapter -> flatten -> Linear ---
    rb = zr + _mlp(zr, misc_ref, ML["reg_ad"])
    ypred_ref[...] = _flatten_head(rb, misc_ref, ML["reg"], B=B, T=T, H=H)

    # --- both ReconstructionDecoder TCN stacks, still inside the same kernel ---
    xhatc_ref[...] = _tcn_stack(zr, deccls_ref, deccls_lay, pads, B=B, T=T, K=K, padb=padb)
    xhatr_ref[...] = _tcn_stack(zc, decreg_ref, decreg_lay, pads, B=B, T=T, K=K, padb=padb)


# ----------------------------- host-side parameter packing -----------------------------

class _RowPacker:
    """Packs many small (r, c) matrices into one 2-D buffer with 8-aligned row offsets,
    so the kernel sees a handful of operands instead of ~65 tiny HBM->VMEM DMAs."""

    def __init__(self, width):
        self.width = width
        self.chunks = []
        self.off = 0

    def add(self, mat):
        mat = jnp.asarray(mat, dtype=jnp.float32)
        r, c = mat.shape
        if c < self.width:
            mat = jnp.pad(mat, ((0, 0), (0, self.width - c)))
        start = self.off
        self.chunks.append(mat)
        pad = (-r) % 8
        if pad:
            self.chunks.append(jnp.zeros((pad, self.width), jnp.float32))
        self.off += r + pad
        return start

    def finalize(self):
        buf = jnp.concatenate(self.chunks, axis=0)
        return buf.astype(jnp.bfloat16) if MXU_BF16 else buf


def _pack_tcn(blocks, K):
    """One packed weight buffer + static layout for a TemporalConvNet stack."""
    cout0 = int(blocks[0]["w1"].shape[2])
    pk = _RowPacker(cout0)
    layout = []
    for blk in blocks:
        _, cin, co = (int(s) for s in blk["w1"].shape)
        L = {"cin": cin, "cout": co,
             "w1": tuple(pk.add(blk["w1"][k]) for k in range(K)),
             "b1": pk.add(blk["b1"]),
             "w2": tuple(pk.add(blk["w2"][k]) for k in range(K)),
             "b2": pk.add(blk["b2"])}
        if "wd" in blk:
            L["wd"] = pk.add(blk["wd"])
            L["bd"] = pk.add(blk["bd"])
        else:
            L["wd"] = -1
            L["bd"] = -1
        layout.append(L)
    return pk.finalize(), tuple(layout)


def _pack_misc(params, *, B, T, H, classnum, joint):
    """Capsules (merged), head/reg adapters, both flatten heads and all constant
    fold/mask matrices, packed into ONE misc buffer."""
    h2 = H // 2
    caps = params["capsules"]
    cap_wd = jnp.concatenate([cp["wd"] for cp in caps], axis=1)       # (H, classnum*h2)
    cap_bd = jnp.concatenate([cp["bd"] for cp in caps], axis=1)
    cap_wu = jnp.zeros((classnum * h2, classnum * H), jnp.float32)    # block-diagonal up
    for c, cp in enumerate(caps):
        cap_wu = cap_wu.at[c * h2:(c + 1) * h2, c * H:(c + 1) * H].set(cp["wu"])
    cap_bu = jnp.concatenate([cp["bu"] for cp in caps], axis=1)

    TB = T * B
    selT = (jnp.arange(TB)[None, :] % B == jnp.arange(B)[:, None]).astype(jnp.float32)
    sel = selT.T                                                      # (T*B, B)

    width = max(classnum * H, T * classnum, T * joint, TB, H)
    pk = _RowPacker(width)
    ML = {"caps": dict(din=H, dmid=classnum * h2, dout=classnum * H,
                       wd=pk.add(cap_wd), bd=pk.add(cap_bd),
                       wu=pk.add(cap_wu), bu=pk.add(cap_bu))}
    for name, key in (("head_ad", "head_adapter"), ("reg_ad", "reg_adapter")):
        ad = params[key]
        ML[name] = dict(din=H, dmid=h2, dout=H,
                        wd=pk.add(ad["wd"]), bd=pk.add(ad["bd"]),
                        wu=pk.add(ad["wu"]), bu=pk.add(ad["bu"]))
    selT_off = pk.add(selT)
    ML["sel"] = pk.add(sel)
    for name, wkey, bkey, n in (("head", "head_w", "head_b", classnum),
                                ("reg", "reg_w", "reg_b", joint)):
        # torch flattens t-major/h-minor (permute before view), so weight rows index t*H+h.
        wlane = params[wkey].reshape(T, H, n).transpose(1, 0, 2).reshape(H, T * n)
        mask = ((jnp.arange(TB)[:, None] // B)
                == (jnp.arange(T * n)[None, :] // n)).astype(jnp.float32)
        g = ((jnp.arange(T * n)[:, None] % n) == jnp.arange(n)[None, :]).astype(jnp.float32)
        ML[name] = dict(n=n, tn=T * n, selT=selT_off,
                        w=pk.add(wlane), b=pk.add(params[bkey]),
                        mask=pk.add(mask), g=pk.add(g))
    return pk.finalize(), ML


# ----------------------------- deterministic parameter init -----------------------------

def _dense_init(key, shape, scale=0.1):
    return scale * jax.random.normal(key, shape, jnp.float32)


def _tcn_params(key, cin_first, cout, num_levels=4, K=3):
    blocks = []
    for i in range(num_levels):
        cin = cin_first if i == 0 else cout
        key, k1, k2, k3, k4, k5, k6 = jax.random.split(key, 7)
        blk = {"w1": _dense_init(k1, (K, cin, cout)), "b1": _dense_init(k2, (1, cout)),
               "w2": _dense_init(k3, (K, cout, cout)), "b2": _dense_init(k4, (1, cout))}
        if cin != cout:                                   # torch adds 1x1 downsample only here
            blk["wd"] = _dense_init(k5, (cin, cout))
            blk["bd"] = _dense_init(k6, (1, cout))
        blocks.append(blk)
    return blocks


def _adapter_params(key, hidden):
    k1, k2, k3, k4 = jax.random.split(key, 4)
    return {"wd": _dense_init(k1, (hidden, hidden // 2)),
            "bd": _dense_init(k2, (1, hidden // 2)),
            "wu": _dense_init(k3, (hidden // 2, hidden)),
            "bu": _dense_init(k4, (1, hidden))}


def init_lcsn_params(key, *, vocab_size, hidden, class_num, joint_channels, emg_channels):
    keys = jax.random.split(key, 11)
    cap_keys = jax.random.split(keys[4], class_num)
    return {"gen_tcn": _tcn_params(keys[0], emg_channels, hidden),      # RegressionEncoder TCN
            "chara_tcn": _tcn_params(keys[1], emg_channels, hidden),    # ClassificationEncoder
            "rec_cls_tcn": _tcn_params(keys[2], hidden, emg_channels),  # ReconstructionDecoder
            "rec_reg_tcn": _tcn_params(keys[3], hidden, emg_channels),  # ReconstructionDecoder
            "capsules": [_adapter_params(k, hidden) for k in cap_keys],
            "head_adapter": _adapter_params(keys[5], hidden),
            "reg_adapter": _adapter_params(keys[6], hidden),
            "head_w": _dense_init(keys[7], (vocab_size * hidden, class_num)),
            "head_b": _dense_init(keys[8], (1, class_num)),
            "reg_w": _dense_init(keys[9], (vocab_size * hidden, joint_channels)),
            "reg_b": _dense_init(keys[10], (1, joint_channels))}


# ----------------------------- wrapper / full forward pass -----------------------------

def lcsn_forward(params, x):
    # x: (B, emg_ch, T) or (B, emg_ch, T, 1) — PyTorch NCL(+1) layout, like the torch module
    if x.ndim == 4:
        x = jnp.squeeze(x, axis=3)                        # torch: x.squeeze(3)
    x = x.astype(jnp.float32)
    B, E, T = x.shape
    H = int(params["gen_tcn"][0]["w1"].shape[-1])
    K = int(params["gen_tcn"][0]["w1"].shape[0])
    levels = len(params["gen_tcn"])
    classnum = len(params["capsules"])
    joint = int(params["reg_w"].shape[-1])

    # t-major / b-minor slab: row = t*B + b, so B feeds every matmul's M dimension.
    x_slab = jnp.transpose(x, (2, 0, 1)).reshape(T * B, E)

    gen_buf, gen_lay = _pack_tcn(params["gen_tcn"], K)
    chara_buf, chara_lay = _pack_tcn(params["chara_tcn"], K)
    deccls_buf, deccls_lay = _pack_tcn(params["rec_cls_tcn"], K)
    decreg_buf, decreg_lay = _pack_tcn(params["rec_reg_tcn"], K)
    misc_buf, ML = _pack_misc(params, B=B, T=T, H=H, classnum=classnum, joint=joint)

    max_shift = (K - 1) * (2 ** (levels - 1))             # max causal pad over all blocks
    padb = (-(-max_shift * B // 8)) * 8                   # sublane-aligned pad rows
    pad_widths = tuple(sorted({E, H}))

    kernel = functools.partial(
        _lcsn_kernel, B=B, T=T, H=H, K=K, classnum=classnum, joint=joint,
        padb=padb, pad_widths=pad_widths,
        gen_lay=gen_lay, chara_lay=chara_lay,
        deccls_lay=deccls_lay, decreg_lay=decreg_lay, ML=ML)

    # Single fused, grid-less, VMEM-resident launch (everything here is a few MB).
    # TODO(synk): at production T/H add a "parallel" grid axis (v7x second TensorCore)
    # and re-derive tiling against v7x's 64 MiB VMEM.
    y_pred, y_c, xc_slab, xr_slab = pl.pallas_call(
        kernel,
        out_shape=(jax.ShapeDtypeStruct((B, joint), jnp.float32),
                   jax.ShapeDtypeStruct((B, classnum), jnp.float32),
                   jax.ShapeDtypeStruct((T * B, E), jnp.float32),
                   jax.ShapeDtypeStruct((T * B, E), jnp.float32)),
        scratch_shapes=[pltpu.VMEM((padb + T * B, w), jnp.float32) for w in pad_widths],
    )(x_slab, gen_buf, chara_buf, deccls_buf, decreg_buf, misc_buf)

    y_pred = y_pred[:, None, :]                           # (B, 1, joint_channels)
    x_hat_c = jnp.transpose(xc_slab.reshape(T, B, E), (1, 2, 0))   # (B, emg_ch, T)
    x_hat_r = jnp.transpose(xr_slab.reshape(T, B, E), (1, 2, 0))
    return y_pred, y_c, x_hat_c, x_hat_r


# ----------------------------- demo -----------------------------

if __name__ == "__main__":
    VOCAB, HIDDEN, CLASSNUM, JOINT, EMG, B = 16, 32, 4, 10, 12, 2

    key = jax.random.PRNGKey(0)
    pkey, xkey = jax.random.split(key)
    params = init_lcsn_params(pkey, vocab_size=VOCAB, hidden=HIDDEN, class_num=CLASSNUM,
                              joint_channels=JOINT, emg_channels=EMG)
    # PyTorch-style 4D input (B, emg_channels, T, 1) -> exercises the squeeze(3) path
    x = jax.random.normal(xkey, (B, EMG, VOCAB, 1), jnp.float32)

    fwd = jax.jit(lcsn_forward)
    y_pred, y_c, x_hat_c, x_hat_r = fwd(params, x)
    jax.block_until_ready((y_pred, y_c, x_hat_c, x_hat_r))

    assert y_pred.shape == (B, 1, JOINT)
    assert y_c.shape == (B, CLASSNUM)
    assert x_hat_c.shape == (B, EMG, VOCAB)
    assert x_hat_r.shape == (B, EMG, VOCAB)
    assert bool(jnp.all(jnp.isfinite(y_pred)))
    assert bool(jnp.all(jnp.isfinite(y_c)))
    assert bool(jnp.all(jnp.isfinite(x_hat_c)))
    assert bool(jnp.all(jnp.isfinite(x_hat_r)))
    # softmax rows should sum to ~1 (exact divide used in-kernel)
    assert bool(jnp.all(jnp.abs(jnp.sum(y_c, axis=-1) - 1.0) < 1e-5))
    print("KERNEL_OK")
</pallas_src>

<mosaic_0001>
module attributes {stable_mosaic.version = 11 : i64} {
  func.func @_lcsn_kernel(%arg0: memref<32x12xf32, #tpu.memory_space<vmem>>, %arg1: memref<808x32xf32, #tpu.memory_space<vmem>>, %arg2: memref<808x32xf32, #tpu.memory_space<vmem>>, %arg3: memref<536x12xf32, #tpu.memory_space<vmem>>, %arg4: memref<536x12xf32, #tpu.memory_space<vmem>>, %arg5: memref<648x160xf32, #tpu.memory_space<vmem>>, %arg6: memref<2x10xf32, #tpu.memory_space<vmem>>, %arg7: memref<2x4xf32, #tpu.memory_space<vmem>>, %arg8: memref<32x12xf32, #tpu.memory_space<vmem>>, %arg9: memref<32x12xf32, #tpu.memory_space<vmem>>, %arg10: memref<64x12xf32, #tpu.memory_space<vmem>>, %arg11: memref<64x32xf32, #tpu.memory_space<vmem>>) attributes {dimension_semantics = [], scalar_prefetch = 0 : i64, scratch_operands = 2 : i64, tpu.core_type = #tpu.core_type<tc>} {
    %cst = arith.constant 0.000000e+00 : f32
    %0 = vector.broadcast %cst : f32 to vector<64x12xf32>
    %c0 = arith.constant 0 : index
    %c0_0 = arith.constant 0 : index
    %1 = vector.load %arg10[%c0, %c0_0] : memref<64x12xf32, #tpu.memory_space<vmem>>, vector<64x12xf32>
    tpu.vector_store %arg10[%c0, %c0_0], %0 {strides = array<i32>} : memref<64x12xf32, #tpu.memory_space<vmem>>, vector<64x12xf32>,
    %cst_1 = arith.constant 0.000000e+00 : f32
    %2 = vector.broadcast %cst_1 : f32 to vector<64x32xf32>
    %c0_2 = arith.constant 0 : index
    %c0_3 = arith.constant 0 : index
    %3 = vector.load %arg11[%c0_2, %c0_3] : memref<64x32xf32, #tpu.memory_space<vmem>>, vector<64x32xf32>
    tpu.vector_store %arg11[%c0_2, %c0_3], %2 {strides = array<i32>} : memref<64x32xf32, #tpu.memory_space<vmem>>, vector<64x32xf32>,
    %c0_4 = arith.constant 0 : index
    %c0_5 = arith.constant 0 : index
    %4 = vector.load %arg0[%c0_4, %c0_5] : memref<32x12xf32, #tpu.memory_space<vmem>>, vector<32x12xf32>
    %c32 = arith.constant 32 : index
    %c0_6 = arith.constant 0 : index
    %5 = vector.load %arg10[%c32, %c0_6] : memref<64x12xf32, #tpu.memory_space<vmem>>, vector<32x12xf32>
    tpu.vector_store %arg10[%c32, %c0_6], %4 {strides = array<i32>} : memref<64x12xf32, #tpu.memory_space<vmem>>, vector<32x12xf32>,
    %c28 = arith.constant 28 : index
    %c0_7 = arith.constant 0 : index
    %6 = vector.load %arg10[%c28, %c0_7] : memref<64x12xf32, #tpu.memory_space<vmem>>, vector<32x12xf32>
    %c0_8 = arith.constant 0 : index
    %c0_9 = arith.constant 0 : index
    %7 = vector.load %arg1[%c0_8, %c0_9] : memref<808x32xf32, #tpu.memory_space<vmem>>, vector<12x32xf32>
    %cst_10 = arith.constant dense<0.000000e+00> : vector<32x32xf32>
    %8 = tpu.matmul %6, %7, %cst_10 {dimension_numbers = #tpu.dot_dimension_numbers<[1], [0], [0], [1], [0, 0, 1, 1], [], []>} : vector<32x12xf32>, vector<12x32xf32>, vector<32x32xf32> -> vector<32x32xf32>
    %c30 = arith.constant 30 : index
    %c0_11 = arith.constant 0 : index
    %9 = vector.load %arg10[%c30, %c0_11] : memref<64x12xf32, #tpu.memory_space<vmem>>, vector<32x12xf32>
    %c16 = arith.constant 16 : index
    %c0_12 = arith.constant 0 : index
    %10 = vector.load %arg1[%c16, %c0_12] : memref<808x32xf32, #tpu.memory_space<vmem>>, vector<12x32xf32>
    %cst_13 = arith.constant dense<0.000000e+00> : vector<32x32xf32>
    %11 = tpu.matmul %9, %10, %cst_13 {dimension_numbers = #tpu.dot_dimension_numbers<[1], [0], [0], [1], [0, 0, 1, 1], [], []>} : vector<32x12xf32>, vector<12x32xf32>, vector<32x32xf32> -> vector<32x32xf32>
    %12 = arith.addf %8, %11 : vector<32x32xf32>
    %c32_14 = arith.constant 32 : index
    %c0_15 = arith.constant 0 : index
    %13 = vector.load %arg10[%c32_14, %c0_15] : memref<64x12xf32, #tpu.memory_space<vmem>>, vector<32x12xf32>
    %c32_16 = arith.constant 32 : index
    %c0_17 = arith.constant 0 : index
    %14 = vector.load %arg1[%c32_16, %c0_17] : memref<808x32xf32, #tpu.memory_space<vmem>>, vector<12x32xf32>
    %cst_18 = arith.constant dense<0.000000e+00> : vector<32x32xf32>
    %15 = tpu.matmul %13, %14, %cst_18 {dimension_numbers = #tpu.dot_dimension_numbers<[1], [0], [0], [1], [0, 0, 1, 1], [], []>} : vector<32x12xf32>, vector<12x32xf32>, vector<32x32xf32> -> vector<32x32xf32>
    %16 = arith.addf %12, %15 : vector<32x32xf32>
    %c48 = arith.constant 48 : index
    %c0_19 = arith.constant 0 : index
    %17 = vector.load %arg1[%c48, %c0_19] : memref<808x32xf32, #tpu.memory_space<vmem>>, vector<1x32xf32>
    %18 = vector.broadcast %17 : vector<1x32xf32> to vector<32x32xf32>
    %19 = arith.addf %16, %18 : vector<32x32xf32>
    %cst_20 = arith.constant 0.000000e+00 : f32
    %20 = vector.broadcast %cst_20 : f32 to vector<32x32xf32>
    %21 = arith.maximumf %19, %20 : vector<32x32xf32>
    %c32_21 = arith.constant 32 : index
    %c0_22 = arith.constant 0 : index
    %22 = vector.load %arg11[%c32_21, %c0_22] : memref<64x32xf32, #tpu.memory_space<vmem>>, vector<32x32xf32>
    tpu.vector_store %arg11[%c32_21, %c0_22], %21 {strides = array<i32>} : memref<64x32xf32, #tpu.memory_space<vmem>>, vector<32x32xf32>,
    %c28_23 = arith.constant 28 : index
    %c0_24 = arith.constant 0 : index
    %23 = vector.load %arg11[%c28_23, %c0_24] : memref<64x32xf32, #tpu.memory_space<vmem>>, vector<32x32xf32>
    %c56 = arith.constant 56 : index
    %c0_25 = arith.constant 0 : index
    %24 = vector.load %arg1[%c56, %c0_25] : memref<808x32xf32, #tpu.memory_space<vmem>>, vector<32x32xf32>
    %cst_26 = arith.constant dense<0.000000e+00> : vector<32x32xf32>
    %25 = tpu.matmul %23, %24, %cst_26 {dimension_numbers = #tpu.dot_dimension_numbers<[1], [0], [0], [1], [0, 0, 1, 1], [], []>} : vector<32x32xf32>, vector<32x32xf32>, vector<32x32xf32> -> vector<32x32xf32>
    %c30_27 = arith.constant 30 : index
    %c0_28 = arith.constant 0 : index
    %26 = vector.load %arg11[%c30_27, %c0_28] : memref<64x32xf32, #tpu.memory_space<vmem>>, vector<32x32xf32>
    %c88 = arith.constant 88 : index
    %c0_29 = arith.constant 0 : index
    %27 = vector.load %arg1[%c88, %c0_29] : memref<808x32xf32, #tpu.memory_space<vmem>>, vector<32x32xf32>
    %cst_30 = arith.constant dense<0.000000e+00> : vector<32x32xf32>
    %28 = tpu.matmul %26, %27, %cst_30 {dimension_numbers = #tpu.dot_dimension_numbers<[1], [0], [0], [1], [0, 0, 1, 1], [], []>} : vector<32x32xf32>, vector<32x32xf32>, vector<32x32xf32> -> vector<32x32xf32>
    %29 = arith.addf %25, %28 : vector<32x32xf32>
    %c32_31 = arith.constant 32 : index
    %c0_32 = arith.constant 0 : index
    %30 = vector.load %arg11[%c32_31, %c0_32] : memref<64x32xf32, #tpu.memory_space<vmem>>, vector<32x32xf32>
    %c120 = arith.constant 120 : index
    %c0_33 = arith.constant 0 : index
    %31 = vector.load %arg1[%c120, %c0_33] : memref<808x32xf32, #tpu.memory_space<vmem>>, vector<32x32xf32>
    %cst_34 = arith.constant dense<0.000000e+00> : vector<32x32xf32>
    %32 = tpu.matmul %30, %31, %cst_34 {dimension_numbers = #tpu.dot_dimension_numbers<[1], [0], [0], [1], [0, 0, 1, 1], [], []>} : vector<32x32xf32>, vector<32x32xf32>, vector<32x32xf32> -> vector<32x32xf32>
    %33 = arith.addf %29, %32 : vector<32x32xf32>
    %c152 = arith.constant 152 : index
    %c0_35 = arith.constant 0 : index
    %34 = vector.load %arg1[%c152, %c0_35] : memref<808x32xf32, #tpu.memory_space<vmem>>, vector<1x32xf32>
    %35 = vector.broadcast %34 : vector<1x32xf32> to vector<32x32xf32>
    %36 = arith.addf %33, %35 : vector<32x32xf32>
    %cst_36 = arith.constant 0.000000e+00 : f32
    %37 = vector.broadcast %cst_36 : f32 to vector<32x32xf32>
    %38 = arith.maximumf %36, %37 : vector<32x32xf32>
    %c160 = arith.constant 160 : index
    %c0_37 = arith.constant 0 : index
    %39 = vector.load %arg1[%c160, %c0_37] : memref<808x32xf32, #tpu.memory_space<vmem>>, vector<12x32xf32>
    %cst_38 = arith.constant dense<0.000000e+00> : vector<32x32xf32>
    %40 = tpu.matmul %4, %39, %cst_38 {dimension_numbers = #tpu.dot_dimension_numbers<[1], [0], [0], [1], [0, 0, 1, 1], [], []>} : vector<32x12xf32>, vector<12x32xf32>, vector<32x32xf32> -> vector<32x32xf32>
    %c176 = arith.constant 176 : index
    %c0_39 = arith.constant 0 : index
    %41 = vector.load %arg1[%c176, %c0_39] : memref<808x32xf32, #tpu.memory_space<vmem>>, vector<1x32xf32>
    %42 = vector.broadcast %41 : vector<1x32xf32> to vector<32x32xf32>
    %43 = arith.addf %40, %42 : vector<32x32xf32>
    %44 = arith.addf %38, %43 : vector<32x32xf32>
    %cst_40 = arith.constant 0.000000e+00 : f32
    %45 = vector.broadcast %cst_40 : f32 to vector<32x32xf32>
    %46 = arith.maximumf %44, %45 : vector<32x32xf32>
    %c32_41 = arith.constant 32 : index
    %c0_42 = arith.constant 0 : index
    %47 = vector.load %arg11[%c32_41, %c0_42] : memref<64x32xf32, #tpu.memory_space<vmem>>, vector<32x32xf32>
    tpu.vector_store %arg11[%c32_41, %c0_42], %46 {strides = array<i32>} : memref<64x32xf32, #tpu.memory_space<vmem>>, vector<32x32xf32>,
    %c24 = arith.constant 24 : index
    %c0_43 = arith.constant 0 : index
    %48 = vector.load %arg11[%c24, %c0_43] : memref<64x32xf32, #tpu.memory_space<vmem>>, vector<32x32xf32>
    %c184 = arith.constant 184 : index
    %c0_44 = arith.constant 0 : index
    %49 = vector.load %arg1[%c184, %c0_44] : memref<808x32xf32, #tpu.memory_space<vmem>>, vector<32x32xf32>
    %cst_45 = arith.constant dense<0.000000e+00> : vector<32x32xf32>
    %50 = tpu.matmul %48, %49, %cst_45 {dimension_numbers = #tpu.dot_dimension_numbers<[1], [0], [0], [1], [0, 0, 1, 1], [], []>} : vector<32x32xf32>, vector<32x32xf32>, vector<32x32xf32> -> vector<32x32xf32>
    %c28_46 = arith.constant 28 : index
    %c0_47 = arith.constant 0 : index
    %51 = vector.load %arg11[%c28_46, %c0_47] : memref<64x32xf32, #tpu.memory_space<vmem>>, vector<32x32xf32>
    %c216 = arith.constant 216 : index
    %c0_48 = arith.constant 0 : index
    %52 = vector.load %arg1[%c216, %c0_48] : memref<808x32xf32, #tpu.memory_space<vmem>>, vector<32x32xf32>
    %cst_49 = arith.constant dense<0.000000e+00> : vector<32x32xf32>
    %53 = tpu.matmul %51, %52, %cst_49 {dimension_numbers = #tpu.dot_dimension_numbers<[1], [0], [0], [1], [0, 0, 1, 1], [], []>} : vector<32x32xf32>, vector<32x32xf32>, vector<32x32xf32> -> vector<32x32xf32>
    %54 = arith.addf %50, %53 : vector<32x32xf32>
    %c32_50 = arith.constant 32 : index
    %c0_51 = arith.constant 0 : index
    %55 = vector.load %arg11[%c32_50, %c0_51] : memref<64x32xf32, #tpu.memory_space<vmem>>, vector<32x32xf32>
    %c248 = arith.constant 248 : index
    %c0_52 = arith.constant 0 : index
    %56 = vector.load %arg1[%c248, %c0_52] : memref<808x32xf32, #tpu.memory_space<vmem>>, vector<32x32xf32>
    %cst_53 = arith.constant dense<0.000000e+00> : vector<32x32xf32>
    %57 = tpu.matmul %55, %56, %cst_53 {dimension_numbers = #tpu.dot_dimension_numbers<[1], [0], [0], [1], [0, 0, 1, 1], [], []>} : vector<32x32xf32>, vector<32x32xf32>, vector<32x32xf32> -> vector<32x32xf32>
    %58 = arith.addf %54, %57 : vector<32x32xf32>
    %c280 = arith.constant 280 : index
    %c0_54 = arith.constant 0 : index
    %59 = vector.load %arg1[%c280, %c0_54] : memref<808x32xf32, #tpu.memory_space<vmem>>, vector<1x32xf32>
    %60 = vector.broadcast %59 : vector<1x32xf32> to vector<32x32xf32>
    %61 = arith.addf %58, %60 : vector<32x32xf32>
    %cst_55 = arith.constant 0.000000e+00 : f32
    %62 = vector.broadcast %cst_55 : f32 to vector<32x32xf32>
    %63 = arith.maximumf %61, %62 : vector<32x32xf32>
    %c32_56 = arith.constant 32 : index
    %c0_57 = arith.constant 0 : index
    %64 = vector.load %arg11[%c32_56, %c0_57] : memref<64x32xf32, #tpu.memory_space<vmem>>, vector<32x32xf32>
    tpu.vector_store %arg11[%c32_56, %c0_57], %63 {strides = array<i32>} : memref<64x32xf32, #tpu.memory_space<vmem>>, vector<32x32xf32>,
    %c24_58 = arith.constant 24 : index
    %c0_59 = arith.constant 0 : index
    %65 = vector.load %arg11[%c24_58, %c0_59] : memref<64x32xf32, #tpu.memory_space<vmem>>, vector<32x32xf32>
    %c288 = arith.constant 288 : index
    %c0_60 = arith.constant 0 : index
    %66 = vector.load %arg1[%c288, %c0_60] : memref<808x32xf32, #tpu.memory_space<vmem>>, vector<32x32xf32>
    %cst_61 = arith.constant dense<0.000000e+00> : vector<32x32xf32>
    %67 = tpu.matmul %65, %66, %cst_61 {dimension_numbers = #tpu.dot_dimension_numbers<[1], [0], [0], [1], [0, 0, 1, 1], [], []>} : vector<32x32xf32>, vector<32x32xf32>, vector<32x32xf32> -> vector<32x32xf32>
    %c28_62 = arith.constant 28 : index
    %c0_63 = arith.constant 0 : index
    %68 = vector.load %arg11[%c28_62, %c0_63] : memref<64x32xf32, #tpu.memory_space<vmem>>, vector<32x32xf32>
    %c320 = arith.constant 320 : index
    %c0_64 = arith.constant 0 : index
    %69 = vector.load %arg1[%c320, %c0_64] : memref<808x32xf32, #tpu.memory_space<vmem>>, vector<32x32xf32>
    %cst_65 = arith.constant dense<0.000000e+00> : vector<32x32xf32>
    %70 = tpu.matmul %68, %69, %cst_65 {dimension_numbers = #tpu.dot_dimension_numbers<[1], [0], [0], [1], [0, 0, 1, 1], [], []>} : vector<32x32xf32>, vector<32x32xf32>, vector<32x32xf32> -> vector<32x32xf32>
    %71 = arith.addf %67, %70 : vector<32x32xf32>
    %c32_66 = arith.constant 32 : index
    %c0_67 = arith.constant 0 : index
    %72 = vector.load %arg11[%c32_66, %c0_67] : memref<64x32xf32, #tpu.memory_space<vmem>>, vector<32x32xf32>
    %c352 = arith.constant 352 : index
    %c0_68 = arith.constant 0 : index
    %73 = vector.load %arg1[%c352, %c0_68] : memref<808x32xf32, #tpu.memory_space<vmem>>, vector<32x32xf32>
    %cst_69 = arith.constant dense<0.000000e+00> : vector<32x32xf32>
    %74 = tpu.matmul %72, %73, %cst_69 {dimension_numbers = #tpu.dot_dimension_numbers<[1], [0], [0], [1], [0, 0, 1, 1], [], []>} : vector<32x32xf32>, vector<32x32xf32>, vector<32x32xf32> -> vector<32x32xf32>
    %75 = arith.addf %71, %74 : vector<32x32xf32>
    %c384 = arith.constant 384 : index
    %c0_70 = arith.constant 0 : index
    %76 = vector.load %arg1[%c384, %c0_70] : memref<808x32xf32, #tpu.memory_space<vmem>>, vector<1x32xf32>
    %77 = vector.broadcast %76 : vector<1x32xf32> to vector<32x32xf32>
    %78 = arith.addf %75, %77 : vector<32x32xf32>
    %cst_71 = arith.constant 0.000000e+00 : f32
    %79 = vector.broadcast %cst_71 : f32 to vector<32x32xf32>
    %80 = arith.maximumf %78, %79 : vector<32x32xf32>
    %81 = arith.addf %80, %46 : vector<32x32xf32>
    %cst_72 = arith.constant 0.000000e+00 : f32
    %82 = vector.broadcast %cst_72 : f32 to vector<32x32xf32>
    %83 = arith.maximumf %81, %82 : vector<32x32xf32>
    %c32_73 = arith.constant 32 : index
    %c0_74 = arith.constant 0 : index
    %84 = vector.load %arg11[%c32_73, %c0_74] : memref<64x32xf32, #tpu.memory_space<vmem>>, vector<32x32xf32>
    tpu.vector_store %arg11[%c32_73, %c0_74], %83 {strides = array<i32>} : memref<64x32xf32, #tpu.memory_space<vmem>>, vector<32x32xf32>,
    %c16_75 = arith.constant 16 : index
    %c0_76 = arith.constant 0 : index
    %85 = vector.load %arg11[%c16_75, %c0_76] : memref<64x32xf32, #tpu.memory_space<vmem>>, vector<32x32xf32>
    %c392 = arith.constant 392 : index
    %c0_77 = arith.constant 0 : index
    %86 = vector.load %arg1[%c392, %c0_77] : memref<808x32xf32, #tpu.memory_space<vmem>>, vector<32x32xf32>
    %cst_78 = arith.constant dense<0.000000e+00> : vector<32x32xf32>
    %87 = tpu.matmul %85, %86, %cst_78 {dimension_numbers = #tpu.dot_dimension_numbers<[1], [0], [0], [1], [0, 0, 1, 1], [], []>} : vector<32x32xf32>, vector<32x32xf32>, vector<32x32xf32> -> vector<32x32xf32>
    %c24_79 = arith.constant 24 : index
    %c0_80 = arith.constant 0 : index
    %88 = vector.load %arg11[%c24_79, %c0_80] : memref<64x32xf32, #tpu.memory_space<vmem>>, vector<32x32xf32>
    %c424 = arith.constant 424 : index
    %c0_81 = arith.constant 0 : index
    %89 = vector.load %arg1[%c424, %c0_81] : memref<808x32xf32, #tpu.memory_space<vmem>>, vector<32x32xf32>
    %cst_82 = arith.constant dense<0.000000e+00> : vector<32x32xf32>
    %90 = tpu.matmul %88, %89, %cst_82 {dimension_numbers = #tpu.dot_dimension_numbers<[1], [0], [0], [1], [0, 0, 1, 1], [], []>} : vector<32x32xf32>, vector<32x32xf32>, vector<32x32xf32> -> vector<32x32xf32>
    %91 = arith.addf %87, %90 : vector<32x32xf32>
    %c32_83 = arith.constant 32 : index
    %c0_84 = arith.constant 0 : index
    %92 = vector.load %arg11[%c32_83, %c0_84] : memref<64x32xf32, #tpu.memory_space<vmem>>, vector<32x32xf32>
    %c456 = arith.constant 456 : index
    %c0_85 = arith.constant 0 : index
    %93 = vector.load %arg1[%c456, %c0_85] : memref<808x32xf32, #tpu.memory_space<vmem>>, vector<32x32xf32>
    %cst_86 = arith.constant dense<0.000000e+00> : vector<32x32xf32>
    %94 = tpu.matmul %92, %93, %cst_86 {dimension_numbers = #tpu.dot_dimension_numbers<[1], [0], [0], [1], [0, 0, 1, 1], [], []>} : vector<32x32xf32>, vector<32x32xf32>, vector<32x32xf32> -> vector<32x32xf32>
    %95 = arith.addf %91, %94 : vector<32x32xf32>
    %c488 = arith.constant 488 : index
    %c0_87 = arith.constant 0 : index
    %96 = vector.load %arg1[%c488, %c0_87] : memref<808x32xf32, #tpu.memory_space<vmem>>, vector<1x32xf32>
    %97 = vector.broadcast %96 : vector<1x32xf32> to vector<32x32xf32>
    %98 = arith.addf %95, %97 : vector<32x32xf32>
    %cst_88 = arith.constant 0.000000e+00 : f32
    %99 = vector.broadcast %cst_88 : f32 to vector<32x32xf32>
    %100 = arith.maximumf %98, %99 : vector<32x32xf32>
    %c32_89 = arith.constant 32 : index
    %c0_90 = arith.constant 0 : index
    %101 = vector.load %arg11[%c32_89, %c0_90] : memref<64x32xf32, #tpu.memory_space<vmem>>, vector<32x32xf32>
    tpu.vector_store %arg11[%c32_89, %c0_90], %100 {strides = array<i32>} : memref<64x32xf32, #tpu.memory_space<vmem>>, vector<32x32xf32>,
    %c16_91 = arith.constant 16 : index
    %c0_92 = arith.constant 0 : index
    %102 = vector.load %arg11[%c16_91, %c0_92] : memref<64x32xf32, #tpu.memory_space<vmem>>, vector<32x32xf32>
    %c496 = arith.constant 496 : index
    %c0_93 = arith.constant 0 : index
    %103 = vector.load %arg1[%c496, %c0_93] : memref<808x32xf32, #tpu.memory_space<vmem>>, vector<32x32xf32>
    %cst_94 = arith.constant dense<0.000000e+00> : vector<32x32xf32>
    %104 = tpu.matmul %102, %103, %cst_94 {dimension_numbers = #tpu.dot_dimension_numbers<[1], [0], [0], [1], [0, 0, 1, 1], [], []>} : vector<32x32xf32>, vector<32x32xf32>, vector<32x32xf32> -> vector<32x32xf32>
    %c24_95 = arith.constant 24 : index
    %c0_96 = arith.constant 0 : index
    %105 = vector.load %arg11[%c24_95, %c0_96] : memref<64x32xf32, #tpu.memory_space<vmem>>, vector<32x32xf32>
    %c528 = arith.constant 528 : index
    %c0_97 = arith.constant 0 : index
    %106 = vector.load %arg1[%c528, %c0_97] : memref<808x32xf32, #tpu.memory_space<vmem>>, vector<32x32xf32>
    %cst_98 = arith.constant dense<0.000000e+00> : vector<32x32xf32>
    %107 = tpu.matmul %105, %106, %cst_98 {dimension_numbers = #tpu.dot_dimension_numbers<[1], [0], [0], [1], [0, 0, 1, 1], [], []>} : vector<32x32xf32>, vector<32x32xf32>, vector<32x32xf32> -> vector<32x32xf32>
    %108 = arith.addf %104, %107 : vector<32x32xf32>
    %c32_99 = arith.constant 32 : index
    %c0_100 = arith.constant 0 : index
    %109 = vector.load %arg11[%c32_99, %c0_100] : memref<64x32xf32, #tpu.memory_space<vmem>>, vector<32x32xf32>
    %c560 = arith.constant 560 : index
    %c0_101 = arith.constant 0 : index
    %110 = vector.load %arg1[%c560, %c0_101] : memref<808x32xf32, #tpu.memory_space<vmem>>, vector<32x32xf32>
    %cst_102 = arith.constant dense<0.000000e+00> : vector<32x32xf32>
    %111 = tpu.matmul %109, %110, %cst_102 {dimension_numbers = #tpu.dot_dimension_numbers<[1], [0], [0], [1], [0, 0, 1, 1], [], []>} : vector<32x32xf32>, vector<32x32xf32>, vector<32x32xf32> -> vector<32x32xf32>
    %112 = arith.addf %108, %111 : vector<32x32xf32>
    %c592 = arith.constant 592 : index
    %c0_103 = arith.constant 0 : index
    %113 = vector.load %arg1[%c592, %c0_103] : memref<808x32xf32, #tpu.memory_space<vmem>>, vector<1x32xf32>
    %114 = vector.broadcast %113 : vector<1x32xf32> to vector<32x32xf32>
    %115 = arith.addf %112, %114 : vector<32x32xf32>
    %cst_104 = arith.constant 0.000000e+00 : f32
    %116 = vector.broadcast %cst_104 : f32 to vector<32x32xf32>
    %117 = arith.maximumf %115, %116 : vector<32x32xf32>
    %118 = arith.addf %117, %83 : vector<32x32xf32>
    %cst_105 = arith.constant 0.000000e+00 : f32
    %119 = vector.broadcast %cst_105 : f32 to vector<32x32xf32>
    %120 = arith.maximumf %118, %119 : vector<32x32xf32>
    %c32_106 = arith.constant 32 : index
    %c0_107 = arith.constant 0 : index
    %121 = vector.load %arg11[%c32_106, %c0_107] : memref<64x32xf32, #tpu.memory_space<vmem>>, vector<32x32xf32>
    tpu.vector_store %arg11[%c32_106, %c0_107], %120 {strides = array<i32>} : memref<64x32xf32, #tpu.memory_space<vmem>>, vector<32x32xf32>,
    %c16_108 = arith.constant 16 : index
    %c0_109 = arith.constant 0 : index
    %122 = vector.load %arg11[%c16_108, %c0_109] : memref<64x32xf32, #tpu.memory_space<vmem>>, vector<32x32xf32>
    %c632 = arith.constant 632 : index
    %c0_110 = arith.constant 0 : index
    %123 = vector.load %arg1[%c632, %c0_110] : memref<808x32xf32, #tpu.memory_space<vmem>>, vector<32x32xf32>
    %cst_111 = arith.constant dense<0.000000e+00> : vector<32x32xf32>
    %124 = tpu.matmul %122, %123, %cst_111 {dimension_numbers = #tpu.dot_dimension_numbers<[1], [0], [0], [1], [0, 0, 1, 1], [], []>} : vector<32x32xf32>, vector<32x32xf32>, vector<32x32xf32> -> vector<32x32xf32>
    %c32_112 = arith.constant 32 : index
    %c0_113 = arith.constant 0 : index
    %125 = vector.load %arg11[%c32_112, %c0_113] : memref<64x32xf32, #tpu.memory_space<vmem>>, vector<32x32xf32>
    %c664 = arith.constant 664 : index
    %c0_114 = arith.constant 0 : index
    %126 = vector.load %arg1[%c664, %c0_114] : memref<808x32xf32, #tpu.memory_space<vmem>>, vector<32x32xf32>
    %cst_115 = arith.constant dense<0.000000e+00> : vector<32x32xf32>
    %127 = tpu.matmul %125, %126, %cst_115 {dimension_numbers = #tpu.dot_dimension_numbers<[1], [0], [0], [1], [0, 0, 1, 1], [], []>} : vector<32x32xf32>, vector<32x32xf32>, vector<32x32xf32> -> vector<32x32xf32>
    %128 = arith.addf %124, %127 : vector<32x32xf32>
    %c696 = arith.constant 696 : index
    %c0_116 = arith.constant 0 : index
    %129 = vector.load %arg1[%c696, %c0_116] : memref<808x32xf32, #tpu.memory_space<vmem>>, vector<1x32xf32>
    %130 = vector.broadcast %129 : vector<1x32xf32> to vector<32x32xf32>
    %131 = arith.addf %128, %130 : vector<32x32xf32>
    %cst_117 = arith.constant 0.000000e+00 : f32
    %132 = vector.broadcast %cst_117 : f32 to vector<32x32xf32>
    %133 = arith.maximumf %131, %132 : vector<32x32xf32>
    %c32_118 = arith.constant 32 : index
    %c0_119 = arith.constant 0 : index
    %134 = vector.load %arg11[%c32_118, %c0_119] : memref<64x32xf32, #tpu.memory_space<vmem>>, vector<32x32xf32>
    tpu.vector_store %arg11[%c32_118, %c0_119], %133 {strides = array<i32>} : memref<64x32xf32, #tpu.memory_space<vmem>>, vector<32x32xf32>,
    %c16_120 = arith.constant 16 : index
    %c0_121 = arith.constant 0 : index
    %135 = vector.load %arg11[%c16_120, %c0_121] : memref<64x32xf32, #tpu.memory_space<vmem>>, vector<32x32xf32>
    %c736 = arith.constant 736 : index
    %c0_122 = arith.constant 0 : index
    %136 = vector.load %arg1[%c736, %c0_122] : memref<808x32xf32, #tpu.memory_space<vmem>>, vector<32x32xf32>
    %cst_123 = arith.constant dense<0.000000e+00> : vector<32x32xf32>
    %137 = tpu.matmul %135, %136, %cst_123 {dimension_numbers = #tpu.dot_dimension_numbers<[1], [0], [0], [1], [0, 0, 1, 1], [], []>} : vector<32x32xf32>, vector<32x32xf32>, vector<32x32xf32> -> vector<32x32xf32>
    %c32_124 = arith.constant 32 : index
    %c0_125 = arith.constant 0 : index
    %138 = vector.load %arg11[%c32_124, %c0_125] : memref<64x32xf32, #tpu.memory_space<vmem>>, vector<32x32xf32>
    %c768 = arith.constant 768 : index
    %c0_126 = arith.constant 0 : index
    %139 = vector.load %arg1[%c768, %c0_126] : memref<808x32xf32, #tpu.memory_space<vmem>>, vector<32x32xf32>
    %cst_127 = arith.constant dense<0.000000e+00> : vector<32x32xf32>
    %140 = tpu.matmul %138, %139, %cst_127 {dimension_numbers = #tpu.dot_dimension_numbers<[1], [0], [0], [1], [0, 0, 1, 1], [], []>} : vector<32x32xf32>, vector<32x32xf32>, vector<32x32xf32> -> vector<32x32xf32>
    %141 = arith.addf %137, %140 : vector<32x32xf32>
    %c800 = arith.constant 800 : index
    %c0_128 = arith.constant 0 : index
    %142 = vector.load %arg1[%c800, %c0_128] : memref<808x32xf32, #tpu.memory_space<vmem>>, vector<1x32xf32>
    %143 = vector.broadcast %142 : vector<1x32xf32> to vector<32x32xf32>
    %144 = arith.addf %141, %143 : vector<32x32xf32>
    %cst_129 = arith.constant 0.000000e+00 : f32
    %145 = vector.broadcast %cst_129 : f32 to vector<32x32xf32>
    %146 = arith.maximumf %144, %145 : vector<32x32xf32>
    %147 = arith.addf %146, %120 : vector<32x32xf32>
    %cst_130 = arith.constant 0.000000e+00 : f32
    %148 = vector.broadcast %cst_130 : f32 to vector<32x32xf32>
    %149 = arith.maximumf %147, %148 : vector<32x32xf32>
    %c32_131 = arith.constant 32 : index
    %c0_132 = arith.constant 0 : index
    %150 = vector.load %arg10[%c32_131, %c0_132] : memref<64x12xf32, #tpu.memory_space<vmem>>, vector<32x12xf32>
    tpu.vector_store %arg10[%c32_131, %c0_132], %4 {strides = array<i32>} : memref<64x12xf32, #tpu.memory_space<vmem>>, vector<32x12xf32>,
    %c28_133 = arith.constant 28 : index
    %c0_134 = arith.constant 0 : index
    %151 = vector.load %arg10[%c28_133, %c0_134] : memref<64x12xf32, #tpu.memory_space<vmem>>, vector<32x12xf32>
    %c0_135 = arith.constant 0 : index
    %c0_136 = arith.constant 0 : index
    %152 = vector.load %arg2[%c0_135, %c0_136] : memref<808x32xf32, #tpu.memory_space<vmem>>, vector<12x32xf32>
    %cst_137 = arith.constant dense<0.000000e+00> : vector<32x32xf32>
    %153 = tpu.matmul %151, %152, %cst_137 {dimension_numbers = #tpu.dot_dimension_numbers<[1], [0], [0], [1], [0, 0, 1, 1], [], []>} : vector<32x12xf32>, vector<12x32xf32>, vector<32x32xf32> -> vector<32x32xf32>
    %c30_138 = arith.constant 30 : index
    %c0_139 = arith.constant 0 : index
    %154 = vector.load %arg10[%c30_138, %c0_139] : memref<64x12xf32, #tpu.memory_space<vmem>>, vector<32x12xf32>
    %c16_140 = arith.constant 16 : index
    %c0_141 = arith.constant 0 : index
    %155 = vector.load %arg2[%c16_140, %c0_141] : memref<808x32xf32, #tpu.memory_space<vmem>>, vector<12x32xf32>
    %cst_142 = arith.constant dense<0.000000e+00> : vector<32x32xf32>
    %156 = tpu.matmul %154, %155, %cst_142 {dimension_numbers = #tpu.dot_dimension_numbers<[1], [0], [0], [1], [0, 0, 1, 1], [], []>} : vector<32x12xf32>, vector<12x32xf32>, vector<32x32xf32> -> vector<32x32xf32>
    %157 = arith.addf %153, %156 : vector<32x32xf32>
    %c32_143 = arith.constant 32 : index
    %c0_144 = arith.constant 0 : index
    %158 = vector.load %arg10[%c32_143, %c0_144] : memref<64x12xf32, #tpu.memory_space<vmem>>, vector<32x12xf32>
    %c32_145 = arith.constant 32 : index
    %c0_146 = arith.constant 0 : index
    %159 = vector.load %arg2[%c32_145, %c0_146] : memref<808x32xf32, #tpu.memory_space<vmem>>, vector<12x32xf32>
    %cst_147 = arith.constant dense<0.000000e+00> : vector<32x32xf32>
    %160 = tpu.matmul %158, %159, %cst_147 {dimension_numbers = #tpu.dot_dimension_numbers<[1], [0], [0], [1], [0, 0, 1, 1], [], []>} : vector<32x12xf32>, vector<12x32xf32>, vector<32x32xf32> -> vector<32x32xf32>
    %161 = arith.addf %157, %160 : vector<32x32xf32>
    %c48_148 = arith.constant 48 : index
    %c0_149 = arith.constant 0 : index
    %162 = vector.load %arg2[%c48_148, %c0_149] : memref<808x32xf32, #tpu.memory_space<vmem>>, vector<1x32xf32>
    %163 = vector.broadcast %162 : vector<1x32xf32> to vector<32x32xf32>
    %164 = arith.addf %161, %163 : vector<32x32xf32>
    %cst_150 = arith.constant 0.000000e+00 : f32
    %165 = vector.broadcast %cst_150 : f32 to vector<32x32xf32>
    %166 = arith.maximumf %164, %165 : vector<32x32xf32>
    %c32_151 = arith.constant 32 : index
    %c0_152 = arith.constant 0 : index
    %167 = vector.load %arg11[%c32_151, %c0_152] : memref<64x32xf32, #tpu.memory_space<vmem>>, vector<32x32xf32>
    tpu.vector_store %arg11[%c32_151, %c0_152], %166 {strides = array<i32>} : memref<64x32xf32, #tpu.memory_space<vmem>>, vector<32x32xf32>,
    %c28_153 = arith.constant 28 : index
    %c0_154 = arith.constant 0 : index
    %168 = vector.load %arg11[%c28_153, %c0_154] : memref<64x32xf32, #tpu.memory_space<vmem>>, vector<32x32xf32>
    %c56_155 = arith.constant 56 : index
    %c0_156 = arith.constant 0 : index
    %169 = vector.load %arg2[%c56_155, %c0_156] : memref<808x32xf32, #tpu.memory_space<vmem>>, vector<32x32xf32>
    %cst_157 = arith.constant dense<0.000000e+00> : vector<32x32xf32>
    %170 = tpu.matmul %168, %169, %cst_157 {dimension_numbers = #tpu.dot_dimension_numbers<[1], [0], [0], [1], [0, 0, 1, 1], [], []>} : vector<32x32xf32>, vector<32x32xf32>, vector<32x32xf32> -> vector<32x32xf32>
    %c30_158 = arith.constant 30 : index
    %c0_159 = arith.constant 0 : index
    %171 = vector.load %arg11[%c30_158, %c0_159] : memref<64x32xf32, #tpu.memory_space<vmem>>, vector<32x32xf32>
    %c88_160 = arith.constant 88 : index
    %c0_161 = arith.constant 0 : index
    %172 = vector.load %arg2[%c88_160, %c0_161] : memref<808x32xf32, #tpu.memory_space<vmem>>, vector<32x32xf32>
    %cst_162 = arith.constant dense<0.000000e+00> : vector<32x32xf32>
    %173 = tpu.matmul %171, %172, %cst_162 {dimension_numbers = #tpu.dot_dimension_numbers<[1], [0], [0], [1], [0, 0, 1, 1], [], []>} : vector<32x32xf32>, vector<32x32xf32>, vector<32x32xf32> -> vector<32x32xf32>
    %174 = arith.addf %170, %173 : vector<32x32xf32>
    %c32_163 = arith.constant 32 : index
    %c0_164 = arith.constant 0 : index
    %175 = vector.load %arg11[%c32_163, %c0_164] : memref<64x32xf32, #tpu.memory_space<vmem>>, vector<32x32xf32>
    %c120_165 = arith.constant 120 : index
    %c0_166 = arith.constant 0 : index
    %176 = vector.load %arg2[%c120_165, %c0_166] : memref<808x32xf32, #tpu.memory_space<vmem>>, vector<32x32xf32>
    %cst_167 = arith.constant dense<0.000000e+00> : vector<32x32xf32>
    %177 = tpu.matmul %175, %176, %cst_167 {dimension_numbers = #tpu.dot_dimension_numbers<[1], [0], [0], [1], [0, 0, 1, 1], [], []>} : vector<32x32xf32>, vector<32x32xf32>, vector<32x32xf32> -> vector<32x32xf32>
    %178 = arith.addf %174, %177 : vector<32x32xf32>
    %c152_168 = arith.constant 152 : index
    %c0_169 = arith.constant 0 : index
    %179 = vector.load %arg2[%c152_168, %c0_169] : memref<808x32xf32, #tpu.memory_space<vmem>>, vector<1x32xf32>
    %180 = vector.broadcast %179 : vector<1x32xf32> to vector<32x32xf32>
    %181 = arith.addf %178, %180 : vector<32x32xf32>
    %cst_170 = arith.constant 0.000000e+00 : f32
    %182 = vector.broadcast %cst_170 : f32 to vector<32x32xf32>
    %183 = arith.maximumf %181, %182 : vector<32x32xf32>
    %c160_171 = arith.constant 160 : index
    %c0_172 = arith.constant 0 : index
    %184 = vector.load %arg2[%c160_171, %c0_172] : memref<808x32xf32, #tpu.memory_space<vmem>>, vector<12x32xf32>
    %cst_173 = arith.constant dense<0.000000e+00> : vector<32x32xf32>
    %185 = tpu.matmul %4, %184, %cst_173 {dimension_numbers = #tpu.dot_dimension_numbers<[1], [0], [0], [1], [0, 0, 1, 1], [], []>} : vector<32x12xf32>, vector<12x32xf32>, vector<32x32xf32> -> vector<32x32xf32>
    %c176_174 = arith.constant 176 : index
    %c0_175 = arith.constant 0 : index
    %186 = vector.load %arg2[%c176_174, %c0_175] : memref<808x32xf32, #tpu.memory_space<vmem>>, vector<1x32xf32>
    %187 = vector.broadcast %186 : vector<1x32xf32> to vector<32x32xf32>
    %188 = arith.addf %185, %187 : vector<32x32xf32>
    %189 = arith.addf %183, %188 : vector<32x32xf32>
    %cst_176 = arith.constant 0.000000e+00 : f32
    %190 = vector.broadcast %cst_176 : f32 to vector<32x32xf32>
    %191 = arith.maximumf %189, %190 : vector<32x32xf32>
    %c32_177 = arith.constant 32 : index
    %c0_178 = arith.constant 0 : index
    %192 = vector.load %arg11[%c32_177, %c0_178] : memref<64x32xf32, #tpu.memory_space<vmem>>, vector<32x32xf32>
    tpu.vector_store %arg11[%c32_177, %c0_178], %191 {strides = array<i32>} : memref<64x32xf32, #tpu.memory_space<vmem>>, vector<32x32xf32>,
    %c24_179 = arith.constant 24 : index
    %c0_180 = arith.constant 0 : index
    %193 = vector.load %arg11[%c24_179, %c0_180] : memref<64x32xf32, #tpu.memory_space<vmem>>, vector<32x32xf32>
    %c184_181 = arith.constant 184 : index
    %c0_182 = arith.constant 0 : index
    %194 = vector.load %arg2[%c184_181, %c0_182] : memref<808x32xf32, #tpu.memory_space<vmem>>, vector<32x32xf32>
    %cst_183 = arith.constant dense<0.000000e+00> : vector<32x32xf32>
    %195 = tpu.matmul %193, %194, %cst_183 {dimension_numbers = #tpu.dot_dimension_numbers<[1], [0], [0], [1], [0, 0, 1, 1], [], []>} : vector<32x32xf32>, vector<32x32xf32>, vector<32x32xf32> -> vector<32x32xf32>
    %c28_184 = arith.constant 28 : index
    %c0_185 = arith.constant 0 : index
    %196 = vector.load %arg11[%c28_184, %c0_185] : memref<64x32xf32, #tpu.memory_space<vmem>>, vector<32x32xf32>
    %c216_186 = arith.constant 216 : index
    %c0_187 = arith.constant 0 : index
    %197 = vector.load %arg2[%c216_186, %c0_187] : memref<808x32xf32, #tpu.memory_space<vmem>>, vector<32x32xf32>
    %cst_188 = arith.constant dense<0.000000e+00> : vector<32x32xf32>
    %198 = tpu.matmul %196, %197, %cst_188 {dimension_numbers = #tpu.dot_dimension_numbers<[1], [0], [0], [1], [0, 0, 1, 1], [], []>} : vector<32x32xf32>, vector<32x32xf32>, vector<32x32xf32> -> vector<32x32xf32>
    %199 = arith.addf %195, %198 : vector<32x32xf32>
    %c32_189 = arith.constant 32 : index
    %c0_190 = arith.constant 0 : index
    %200 = vector.load %arg11[%c32_189, %c0_190] : memref<64x32xf32, #tpu.memory_space<vmem>>, vector<32x32xf32>
    %c248_191 = arith.constant 248 : index
    %c0_192 = arith.constant 0 : index
    %201 = vector.load %arg2[%c248_191, %c0_192] : memref<808x32xf32, #tpu.memory_space<vmem>>, vector<32x32xf32>
    %cst_193 = arith.constant dense<0.000000e+00> : vector<32x32xf32>
    %202 = tpu.matmul %200, %201, %cst_193 {dimension_numbers = #tpu.dot_dimension_numbers<[1], [0], [0], [1], [0, 0, 1, 1], [], []>} : vector<32x32xf32>, vector<32x32xf32>, vector<32x32xf32> -> vector<32x32xf32>
    %203 = arith.addf %199, %202 : vector<32x32xf32>
    %c280_194 = arith.constant 280 : index
    %c0_195 = arith.constant 0 : index
    %204 = vector.load %arg2[%c280_194, %c0_195] : memref<808x32xf32, #tpu.memory_space<vmem>>, vector<1x32xf32>
    %205 = vector.broadcast %204 : vector<1x32xf32> to vector<32x32xf32>
    %206 = arith.addf %203, %205 : vector<32x32xf32>
    %cst_196 = arith.constant 0.000000e+00 : f32
    %207 = vector.broadcast %cst_196 : f32 to vector<32x32xf32>
    %208 = arith.maximumf %206, %207 : vector<32x32xf32>
    %c32_197 = arith.constant 32 : index
    %c0_198 = arith.constant 0 : index
    %209 = vector.load %arg11[%c32_197, %c0_198] : memref<64x32xf32, #tpu.memory_space<vmem>>, vector<32x32xf32>
    tpu.vector_store %arg11[%c32_197, %c0_198], %208 {strides = array<i32>} : memref<64x32xf32, #tpu.memory_space<vmem>>, vector<32x32xf32>,
    %c24_199 = arith.constant 24 : index
    %c0_200 = arith.constant 0 : index
    %210 = vector.load %arg11[%c24_199, %c0_200] : memref<64x32xf32, #tpu.memory_space<vmem>>, vector<32x32xf32>
    %c288_201 = arith.constant 288 : index
    %c0_202 = arith.constant 0 : index
    %211 = vector.load %arg2[%c288_201, %c0_202] : memref<808x32xf32, #tpu.memory_space<vmem>>, vector<32x32xf32>
    %cst_203 = arith.constant dense<0.000000e+00> : vector<32x32xf32>
    %212 = tpu.matmul %210, %211, %cst_203 {dimension_numbers = #tpu.dot_dimension_numbers<[1], [0], [0], [1], [0, 0, 1, 1], [], []>} : vector<32x32xf32>, vector<32x32xf32>, vector<32x32xf32> -> vector<32x32xf32>
    %c28_204 = arith.constant 28 : index
    %c0_205 = arith.constant 0 : index
    %213 = vector.load %arg11[%c28_204, %c0_205] : memref<64x32xf32, #tpu.memory_space<vmem>>, vector<32x32xf32>
    %c320_206 = arith.constant 320 : index
    %c0_207 = arith.constant 0 : index
    %214 = vector.load %arg2[%c320_206, %c0_207] : memref<808x32xf32, #tpu.memory_space<vmem>>, vector<32x32xf32>
    %cst_208 = arith.constant dense<0.000000e+00> : vector<32x32xf32>
    %215 = tpu.matmul %213, %214, %cst_208 {dimension_numbers = #tpu.dot_dimension_numbers<[1], [0], [0], [1], [0, 0, 1, 1], [], []>} : vector<32x32xf32>, vector<32x32xf32>, vector<32x32xf32> -> vector<32x32xf32>
    %216 = arith.addf %212, %215 : vector<32x32xf32>
    %c32_209 = arith.constant 32 : index
    %c0_210 = arith.constant 0 : index
    %217 = vector.load %arg11[%c32_209, %c0_210] : memref<64x32xf32, #tpu.memory_space<vmem>>, vector<32x32xf32>
    %c352_211 = arith.constant 352 : index
    %c0_212 = arith.constant 0 : index
    %218 = vector.load %arg2[%c352_211, %c0_212] : memref<808x32xf32, #tpu.memory_space<vmem>>, vector<32x32xf32>
    %cst_213 = arith.constant dense<0.000000e+00> : vector<32x32xf32>
    %219 = tpu.matmul %217, %218, %cst_213 {dimension_numbers = #tpu.dot_dimension_numbers<[1], [0], [0], [1], [0, 0, 1, 1], [], []>} : vector<32x32xf32>, vector<32x32xf32>, vector<32x32xf32> -> vector<32x32xf32>
    %220 = arith.addf %216, %219 : vector<32x32xf32>
    %c384_214 = arith.constant 384 : index
    %c0_215 = arith.constant 0 : index
    %221 = vector.load %arg2[%c384_214, %c0_215] : memref<808x32xf32, #tpu.memory_space<vmem>>, vector<1x32xf32>
    %222 = vector.broadcast %221 : vector<1x32xf32> to vector<32x32xf32>
    %223 = arith.addf %220, %222 : vector<32x32xf32>
    %cst_216 = arith.constant 0.000000e+00 : f32
    %224 = vector.broadcast %cst_216 : f32 to vector<32x32xf32>
    %225 = arith.maximumf %223, %224 : vector<32x32xf32>
    %226 = arith.addf %225, %191 : vector<32x32xf32>
    %cst_217 = arith.constant 0.000000e+00 : f32
    %227 = vector.broadcast %cst_217 : f32 to vector<32x32xf32>
    %228 = arith.maximumf %226, %227 : vector<32x32xf32>
    %c32_218 = arith.constant 32 : index
    %c0_219 = arith.constant 0 : index
    %229 = vector.load %arg11[%c32_218, %c0_219] : memref<64x32xf32, #tpu.memory_space<vmem>>, vector<32x32xf32>
    tpu.vector_store %arg11[%c32_218, %c0_219], %228 {strides = array<i32>} : memref<64x32xf32, #tpu.memory_space<vmem>>, vector<32x32xf32>,
    %c16_220 = arith.constant 16 : index
    %c0_221 = arith.constant 0 : index
    %230 = vector.load %arg11[%c16_220, %c0_221] : memref<64x32xf32, #tpu.memory_space<vmem>>, vector<32x32xf32>
    %c392_222 = arith.constant 392 : index
    %c0_223 = arith.constant 0 : index
    %231 = vector.load %arg2[%c392_222, %c0_223] : memref<808x32xf32, #tpu.memory_space<vmem>>, vector<32x32xf32>
    %cst_224 = arith.constant dense<0.000000e+00> : vector<32x32xf32>
    %232 = tpu.matmul %230, %231, %cst_224 {dimension_numbers = #tpu.dot_dimension_numbers<[1], [0], [0], [1], [0, 0, 1, 1], [], []>} : vector<32x32xf32>, vector<32x32xf32>, vector<32x32xf32> -> vector<32x32xf32>
    %c24_225 = arith.constant 24 : index
    %c0_226 = arith.constant 0 : index
    %233 = vector.load %arg11[%c24_225, %c0_226] : memref<64x32xf32, #tpu.memory_space<vmem>>, vector<32x32xf32>
    %c424_227 = arith.constant 424 : index
    %c0_228 = arith.constant 0 : index
    %234 = vector.load %arg2[%c424_227, %c0_228] : memref<808x32xf32, #tpu.memory_space<vmem>>, vector<32x32xf32>
    %cst_229 = arith.constant dense<0.000000e+00> : vector<32x32xf32>
    %235 = tpu.matmul %233, %234, %cst_229 {dimension_numbers = #tpu.dot_dimension_numbers<[1], [0], [0], [1], [0, 0, 1, 1], [], []>} : vector<32x32xf32>, vector<32x32xf32>, vector<32x32xf32> -> vector<32x32xf32>
    %236 = arith.addf %232, %235 : vector<32x32xf32>
    %c32_230 = arith.constant 32 : index
    %c0_231 = arith.constant 0 : index
    %237 = vector.load %arg11[%c32_230, %c0_231] : memref<64x32xf32, #tpu.memory_space<vmem>>, vector<32x32xf32>
    %c456_232 = arith.constant 456 : index
    %c0_233 = arith.constant 0 : index
    %238 = vector.load %arg2[%c456_232, %c0_233] : memref<808x32xf32, #tpu.memory_space<vmem>>, vector<32x32xf32>
    %cst_234 = arith.constant dense<0.000000e+00> : vector<32x32xf32>
    %239 = tpu.matmul %237, %238, %cst_234 {dimension_numbers = #tpu.dot_dimension_numbers<[1], [0], [0], [1], [0, 0, 1, 1], [], []>} : vector<32x32xf32>, vector<32x32xf32>, vector<32x32xf32> -> vector<32x32xf32>
    %240 = arith.addf %236, %239 : vector<32x32xf32>
    %c488_235 = arith.constant 488 : index
    %c0_236 = arith.constant 0 : index
    %241 = vector.load %arg2[%c488_235, %c0_236] : memref<808x32xf32, #tpu.memory_space<vmem>>, vector<1x32xf32>
    %242 = vector.broadcast %241 : vector<1x32xf32> to vector<32x32xf32>
    %243 = arith.addf %240, %242 : vector<32x32xf32>
    %cst_237 = arith.constant 0.000000e+00 : f32
    %244 = vector.broadcast %cst_237 : f32 to vector<32x32xf32>
    %245 = arith.maximumf %243, %244 : vector<32x32xf32>
    %c32_238 = arith.constant 32 : index
    %c0_239 = arith.constant 0 : index
    %246 = vector.load %arg11[%c32_238, %c0_239] : memref<64x32xf32, #tpu.memory_space<vmem>>, vector<32x32xf32>
    tpu.vector_store %arg11[%c32_238, %c0_239], %245 {strides = array<i32>} : memref<64x32xf32, #tpu.memory_space<vmem>>, vector<32x32xf32>,
    %c16_240 = arith.constant 16 : index
    %c0_241 = arith.constant 0 : index
    %247 = vector.load %arg11[%c16_240, %c0_241] : memref<64x32xf32, #tpu.memory_space<vmem>>, vector<32x32xf32>
    %c496_242 = arith.constant 496 : index
    %c0_243 = arith.constant 0 : index
    %248 = vector.load %arg2[%c496_242, %c0_243] : memref<808x32xf32, #tpu.memory_space<vmem>>, vector<32x32xf32>
    %cst_244 = arith.constant dense<0.000000e+00> : vector<32x32xf32>
    %249 = tpu.matmul %247, %248, %cst_244 {dimension_numbers = #tpu.dot_dimension_numbers<[1], [0], [0], [1], [0, 0, 1, 1], [], []>} : vector<32x32xf32>, vector<32x32xf32>, vector<32x32xf32> -> vector<32x32xf32>
    %c24_245 = arith.constant 24 : index
    %c0_246 = arith.constant 0 : index
    %250 = vector.load %arg11[%c24_245, %c0_246] : memref<64x32xf32, #tpu.memory_space<vmem>>, vector<32x32xf32>
    %c528_247 = arith.constant 528 : index
    %c0_248 = arith.constant 0 : index
    %251 = vector.load %arg2[%c528_247, %c0_248] : memref<808x32xf32, #tpu.memory_space<vmem>>, vector<32x32xf32>
    %cst_249 = arith.constant dense<0.000000e+00> : vector<32x32xf32>
    %252 = tpu.matmul %250, %251, %cst_249 {dimension_numbers = #tpu.dot_dimension_numbers<[1], [0], [0], [1], [0, 0, 1, 1], [], []>} : vector<32x32xf32>, vector<32x32xf32>, vector<32x32xf32> -> vector<32x32xf32>
    %253 = arith.addf %249, %252 : vector<32x32xf32>
    %c32_250 = arith.constant 32 : index
    %c0_251 = arith.constant 0 : index
    %254 = vector.load %arg11[%c32_250, %c0_251] : memref<64x32xf32, #tpu.memory_space<vmem>>, vector<32x32xf32>
    %c560_252 = arith.constant 560 : index
    %c0_253 = arith.constant 0 : index
    %255 = vector.load %arg2[%c560_252, %c0_253] : memref<808x32xf32, #tpu.memory_space<vmem>>, vector<32x32xf32>
    %cst_254 = arith.constant dense<0.000000e+00> : vector<32x32xf32>
    %256 = tpu.matmul %254, %255, %cst_254 {dimension_numbers = #tpu.dot_dimension_numbers<[1], [0], [0], [1], [0, 0, 1, 1], [], []>} : vector<32x32xf32>, vector<32x32xf32>, vector<32x32xf32> -> vector<32x32xf32>
    %257 = arith.addf %253, %256 : vector<32x32xf32>
    %c592_255 = arith.constant 592 : index
    %c0_256 = arith.constant 0 : index
    %258 = vector.load %arg2[%c592_255, %c0_256] : memref<808x32xf32, #tpu.memory_space<vmem>>, vector<1x32xf32>
    %259 = vector.broadcast %258 : vector<1x32xf32> to vector<32x32xf32>
    %260 = arith.addf %257, %259 : vector<32x32xf32>
    %cst_257 = arith.constant 0.000000e+00 : f32
    %261 = vector.broadcast %cst_257 : f32 to vector<32x32xf32>
    %262 = arith.maximumf %260, %261 : vector<32x32xf32>
    %263 = arith.addf %262, %228 : vector<32x32xf32>
    %cst_258 = arith.constant 0.000000e+00 : f32
    %264 = vector.broadcast %cst_258 : f32 to vector<32x32xf32>
    %265 = arith.maximumf %263, %264 : vector<32x32xf32>
    %c32_259 = arith.constant 32 : index
    %c0_260 = arith.constant 0 : index
    %266 = vector.load %arg11[%c32_259, %c0_260] : memref<64x32xf32, #tpu.memory_space<vmem>>, vector<32x32xf32>
    tpu.vector_store %arg11[%c32_259, %c0_260], %265 {strides = array<i32>} : memref<64x32xf32, #tpu.memory_space<vmem>>, vector<32x32xf32>,
    %c16_261 = arith.constant 16 : index
    %c0_262 = arith.constant 0 : index
    %267 = vector.load %arg11[%c16_261, %c0_262] : memref<64x32xf32, #tpu.memory_space<vmem>>, vector<32x32xf32>
    %c632_263 = arith.constant 632 : index
    %c0_264 = arith.constant 0 : index
    %268 = vector.load %arg2[%c632_263, %c0_264] : memref<808x32xf32, #tpu.memory_space<vmem>>, vector<32x32xf32>
    %cst_265 = arith.constant dense<0.000000e+00> : vector<32x32xf32>
    %269 = tpu.matmul %267, %268, %cst_265 {dimension_numbers = #tpu.dot_dimension_numbers<[1], [0], [0], [1], [0, 0, 1, 1], [], []>} : vector<32x32xf32>, vector<32x32xf32>, vector<32x32xf32> -> vector<32x32xf32>
    %c32_266 = arith.constant 32 : index
    %c0_267 = arith.constant 0 : index
    %270 = vector.load %arg11[%c32_266, %c0_267] : memref<64x32xf32, #tpu.memory_space<vmem>>, vector<32x32xf32>
    %c664_268 = arith.constant 664 : index
    %c0_269 = arith.constant 0 : index
    %271 = vector.load %arg2[%c664_268, %c0_269] : memref<808x32xf32, #tpu.memory_space<vmem>>, vector<32x32xf32>
    %cst_270 = arith.constant dense<0.000000e+00> : vector<32x32xf32>
    %272 = tpu.matmul %270, %271, %cst_270 {dimension_numbers = #tpu.dot_dimension_numbers<[1], [0], [0], [1], [0, 0, 1, 1], [], []>} : vector<32x32xf32>, vector<32x32xf32>, vector<32x32xf32> -> vector<32x32xf32>
    %273 = arith.addf %269, %272 : vector<32x32xf32>
    %c696_271 = arith.constant 696 : index
    %c0_272 = arith.constant 0 : index
    %274 = vector.load %arg2[%c696_271, %c0_272] : memref<808x32xf32, #tpu.memory_space<vmem>>, vector<1x32xf32>
    %275 = vector.broadcast %274 : vector<1x32xf32> to vector<32x32xf32>
    %276 = arith.addf %273, %275 : vector<32x32xf32>
    %cst_273 = arith.constant 0.000000e+00 : f32
    %277 = vector.broadcast %cst_273 : f32 to vector<32x32xf32>
    %278 = arith.maximumf %276, %277 : vector<32x32xf32>
    %c32_274 = arith.constant 32 : index
    %c0_275 = arith.constant 0 : index
    %279 = vector.load %arg11[%c32_274, %c0_275] : memref<64x32xf32, #tpu.memory_space<vmem>>, vector<32x32xf32>
    tpu.vector_store %arg11[%c32_274, %c0_275], %278 {strides = array<i32>} : memref<64x32xf32, #tpu.memory_space<vmem>>, vector<32x32xf32>,
    %c16_276 = arith.constant 16 : index
    %c0_277 = arith.constant 0 : index
    %280 = vector.load %arg11[%c16_276, %c0_277] : memref<64x32xf32, #tpu.memory_space<vmem>>, vector<32x32xf32>
    %c736_278 = arith.constant 736 : index
    %c0_279 = arith.constant 0 : index
    %281 = vector.load %arg2[%c736_278, %c0_279] : memref<808x32xf32, #tpu.memory_space<vmem>>, vector<32x32xf32>
    %cst_280 = arith.constant dense<0.000000e+00> : vector<32x32xf32>
    %282 = tpu.matmul %280, %281, %cst_280 {dimension_numbers = #tpu.dot_dimension_numbers<[1], [0], [0], [1], [0, 0, 1, 1], [], []>} : vector<32x32xf32>, vector<32x32xf32>, vector<32x32xf32> -> vector<32x32xf32>
    %c32_281 = arith.constant 32 : index
    %c0_282 = arith.constant 0 : index
    %283 = vector.load %arg11[%c32_281, %c0_282] : memref<64x32xf32, #tpu.memory_space<vmem>>, vector<32x32xf32>
    %c768_283 = arith.constant 768 : index
    %c0_284 = arith.constant 0 : index
    %284 = vector.load %arg2[%c768_283, %c0_284] : memref<808x32xf32, #tpu.memory_space<vmem>>, vector<32x32xf32>
    %cst_285 = arith.constant dense<0.000000e+00> : vector<32x32xf32>
    %285 = tpu.matmul %283, %284, %cst_285 {dimension_numbers = #tpu.dot_dimension_numbers<[1], [0], [0], [1], [0, 0, 1, 1], [], []>} : vector<32x32xf32>, vector<32x32xf32>, vector<32x32xf32> -> vector<32x32xf32>
    %286 = arith.addf %282, %285 : vector<32x32xf32>
    %c800_286 = arith.constant 800 : index
    %c0_287 = arith.constant 0 : index
    %287 = vector.load %arg2[%c800_286, %c0_287] : memref<808x32xf32, #tpu.memory_space<vmem>>, vector<1x32xf32>
    %288 = vector.broadcast %287 : vector<1x32xf32> to vector<32x32xf32>
    %289 = arith.addf %286, %288 : vector<32x32xf32>
    %cst_288 = arith.constant 0.000000e+00 : f32
    %290 = vector.broadcast %cst_288 : f32 to vector<32x32xf32>
    %291 = arith.maximumf %289, %290 : vector<32x32xf32>
    %292 = arith.addf %291, %265 : vector<32x32xf32>
    %cst_289 = arith.constant 0.000000e+00 : f32
    %293 = vector.broadcast %cst_289 : f32 to vector<32x32xf32>
    %294 = arith.maximumf %292, %293 : vector<32x32xf32>
    %c0_290 = arith.constant 0 : index
    %c0_291 = arith.constant 0 : index
    %295 = vector.load %arg5[%c0_290, %c0_291] : memref<648x160xf32, #tpu.memory_space<vmem>>, vector<32x64xf32>
    %cst_292 = arith.constant dense<0.000000e+00> : vector<32x64xf32>
    %296 = tpu.matmul %149, %295, %cst_292 {dimension_numbers = #tpu.dot_dimension_numbers<[1], [0], [0], [1], [0, 0, 1, 1], [], []>} : vector<32x32xf32>, vector<32x64xf32>, vector<32x64xf32> -> vector<32x64xf32>
    %c32_293 = arith.constant 32 : index
    %c0_294 = arith.constant 0 : index
    %297 = vector.load %arg5[%c32_293, %c0_294] : memref<648x160xf32, #tpu.memory_space<vmem>>, vector<1x64xf32>
    %298 = vector.broadcast %297 : vector<1x64xf32> to vector<32x64xf32>
    %299 = arith.addf %296, %298 : vector<32x64xf32>
    %cst_295 = arith.constant 0.707106769 : f32
    %300 = vector.broadcast %cst_295 : f32 to vector<32x64xf32>
    %301 = arith.mulf %299, %300 : vector<32x64xf32>
    %302 = math.absf %301 : vector<32x64xf32>
    %cst_296 = arith.constant 0.327591091 : f32
    %303 = vector.broadcast %cst_296 : f32 to vector<32x64xf32>
    %304 = arith.mulf %303, %302 : vector<32x64xf32>
    %cst_297 = arith.constant 1.000000e+00 : f32
    %305 = vector.broadcast %cst_297 : f32 to vector<32x64xf32>
    %306 = arith.addf %305, %304 : vector<32x64xf32>
    %307 = tpu.reciprocal %306 : vector<32x64xf32> -> vector<32x64xf32>
    %cst_298 = arith.constant 1.06140542 : f32
    %308 = vector.broadcast %cst_298 : f32 to vector<32x64xf32>
    %309 = arith.mulf %308, %307 : vector<32x64xf32>
    %cst_299 = arith.constant -1.45315206 : f32
    %310 = vector.broadcast %cst_299 : f32 to vector<32x64xf32>
    %311 = arith.addf %309, %310 : vector<32x64xf32>
    %312 = arith.mulf %311, %307 : vector<32x64xf32>
    %cst_300 = arith.constant 1.42141378 : f32
    %313 = vector.broadcast %cst_300 : f32 to vector<32x64xf32>
    %314 = arith.addf %312, %313 : vector<32x64xf32>
    %315 = arith.mulf %314, %307 : vector<32x64xf32>
    %cst_301 = arith.constant -0.284496725 : f32
    %316 = vector.broadcast %cst_301 : f32 to vector<32x64xf32>
    %317 = arith.addf %315, %316 : vector<32x64xf32>
    %318 = arith.mulf %317, %307 : vector<32x64xf32>
    %cst_302 = arith.constant 0.254829586 : f32
    %319 = vector.broadcast %cst_302 : f32 to vector<32x64xf32>
    %320 = arith.addf %318, %319 : vector<32x64xf32>
    %321 = arith.mulf %320, %307 : vector<32x64xf32>
    %cst_303 = arith.constant 0.000000e+00 : f32
    %322 = vector.broadcast %cst_303 : f32 to vector<32x64xf32>
    %323 = arith.cmpf oge, %301, %322 : vector<32x64xf32>
    %cst_304 = arith.constant 1.000000e+00 : f32
    %cst_305 = arith.constant -1.000000e+00 : f32
    %324 = vector.broadcast %cst_304 : f32 to vector<32x64xf32>
    %325 = vector.broadcast %cst_305 : f32 to vector<32x64xf32>
    %326 = arith.select %323, %324, %325 : vector<32x64xi1>, vector<32x64xf32>
    %cst_306 = arith.constant 0.000000e+00 : f32
    %327 = vector.broadcast %cst_306 : f32 to vector<32x64xf32>
    %328 = arith.subf %327, %302 : vector<32x64xf32>
    %329 = arith.mulf %328, %302 : vector<32x64xf32>
    %330 = math.exp %329 : vector<32x64xf32>
    %331 = arith.mulf %321, %330 : vector<32x64xf32>
    %cst_307 = arith.constant 1.000000e+00 : f32
    %332 = vector.broadcast %cst_307 : f32 to vector<32x64xf32>
    %333 = arith.subf %332, %331 : vector<32x64xf32>
    %334 = arith.mulf %326, %333 : vector<32x64xf32>
    %cst_308 = arith.constant 5.000000e-01 : f32
    %335 = vector.broadcast %cst_308 : f32 to vector<32x64xf32>
    %336 = arith.mulf %335, %299 : vector<32x64xf32>
    %cst_309 = arith.constant 1.000000e+00 : f32
    %337 = vector.broadcast %cst_309 : f32 to vector<32x64xf32>
    %338 = arith.addf %337, %334 : vector<32x64xf32>
    %339 = arith.mulf %336, %338 : vector<32x64xf32>
    %c40 = arith.constant 40 : index
    %c0_310 = arith.constant 0 : index
    %340 = vector.load %arg5[%c40, %c0_310] : memref<648x160xf32, #tpu.memory_space<vmem>>, vector<64x128xf32>
    %cst_311 = arith.constant dense<0.000000e+00> : vector<32x128xf32>
    %341 = tpu.matmul %339, %340, %cst_311 {dimension_numbers = #tpu.dot_dimension_numbers<[1], [0], [0], [1], [0, 0, 1, 1], [], []>} : vector<32x64xf32>, vector<64x128xf32>, vector<32x128xf32> -> vector<32x128xf32>
    %c104 = arith.constant 104 : index
    %c0_312 = arith.constant 0 : index
    %342 = vector.load %arg5[%c104, %c0_312] : memref<648x160xf32, #tpu.memory_space<vmem>>, vector<1x128xf32>
    %343 = vector.broadcast %342 : vector<1x128xf32> to vector<32x128xf32>
    %344 = arith.addf %341, %343 : vector<32x128xf32>
    %c112 = arith.constant 112 : index
    %c0_313 = arith.constant 0 : index
    %345 = vector.load %arg5[%c112, %c0_313] : memref<648x160xf32, #tpu.memory_space<vmem>>, vector<32x16xf32>
    %cst_314 = arith.constant dense<0.000000e+00> : vector<32x16xf32>
    %346 = tpu.matmul %294, %345, %cst_314 {dimension_numbers = #tpu.dot_dimension_numbers<[1], [0], [0], [1], [0, 0, 1, 1], [], []>} : vector<32x32xf32>, vector<32x16xf32>, vector<32x16xf32> -> vector<32x16xf32>
    %c144 = arith.constant 144 : index
    %c0_315 = arith.constant 0 : index
    %347 = vector.load %arg5[%c144, %c0_315] : memref<648x160xf32, #tpu.memory_space<vmem>>, vector<1x16xf32>
    %348 = vector.broadcast %347 : vector<1x16xf32> to vector<32x16xf32>
    %349 = arith.addf %346, %348 : vector<32x16xf32>
    %cst_316 = arith.constant 0.707106769 : f32
    %350 = vector.broadcast %cst_316 : f32 to vector<32x16xf32>
    %351 = arith.mulf %349, %350 : vector<32x16xf32>
    %352 = math.absf %351 : vector<32x16xf32>
    %cst_317 = arith.constant 0.327591091 : f32
    %353 = vector.broadcast %cst_317 : f32 to vector<32x16xf32>
    %354 = arith.mulf %353, %352 : vector<32x16xf32>
    %cst_318 = arith.constant 1.000000e+00 : f32
    %355 = vector.broadcast %cst_318 : f32 to vector<32x16xf32>
    %356 = arith.addf %355, %354 : vector<32x16xf32>
    %357 = tpu.reciprocal %356 : vector<32x16xf32> -> vector<32x16xf32>
    %cst_319 = arith.constant 1.06140542 : f32
    %358 = vector.broadcast %cst_319 : f32 to vector<32x16xf32>
    %359 = arith.mulf %358, %357 : vector<32x16xf32>
    %cst_320 = arith.constant -1.45315206 : f32
    %360 = vector.broadcast %cst_320 : f32 to vector<32x16xf32>
    %361 = arith.addf %359, %360 : vector<32x16xf32>
    %362 = arith.mulf %361, %357 : vector<32x16xf32>
    %cst_321 = arith.constant 1.42141378 : f32
    %363 = vector.broadcast %cst_321 : f32 to vector<32x16xf32>
    %364 = arith.addf %362, %363 : vector<32x16xf32>
    %365 = arith.mulf %364, %357 : vector<32x16xf32>
    %cst_322 = arith.constant -0.284496725 : f32
    %366 = vector.broadcast %cst_322 : f32 to vector<32x16xf32>
    %367 = arith.addf %365, %366 : vector<32x16xf32>
    %368 = arith.mulf %367, %357 : vector<32x16xf32>
    %cst_323 = arith.constant 0.254829586 : f32
    %369 = vector.broadcast %cst_323 : f32 to vector<32x16xf32>
    %370 = arith.addf %368, %369 : vector<32x16xf32>
    %371 = arith.mulf %370, %357 : vector<32x16xf32>
    %cst_324 = arith.constant 0.000000e+00 : f32
    %372 = vector.broadcast %cst_324 : f32 to vector<32x16xf32>
    %373 = arith.cmpf oge, %351, %372 : vector<32x16xf32>
    %cst_325 = arith.constant 1.000000e+00 : f32
    %cst_326 = arith.constant -1.000000e+00 : f32
    %374 = vector.broadcast %cst_325 : f32 to vector<32x16xf32>
    %375 = vector.broadcast %cst_326 : f32 to vector<32x16xf32>
    %376 = arith.select %373, %374, %375 : vector<32x16xi1>, vector<32x16xf32>
    %cst_327 = arith.constant 0.000000e+00 : f32
    %377 = vector.broadcast %cst_327 : f32 to vector<32x16xf32>
    %378 = arith.subf %377, %352 : vector<32x16xf32>
    %379 = arith.mulf %378, %352 : vector<32x16xf32>
    %380 = math.exp %379 : vector<32x16xf32>
    %381 = arith.mulf %371, %380 : vector<32x16xf32>
    %cst_328 = arith.constant 1.000000e+00 : f32
    %382 = vector.broadcast %cst_328 : f32 to vector<32x16xf32>
    %383 = arith.subf %382, %381 : vector<32x16xf32>
    %384 = arith.mulf %376, %383 : vector<32x16xf32>
    %cst_329 = arith.constant 5.000000e-01 : f32
    %385 = vector.broadcast %cst_329 : f32 to vector<32x16xf32>
    %386 = arith.mulf %385, %349 : vector<32x16xf32>
    %cst_330 = arith.constant 1.000000e+00 : f32
    %387 = vector.broadcast %cst_330 : f32 to vector<32x16xf32>
    %388 = arith.addf %387, %384 : vector<32x16xf32>
    %389 = arith.mulf %386, %388 : vector<32x16xf32>
    %c152_331 = arith.constant 152 : index
    %c0_332 = arith.constant 0 : index
    %390 = vector.load %arg5[%c152_331, %c0_332] : memref<648x160xf32, #tpu.memory_space<vmem>>, vector<16x32xf32>
    %cst_333 = arith.constant dense<0.000000e+00> : vector<32x32xf32>
    %391 = tpu.matmul %389, %390, %cst_333 {dimension_numbers = #tpu.dot_dimension_numbers<[1], [0], [0], [1], [0, 0, 1, 1], [], []>} : vector<32x16xf32>, vector<16x32xf32>, vector<32x32xf32> -> vector<32x32xf32>
    %c168 = arith.constant 168 : index
    %c0_334 = arith.constant 0 : index
    %392 = vector.load %arg5[%c168, %c0_334] : memref<648x160xf32, #tpu.memory_space<vmem>>, vector<1x32xf32>
    %393 = vector.broadcast %392 : vector<1x32xf32> to vector<32x32xf32>
    %394 = arith.addf %391, %393 : vector<32x32xf32>
    %395 = arith.addf %294, %394 : vector<32x32xf32>
    %c280_335 = arith.constant 280 : index
    %c0_336 = arith.constant 0 : index
    %396 = vector.load %arg5[%c280_335, %c0_336] : memref<648x160xf32, #tpu.memory_space<vmem>>, vector<32x64xf32>
    %cst_337 = arith.constant dense<0.000000e+00> : vector<32x64xf32>
    %397 = tpu.matmul %395, %396, %cst_337 {dimension_numbers = #tpu.dot_dimension_numbers<[1], [0], [0], [1], [0, 0, 1, 1], [], []>} : vector<32x32xf32>, vector<32x64xf32>, vector<32x64xf32> -> vector<32x64xf32>
    %c320_338 = arith.constant 320 : index
    %c0_339 = arith.constant 0 : index
    %398 = vector.load %arg5[%c320_338, %c0_339] : memref<648x160xf32, #tpu.memory_space<vmem>>, vector<32x64xf32>
    %399 = arith.mulf %397, %398 : vector<32x64xf32>
    %c352_340 = arith.constant 352 : index
    %c0_341 = arith.constant 0 : index
    %400 = vector.load %arg5[%c352_340, %c0_341] : memref<648x160xf32, #tpu.memory_space<vmem>>, vector<64x4xf32>
    %cst_342 = arith.constant dense<0.000000e+00> : vector<32x4xf32>
    %401 = tpu.matmul %399, %400, %cst_342 {dimension_numbers = #tpu.dot_dimension_numbers<[1], [0], [0], [1], [0, 0, 1, 1], [], []>} : vector<32x64xf32>, vector<64x4xf32>, vector<32x4xf32> -> vector<32x4xf32>
    %c240 = arith.constant 240 : index
    %c0_343 = arith.constant 0 : index
    %402 = vector.load %arg5[%c240, %c0_343] : memref<648x160xf32, #tpu.memory_space<vmem>>, vector<2x32xf32>
    %cst_344 = arith.constant dense<0.000000e+00> : vector<2x4xf32>
    %403 = tpu.matmul %402, %401, %cst_344 {dimension_numbers = #tpu.dot_dimension_numbers<[1], [0], [0], [1], [0, 0, 1, 1], [], []>} : vector<2x32xf32>, vector<32x4xf32>, vector<2x4xf32> -> vector<2x4xf32>
    %c312 = arith.constant 312 : index
    %c0_345 = arith.constant 0 : index
    %404 = vector.load %arg5[%c312, %c0_345] : memref<648x160xf32, #tpu.memory_space<vmem>>, vector<1x4xf32>
    %405 = vector.broadcast %404 : vector<1x4xf32> to vector<2x4xf32>
    %406 = arith.addf %403, %405 : vector<2x4xf32>
    %cst_346 = arith.constant dense<0xFF800000> : vector<2xf32>
    %407 = vector.multi_reduction <maximumf>, %406, %cst_346 [1] : vector<2x4xf32> to vector<2xf32>
    %408 = vector.shape_cast %407 : vector<2xf32> to vector<2x1xf32>
    %409 = vector.broadcast %408 : vector<2x1xf32> to vector<2x4xf32>
    %410 = arith.subf %406, %409 : vector<2x4xf32>
    %411 = math.exp %410 : vector<2x4xf32>
    %cst_347 = arith.constant dense<0.000000e+00> : vector<2xf32>
    %412 = vector.multi_reduction <add>, %411, %cst_347 [1] : vector<2x4xf32> to vector<2xf32>
    %413 = vector.shape_cast %412 : vector<2xf32> to vector<2x1xf32>
    %414 = vector.broadcast %413 : vector<2x1xf32> to vector<2x4xf32>
    %415 = arith.divf %411, %414 : vector<2x4xf32>
    %c0_348 = arith.constant 0 : index
    %c0_349 = arith.constant 0 : index
    %416 = vector.load %arg7[%c0_348, %c0_349] : memref<2x4xf32, #tpu.memory_space<vmem>>, vector<2x4xf32>
    tpu.vector_store %arg7[%c0_348, %c0_349], %415 {strides = array<i32>} : memref<2x4xf32, #tpu.memory_space<vmem>>, vector<2x4xf32>,
    %c248_350 = arith.constant 248 : index
    %c0_351 = arith.constant 0 : index
    %417 = vector.load %arg5[%c248_350, %c0_351] : memref<648x160xf32, #tpu.memory_space<vmem>>, vector<32x2xf32>
    %cst_352 = arith.constant dense<0.000000e+00> : vector<32x4xf32>
    %418 = tpu.matmul %417, %415, %cst_352 {dimension_numbers = #tpu.dot_dimension_numbers<[1], [0], [0], [1], [0, 0, 1, 1], [], []>} : vector<32x2xf32>, vector<2x4xf32>, vector<32x4xf32> -> vector<32x4xf32>
    %cst_353 = arith.constant dense<0.000000e+00> : vector<32xf32>
    %419 = vector.multi_reduction <add>, %418, %cst_353 [1] : vector<32x4xf32> to vector<32xf32>
    %420 = vector.shape_cast %419 : vector<32xf32> to vector<32x1xf32>
    %421 = vector.broadcast %420 : vector<32x1xf32> to vector<32x32xf32>
    %422 = arith.mulf %149, %421 : vector<32x32xf32>
    %423 = vector.extract_strided_slice %418 {offsets = [0, 0], sizes = [32, 1], strides = [1, 1]} : vector<32x4xf32> to vector<32x1xf32>
    %424 = vector.extract_strided_slice %344 {offsets = [0, 0], sizes = [32, 32], strides = [1, 1]} : vector<32x128xf32> to vector<32x32xf32>
    %425 = vector.broadcast %423 : vector<32x1xf32> to vector<32x32xf32>
    %426 = arith.mulf %425, %424 : vector<32x32xf32>
    %427 = arith.addf %422, %426 : vector<32x32xf32>
    %428 = vector.extract_strided_slice %418 {offsets = [0, 1], sizes = [32, 1], strides = [1, 1]} : vector<32x4xf32> to vector<32x1xf32>
    %429 = vector.extract_strided_slice %344 {offsets = [0, 32], sizes = [32, 32], strides = [1, 1]} : vector<32x128xf32> to vector<32x32xf32>
    %430 = vector.broadcast %428 : vector<32x1xf32> to vector<32x32xf32>
    %431 = arith.mulf %430, %429 : vector<32x32xf32>
    %432 = arith.addf %427, %431 : vector<32x32xf32>
    %433 = vector.extract_strided_slice %418 {offsets = [0, 2], sizes = [32, 1], strides = [1, 1]} : vector<32x4xf32> to vector<32x1xf32>
    %434 = vector.extract_strided_slice %344 {offsets = [0, 64], sizes = [32, 32], strides = [1, 1]} : vector<32x128xf32> to vector<32x32xf32>
    %435 = vector.broadcast %433 : vector<32x1xf32> to vector<32x32xf32>
    %436 = arith.mulf %435, %434 : vector<32x32xf32>
    %437 = arith.addf %432, %436 : vector<32x32xf32>
    %438 = vector.extract_strided_slice %418 {offsets = [0, 3], sizes = [32, 1], strides = [1, 1]} : vector<32x4xf32> to vector<32x1xf32>
    %439 = vector.extract_strided_slice %344 {offsets = [0, 96], sizes = [32, 32], strides = [1, 1]} : vector<32x128xf32> to vector<32x32xf32>
    %440 = vector.broadcast %438 : vector<32x1xf32> to vector<32x32xf32>
    %441 = arith.mulf %440, %439 : vector<32x32xf32>
    %442 = arith.addf %437, %441 : vector<32x32xf32>
    %c176_354 = arith.constant 176 : index
    %c0_355 = arith.constant 0 : index
    %443 = vector.load %arg5[%c176_354, %c0_355] : memref<648x160xf32, #tpu.memory_space<vmem>>, vector<32x16xf32>
    %cst_356 = arith.constant dense<0.000000e+00> : vector<32x16xf32>
    %444 = tpu.matmul %442, %443, %cst_356 {dimension_numbers = #tpu.dot_dimension_numbers<[1], [0], [0], [1], [0, 0, 1, 1], [], []>} : vector<32x32xf32>, vector<32x16xf32>, vector<32x16xf32> -> vector<32x16xf32>
    %c208 = arith.constant 208 : index
    %c0_357 = arith.constant 0 : index
    %445 = vector.load %arg5[%c208, %c0_357] : memref<648x160xf32, #tpu.memory_space<vmem>>, vector<1x16xf32>
    %446 = vector.broadcast %445 : vector<1x16xf32> to vector<32x16xf32>
    %447 = arith.addf %444, %446 : vector<32x16xf32>
    %cst_358 = arith.constant 0.707106769 : f32
    %448 = vector.broadcast %cst_358 : f32 to vector<32x16xf32>
    %449 = arith.mulf %447, %448 : vector<32x16xf32>
    %450 = math.absf %449 : vector<32x16xf32>
    %cst_359 = arith.constant 0.327591091 : f32
    %451 = vector.broadcast %cst_359 : f32 to vector<32x16xf32>
    %452 = arith.mulf %451, %450 : vector<32x16xf32>
    %cst_360 = arith.constant 1.000000e+00 : f32
    %453 = vector.broadcast %cst_360 : f32 to vector<32x16xf32>
    %454 = arith.addf %453, %452 : vector<32x16xf32>
    %455 = tpu.reciprocal %454 : vector<32x16xf32> -> vector<32x16xf32>
    %cst_361 = arith.constant 1.06140542 : f32
    %456 = vector.broadcast %cst_361 : f32 to vector<32x16xf32>
    %457 = arith.mulf %456, %455 : vector<32x16xf32>
    %cst_362 = arith.constant -1.45315206 : f32
    %458 = vector.broadcast %cst_362 : f32 to vector<32x16xf32>
    %459 = arith.addf %457, %458 : vector<32x16xf32>
    %460 = arith.mulf %459, %455 : vector<32x16xf32>
    %cst_363 = arith.constant 1.42141378 : f32
    %461 = vector.broadcast %cst_363 : f32 to vector<32x16xf32>
    %462 = arith.addf %460, %461 : vector<32x16xf32>
    %463 = arith.mulf %462, %455 : vector<32x16xf32>
    %cst_364 = arith.constant -0.284496725 : f32
    %464 = vector.broadcast %cst_364 : f32 to vector<32x16xf32>
    %465 = arith.addf %463, %464 : vector<32x16xf32>
    %466 = arith.mulf %465, %455 : vector<32x16xf32>
    %cst_365 = arith.constant 0.254829586 : f32
    %467 = vector.broadcast %cst_365 : f32 to vector<32x16xf32>
    %468 = arith.addf %466, %467 : vector<32x16xf32>
    %469 = arith.mulf %468, %455 : vector<32x16xf32>
    %cst_366 = arith.constant 0.000000e+00 : f32
    %470 = vector.broadcast %cst_366 : f32 to vector<32x16xf32>
    %471 = arith.cmpf oge, %449, %470 : vector<32x16xf32>
    %cst_367 = arith.constant 1.000000e+00 : f32
    %cst_368 = arith.constant -1.000000e+00 : f32
    %472 = vector.broadcast %cst_367 : f32 to vector<32x16xf32>
    %473 = vector.broadcast %cst_368 : f32 to vector<32x16xf32>
    %474 = arith.select %471, %472, %473 : vector<32x16xi1>, vector<32x16xf32>
    %cst_369 = arith.constant 0.000000e+00 : f32
    %475 = vector.broadcast %cst_369 : f32 to vector<32x16xf32>
    %476 = arith.subf %475, %450 : vector<32x16xf32>
    %477 = arith.mulf %476, %450 : vector<32x16xf32>
    %478 = math.exp %477 : vector<32x16xf32>
    %479 = arith.mulf %469, %478 : vector<32x16xf32>
    %cst_370 = arith.constant 1.000000e+00 : f32
    %480 = vector.broadcast %cst_370 : f32 to vector<32x16xf32>
    %481 = arith.subf %480, %479 : vector<32x16xf32>
    %482 = arith.mulf %474, %481 : vector<32x16xf32>
    %cst_371 = arith.constant 5.000000e-01 : f32
    %483 = vector.broadcast %cst_371 : f32 to vector<32x16xf32>
    %484 = arith.mulf %483, %447 : vector<32x16xf32>
    %cst_372 = arith.constant 1.000000e+00 : f32
    %485 = vector.broadcast %cst_372 : f32 to vector<32x16xf32>
    %486 = arith.addf %485, %482 : vector<32x16xf32>
    %487 = arith.mulf %484, %486 : vector<32x16xf32>
    %c216_373 = arith.constant 216 : index
    %c0_374 = arith.constant 0 : index
    %488 = vector.load %arg5[%c216_373, %c0_374] : memref<648x160xf32, #tpu.memory_space<vmem>>, vector<16x32xf32>
    %cst_375 = arith.constant dense<0.000000e+00> : vector<32x32xf32>
    %489 = tpu.matmul %487, %488, %cst_375 {dimension_numbers = #tpu.dot_dimension_numbers<[1], [0], [0], [1], [0, 0, 1, 1], [], []>} : vector<32x16xf32>, vector<16x32xf32>, vector<32x32xf32> -> vector<32x32xf32>
    %c232 = arith.constant 232 : index
    %c0_376 = arith.constant 0 : index
    %490 = vector.load %arg5[%c232, %c0_376] : memref<648x160xf32, #tpu.memory_space<vmem>>, vector<1x32xf32>
    %491 = vector.broadcast %490 : vector<1x32xf32> to vector<32x32xf32>
    %492 = arith.addf %489, %491 : vector<32x32xf32>
    %493 = arith.addf %442, %492 : vector<32x32xf32>
    %c416 = arith.constant 416 : index
    %c0_377 = arith.constant 0 : index
    %494 = vector.load %arg5[%c416, %c0_377] : memref<648x160xf32, #tpu.memory_space<vmem>>, vector<32x160xf32>
    %cst_378 = arith.constant dense<0.000000e+00> : vector<32x160xf32>
    %495 = tpu.matmul %493, %494, %cst_378 {dimension_numbers = #tpu.dot_dimension_numbers<[1], [0], [0], [1], [0, 0, 1, 1], [], []>} : vector<32x32xf32>, vector<32x160xf32>, vector<32x160xf32> -> vector<32x160xf32>
    %c456_379 = arith.constant 456 : index
    %c0_380 = arith.constant 0 : index
    %496 = vector.load %arg5[%c456_379, %c0_380] : memref<648x160xf32, #tpu.memory_space<vmem>>, vector<32x160xf32>
    %497 = arith.mulf %495, %496 : vector<32x160xf32>
    %c488_381 = arith.constant 488 : index
    %c0_382 = arith.constant 0 : index
    %498 = vector.load %arg5[%c488_381, %c0_382] : memref<648x160xf32, #tpu.memory_space<vmem>>, vector<160x10xf32>
    %cst_383 = arith.constant dense<0.000000e+00> : vector<32x10xf32>
    %499 = tpu.matmul %497, %498, %cst_383 {dimension_numbers = #tpu.dot_dimension_numbers<[1], [0], [0], [1], [0, 0, 1, 1], [], []>} : vector<32x160xf32>, vector<160x10xf32>, vector<32x10xf32> -> vector<32x10xf32>
    %c240_384 = arith.constant 240 : index
    %c0_385 = arith.constant 0 : index
    %500 = vector.load %arg5[%c240_384, %c0_385] : memref<648x160xf32, #tpu.memory_space<vmem>>, vector<2x32xf32>
    %cst_386 = arith.constant dense<0.000000e+00> : vector<2x10xf32>
    %501 = tpu.matmul %500, %499, %cst_386 {dimension_numbers = #tpu.dot_dimension_numbers<[1], [0], [0], [1], [0, 0, 1, 1], [], []>} : vector<2x32xf32>, vector<32x10xf32>, vector<2x10xf32> -> vector<2x10xf32>
    %c448 = arith.constant 448 : index
    %c0_387 = arith.constant 0 : index
    %502 = vector.load %arg5[%c448, %c0_387] : memref<648x160xf32, #tpu.memory_space<vmem>>, vector<1x10xf32>
    %503 = vector.broadcast %502 : vector<1x10xf32> to vector<2x10xf32>
    %504 = arith.addf %501, %503 : vector<2x10xf32>
    %c0_388 = arith.constant 0 : index
    %c0_389 = arith.constant 0 : index
    %505 = vector.load %arg6[%c0_388, %c0_389] : memref<2x10xf32, #tpu.memory_space<vmem>>, vector<2x10xf32>
    tpu.vector_store %arg6[%c0_388, %c0_389], %504 {strides = array<i32>} : memref<2x10xf32, #tpu.memory_space<vmem>>, vector<2x10xf32>,
    %c32_390 = arith.constant 32 : index
    %c0_391 = arith.constant 0 : index
    %506 = vector.load %arg11[%c32_390, %c0_391] : memref<64x32xf32, #tpu.memory_space<vmem>>, vector<32x32xf32>
    tpu.vector_store %arg11[%c32_390, %c0_391], %442 {strides = array<i32>} : memref<64x32xf32, #tpu.memory_space<vmem>>, vector<32x32xf32>,
    %c28_392 = arith.constant 28 : index
    %c0_393 = arith.constant 0 : index
    %507 = vector.load %arg11[%c28_392, %c0_393] : memref<64x32xf32, #tpu.memory_space<vmem>>, vector<32x32xf32>
    %c0_394 = arith.constant 0 : index
    %c0_395 = arith.constant 0 : index
    %508 = vector.load %arg3[%c0_394, %c0_395] : memref<536x12xf32, #tpu.memory_space<vmem>>, vector<32x12xf32>
    %cst_396 = arith.constant dense<0.000000e+00> : vector<32x12xf32>
    %509 = tpu.matmul %507, %508, %cst_396 {dimension_numbers = #tpu.dot_dimension_numbers<[1], [0], [0], [1], [0, 0, 1, 1], [], []>} : vector<32x32xf32>, vector<32x12xf32>, vector<32x12xf32> -> vector<32x12xf32>
    %c30_397 = arith.constant 30 : index
    %c0_398 = arith.constant 0 : index
    %510 = vector.load %arg11[%c30_397, %c0_398] : memref<64x32xf32, #tpu.memory_space<vmem>>, vector<32x32xf32>
    %c32_399 = arith.constant 32 : index
    %c0_400 = arith.constant 0 : index
    %511 = vector.load %arg3[%c32_399, %c0_400] : memref<536x12xf32, #tpu.memory_space<vmem>>, vector<32x12xf32>
    %cst_401 = arith.constant dense<0.000000e+00> : vector<32x12xf32>
    %512 = tpu.matmul %510, %511, %cst_401 {dimension_numbers = #tpu.dot_dimension_numbers<[1], [0], [0], [1], [0, 0, 1, 1], [], []>} : vector<32x32xf32>, vector<32x12xf32>, vector<32x12xf32> -> vector<32x12xf32>
    %513 = arith.addf %509, %512 : vector<32x12xf32>
    %c32_402 = arith.constant 32 : index
    %c0_403 = arith.constant 0 : index
    %514 = vector.load %arg11[%c32_402, %c0_403] : memref<64x32xf32, #tpu.memory_space<vmem>>, vector<32x32xf32>
    %c64 = arith.constant 64 : index
    %c0_404 = arith.constant 0 : index
    %515 = vector.load %arg3[%c64, %c0_404] : memref<536x12xf32, #tpu.memory_space<vmem>>, vector<32x12xf32>
    %cst_405 = arith.constant dense<0.000000e+00> : vector<32x12xf32>
    %516 = tpu.matmul %514, %515, %cst_405 {dimension_numbers = #tpu.dot_dimension_numbers<[1], [0], [0], [1], [0, 0, 1, 1], [], []>} : vector<32x32xf32>, vector<32x12xf32>, vector<32x12xf32> -> vector<32x12xf32>
    %517 = arith.addf %513, %516 : vector<32x12xf32>
    %c96 = arith.constant 96 : index
    %c0_406 = arith.constant 0 : index
    %518 = vector.load %arg3[%c96, %c0_406] : memref<536x12xf32, #tpu.memory_space<vmem>>, vector<1x12xf32>
    %519 = vector.broadcast %518 : vector<1x12xf32> to vector<32x12xf32>
    %520 = arith.addf %517, %519 : vector<32x12xf32>
    %cst_407 = arith.constant 0.000000e+00 : f32
    %521 = vector.broadcast %cst_407 : f32 to vector<32x12xf32>
    %522 = arith.maximumf %520, %521 : vector<32x12xf32>
    %c32_408 = arith.constant 32 : index
    %c0_409 = arith.constant 0 : index
    %523 = vector.load %arg10[%c32_408, %c0_409] : memref<64x12xf32, #tpu.memory_space<vmem>>, vector<32x12xf32>
    tpu.vector_store %arg10[%c32_408, %c0_409], %522 {strides = array<i32>} : memref<64x12xf32, #tpu.memory_space<vmem>>, vector<32x12xf32>,
    %c28_410 = arith.constant 28 : index
    %c0_411 = arith.constant 0 : index
    %524 = vector.load %arg10[%c28_410, %c0_411] : memref<64x12xf32, #tpu.memory_space<vmem>>, vector<32x12xf32>
    %c104_412 = arith.constant 104 : index
    %c0_413 = arith.constant 0 : index
    %525 = vector.load %arg3[%c104_412, %c0_413] : memref<536x12xf32, #tpu.memory_space<vmem>>, vector<12x12xf32>
    %cst_414 = arith.constant dense<0.000000e+00> : vector<32x12xf32>
    %526 = tpu.matmul %524, %525, %cst_414 {dimension_numbers = #tpu.dot_dimension_numbers<[1], [0], [0], [1], [0, 0, 1, 1], [], []>} : vector<32x12xf32>, vector<12x12xf32>, vector<32x12xf32> -> vector<32x12xf32>
    %c30_415 = arith.constant 30 : index
    %c0_416 = arith.constant 0 : index
    %527 = vector.load %arg10[%c30_415, %c0_416] : memref<64x12xf32, #tpu.memory_space<vmem>>, vector<32x12xf32>
    %c120_417 = arith.constant 120 : index
    %c0_418 = arith.constant 0 : index
    %528 = vector.load %arg3[%c120_417, %c0_418] : memref<536x12xf32, #tpu.memory_space<vmem>>, vector<12x12xf32>
    %cst_419 = arith.constant dense<0.000000e+00> : vector<32x12xf32>
    %529 = tpu.matmul %527, %528, %cst_419 {dimension_numbers = #tpu.dot_dimension_numbers<[1], [0], [0], [1], [0, 0, 1, 1], [], []>} : vector<32x12xf32>, vector<12x12xf32>, vector<32x12xf32> -> vector<32x12xf32>
    %530 = arith.addf %526, %529 : vector<32x12xf32>
    %c32_420 = arith.constant 32 : index
    %c0_421 = arith.constant 0 : index
    %531 = vector.load %arg10[%c32_420, %c0_421] : memref<64x12xf32, #tpu.memory_space<vmem>>, vector<32x12xf32>
    %c136 = arith.constant 136 : index
    %c0_422 = arith.constant 0 : index
    %532 = vector.load %arg3[%c136, %c0_422] : memref<536x12xf32, #tpu.memory_space<vmem>>, vector<12x12xf32>
    %cst_423 = arith.constant dense<0.000000e+00> : vector<32x12xf32>
    %533 = tpu.matmul %531, %532, %cst_423 {dimension_numbers = #tpu.dot_dimension_numbers<[1], [0], [0], [1], [0, 0, 1, 1], [], []>} : vector<32x12xf32>, vector<12x12xf32>, vector<32x12xf32> -> vector<32x12xf32>
    %534 = arith.addf %530, %533 : vector<32x12xf32>
    %c152_424 = arith.constant 152 : index
    %c0_425 = arith.constant 0 : index
    %535 = vector.load %arg3[%c152_424, %c0_425] : memref<536x12xf32, #tpu.memory_space<vmem>>, vector<1x12xf32>
    %536 = vector.broadcast %535 : vector<1x12xf32> to vector<32x12xf32>
    %537 = arith.addf %534, %536 : vector<32x12xf32>
    %cst_426 = arith.constant 0.000000e+00 : f32
    %538 = vector.broadcast %cst_426 : f32 to vector<32x12xf32>
    %539 = arith.maximumf %537, %538 : vector<32x12xf32>
    %c160_427 = arith.constant 160 : index
    %c0_428 = arith.constant 0 : index
    %540 = vector.load %arg3[%c160_427, %c0_428] : memref<536x12xf32, #tpu.memory_space<vmem>>, vector<32x12xf32>
    %cst_429 = arith.constant dense<0.000000e+00> : vector<32x12xf32>
    %541 = tpu.matmul %442, %540, %cst_429 {dimension_numbers = #tpu.dot_dimension_numbers<[1], [0], [0], [1], [0, 0, 1, 1], [], []>} : vector<32x32xf32>, vector<32x12xf32>, vector<32x12xf32> -> vector<32x12xf32>
    %c192 = arith.constant 192 : index
    %c0_430 = arith.constant 0 : index
    %542 = vector.load %arg3[%c192, %c0_430] : memref<536x12xf32, #tpu.memory_space<vmem>>, vector<1x12xf32>
    %543 = vector.broadcast %542 : vector<1x12xf32> to vector<32x12xf32>
    %544 = arith.addf %541, %543 : vector<32x12xf32>
    %545 = arith.addf %539, %544 : vector<32x12xf32>
    %cst_431 = arith.constant 0.000000e+00 : f32
    %546 = vector.broadcast %cst_431 : f32 to vector<32x12xf32>
    %547 = arith.maximumf %545, %546 : vector<32x12xf32>
    %c32_432 = arith.constant 32 : index
    %c0_433 = arith.constant 0 : index
    %548 = vector.load %arg10[%c32_432, %c0_433] : memref<64x12xf32, #tpu.memory_space<vmem>>, vector<32x12xf32>
    tpu.vector_store %arg10[%c32_432, %c0_433], %547 {strides = array<i32>} : memref<64x12xf32, #tpu.memory_space<vmem>>, vector<32x12xf32>,
    %c24_434 = arith.constant 24 : index
    %c0_435 = arith.constant 0 : index
    %549 = vector.load %arg10[%c24_434, %c0_435] : memref<64x12xf32, #tpu.memory_space<vmem>>, vector<32x12xf32>
    %c200 = arith.constant 200 : index
    %c0_436 = arith.constant 0 : index
    %550 = vector.load %arg3[%c200, %c0_436] : memref<536x12xf32, #tpu.memory_space<vmem>>, vector<12x12xf32>
    %cst_437 = arith.constant dense<0.000000e+00> : vector<32x12xf32>
    %551 = tpu.matmul %549, %550, %cst_437 {dimension_numbers = #tpu.dot_dimension_numbers<[1], [0], [0], [1], [0, 0, 1, 1], [], []>} : vector<32x12xf32>, vector<12x12xf32>, vector<32x12xf32> -> vector<32x12xf32>
    %c28_438 = arith.constant 28 : index
    %c0_439 = arith.constant 0 : index
    %552 = vector.load %arg10[%c28_438, %c0_439] : memref<64x12xf32, #tpu.memory_space<vmem>>, vector<32x12xf32>
    %c216_440 = arith.constant 216 : index
    %c0_441 = arith.constant 0 : index
    %553 = vector.load %arg3[%c216_440, %c0_441] : memref<536x12xf32, #tpu.memory_space<vmem>>, vector<12x12xf32>
    %cst_442 = arith.constant dense<0.000000e+00> : vector<32x12xf32>
    %554 = tpu.matmul %552, %553, %cst_442 {dimension_numbers = #tpu.dot_dimension_numbers<[1], [0], [0], [1], [0, 0, 1, 1], [], []>} : vector<32x12xf32>, vector<12x12xf32>, vector<32x12xf32> -> vector<32x12xf32>
    %555 = arith.addf %551, %554 : vector<32x12xf32>
    %c32_443 = arith.constant 32 : index
    %c0_444 = arith.constant 0 : index
    %556 = vector.load %arg10[%c32_443, %c0_444] : memref<64x12xf32, #tpu.memory_space<vmem>>, vector<32x12xf32>
    %c232_445 = arith.constant 232 : index
    %c0_446 = arith.constant 0 : index
    %557 = vector.load %arg3[%c232_445, %c0_446] : memref<536x12xf32, #tpu.memory_space<vmem>>, vector<12x12xf32>
    %cst_447 = arith.constant dense<0.000000e+00> : vector<32x12xf32>
    %558 = tpu.matmul %556, %557, %cst_447 {dimension_numbers = #tpu.dot_dimension_numbers<[1], [0], [0], [1], [0, 0, 1, 1], [], []>} : vector<32x12xf32>, vector<12x12xf32>, vector<32x12xf32> -> vector<32x12xf32>
    %559 = arith.addf %555, %558 : vector<32x12xf32>
    %c248_448 = arith.constant 248 : index
    %c0_449 = arith.constant 0 : index
    %560 = vector.load %arg3[%c248_448, %c0_449] : memref<536x12xf32, #tpu.memory_space<vmem>>, vector<1x12xf32>
    %561 = vector.broadcast %560 : vector<1x12xf32> to vector<32x12xf32>
    %562 = arith.addf %559, %561 : vector<32x12xf32>
    %cst_450 = arith.constant 0.000000e+00 : f32
    %563 = vector.broadcast %cst_450 : f32 to vector<32x12xf32>
    %564 = arith.maximumf %562, %563 : vector<32x12xf32>
    %c32_451 = arith.constant 32 : index
    %c0_452 = arith.constant 0 : index
    %565 = vector.load %arg10[%c32_451, %c0_452] : memref<64x12xf32, #tpu.memory_space<vmem>>, vector<32x12xf32>
    tpu.vector_store %arg10[%c32_451, %c0_452], %564 {strides = array<i32>} : memref<64x12xf32, #tpu.memory_space<vmem>>, vector<32x12xf32>,
    %c24_453 = arith.constant 24 : index
    %c0_454 = arith.constant 0 : index
    %566 = vector.load %arg10[%c24_453, %c0_454] : memref<64x12xf32, #tpu.memory_space<vmem>>, vector<32x12xf32>
    %c256 = arith.constant 256 : index
    %c0_455 = arith.constant 0 : index
    %567 = vector.load %arg3[%c256, %c0_455] : memref<536x12xf32, #tpu.memory_space<vmem>>, vector<12x12xf32>
    %cst_456 = arith.constant dense<0.000000e+00> : vector<32x12xf32>
    %568 = tpu.matmul %566, %567, %cst_456 {dimension_numbers = #tpu.dot_dimension_numbers<[1], [0], [0], [1], [0, 0, 1, 1], [], []>} : vector<32x12xf32>, vector<12x12xf32>, vector<32x12xf32> -> vector<32x12xf32>
    %c28_457 = arith.constant 28 : index
    %c0_458 = arith.constant 0 : index
    %569 = vector.load %arg10[%c28_457, %c0_458] : memref<64x12xf32, #tpu.memory_space<vmem>>, vector<32x12xf32>
    %c272 = arith.constant 272 : index
    %c0_459 = arith.constant 0 : index
    %570 = vector.load %arg3[%c272, %c0_459] : memref<536x12xf32, #tpu.memory_space<vmem>>, vector<12x12xf32>
    %cst_460 = arith.constant dense<0.000000e+00> : vector<32x12xf32>
    %571 = tpu.matmul %569, %570, %cst_460 {dimension_numbers = #tpu.dot_dimension_numbers<[1], [0], [0], [1], [0, 0, 1, 1], [], []>} : vector<32x12xf32>, vector<12x12xf32>, vector<32x12xf32> -> vector<32x12xf32>
    %572 = arith.addf %568, %571 : vector<32x12xf32>
    %c32_461 = arith.constant 32 : index
    %c0_462 = arith.constant 0 : index
    %573 = vector.load %arg10[%c32_461, %c0_462] : memref<64x12xf32, #tpu.memory_space<vmem>>, vector<32x12xf32>
    %c288_463 = arith.constant 288 : index
    %c0_464 = arith.constant 0 : index
    %574 = vector.load %arg3[%c288_463, %c0_464] : memref<536x12xf32, #tpu.memory_space<vmem>>, vector<12x12xf32>
    %cst_465 = arith.constant dense<0.000000e+00> : vector<32x12xf32>
    %575 = tpu.matmul %573, %574, %cst_465 {dimension_numbers = #tpu.dot_dimension_numbers<[1], [0], [0], [1], [0, 0, 1, 1], [], []>} : vector<32x12xf32>, vector<12x12xf32>, vector<32x12xf32> -> vector<32x12xf32>
    %576 = arith.addf %572, %575 : vector<32x12xf32>
    %c304 = arith.constant 304 : index
    %c0_466 = arith.constant 0 : index
    %577 = vector.load %arg3[%c304, %c0_466] : memref<536x12xf32, #tpu.memory_space<vmem>>, vector<1x12xf32>
    %578 = vector.broadcast %577 : vector<1x12xf32> to vector<32x12xf32>
    %579 = arith.addf %576, %578 : vector<32x12xf32>
    %cst_467 = arith.constant 0.000000e+00 : f32
    %580 = vector.broadcast %cst_467 : f32 to vector<32x12xf32>
    %581 = arith.maximumf %579, %580 : vector<32x12xf32>
    %582 = arith.addf %581, %547 : vector<32x12xf32>
    %cst_468 = arith.constant 0.000000e+00 : f32
    %583 = vector.broadcast %cst_468 : f32 to vector<32x12xf32>
    %584 = arith.maximumf %582, %583 : vector<32x12xf32>
    %c32_469 = arith.constant 32 : index
    %c0_470 = arith.constant 0 : index
    %585 = vector.load %arg10[%c32_469, %c0_470] : memref<64x12xf32, #tpu.memory_space<vmem>>, vector<32x12xf32>
    tpu.vector_store %arg10[%c32_469, %c0_470], %584 {strides = array<i32>} : memref<64x12xf32, #tpu.memory_space<vmem>>, vector<32x12xf32>,
    %c16_471 = arith.constant 16 : index
    %c0_472 = arith.constant 0 : index
    %586 = vector.load %arg10[%c16_471, %c0_472] : memref<64x12xf32, #tpu.memory_space<vmem>>, vector<32x12xf32>
    %c312_473 = arith.constant 312 : index
    %c0_474 = arith.constant 0 : index
    %587 = vector.load %arg3[%c312_473, %c0_474] : memref<536x12xf32, #tpu.memory_space<vmem>>, vector<12x12xf32>
    %cst_475 = arith.constant dense<0.000000e+00> : vector<32x12xf32>
    %588 = tpu.matmul %586, %587, %cst_475 {dimension_numbers = #tpu.dot_dimension_numbers<[1], [0], [0], [1], [0, 0, 1, 1], [], []>} : vector<32x12xf32>, vector<12x12xf32>, vector<32x12xf32> -> vector<32x12xf32>
    %c24_476 = arith.constant 24 : index
    %c0_477 = arith.constant 0 : index
    %589 = vector.load %arg10[%c24_476, %c0_477] : memref<64x12xf32, #tpu.memory_space<vmem>>, vector<32x12xf32>
    %c328 = arith.constant 328 : index
    %c0_478 = arith.constant 0 : index
    %590 = vector.load %arg3[%c328, %c0_478] : memref<536x12xf32, #tpu.memory_space<vmem>>, vector<12x12xf32>
    %cst_479 = arith.constant dense<0.000000e+00> : vector<32x12xf32>
    %591 = tpu.matmul %589, %590, %cst_479 {dimension_numbers = #tpu.dot_dimension_numbers<[1], [0], [0], [1], [0, 0, 1, 1], [], []>} : vector<32x12xf32>, vector<12x12xf32>, vector<32x12xf32> -> vector<32x12xf32>
    %592 = arith.addf %588, %591 : vector<32x12xf32>
    %c32_480 = arith.constant 32 : index
    %c0_481 = arith.constant 0 : index
    %593 = vector.load %arg10[%c32_480, %c0_481] : memref<64x12xf32, #tpu.memory_space<vmem>>, vector<32x12xf32>
    %c344 = arith.constant 344 : index
    %c0_482 = arith.constant 0 : index
    %594 = vector.load %arg3[%c344, %c0_482] : memref<536x12xf32, #tpu.memory_space<vmem>>, vector<12x12xf32>
    %cst_483 = arith.constant dense<0.000000e+00> : vector<32x12xf32>
    %595 = tpu.matmul %593, %594, %cst_483 {dimension_numbers = #tpu.dot_dimension_numbers<[1], [0], [0], [1], [0, 0, 1, 1], [], []>} : vector<32x12xf32>, vector<12x12xf32>, vector<32x12xf32> -> vector<32x12xf32>
    %596 = arith.addf %592, %595 : vector<32x12xf32>
    %c360 = arith.constant 360 : index
    %c0_484 = arith.constant 0 : index
    %597 = vector.load %arg3[%c360, %c0_484] : memref<536x12xf32, #tpu.memory_space<vmem>>, vector<1x12xf32>
    %598 = vector.broadcast %597 : vector<1x12xf32> to vector<32x12xf32>
    %599 = arith.addf %596, %598 : vector<32x12xf32>
    %cst_485 = arith.constant 0.000000e+00 : f32
    %600 = vector.broadcast %cst_485 : f32 to vector<32x12xf32>
    %601 = arith.maximumf %599, %600 : vector<32x12xf32>
    %c32_486 = arith.constant 32 : index
    %c0_487 = arith.constant 0 : index
    %602 = vector.load %arg10[%c32_486, %c0_487] : memref<64x12xf32, #tpu.memory_space<vmem>>, vector<32x12xf32>
    tpu.vector_store %arg10[%c32_486, %c0_487], %601 {strides = array<i32>} : memref<64x12xf32, #tpu.memory_space<vmem>>, vector<32x12xf32>,
    %c16_488 = arith.constant 16 : index
    %c0_489 = arith.constant 0 : index
    %603 = vector.load %arg10[%c16_488, %c0_489] : memref<64x12xf32, #tpu.memory_space<vmem>>, vector<32x12xf32>
    %c368 = arith.constant 368 : index
    %c0_490 = arith.constant 0 : index
    %604 = vector.load %arg3[%c368, %c0_490] : memref<536x12xf32, #tpu.memory_space<vmem>>, vector<12x12xf32>
    %cst_491 = arith.constant dense<0.000000e+00> : vector<32x12xf32>
    %605 = tpu.matmul %603, %604, %cst_491 {dimension_numbers = #tpu.dot_dimension_numbers<[1], [0], [0], [1], [0, 0, 1, 1], [], []>} : vector<32x12xf32>, vector<12x12xf32>, vector<32x12xf32> -> vector<32x12xf32>
    %c24_492 = arith.constant 24 : index
    %c0_493 = arith.constant 0 : index
    %606 = vector.load %arg10[%c24_492, %c0_493] : memref<64x12xf32, #tpu.memory_space<vmem>>, vector<32x12xf32>
    %c384_494 = arith.constant 384 : index
    %c0_495 = arith.constant 0 : index
    %607 = vector.load %arg3[%c384_494, %c0_495] : memref<536x12xf32, #tpu.memory_space<vmem>>, vector<12x12xf32>
    %cst_496 = arith.constant dense<0.000000e+00> : vector<32x12xf32>
    %608 = tpu.matmul %606, %607, %cst_496 {dimension_numbers = #tpu.dot_dimension_numbers<[1], [0], [0], [1], [0, 0, 1, 1], [], []>} : vector<32x12xf32>, vector<12x12xf32>, vector<32x12xf32> -> vector<32x12xf32>
    %609 = arith.addf %605, %608 : vector<32x12xf32>
    %c32_497 = arith.constant 32 : index
    %c0_498 = arith.constant 0 : index
    %610 = vector.load %arg10[%c32_497, %c0_498] : memref<64x12xf32, #tpu.memory_space<vmem>>, vector<32x12xf32>
    %c400 = arith.constant 400 : index
    %c0_499 = arith.constant 0 : index
    %611 = vector.load %arg3[%c400, %c0_499] : memref<536x12xf32, #tpu.memory_space<vmem>>, vector<12x12xf32>
    %cst_500 = arith.constant dense<0.000000e+00> : vector<32x12xf32>
    %612 = tpu.matmul %610, %611, %cst_500 {dimension_numbers = #tpu.dot_dimension_numbers<[1], [0], [0], [1], [0, 0, 1, 1], [], []>} : vector<32x12xf32>, vector<12x12xf32>, vector<32x12xf32> -> vector<32x12xf32>
    %613 = arith.addf %609, %612 : vector<32x12xf32>
    %c416_501 = arith.constant 416 : index
    %c0_502 = arith.constant 0 : index
    %614 = vector.load %arg3[%c416_501, %c0_502] : memref<536x12xf32, #tpu.memory_space<vmem>>, vector<1x12xf32>
    %615 = vector.broadcast %614 : vector<1x12xf32> to vector<32x12xf32>
    %616 = arith.addf %613, %615 : vector<32x12xf32>
    %cst_503 = arith.constant 0.000000e+00 : f32
    %617 = vector.broadcast %cst_503 : f32 to vector<32x12xf32>
    %618 = arith.maximumf %616, %617 : vector<32x12xf32>
    %619 = arith.addf %618, %584 : vector<32x12xf32>
    %cst_504 = arith.constant 0.000000e+00 : f32
    %620 = vector.broadcast %cst_504 : f32 to vector<32x12xf32>
    %621 = arith.maximumf %619, %620 : vector<32x12xf32>
    %c32_505 = arith.constant 32 : index
    %c0_506 = arith.constant 0 : index
    %622 = vector.load %arg10[%c32_505, %c0_506] : memref<64x12xf32, #tpu.memory_space<vmem>>, vector<32x12xf32>
    tpu.vector_store %arg10[%c32_505, %c0_506], %621 {strides = array<i32>} : memref<64x12xf32, #tpu.memory_space<vmem>>, vector<32x12xf32>,
    %c16_507 = arith.constant 16 : index
    %c0_508 = arith.constant 0 : index
    %623 = vector.load %arg10[%c16_507, %c0_508] : memref<64x12xf32, #tpu.memory_space<vmem>>, vector<32x12xf32>
    %c440 = arith.constant 440 : index
    %c0_509 = arith.constant 0 : index
    %624 = vector.load %arg3[%c440, %c0_509] : memref<536x12xf32, #tpu.memory_space<vmem>>, vector<12x12xf32>
    %cst_510 = arith.constant dense<0.000000e+00> : vector<32x12xf32>
    %625 = tpu.matmul %623, %624, %cst_510 {dimension_numbers = #tpu.dot_dimension_numbers<[1], [0], [0], [1], [0, 0, 1, 1], [], []>} : vector<32x12xf32>, vector<12x12xf32>, vector<32x12xf32> -> vector<32x12xf32>
    %c32_511 = arith.constant 32 : index
    %c0_512 = arith.constant 0 : index
    %626 = vector.load %arg10[%c32_511, %c0_512] : memref<64x12xf32, #tpu.memory_space<vmem>>, vector<32x12xf32>
    %c456_513 = arith.constant 456 : index
    %c0_514 = arith.constant 0 : index
    %627 = vector.load %arg3[%c456_513, %c0_514] : memref<536x12xf32, #tpu.memory_space<vmem>>, vector<12x12xf32>
    %cst_515 = arith.constant dense<0.000000e+00> : vector<32x12xf32>
    %628 = tpu.matmul %626, %627, %cst_515 {dimension_numbers = #tpu.dot_dimension_numbers<[1], [0], [0], [1], [0, 0, 1, 1], [], []>} : vector<32x12xf32>, vector<12x12xf32>, vector<32x12xf32> -> vector<32x12xf32>
    %629 = arith.addf %625, %628 : vector<32x12xf32>
    %c472 = arith.constant 472 : index
    %c0_516 = arith.constant 0 : index
    %630 = vector.load %arg3[%c472, %c0_516] : memref<536x12xf32, #tpu.memory_space<vmem>>, vector<1x12xf32>
    %631 = vector.broadcast %630 : vector<1x12xf32> to vector<32x12xf32>
    %632 = arith.addf %629, %631 : vector<32x12xf32>
    %cst_517 = arith.constant 0.000000e+00 : f32
    %633 = vector.broadcast %cst_517 : f32 to vector<32x12xf32>
    %634 = arith.maximumf %632, %633 : vector<32x12xf32>
    %c32_518 = arith.constant 32 : index
    %c0_519 = arith.constant 0 : index
    %635 = vector.load %arg10[%c32_518, %c0_519] : memref<64x12xf32, #tpu.memory_space<vmem>>, vector<32x12xf32>
    tpu.vector_store %arg10[%c32_518, %c0_519], %634 {strides = array<i32>} : memref<64x12xf32, #tpu.memory_space<vmem>>, vector<32x12xf32>,
    %c16_520 = arith.constant 16 : index
    %c0_521 = arith.constant 0 : index
    %636 = vector.load %arg10[%c16_520, %c0_521] : memref<64x12xf32, #tpu.memory_space<vmem>>, vector<32x12xf32>
    %c496_522 = arith.constant 496 : index
    %c0_523 = arith.constant 0 : index
    %637 = vector.load %arg3[%c496_522, %c0_523] : memref<536x12xf32, #tpu.memory_space<vmem>>, vector<12x12xf32>
    %cst_524 = arith.constant dense<0.000000e+00> : vector<32x12xf32>
    %638 = tpu.matmul %636, %637, %cst_524 {dimension_numbers = #tpu.dot_dimension_numbers<[1], [0], [0], [1], [0, 0, 1, 1], [], []>} : vector<32x12xf32>, vector<12x12xf32>, vector<32x12xf32> -> vector<32x12xf32>
    %c32_525 = arith.constant 32 : index
    %c0_526 = arith.constant 0 : index
    %639 = vector.load %arg10[%c32_525, %c0_526] : memref<64x12xf32, #tpu.memory_space<vmem>>, vector<32x12xf32>
    %c512 = arith.constant 512 : index
    %c0_527 = arith.constant 0 : index
    %640 = vector.load %arg3[%c512, %c0_527] : memref<536x12xf32, #tpu.memory_space<vmem>>, vector<12x12xf32>
    %cst_528 = arith.constant dense<0.000000e+00> : vector<32x12xf32>
    %641 = tpu.matmul %639, %640, %cst_528 {dimension_numbers = #tpu.dot_dimension_numbers<[1], [0], [0], [1], [0, 0, 1, 1], [], []>} : vector<32x12xf32>, vector<12x12xf32>, vector<32x12xf32> -> vector<32x12xf32>
    %642 = arith.addf %638, %641 : vector<32x12xf32>
    %c528_529 = arith.constant 528 : index
    %c0_530 = arith.constant 0 : index
    %643 = vector.load %arg3[%c528_529, %c0_530] : memref<536x12xf32, #tpu.memory_space<vmem>>, vector<1x12xf32>
    %644 = vector.broadcast %643 : vector<1x12xf32> to vector<32x12xf32>
    %645 = arith.addf %642, %644 : vector<32x12xf32>
    %cst_531 = arith.constant 0.000000e+00 : f32
    %646 = vector.broadcast %cst_531 : f32 to vector<32x12xf32>
    %647 = arith.maximumf %645, %646 : vector<32x12xf32>
    %648 = arith.addf %647, %621 : vector<32x12xf32>
    %cst_532 = arith.constant 0.000000e+00 : f32
    %649 = vector.broadcast %cst_532 : f32 to vector<32x12xf32>
    %650 = arith.maximumf %648, %649 : vector<32x12xf32>
    %c0_533 = arith.constant 0 : index
    %c0_534 = arith.constant 0 : index
    %651 = vector.load %arg8[%c0_533, %c0_534] : memref<32x12xf32, #tpu.memory_space<vmem>>, vector<32x12xf32>
    tpu.vector_store %arg8[%c0_533, %c0_534], %650 {strides = array<i32>} : memref<32x12xf32, #tpu.memory_space<vmem>>, vector<32x12xf32>,
    %c32_535 = arith.constant 32 : index
    %c0_536 = arith.constant 0 : index
    %652 = vector.load %arg11[%c32_535, %c0_536] : memref<64x32xf32, #tpu.memory_space<vmem>>, vector<32x32xf32>
    tpu.vector_store %arg11[%c32_535, %c0_536], %294 {strides = array<i32>} : memref<64x32xf32, #tpu.memory_space<vmem>>, vector<32x32xf32>,
    %c28_537 = arith.constant 28 : index
    %c0_538 = arith.constant 0 : index
    %653 = vector.load %arg11[%c28_537, %c0_538] : memref<64x32xf32, #tpu.memory_space<vmem>>, vector<32x32xf32>
    %c0_539 = arith.constant 0 : index
    %c0_540 = arith.constant 0 : index
    %654 = vector.load %arg4[%c0_539, %c0_540] : memref<536x12xf32, #tpu.memory_space<vmem>>, vector<32x12xf32>
    %cst_541 = arith.constant dense<0.000000e+00> : vector<32x12xf32>
    %655 = tpu.matmul %653, %654, %cst_541 {dimension_numbers = #tpu.dot_dimension_numbers<[1], [0], [0], [1], [0, 0, 1, 1], [], []>} : vector<32x32xf32>, vector<32x12xf32>, vector<32x12xf32> -> vector<32x12xf32>
    %c30_542 = arith.constant 30 : index
    %c0_543 = arith.constant 0 : index
    %656 = vector.load %arg11[%c30_542, %c0_543] : memref<64x32xf32, #tpu.memory_space<vmem>>, vector<32x32xf32>
    %c32_544 = arith.constant 32 : index
    %c0_545 = arith.constant 0 : index
    %657 = vector.load %arg4[%c32_544, %c0_545] : memref<536x12xf32, #tpu.memory_space<vmem>>, vector<32x12xf32>
    %cst_546 = arith.constant dense<0.000000e+00> : vector<32x12xf32>
    %658 = tpu.matmul %656, %657, %cst_546 {dimension_numbers = #tpu.dot_dimension_numbers<[1], [0], [0], [1], [0, 0, 1, 1], [], []>} : vector<32x32xf32>, vector<32x12xf32>, vector<32x12xf32> -> vector<32x12xf32>
    %659 = arith.addf %655, %658 : vector<32x12xf32>
    %c32_547 = arith.constant 32 : index
    %c0_548 = arith.constant 0 : index
    %660 = vector.load %arg11[%c32_547, %c0_548] : memref<64x32xf32, #tpu.memory_space<vmem>>, vector<32x32xf32>
    %c64_549 = arith.constant 64 : index
    %c0_550 = arith.constant 0 : index
    %661 = vector.load %arg4[%c64_549, %c0_550] : memref<536x12xf32, #tpu.memory_space<vmem>>, vector<32x12xf32>
    %cst_551 = arith.constant dense<0.000000e+00> : vector<32x12xf32>
    %662 = tpu.matmul %660, %661, %cst_551 {dimension_numbers = #tpu.dot_dimension_numbers<[1], [0], [0], [1], [0, 0, 1, 1], [], []>} : vector<32x32xf32>, vector<32x12xf32>, vector<32x12xf32> -> vector<32x12xf32>
    %663 = arith.addf %659, %662 : vector<32x12xf32>
    %c96_552 = arith.constant 96 : index
    %c0_553 = arith.constant 0 : index
    %664 = vector.load %arg4[%c96_552, %c0_553] : memref<536x12xf32, #tpu.memory_space<vmem>>, vector<1x12xf32>
    %665 = vector.broadcast %664 : vector<1x12xf32> to vector<32x12xf32>
    %666 = arith.addf %663, %665 : vector<32x12xf32>
    %cst_554 = arith.constant 0.000000e+00 : f32
    %667 = vector.broadcast %cst_554 : f32 to vector<32x12xf32>
    %668 = arith.maximumf %666, %667 : vector<32x12xf32>
    %c32_555 = arith.constant 32 : index
    %c0_556 = arith.constant 0 : index
    %669 = vector.load %arg10[%c32_555, %c0_556] : memref<64x12xf32, #tpu.memory_space<vmem>>, vector<32x12xf32>
    tpu.vector_store %arg10[%c32_555, %c0_556], %668 {strides = array<i32>} : memref<64x12xf32, #tpu.memory_space<vmem>>, vector<32x12xf32>,
    %c28_557 = arith.constant 28 : index
    %c0_558 = arith.constant 0 : index
    %670 = vector.load %arg10[%c28_557, %c0_558] : memref<64x12xf32, #tpu.memory_space<vmem>>, vector<32x12xf32>
    %c104_559 = arith.constant 104 : index
    %c0_560 = arith.constant 0 : index
    %671 = vector.load %arg4[%c104_559, %c0_560] : memref<536x12xf32, #tpu.memory_space<vmem>>, vector<12x12xf32>
    %cst_561 = arith.constant dense<0.000000e+00> : vector<32x12xf32>
    %672 = tpu.matmul %670, %671, %cst_561 {dimension_numbers = #tpu.dot_dimension_numbers<[1], [0], [0], [1], [0, 0, 1, 1], [], []>} : vector<32x12xf32>, vector<12x12xf32>, vector<32x12xf32> -> vector<32x12xf32>
    %c30_562 = arith.constant 30 : index
    %c0_563 = arith.constant 0 : index
    %673 = vector.load %arg10[%c30_562, %c0_563] : memref<64x12xf32, #tpu.memory_space<vmem>>, vector<32x12xf32>
    %c120_564 = arith.constant 120 : index
    %c0_565 = arith.constant 0 : index
    %674 = vector.load %arg4[%c120_564, %c0_565] : memref<536x12xf32, #tpu.memory_space<vmem>>, vector<12x12xf32>
    %cst_566 = arith.constant dense<0.000000e+00> : vector<32x12xf32>
    %675 = tpu.matmul %673, %674, %cst_566 {dimension_numbers = #tpu.dot_dimension_numbers<[1], [0], [0], [1], [0, 0, 1, 1], [], []>} : vector<32x12xf32>, vector<12x12xf32>, vector<32x12xf32> -> vector<32x12xf32>
    %676 = arith.addf %672, %675 : vector<32x12xf32>
    %c32_567 = arith.constant 32 : index
    %c0_568 = arith.constant 0 : index
    %677 = vector.load %arg10[%c32_567, %c0_568] : memref<64x12xf32, #tpu.memory_space<vmem>>, vector<32x12xf32>
    %c136_569 = arith.constant 136 : index
    %c0_570 = arith.constant 0 : index
    %678 = vector.load %arg4[%c136_569, %c0_570] : memref<536x12xf32, #tpu.memory_space<vmem>>, vector<12x12xf32>
    %cst_571 = arith.constant dense<0.000000e+00> : vector<32x12xf32>
    %679 = tpu.matmul %677, %678, %cst_571 {dimension_numbers = #tpu.dot_dimension_numbers<[1], [0], [0], [1], [0, 0, 1, 1], [], []>} : vector<32x12xf32>, vector<12x12xf32>, vector<32x12xf32> -> vector<32x12xf32>
    %680 = arith.addf %676, %679 : vector<32x12xf32>
    %c152_572 = arith.constant 152 : index
    %c0_573 = arith.constant 0 : index
    %681 = vector.load %arg4[%c152_572, %c0_573] : memref<536x12xf32, #tpu.memory_space<vmem>>, vector<1x12xf32>
    %682 = vector.broadcast %681 : vector<1x12xf32> to vector<32x12xf32>
    %683 = arith.addf %680, %682 : vector<32x12xf32>
    %cst_574 = arith.constant 0.000000e+00 : f32
    %684 = vector.broadcast %cst_574 : f32 to vector<32x12xf32>
    %685 = arith.maximumf %683, %684 : vector<32x12xf32>
    %c160_575 = arith.constant 160 : index
    %c0_576 = arith.constant 0 : index
    %686 = vector.load %arg4[%c160_575, %c0_576] : memref<536x12xf32, #tpu.memory_space<vmem>>, vector<32x12xf32>
    %cst_577 = arith.constant dense<0.000000e+00> : vector<32x12xf32>
    %687 = tpu.matmul %294, %686, %cst_577 {dimension_numbers = #tpu.dot_dimension_numbers<[1], [0], [0], [1], [0, 0, 1, 1], [], []>} : vector<32x32xf32>, vector<32x12xf32>, vector<32x12xf32> -> vector<32x12xf32>
    %c192_578 = arith.constant 192 : index
    %c0_579 = arith.constant 0 : index
    %688 = vector.load %arg4[%c192_578, %c0_579] : memref<536x12xf32, #tpu.memory_space<vmem>>, vector<1x12xf32>
    %689 = vector.broadcast %688 : vector<1x12xf32> to vector<32x12xf32>
    %690 = arith.addf %687, %689 : vector<32x12xf32>
    %691 = arith.addf %685, %690 : vector<32x12xf32>
    %cst_580 = arith.constant 0.000000e+00 : f32
    %692 = vector.broadcast %cst_580 : f32 to vector<32x12xf32>
    %693 = arith.maximumf %691, %692 : vector<32x12xf32>
    %c32_581 = arith.constant 32 : index
    %c0_582 = arith.constant 0 : index
    %694 = vector.load %arg10[%c32_581, %c0_582] : memref<64x12xf32, #tpu.memory_space<vmem>>, vector<32x12xf32>
    tpu.vector_store %arg10[%c32_581, %c0_582], %693 {strides = array<i32>} : memref<64x12xf32, #tpu.memory_space<vmem>>, vector<32x12xf32>,
    %c24_583 = arith.constant 24 : index
    %c0_584 = arith.constant 0 : index
    %695 = vector.load %arg10[%c24_583, %c0_584] : memref<64x12xf32, #tpu.memory_space<vmem>>, vector<32x12xf32>
    %c200_585 = arith.constant 200 : index
    %c0_586 = arith.constant 0 : index
    %696 = vector.load %arg4[%c200_585, %c0_586] : memref<536x12xf32, #tpu.memory_space<vmem>>, vector<12x12xf32>
    %cst_587 = arith.constant dense<0.000000e+00> : vector<32x12xf32>
    %697 = tpu.matmul %695, %696, %cst_587 {dimension_numbers = #tpu.dot_dimension_numbers<[1], [0], [0], [1], [0, 0, 1, 1], [], []>} : vector<32x12xf32>, vector<12x12xf32>, vector<32x12xf32> -> vector<32x12xf32>
    %c28_588 = arith.constant 28 : index
    %c0_589 = arith.constant 0 : index
    %698 = vector.load %arg10[%c28_588, %c0_589] : memref<64x12xf32, #tpu.memory_space<vmem>>, vector<32x12xf32>
    %c216_590 = arith.constant 216 : index
    %c0_591 = arith.constant 0 : index
    %699 = vector.load %arg4[%c216_590, %c0_591] : memref<536x12xf32, #tpu.memory_space<vmem>>, vector<12x12xf32>
    %cst_592 = arith.constant dense<0.000000e+00> : vector<32x12xf32>
    %700 = tpu.matmul %698, %699, %cst_592 {dimension_numbers = #tpu.dot_dimension_numbers<[1], [0], [0], [1], [0, 0, 1, 1], [], []>} : vector<32x12xf32>, vector<12x12xf32>, vector<32x12xf32> -> vector<32x12xf32>
    %701 = arith.addf %697, %700 : vector<32x12xf32>
    %c32_593 = arith.constant 32 : index
    %c0_594 = arith.constant 0 : index
    %702 = vector.load %arg10[%c32_593, %c0_594] : memref<64x12xf32, #tpu.memory_space<vmem>>, vector<32x12xf32>
    %c232_595 = arith.constant 232 : index
    %c0_596 = arith.constant 0 : index
    %703 = vector.load %arg4[%c232_595, %c0_596] : memref<536x12xf32, #tpu.memory_space<vmem>>, vector<12x12xf32>
    %cst_597 = arith.constant dense<0.000000e+00> : vector<32x12xf32>
    %704 = tpu.matmul %702, %703, %cst_597 {dimension_numbers = #tpu.dot_dimension_numbers<[1], [0], [0], [1], [0, 0, 1, 1], [], []>} : vector<32x12xf32>, vector<12x12xf32>, vector<32x12xf32> -> vector<32x12xf32>
    %705 = arith.addf %701, %704 : vector<32x12xf32>
    %c248_598 = arith.constant 248 : index
    %c0_599 = arith.constant 0 : index
    %706 = vector.load %arg4[%c248_598, %c0_599] : memref<536x12xf32, #tpu.memory_space<vmem>>, vector<1x12xf32>
    %707 = vector.broadcast %706 : vector<1x12xf32> to vector<32x12xf32>
    %708 = arith.addf %705, %707 : vector<32x12xf32>
    %cst_600 = arith.constant 0.000000e+00 : f32
    %709 = vector.broadcast %cst_600 : f32 to vector<32x12xf32>
    %710 = arith.maximumf %708, %709 : vector<32x12xf32>
    %c32_601 = arith.constant 32 : index
    %c0_602 = arith.constant 0 : index
    %711 = vector.load %arg10[%c32_601, %c0_602] : memref<64x12xf32, #tpu.memory_space<vmem>>, vector<32x12xf32>
    tpu.vector_store %arg10[%c32_601, %c0_602], %710 {strides = array<i32>} : memref<64x12xf32, #tpu.memory_space<vmem>>, vector<32x12xf32>,
    %c24_603 = arith.constant 24 : index
    %c0_604 = arith.constant 0 : index
    %712 = vector.load %arg10[%c24_603, %c0_604] : memref<64x12xf32, #tpu.memory_space<vmem>>, vector<32x12xf32>
    %c256_605 = arith.constant 256 : index
    %c0_606 = arith.constant 0 : index
    %713 = vector.load %arg4[%c256_605, %c0_606] : memref<536x12xf32, #tpu.memory_space<vmem>>, vector<12x12xf32>
    %cst_607 = arith.constant dense<0.000000e+00> : vector<32x12xf32>
    %714 = tpu.matmul %712, %713, %cst_607 {dimension_numbers = #tpu.dot_dimension_numbers<[1], [0], [0], [1], [0, 0, 1, 1], [], []>} : vector<32x12xf32>, vector<12x12xf32>, vector<32x12xf32> -> vector<32x12xf32>
    %c28_608 = arith.constant 28 : index
    %c0_609 = arith.constant 0 : index
    %715 = vector.load %arg10[%c28_608, %c0_609] : memref<64x12xf32, #tpu.memory_space<vmem>>, vector<32x12xf32>
    %c272_610 = arith.constant 272 : index
    %c0_611 = arith.constant 0 : index
    %716 = vector.load %arg4[%c272_610, %c0_611] : memref<536x12xf32, #tpu.memory_space<vmem>>, vector<12x12xf32>
    %cst_612 = arith.constant dense<0.000000e+00> : vector<32x12xf32>
    %717 = tpu.matmul %715, %716, %cst_612 {dimension_numbers = #tpu.dot_dimension_numbers<[1], [0], [0], [1], [0, 0, 1, 1], [], []>} : vector<32x12xf32>, vector<12x12xf32>, vector<32x12xf32> -> vector<32x12xf32>
    %718 = arith.addf %714, %717 : vector<32x12xf32>
    %c32_613 = arith.constant 32 : index
    %c0_614 = arith.constant 0 : index
    %719 = vector.load %arg10[%c32_613, %c0_614] : memref<64x12xf32, #tpu.memory_space<vmem>>, vector<32x12xf32>
    %c288_615 = arith.constant 288 : index
    %c0_616 = arith.constant 0 : index
    %720 = vector.load %arg4[%c288_615, %c0_616] : memref<536x12xf32, #tpu.memory_space<vmem>>, vector<12x12xf32>
    %cst_617 = arith.constant dense<0.000000e+00> : vector<32x12xf32>
    %721 = tpu.matmul %719, %720, %cst_617 {dimension_numbers = #tpu.dot_dimension_numbers<[1], [0], [0], [1], [0, 0, 1, 1], [], []>} : vector<32x12xf32>, vector<12x12xf32>, vector<32x12xf32> -> vector<32x12xf32>
    %722 = arith.addf %718, %721 : vector<32x12xf32>
    %c304_618 = arith.constant 304 : index
    %c0_619 = arith.constant 0 : index
    %723 = vector.load %arg4[%c304_618, %c0_619] : memref<536x12xf32, #tpu.memory_space<vmem>>, vector<1x12xf32>
    %724 = vector.broadcast %723 : vector<1x12xf32> to vector<32x12xf32>
    %725 = arith.addf %722, %724 : vector<32x12xf32>
    %cst_620 = arith.constant 0.000000e+00 : f32
    %726 = vector.broadcast %cst_620 : f32 to vector<32x12xf32>
    %727 = arith.maximumf %725, %726 : vector<32x12xf32>
    %728 = arith.addf %727, %693 : vector<32x12xf32>
    %cst_621 = arith.constant 0.000000e+00 : f32
    %729 = vector.broadcast %cst_621 : f32 to vector<32x12xf32>
    %730 = arith.maximumf %728, %729 : vector<32x12xf32>
    %c32_622 = arith.constant 32 : index
    %c0_623 = arith.constant 0 : index
    %731 = vector.load %arg10[%c32_622, %c0_623] : memref<64x12xf32, #tpu.memory_space<vmem>>, vector<32x12xf32>
    tpu.vector_store %arg10[%c32_622, %c0_623], %730 {strides = array<i32>} : memref<64x12xf32, #tpu.memory_space<vmem>>, vector<32x12xf32>,
    %c16_624 = arith.constant 16 : index
    %c0_625 = arith.constant 0 : index
    %732 = vector.load %arg10[%c16_624, %c0_625] : memref<64x12xf32, #tpu.memory_space<vmem>>, vector<32x12xf32>
    %c312_626 = arith.constant 312 : index
    %c0_627 = arith.constant 0 : index
    %733 = vector.load %arg4[%c312_626, %c0_627] : memref<536x12xf32, #tpu.memory_space<vmem>>, vector<12x12xf32>
    %cst_628 = arith.constant dense<0.000000e+00> : vector<32x12xf32>
    %734 = tpu.matmul %732, %733, %cst_628 {dimension_numbers = #tpu.dot_dimension_numbers<[1], [0], [0], [1], [0, 0, 1, 1], [], []>} : vector<32x12xf32>, vector<12x12xf32>, vector<32x12xf32> -> vector<32x12xf32>
    %c24_629 = arith.constant 24 : index
    %c0_630 = arith.constant 0 : index
    %735 = vector.load %arg10[%c24_629, %c0_630] : memref<64x12xf32, #tpu.memory_space<vmem>>, vector<32x12xf32>
    %c328_631 = arith.constant 328 : index
    %c0_632 = arith.constant 0 : index
    %736 = vector.load %arg4[%c328_631, %c0_632] : memref<536x12xf32, #tpu.memory_space<vmem>>, vector<12x12xf32>
    %cst_633 = arith.constant dense<0.000000e+00> : vector<32x12xf32>
    %737 = tpu.matmul %735, %736, %cst_633 {dimension_numbers = #tpu.dot_dimension_numbers<[1], [0], [0], [1], [0, 0, 1, 1], [], []>} : vector<32x12xf32>, vector<12x12xf32>, vector<32x12xf32> -> vector<32x12xf32>
    %738 = arith.addf %734, %737 : vector<32x12xf32>
    %c32_634 = arith.constant 32 : index
    %c0_635 = arith.constant 0 : index
    %739 = vector.load %arg10[%c32_634, %c0_635] : memref<64x12xf32, #tpu.memory_space<vmem>>, vector<32x12xf32>
    %c344_636 = arith.constant 344 : index
    %c0_637 = arith.constant 0 : index
    %740 = vector.load %arg4[%c344_636, %c0_637] : memref<536x12xf32, #tpu.memory_space<vmem>>, vector<12x12xf32>
    %cst_638 = arith.constant dense<0.000000e+00> : vector<32x12xf32>
    %741 = tpu.matmul %739, %740, %cst_638 {dimension_numbers = #tpu.dot_dimension_numbers<[1], [0], [0], [1], [0, 0, 1, 1], [], []>} : vector<32x12xf32>, vector<12x12xf32>, vector<32x12xf32> -> vector<32x12xf32>
    %742 = arith.addf %738, %741 : vector<32x12xf32>
    %c360_639 = arith.constant 360 : index
    %c0_640 = arith.constant 0 : index
    %743 = vector.load %arg4[%c360_639, %c0_640] : memref<536x12xf32, #tpu.memory_space<vmem>>, vector<1x12xf32>
    %744 = vector.broadcast %743 : vector<1x12xf32> to vector<32x12xf32>
    %745 = arith.addf %742, %744 : vector<32x12xf32>
    %cst_641 = arith.constant 0.000000e+00 : f32
    %746 = vector.broadcast %cst_641 : f32 to vector<32x12xf32>
    %747 = arith.maximumf %745, %746 : vector<32x12xf32>
    %c32_642 = arith.constant 32 : index
    %c0_643 = arith.constant 0 : index
    %748 = vector.load %arg10[%c32_642, %c0_643] : memref<64x12xf32, #tpu.memory_space<vmem>>, vector<32x12xf32>
    tpu.vector_store %arg10[%c32_642, %c0_643], %747 {strides = array<i32>} : memref<64x12xf32, #tpu.memory_space<vmem>>, vector<32x12xf32>,
    %c16_644 = arith.constant 16 : index
    %c0_645 = arith.constant 0 : index
    %749 = vector.load %arg10[%c16_644, %c0_645] : memref<64x12xf32, #tpu.memory_space<vmem>>, vector<32x12xf32>
    %c368_646 = arith.constant 368 : index
    %c0_647 = arith.constant 0 : index
    %750 = vector.load %arg4[%c368_646, %c0_647] : memref<536x12xf32, #tpu.memory_space<vmem>>, vector<12x12xf32>
    %cst_648 = arith.constant dense<0.000000e+00> : vector<32x12xf32>
    %751 = tpu.matmul %749, %750, %cst_648 {dimension_numbers = #tpu.dot_dimension_numbers<[1], [0], [0], [1], [0, 0, 1, 1], [], []>} : vector<32x12xf32>, vector<12x12xf32>, vector<32x12xf32> -> vector<32x12xf32>
    %c24_649 = arith.constant 24 : index
    %c0_650 = arith.constant 0 : index
    %752 = vector.load %arg10[%c24_649, %c0_650] : memref<64x12xf32, #tpu.memory_space<vmem>>, vector<32x12xf32>
    %c384_651 = arith.constant 384 : index
    %c0_652 = arith.constant 0 : index
    %753 = vector.load %arg4[%c384_651, %c0_652] : memref<536x12xf32, #tpu.memory_space<vmem>>, vector<12x12xf32>
    %cst_653 = arith.constant dense<0.000000e+00> : vector<32x12xf32>
    %754 = tpu.matmul %752, %753, %cst_653 {dimension_numbers = #tpu.dot_dimension_numbers<[1], [0], [0], [1], [0, 0, 1, 1], [], []>} : vector<32x12xf32>, vector<12x12xf32>, vector<32x12xf32> -> vector<32x12xf32>
    %755 = arith.addf %751, %754 : vector<32x12xf32>
    %c32_654 = arith.constant 32 : index
    %c0_655 = arith.constant 0 : index
    %756 = vector.load %arg10[%c32_654, %c0_655] : memref<64x12xf32, #tpu.memory_space<vmem>>, vector<32x12xf32>
    %c400_656 = arith.constant 400 : index
    %c0_657 = arith.constant 0 : index
    %757 = vector.load %arg4[%c400_656, %c0_657] : memref<536x12xf32, #tpu.memory_space<vmem>>, vector<12x12xf32>
    %cst_658 = arith.constant dense<0.000000e+00> : vector<32x12xf32>
    %758 = tpu.matmul %756, %757, %cst_658 {dimension_numbers = #tpu.dot_dimension_numbers<[1], [0], [0], [1], [0, 0, 1, 1], [], []>} : vector<32x12xf32>, vector<12x12xf32>, vector<32x12xf32> -> vector<32x12xf32>
    %759 = arith.addf %755, %758 : vector<32x12xf32>
    %c416_659 = arith.constant 416 : index
    %c0_660 = arith.constant 0 : index
    %760 = vector.load %arg4[%c416_659, %c0_660] : memref<536x12xf32, #tpu.memory_space<vmem>>, vector<1x12xf32>
    %761 = vector.broadcast %760 : vector<1x12xf32> to vector<32x12xf32>
    %762 = arith.addf %759, %761 : vector<32x12xf32>
    %cst_661 = arith.constant 0.000000e+00 : f32
    %763 = vector.broadcast %cst_661 : f32 to vector<32x12xf32>
    %764 = arith.maximumf %762, %763 : vector<32x12xf32>
    %765 = arith.addf %764, %730 : vector<32x12xf32>
    %cst_662 = arith.constant 0.000000e+00 : f32
    %766 = vector.broadcast %cst_662 : f32 to vector<32x12xf32>
    %767 = arith.maximumf %765, %766 : vector<32x12xf32>
    %c32_663 = arith.constant 32 : index
    %c0_664 = arith.constant 0 : index
    %768 = vector.load %arg10[%c32_663, %c0_664] : memref<64x12xf32, #tpu.memory_space<vmem>>, vector<32x12xf32>
    tpu.vector_store %arg10[%c32_663, %c0_664], %767 {strides = array<i32>} : memref<64x12xf32, #tpu.memory_space<vmem>>, vector<32x12xf32>,
    %c16_665 = arith.constant 16 : index
    %c0_666 = arith.constant 0 : index
    %769 = vector.load %arg10[%c16_665, %c0_666] : memref<64x12xf32, #tpu.memory_space<vmem>>, vector<32x12xf32>
    %c440_667 = arith.constant 440 : index
    %c0_668 = arith.constant 0 : index
    %770 = vector.load %arg4[%c440_667, %c0_668] : memref<536x12xf32, #tpu.memory_space<vmem>>, vector<12x12xf32>
    %cst_669 = arith.constant dense<0.000000e+00> : vector<32x12xf32>
    %771 = tpu.matmul %769, %770, %cst_669 {dimension_numbers = #tpu.dot_dimension_numbers<[1], [0], [0], [1], [0, 0, 1, 1], [], []>} : vector<32x12xf32>, vector<12x12xf32>, vector<32x12xf32> -> vector<32x12xf32>
    %c32_670 = arith.constant 32 : index
    %c0_671 = arith.constant 0 : index
    %772 = vector.load %arg10[%c32_670, %c0_671] : memref<64x12xf32, #tpu.memory_space<vmem>>, vector<32x12xf32>
    %c456_672 = arith.constant 456 : index
    %c0_673 = arith.constant 0 : index
    %773 = vector.load %arg4[%c456_672, %c0_673] : memref<536x12xf32, #tpu.memory_space<vmem>>, vector<12x12xf32>
    %cst_674 = arith.constant dense<0.000000e+00> : vector<32x12xf32>
    %774 = tpu.matmul %772, %773, %cst_674 {dimension_numbers = #tpu.dot_dimension_numbers<[1], [0], [0], [1], [0, 0, 1, 1], [], []>} : vector<32x12xf32>, vector<12x12xf32>, vector<32x12xf32> -> vector<32x12xf32>
    %775 = arith.addf %771, %774 : vector<32x12xf32>
    %c472_675 = arith.constant 472 : index
    %c0_676 = arith.constant 0 : index
    %776 = vector.load %arg4[%c472_675, %c0_676] : memref<536x12xf32, #tpu.memory_space<vmem>>, vector<1x12xf32>
    %777 = vector.broadcast %776 : vector<1x12xf32> to vector<32x12xf32>
    %778 = arith.addf %775, %777 : vector<32x12xf32>
    %cst_677 = arith.constant 0.000000e+00 : f32
    %779 = vector.broadcast %cst_677 : f32 to vector<32x12xf32>
    %780 = arith.maximumf %778, %779 : vector<32x12xf32>
    %c32_678 = arith.constant 32 : index
    %c0_679 = arith.constant 0 : index
    %781 = vector.load %arg10[%c32_678, %c0_679] : memref<64x12xf32, #tpu.memory_space<vmem>>, vector<32x12xf32>
    tpu.vector_store %arg10[%c32_678, %c0_679], %780 {strides = array<i32>} : memref<64x12xf32, #tpu.memory_space<vmem>>, vector<32x12xf32>,
    %c16_680 = arith.constant 16 : index
    %c0_681 = arith.constant 0 : index
    %782 = vector.load %arg10[%c16_680, %c0_681] : memref<64x12xf32, #tpu.memory_space<vmem>>, vector<32x12xf32>
    %c496_682 = arith.constant 496 : index
    %c0_683 = arith.constant 0 : index
    %783 = vector.load %arg4[%c496_682, %c0_683] : memref<536x12xf32, #tpu.memory_space<vmem>>, vector<12x12xf32>
    %cst_684 = arith.constant dense<0.000000e+00> : vector<32x12xf32>
    %784 = tpu.matmul %782, %783, %cst_684 {dimension_numbers = #tpu.dot_dimension_numbers<[1], [0], [0], [1], [0, 0, 1, 1], [], []>} : vector<32x12xf32>, vector<12x12xf32>, vector<32x12xf32> -> vector<32x12xf32>
    %c32_685 = arith.constant 32 : index
    %c0_686 = arith.constant 0 : index
    %785 = vector.load %arg10[%c32_685, %c0_686] : memref<64x12xf32, #tpu.memory_space<vmem>>, vector<32x12xf32>
    %c512_687 = arith.constant 512 : index
    %c0_688 = arith.constant 0 : index
    %786 = vector.load %arg4[%c512_687, %c0_688] : memref<536x12xf32, #tpu.memory_space<vmem>>, vector<12x12xf32>
    %cst_689 = arith.constant dense<0.000000e+00> : vector<32x12xf32>
    %787 = tpu.matmul %785, %786, %cst_689 {dimension_numbers = #tpu.dot_dimension_numbers<[1], [0], [0], [1], [0, 0, 1, 1], [], []>} : vector<32x12xf32>, vector<12x12xf32>, vector<32x12xf32> -> vector<32x12xf32>
    %788 = arith.addf %784, %787 : vector<32x12xf32>
    %c528_690 = arith.constant 528 : index
    %c0_691 = arith.constant 0 : index
    %789 = vector.load %arg4[%c528_690, %c0_691] : memref<536x12xf32, #tpu.memory_space<vmem>>, vector<1x12xf32>
    %790 = vector.broadcast %789 : vector<1x12xf32> to vector<32x12xf32>
    %791 = arith.addf %788, %790 : vector<32x12xf32>
    %cst_692 = arith.constant 0.000000e+00 : f32
    %792 = vector.broadcast %cst_692 : f32 to vector<32x12xf32>
    %793 = arith.maximumf %791, %792 : vector<32x12xf32>
    %794 = arith.addf %793, %767 : vector<32x12xf32>
    %cst_693 = arith.constant 0.000000e+00 : f32
    %795 = vector.broadcast %cst_693 : f32 to vector<32x12xf32>
    %796 = arith.maximumf %794, %795 : vector<32x12xf32>
    %c0_694 = arith.constant 0 : index
    %c0_695 = arith.constant 0 : index
    %797 = vector.load %arg9[%c0_694, %c0_695] : memref<32x12xf32, #tpu.memory_space<vmem>>, vector<32x12xf32>
    tpu.vector_store %arg9[%c0_694, %c0_695], %796 {strides = array<i32>} : memref<32x12xf32, #tpu.memory_space<vmem>>, vector<32x12xf32>,
    return
  }
}

</mosaic_0001>

<llo_original>
// kernel: lcsn_forward.1
$region0: #{lcsn_forward.1}
  #allocation0 [shape = 'u32[]', space=smem, size = 0x4, offset = 0x4, fixed_abs, tag = 'smem constant byte address 0x4 - core index']
  #allocation1 [shape = 'u32[72,128]{1,0:T(1,128)}', space=vmem, size = 0x9000, scoped, tag = 'internal scratch']
  #allocation2 [shape = 'f32[64,12]{1,0:T(8,128)}', space=vmem, size = 0x8000, scoped, tag = 'scratch operand']
  #allocation3 [shape = 'f32[64,32]{1,0:T(8,128)}', space=vmem, size = 0x8000, scoped, tag = 'scratch operand']
  %s0 = inlined_call_operand.vmem [shape: f32[32,12], index: 0, kind: input, shape index: {}]
  %s1 = inlined_call_operand.vmem [shape: f32[808,32], index: 1, kind: input, shape index: {}]
  %s2 = inlined_call_operand.vmem [shape: f32[808,32], index: 2, kind: input, shape index: {}]
  %s3 = inlined_call_operand.vmem [shape: f32[536,12], index: 3, kind: input, shape index: {}]
  %s4 = inlined_call_operand.vmem [shape: f32[536,12], index: 4, kind: input, shape index: {}]
  %s5 = inlined_call_operand.vmem [shape: f32[648,160], index: 5, kind: input, shape index: {}]
  %s6 = inlined_call_operand.hbm [shape: f32[2,10], index: 6, kind: output, shape index: {0}]
  %s7 = inlined_call_operand.hbm [shape: f32[2,4], index: 7, kind: output, shape index: {1}]
  %s8 = inlined_call_operand.vmem [shape: f32[32,12], index: 8, kind: output, shape index: {2}]
  %s9 = inlined_call_operand.vmem [shape: f32[32,12], index: 9, kind: output, shape index: {3}]
  %10 = xla_tuple %s6, %s7, %s8, %s9
  %s11 = sld [smem:[#allocation0]]
  $region58: #{lcsn_forward.1} parent=0
    _
  %s13 = ssub.s32 1, %s11
  %s14 = scalar_select 0, %s13, %s11
  $region1: #{lcsn_forward.1} parent=0
    #allocation4 [shape = 'u8[1024]{0}', space=vmem, size = 0x400, scoped, tag = 'output window, operand 0, single buffered']
    #allocation5 [shape = 's32[1]{0}', space=sflag, size = 0x4, scoped, tag = 'scoped memory for lcsn_forward.1']
    #allocation6 [shape = 'u8[1024]{0}', space=vmem, size = 0x400, scoped, tag = 'output window, operand 1, single buffered']
    #allocation7 [shape = 's32[1]{0}', space=sflag, size = 0x4, scoped, tag = 'scoped memory for lcsn_forward.1']
    %15 = vsyncpa [#allocation5], 0
    %16 = vsyncpa [#allocation7], 0
    // Predicated region
    $region2: #{lcsn_forward.1} parent=1 // pred_check
      _
    $region3: #{lcsn_forward.1} parent=1 // pred_check_branch
      %18 = sbr.rel (0) target = $region5
    $region4: #{lcsn_forward.1} parent=1 // pred_region
      _
    $region5: #{lcsn_forward.1} parent=1 // pred_fallthru
      _
    // Predicated region
    $region6: #{lcsn_forward.1} parent=1 // pred_check
      _
    $region7: #{lcsn_forward.1} parent=1 // pred_check_branch
      %20 = sbr.rel (0) target = $region9
    $region8: #{lcsn_forward.1} parent=1 // pred_region
      _
    $region9: #{lcsn_forward.1} parent=1 // pred_fallthru
      _
    // Predicated region
    $region10: #{lcsn_forward.1} parent=1 // pred_check
      _
    $region11: #{lcsn_forward.1} parent=1 // pred_check_branch
      %22 = sbr.rel (0) target = $region13
    $region12: #{lcsn_forward.1} parent=1 // pred_region
      _
    $region13: #{lcsn_forward.1} parent=1 // pred_fallthru
      _
    // Predicated region
    $region14: #{lcsn_forward.1} parent=1 // pred_check
      _
    $region15: #{lcsn_forward.1} parent=1 // pred_check_branch
      %24 = sbr.rel (0) target = $region17
    $region16: #{lcsn_forward.1} parent=1 // pred_region
      _
    $region17: #{lcsn_forward.1} parent=1 // pred_fallthru
      _
    // Predicated region
    $region18: #{lcsn_forward.1} parent=1 // pred_check
      _
    $region19: #{lcsn_forward.1} parent=1 // pred_check_branch
      %26 = sbr.rel (0) target = $region21
    $region20: #{lcsn_forward.1} parent=1 // pred_region
      _
    $region21: #{lcsn_forward.1} parent=1 // pred_fallthru
      _
    // Predicated region
    $region22: #{lcsn_forward.1} parent=1 // pred_check
      _
    $region23: #{lcsn_forward.1} parent=1 // pred_check_branch
      %28 = sbr.rel (0) target = $region25
    $region24: #{lcsn_forward.1} parent=1 // pred_region
      _
    $region25: #{lcsn_forward.1} parent=1 // pred_fallthru
      _
    %vm29 = vcmask 97280
    %30 = vst.msk [vmem:[#allocation2] sm:$0xff] %vm29, 0.0
    %31 = vst.msk [vmem:[#allocation2 + $0x8] sm:$0xff] %vm29, 0.0
    %32 = vst.msk [vmem:[#allocation2 + $0x10] sm:$0xff] %vm29, 0.0
    %33 = vst.msk [vmem:[#allocation2 + $0x18] sm:$0xff] %vm29, 0.0
    %34 = vst.msk [vmem:[#allocation2 + $0x20] sm:$0xff] %vm29, 0.0
    %35 = vst.msk [vmem:[#allocation2 + $0x28] sm:$0xff] %vm29, 0.0
    %36 = vst.msk [vmem:[#allocation2 + $0x30] sm:$0xff] %vm29, 0.0
    %37 = vst.msk [vmem:[#allocation2 + $0x38] sm:$0xff] %vm29, 0.0
    %vm38 = vcmask 261120
    %39 = vst.msk [vmem:[#allocation3] sm:$0xff] %vm38, 0.0
    %40 = vst.msk [vmem:[#allocation3 + $0x8] sm:$0xff] %vm38, 0.0
    %41 = vst.msk [vmem:[#allocation3 + $0x10] sm:$0xff] %vm38, 0.0
    %42 = vst.msk [vmem:[#allocation3 + $0x18] sm:$0xff] %vm38, 0.0
    %43 = vst.msk [vmem:[#allocation3 + $0x20] sm:$0xff] %vm38, 0.0
    %44 = vst.msk [vmem:[#allocation3 + $0x28] sm:$0xff] %vm38, 0.0
    %45 = vst.msk [vmem:[#allocation3 + $0x30] sm:$0xff] %vm38, 0.0
    %46 = vst.msk [vmem:[#allocation3 + $0x38] sm:$0xff] %vm38, 0.0
    %v47 = vld [vmem:[%s0] sm:$0xff]
    %v48 = vld [vmem:[%s0 + $0x8] sm:$0xff]
    %v49 = vld [vmem:[%s0 + $0x10] sm:$0xff]
    %v50 = vld [vmem:[%s0 + $0x18] sm:$0xff]
    %51 = vst.msk [vmem:[#allocation2 + $0x20] sm:$0xff] %vm29, %v47
    %52 = vst.msk [vmem:[#allocation2 + $0x28] sm:$0xff] %vm29, %v48
    %53 = vst.msk [vmem:[#allocation2 + $0x30] sm:$0xff] %vm29, %v49
    %54 = vst.msk [vmem:[#allocation2 + $0x38] sm:$0xff] %vm29, %v50
    %v55 = vld [vmem:[#allocation2 + $0x1c] sm:$0xff]
    %v56 = vld [vmem:[#allocation2 + $0x24] sm:$0xff]
    %v57 = vld [vmem:[#allocation2 + $0x2c] sm:$0xff]
    %v58 = vld [vmem:[#allocation2 + $0x34] sm:$0xff]
    %v59 = vld [vmem:[%s1] sm:$0xff]
    %v60 = vld [vmem:[%s1 + $0x8] sm:$0xf]
    %v61 = vld [vmem:[#allocation2 + $0x1e] sm:$0xff]
    %v62 = vld [vmem:[#allocation2 + $0x26] sm:$0xff]
    %v63 = vld [vmem:[#allocation2 + $0x2e] sm:$0xff]
    %v64 = vld [vmem:[#allocation2 + $0x36] sm:$0xff]
    %v65 = vld [vmem:[%s1 + $0x10] sm:$0xff]
    %v66 = vld [vmem:[%s1 + $0x18] sm:$0xf]
    %v68 = vsel %vm29, %v61, 0
    %v71 = vsel %vm29, %v62, 0
    %v74 = vsel %vm29, %v63, 0
    %v77 = vsel %vm29, %v64, 0
    %vm79 = vcmask 1043456
    %v81 = vsel %vm79, %v66, 0
    %83 = vmatpush.msra.mxu0 0.0
    %84 = vmatpush.msra.mxu0 0.0
    %85 = vmatpush.msra.mxu0 0.0
    %86 = vmatpush.msra.mxu0 0.0
    %87 = vmatpush.msra.mxu0 0.0
    %88 = vmatpush.msra.mxu0 0.0
    %89 = vmatpush.msra.mxu0 0.0
    %90 = vmatpush.msra.mxu0 0.0
    %91 = vmatpush.msra.mxu0 0.0
    %92 = vmatpush.msra.mxu0 0.0
    %93 = vmatpush.msra.mxu0 0.0
    %94 = vmatpush.msra.mxu0 0.0
    %95 = vmatpush.msra.mxu0 0.0
    %96 = vmatpush.msra.mxu0 0.0
    %97 = vmatpush.msra.mxu0 %v81
    %98 = vmatpush.msra.mxu0 %v65
    %99 = vmatmul.f32.gmra.mxu0 %v68
    %v100 = vpop.f32.mrf.mxu0
    %v101 = vadd.f32 0.0, %v100
    %102 = vmatmul.f32.gmra.mxu0 %v71
    %v103 = vpop.f32.mrf.mxu0
    %v104 = vadd.f32 0.0, %v103
    %105 = vmatmul.f32.gmra.mxu0 %v74
    %v106 = vpop.f32.mrf.mxu0
    %v107 = vadd.f32 0.0, %v106
    %108 = vmatmul.f32.gmra.mxu0 %v77
    %v109 = vpop.f32.mrf.mxu0
    %v110 = vadd.f32 0.0, %v109
    %111 = vdwg.mxu0
    %v113 = vsel %vm29, %v55, 0
    %v116 = vsel %vm29, %v56, 0
    %v119 = vsel %vm29, %v57, 0
    %v122 = vsel %vm29, %v58, 0
    %v125 = vsel %vm79, %v60, 0
    %127 = vmatpush.msra.mxu0 0.0
    %128 = vmatpush.msra.mxu0 0.0
    %129 = vmatpush.msra.mxu0 0.0
    %130 = vmatpush.msra.mxu0 0.0
    %131 = vmatpush.msra.mxu0 0.0
    %132 = vmatpush.msra.mxu0 0.0
    %133 = vmatpush.msra.mxu0 0.0
    %134 = vmatpush.msra.mxu0 0.0
    %135 = vmatpush.msra.mxu0 0.0
    %136 = vmatpush.msra.mxu0 0.0
    %137 = vmatpush.msra.mxu0 0.0
    %138 = vmatpush.msra.mxu0 0.0
    %139 = vmatpush.msra.mxu0 0.0
    %140 = vmatpush.msra.mxu0 0.0
    %141 = vmatpush.msra.mxu0 %v125
    %142 = vmatpush.msra.mxu0 %v59
    %143 = vmatmul.f32.gmra.mxu0 %v113
    %v144 = vpop.f32.mrf.mxu0
    %v145 = vadd.f32 %v101, %v144
    %146 = vmatmul.f32.gmra.mxu0 %v116
    %v147 = vpop.f32.mrf.mxu0
    %v148 = vadd.f32 %v104, %v147
    %149 = vmatmul.f32.gmra.mxu0 %v119
    %v150 = vpop.f32.mrf.mxu0
    %v151 = vadd.f32 %v107, %v150
    %152 = vmatmul.f32.gmra.mxu0 %v122
    %v153 = vpop.f32.mrf.mxu0
    %v154 = vadd.f32 %v110, %v153
    %155 = vdwg.mxu0
    %v156 = vld [vmem:[#allocation2 + $0x20] sm:$0xff]
    %v157 = vld [vmem:[#allocation2 + $0x28] sm:$0xff]
    %v158 = vld [vmem:[#allocation2 + $0x30] sm:$0xff]
    %v159 = vld [vmem:[#allocation2 + $0x38] sm:$0xff]
    %v160 = vld [vmem:[%s1 + $0x20] sm:$0xff]
    %v161 = vld [vmem:[%s1 + $0x28] sm:$0xf]
    %v163 = vsel %vm29, %v156, 0
    %v166 = vsel %vm29, %v157, 0
    %v169 = vsel %vm29, %v158, 0
    %v172 = vsel %vm29, %v159, 0
    %v175 = vsel %vm79, %v161, 0
    %177 = vmatpush.msra.mxu0 0.0
    %178 = vmatpush.msra.mxu0 0.0
    %179 = vmatpush.msra.mxu0 0.0
    %180 = vmatpush.msra.mxu0 0.0
    %181 = vmatpush.msra.mxu0 0.0
    %182 = vmatpush.msra.mxu0 0.0
    %183 = vmatpush.msra.mxu0 0.0
    %184 = vmatpush.msra.mxu0 0.0
    %185 = vmatpush.msra.mxu0 0.0
    %186 = vmatpush.msra.mxu0 0.0
    %187 = vmatpush.msra.mxu0 0.0
    %188 = vmatpush.msra.mxu0 0.0
    %189 = vmatpush.msra.mxu0 0.0
    %190 = vmatpush.msra.mxu0 0.0
    %191 = vmatpush.msra.mxu0 %v175
    %192 = vmatpush.msra.mxu0 %v160
    %193 = vmatmul.f32.gmra.mxu0 %v163
    %v194 = vpop.f32.mrf.mxu0
    %v195 = vadd.f32 0.0, %v194
    %196 = vmatmul.f32.gmra.mxu0 %v166
    %v197 = vpop.f32.mrf.mxu0
    %v198 = vadd.f32 0.0, %v197
    %199 = vmatmul.f32.gmra.mxu0 %v169
    %v200 = vpop.f32.mrf.mxu0
    %v201 = vadd.f32 0.0, %v200
    %202 = vmatmul.f32.gmra.mxu0 %v172
    %v203 = vpop.f32.mrf.mxu0
    %v204 = vadd.f32 0.0, %v203
    %205 = vdwg.mxu0
    %v206 = vadd.f32 %v145, %v195
    %v207 = vadd.f32 %v148, %v198
    %v208 = vadd.f32 %v151, %v201
    %v209 = vadd.f32 %v154, %v204
    %v210 = vld [vmem:[%s1 + $0x30] sm:$0x1]
    %v211 = vperm.slane %v210, 0
    %v212 = vadd.f32 %v206, %v211
    %v213 = vadd.f32 %v207, %v211
    %v214 = vadd.f32 %v208, %v211
    %v215 = vadd.f32 %v209, %v211
    %v216 = vmax.f32 %v212, 0.0
    %v217 = vmax.f32 %v213, 0.0
    %v218 = vmax.f32 %v214, 0.0
    %v219 = vmax.f32 %v215, 0.0
    %220 = vst.msk [vmem:[#allocation3 + $0x20] sm:$0xff] %vm38, %v216
    %221 = vst.msk [vmem:[#allocation3 + $0x28] sm:$0xff] %vm38, %v217
    %222 = vst.msk [vmem:[#allocation3 + $0x30] sm:$0xff] %vm38, %v218
    %223 = vst.msk [vmem:[#allocation3 + $0x38] sm:$0xff] %vm38, %v219
    %v224 = vld [vmem:[#allocation3 + $0x1c] sm:$0xff]
    %v225 = vld [vmem:[#allocation3 + $0x24] sm:$0xff]
    %v226 = vld [vmem:[#allocation3 + $0x2c] sm:$0xff]
    %v227 = vld [vmem:[#allocation3 + $0x34] sm:$0xff]
    %v228 = vld [vmem:[%s1 + $0x38] sm:$0xff]
    %v229 = vld [vmem:[%s1 + $0x40] sm:$0xff]
    %v230 = vld [vmem:[%s1 + $0x48] sm:$0xff]
    %v231 = vld [vmem:[%s1 + $0x50] sm:$0xff]
    %v232 = vld [vmem:[#allocation3 + $0x1e] sm:$0xff]
    %v233 = vld [vmem:[#allocation3 + $0x26] sm:$0xff]
    %v234 = vld [vmem:[#allocation3 + $0x2e] sm:$0xff]
    %v235 = vld [vmem:[#allocation3 + $0x36] sm:$0xff]
    %v236 = vld [vmem:[%s1 + $0x58] sm:$0xff]
    %v237 = vld [vmem:[%s1 + $0x60] sm:$0xff]
    %v238 = vld [vmem:[%s1 + $0x68] sm:$0xff]
    %v239 = vld [vmem:[%s1 + $0x70] sm:$0xff]
    %v241 = vsel %vm38, %v232, 0
    %v244 = vsel %vm38, %v233, 0
    %v247 = vsel %vm38, %v234, 0
    %v250 = vsel %vm38, %v235, 0
    %252 = vmatpush.msra.mxu0 0.0
    %253 = vmatpush.msra.mxu0 0.0
    %254 = vmatpush.msra.mxu0 0.0
    %255 = vmatpush.msra.mxu0 0.0
    %256 = vmatpush.msra.mxu0 0.0
    %257 = vmatpush.msra.mxu0 0.0
    %258 = vmatpush.msra.mxu0 0.0
    %259 = vmatpush.msra.mxu0 0.0
    %260 = vmatpush.msra.mxu0 0.0
    %261 = vmatpush.msra.mxu0 0.0
    %262 = vmatpush.msra.mxu0 0.0
    %263 = vmatpush.msra.mxu0 0.0
    %264 = vmatpush.msra.mxu0 %v239
    %265 = vmatpush.msra.mxu0 %v238
    %266 = vmatpush.msra.mxu0 %v237
    %267 = vmatpush.msra.mxu0 %v236
    %268 = vmatmul.f32.gmra.mxu0 %v241
    %v269 = vpop.f32.mrf.mxu0
    %v270 = vadd.f32 0.0, %v269
    %271 = vmatmul.f32.gmra.mxu0 %v244
    %v272 = vpop.f32.mrf.mxu0
    %v273 = vadd.f32 0.0, %v272
    %274 = vmatmul.f32.gmra.mxu0 %v247
    %v275 = vpop.f32.mrf.mxu0
    %v276 = vadd.f32 0.0, %v275
    %277 = vmatmul.f32.gmra.mxu0 %v250
    %v278 = vpop.f32.mrf.mxu0
    %v279 = vadd.f32 0.0, %v278
    %280 = vdwg.mxu0
    %v282 = vsel %vm38, %v224, 0
    %v285 = vsel %vm38, %v225, 0
    %v288 = vsel %vm38, %v226, 0
    %v291 = vsel %vm38, %v227, 0
    %293 = vmatpush.msra.mxu0 0.0
    %294 = vmatpush.msra.mxu0 0.0
    %295 = vmatpush.msra.mxu0 0.0
    %296 = vmatpush.msra.mxu0 0.0
    %297 = vmatpush.msra.mxu0 0.0
    %298 = vmatpush.msra.mxu0 0.0
    %299 = vmatpush.msra.mxu0 0.0
    %300 = vmatpush.msra.mxu0 0.0
    %301 = vmatpush.msra.mxu0 0.0
    %302 = vmatpush.msra.mxu0 0.0
    %303 = vmatpush.msra.mxu0 0.0
    %304 = vmatpush.msra.mxu0 0.0
    %305 = vmatpush.msra.mxu0 %v231
    %306 = vmatpush.msra.mxu0 %v230
    %307 = vmatpush.msra.mxu0 %v229
    %308 = vmatpush.msra.mxu0 %v228
    %309 = vmatmul.f32.gmra.mxu0 %v282
    %v310 = vpop.f32.mrf.mxu0
    %v311 = vadd.f32 %v270, %v310
    %312 = vmatmul.f32.gmra.mxu0 %v285
    %v313 = vpop.f32.mrf.mxu0
    %v314 = vadd.f32 %v273, %v313
    %315 = vmatmul.f32.gmra.mxu0 %v288
    %v316 = vpop.f32.mrf.mxu0
    %v317 = vadd.f32 %v276, %v316
    %318 = vmatmul.f32.gmra.mxu0 %v291
    %v319 = vpop.f32.mrf.mxu0
    %v320 = vadd.f32 %v279, %v319
    %321 = vdwg.mxu0
    %v322 = vld [vmem:[#allocation3 + $0x20] sm:$0xff]
    %v323 = vld [vmem:[#allocation3 + $0x28] sm:$0xff]
    %v324 = vld [vmem:[#allocation3 + $0x30] sm:$0xff]
    %v325 = vld [vmem:[#allocation3 + $0x38] sm:$0xff]
    %v326 = vld [vmem:[%s1 + $0x78] sm:$0xff]
    %v327 = vld [vmem:[%s1 + $0x80] sm:$0xff]
    %v328 = vld [vmem:[%s1 + $0x88] sm:$0xff]
    %v329 = vld [vmem:[%s1 + $0x90] sm:$0xff]
    %v331 = vsel %vm38, %v322, 0
    %v334 = vsel %vm38, %v323, 0
    %v337 = vsel %vm38, %v324, 0
    %v340 = vsel %vm38, %v325, 0
    %342 = vmatpush.msra.mxu0 0.0
    %343 = vmatpush.msra.mxu0 0.0
    %344 = vmatpush.msra.mxu0 0.0
    %345 = vmatpush.msra.mxu0 0.0
    %346 = vmatpush.msra.mxu0 0.0
    %347 = vmatpush.msra.mxu0 0.0
    %348 = vmatpush.msra.mxu0 0.0
    %349 = vmatpush.msra.mxu0 0.0
    %350 = vmatpush.msra.mxu0 0.0
    %351 = vmatpush.msra.mxu0 0.0
    %352 = vmatpush.msra.mxu0 0.0
    %353 = vmatpush.msra.mxu0 0.0
    %354 = vmatpush.msra.mxu0 %v329
    %355 = vmatpush.msra.mxu0 %v328
    %356 = vmatpush.msra.mxu0 %v327
    %357 = vmatpush.msra.mxu0 %v326
    %358 = vmatmul.f32.gmra.mxu0 %v331
    %v359 = vpop.f32.mrf.mxu0
    %v360 = vadd.f32 0.0, %v359
    %361 = vmatmul.f32.gmra.mxu0 %v334
    %v362 = vpop.f32.mrf.mxu0
    %v363 = vadd.f32 0.0, %v362
    %364 = vmatmul.f32.gmra.mxu0 %v337
    %v365 = vpop.f32.mrf.mxu0
    %v366 = vadd.f32 0.0, %v365
    %367 = vmatmul.f32.gmra.mxu0 %v340
    %v368 = vpop.f32.mrf.mxu0
    %v369 = vadd.f32 0.0, %v368
    %370 = vdwg.mxu0
    %v371 = vadd.f32 %v311, %v360
    %v372 = vadd.f32 %v314, %v363
    %v373 = vadd.f32 %v317, %v366
    %v374 = vadd.f32 %v320, %v369
    %v375 = vld [vmem:[%s1 + $0x98] sm:$0x1]
    %v376 = vperm.slane %v375, 0
    %v377 = vadd.f32 %v371, %v376
    %v378 = vadd.f32 %v372, %v376
    %v379 = vadd.f32 %v373, %v376
    %v380 = vadd.f32 %v374, %v376
    %v381 = vmax.f32 %v377, 0.0
    %v382 = vmax.f32 %v378, 0.0
    %v383 = vmax.f32 %v379, 0.0
    %v384 = vmax.f32 %v380, 0.0
    %v385 = vld [vmem:[%s1 + $0xa0] sm:$0xff]
    %v386 = vld [vmem:[%s1 + $0xa8] sm:$0xf]
    %v387 = vld [vmem:[%s1 + $0xb0] sm:$0x1]
    %v388 = vperm.slane %v387, 0
    %v390 = vsel %vm29, %v47, 0
    %v393 = vsel %vm29, %v48, 0
    %v396 = vsel %vm29, %v49, 0
    %v399 = vsel %vm29, %v50, 0
    %v402 = vsel %vm79, %v386, 0
    %404 = vmatpush.msra.mxu0 0.0
    %405 = vmatpush.msra.mxu0 0.0
    %406 = vmatpush.msra.mxu0 0.0
    %407 = vmatpush.msra.mxu0 0.0
    %408 = vmatpush.msra.mxu0 0.0
    %409 = vmatpush.msra.mxu0 0.0
    %410 = vmatpush.msra.mxu0 0.0
    %411 = vmatpush.msra.mxu0 0.0
    %412 = vmatpush.msra.mxu0 0.0
    %413 = vmatpush.msra.mxu0 0.0
    %414 = vmatpush.msra.mxu0 0.0
    %415 = vmatpush.msra.mxu0 0.0
    %416 = vmatpush.msra.mxu0 0.0
    %417 = vmatpush.msra.mxu0 0.0
    %418 = vmatpush.msra.mxu0 %v402
    %419 = vmatpush.msra.mxu0 %v385
    %420 = vmatmul.f32.gmra.mxu0 %v390
    %v421 = vpop.f32.mrf.mxu0
    %v422 = vadd.f32 %v388, %v421
    %423 = vmatmul.f32.gmra.mxu0 %v393
    %v424 = vpop.f32.mrf.mxu0
    %v425 = vadd.f32 %v388, %v424
    %426 = vmatmul.f32.gmra.mxu0 %v396
    %v427 = vpop.f32.mrf.mxu0
    %v428 = vadd.f32 %v388, %v427
    %429 = vmatmul.f32.gmra.mxu0 %v399
    %v430 = vpop.f32.mrf.mxu0
    %v431 = vadd.f32 %v388, %v430
    %432 = vdwg.mxu0
    %v433 = vadd.f32 %v381, %v422
    %v434 = vadd.f32 %v382, %v425
    %v435 = vadd.f32 %v383, %v428
    %v436 = vadd.f32 %v384, %v431
    %v437 = vmax.f32 %v433, 0.0
    %v438 = vmax.f32 %v434, 0.0
    %v439 = vmax.f32 %v435, 0.0
    %v440 = vmax.f32 %v436, 0.0
    %441 = vst.msk [vmem:[#allocation3 + $0x20] sm:$0xff] %vm38, %v437
    %442 = vst.msk [vmem:[#allocation3 + $0x28] sm:$0xff] %vm38, %v438
    %443 = vst.msk [vmem:[#allocation3 + $0x30] sm:$0xff] %vm38, %v439
    %444 = vst.msk [vmem:[#allocation3 + $0x38] sm:$0xff] %vm38, %v440
    %v445 = vld [vmem:[#allocation3 + $0x18] sm:$0xff]
    %v446 = vld [vmem:[#allocation3 + $0x20] sm:$0xff]
    %v447 = vld [vmem:[#allocation3 + $0x28] sm:$0xff]
    %v448 = vld [vmem:[#allocation3 + $0x30] sm:$0xff]
    %v449 = vld [vmem:[%s1 + $0xb8] sm:$0xff]
    %v450 = vld [vmem:[%s1 + $0xc0] sm:$0xff]
    %v451 = vld [vmem:[%s1 + $0xc8] sm:$0xff]
    %v452 = vld [vmem:[%s1 + $0xd0] sm:$0xff]
    %v453 = vld [vmem:[#allocation3 + $0x1c] sm:$0xff]
    %v454 = vld [vmem:[#allocation3 + $0x24] sm:$0xff]
    %v455 = vld [vmem:[#allocation3 + $0x2c] sm:$0xff]
    %v456 = vld [vmem:[#allocation3 + $0x34] sm:$0xff]
    %v457 = vld [vmem:[%s1 + $0xd8] sm:$0xff]
    %v458 = vld [vmem:[%s1 + $0xe0] sm:$0xff]
    %v459 = vld [vmem:[%s1 + $0xe8] sm:$0xff]
    %v460 = vld [vmem:[%s1 + $0xf0] sm:$0xff]
    %v462 = vsel %vm38, %v453, 0
    %v465 = vsel %vm38, %v454, 0
    %v468 = vsel %vm38, %v455, 0
    %v471 = vsel %vm38, %v456, 0
    %473 = vmatpush.msra.mxu0 0.0
    %474 = vmatpush.msra.mxu0 0.0
    %475 = vmatpush.msra.mxu0 0.0
    %476 = vmatpush.msra.mxu0 0.0
    %477 = vmatpush.msra.mxu0 0.0
    %478 = vmatpush.msra.mxu0 0.0
    %479 = vmatpush.msra.mxu0 0.0
    %480 = vmatpush.msra.mxu0 0.0
    %481 = vmatpush.msra.mxu0 0.0
    %482 = vmatpush.msra.mxu0 0.0
    %483 = vmatpush.msra.mxu0 0.0
    %484 = vmatpush.msra.mxu0 0.0
    %485 = vmatpush.msra.mxu0 %v460
    %486 = vmatpush.msra.mxu0 %v459
    %487 = vmatpush.msra.mxu0 %v458
    %488 = vmatpush.msra.mxu0 %v457
    %489 = vmatmul.f32.gmra.mxu0 %v462
    %v490 = vpop.f32.mrf.mxu0
    %v491 = vadd.f32 0.0, %v490
    %492 = vmatmul.f32.gmra.mxu0 %v465
    %v493 = vpop.f32.mrf.mxu0
    %v494 = vadd.f32 0.0, %v493
    %495 = vmatmul.f32.gmra.mxu0 %v468
    %v496 = vpop.f32.mrf.mxu0
    %v497 = vadd.f32 0.0, %v496
    %498 = vmatmul.f32.gmra.mxu0 %v471
    %v499 = vpop.f32.mrf.mxu0
    %v500 = vadd.f32 0.0, %v499
    %501 = vdwg.mxu0
    %v503 = vsel %vm38, %v445, 0
    %v506 = vsel %vm38, %v446, 0
    %v509 = vsel %vm38, %v447, 0
    %v512 = vsel %vm38, %v448, 0
    %514 = vmatpush.msra.mxu0 0.0
    %515 = vmatpush.msra.mxu0 0.0
    %516 = vmatpush.msra.mxu0 0.0
    %517 = vmatpush.msra.mxu0 0.0
    %518 = vmatpush.msra.mxu0 0.0
    %519 = vmatpush.msra.mxu0 0.0
    %520 = vmatpush.msra.mxu0 0.0
    %521 = vmatpush.msra.mxu0 0.0
    %522 = vmatpush.msra.mxu0 0.0
    %523 = vmatpush.msra.mxu0 0.0
    %524 = vmatpush.msra.mxu0 0.0
    %525 = vmatpush.msra.mxu0 0.0
    %526 = vmatpush.msra.mxu0 %v452
    %527 = vmatpush.msra.mxu0 %v451
    %528 = vmatpush.msra.mxu0 %v450
    %529 = vmatpush.msra.mxu0 %v449
    %530 = vmatmul.f32.gmra.mxu0 %v503
    %v531 = vpop.f32.mrf.mxu0
    %v532 = vadd.f32 %v491, %v531
    %533 = vmatmul.f32.gmra.mxu0 %v506
    %v534 = vpop.f32.mrf.mxu0
    %v535 = vadd.f32 %v494, %v534
    %536 = vmatmul.f32.gmra.mxu0 %v509
    %v537 = vpop.f32.mrf.mxu0
    %v538 = vadd.f32 %v497, %v537
    %539 = vmatmul.f32.gmra.mxu0 %v512
    %v540 = vpop.f32.mrf.mxu0
    %v541 = vadd.f32 %v500, %v540
    %542 = vdwg.mxu0
    %v543 = vld [vmem:[#allocation3 + $0x20] sm:$0xff]
    %v544 = vld [vmem:[#allocation3 + $0x28] sm:$0xff]
    %v545 = vld [vmem:[#allocation3 + $0x30] sm:$0xff]
    %v546 = vld [vmem:[#allocation3 + $0x38] sm:$0xff]
    %v547 = vld [vmem:[%s1 + $0xf8] sm:$0xff]
    %v548 = vld [vmem:[%s1 + $0x100] sm:$0xff]
    %v549 = vld [vmem:[%s1 + $0x108] sm:$0xff]
    %v550 = vld [vmem:[%s1 + $0x110] sm:$0xff]
    %v552 = vsel %vm38, %v543, 0
    %v555 = vsel %vm38, %v544, 0
    %v558 = vsel %vm38, %v545, 0
    %v561 = vsel %vm38, %v546, 0
    %563 = vmatpush.msra.mxu0 0.0
    %564 = vmatpush.msra.mxu0 0.0
    %565 = vmatpush.msra.mxu0 0.0
    %566 = vmatpush.msra.mxu0 0.0
    %567 = vmatpush.msra.mxu0 0.0
    %568 = vmatpush.msra.mxu0 0.0
    %569 = vmatpush.msra.mxu0 0.0
    %570 = vmatpush.msra.mxu0 0.0
    %571 = vmatpush.msra.mxu0 0.0
    %572 = vmatpush.msra.mxu0 0.0
    %573 = vmatpush.msra.mxu0 0.0
    %574 = vmatpush.msra.mxu0 0.0
    %575 = vmatpush.msra.mxu0 %v550
    %576 = vmatpush.msra.mxu0 %v549
    %577 = vmatpush.msra.mxu0 %v548
    %578 = vmatpush.msra.mxu0 %v547
    %579 = vmatmul.f32.gmra.mxu0 %v552
    %v580 = vpop.f32.mrf.mxu0
    %v581 = vadd.f32 0.0, %v580
    %582 = vmatmul.f32.gmra.mxu0 %v555
    %v583 = vpop.f32.mrf.mxu0
    %v584 = vadd.f32 0.0, %v583
    %585 = vmatmul.f32.gmra.mxu0 %v558
    %v586 = vpop.f32.mrf.mxu0
    %v587 = vadd.f32 0.0, %v586
    %588 = vmatmul.f32.gmra.mxu0 %v561
    %v589 = vpop.f32.mrf.mxu0
    %v590 = vadd.f32 0.0, %v589
    %591 = vdwg.mxu0
    %v592 = vadd.f32 %v532, %v581
    %v593 = vadd.f32 %v535, %v584
    %v594 = vadd.f32 %v538, %v587
    %v595 = vadd.f32 %v541, %v590
    %v596 = vld [vmem:[%s1 + $0x118] sm:$0x1]
    %v597 = vperm.slane %v596, 0
    %v598 = vadd.f32 %v592, %v597
    %v599 = vadd.f32 %v593, %v597
    %v600 = vadd.f32 %v594, %v597
    %v601 = vadd.f32 %v595, %v597
    %v602 = vmax.f32 %v598, 0.0
    %v603 = vmax.f32 %v599, 0.0
    %v604 = vmax.f32 %v600, 0.0
    %v605 = vmax.f32 %v601, 0.0
    %606 = vst.msk [vmem:[#allocation3 + $0x20] sm:$0xff] %vm38, %v602
    %607 = vst.msk [vmem:[#allocation3 + $0x28] sm:$0xff] %vm38, %v603
    %608 = vst.msk [vmem:[#allocation3 + $0x30] sm:$0xff] %vm38, %v604
    %609 = vst.msk [vmem:[#allocation3 + $0x38] sm:$0xff] %vm38, %v605
    %v610 = vld [vmem:[#allocation3 + $0x18] sm:$0xff]
    %v611 = vld [vmem:[#allocation3 + $0x20] sm:$0xff]
    %v612 = vld [vmem:[#allocation3 + $0x28] sm:$0xff]
    %v613 = vld [vmem:[#allocation3 + $0x30] sm:$0xff]
    %v614 = vld [vmem:[%s1 + $0x120] sm:$0xff]
    %v615 = vld [vmem:[%s1 + $0x128] sm:$0xff]
    %v616 = vld [vmem:[%s1 + $0x130] sm:$0xff]
    %v617 = vld [vmem:[%s1 + $0x138] sm:$0xff]
    %v618 = vld [vmem:[#allocation3 + $0x1c] sm:$0xff]
    %v619 = vld [vmem:[#allocation3 + $0x24] sm:$0xff]
    %v620 = vld [vmem:[#allocation3 + $0x2c] sm:$0xff]
    %v621 = vld [vmem:[#allocation3 + $0x34] sm:$0xff]
    %v622 = vld [vmem:[%s1 + $0x140] sm:$0xff]
    %v623 = vld [vmem:[%s1 + $0x148] sm:$0xff]
    %v624 = vld [vmem:[%s1 + $0x150] sm:$0xff]
    %v625 = vld [vmem:[%s1 + $0x158] sm:$0xff]
    %v627 = vsel %vm38, %v618, 0
    %v630 = vsel %vm38, %v619, 0
    %v633 = vsel %vm38, %v620, 0
    %v636 = vsel %vm38, %v621, 0
    %638 = vmatpush.msra.mxu0 0.0
    %639 = vmatpush.msra.mxu0 0.0
    %640 = vmatpush.msra.mxu0 0.0
    %641 = vmatpush.msra.mxu0 0.0
    %642 = vmatpush.msra.mxu0 0.0
    %643 = vmatpush.msra.mxu0 0.0
    %644 = vmatpush.msra.mxu0 0.0
    %645 = vmatpush.msra.mxu0 0.0
    %646 = vmatpush.msra.mxu0 0.0
    %647 = vmatpush.msra.mxu0 0.0
    %648 = vmatpush.msra.mxu0 0.0
    %649 = vmatpush.msra.mxu0 0.0
    %650 = vmatpush.msra.mxu0 %v625
    %651 = vmatpush.msra.mxu0 %v624
    %652 = vmatpush.msra.mxu0 %v623
    %653 = vmatpush.msra.mxu0 %v622
    %654 = vmatmul.f32.gmra.mxu0 %v627
    %v655 = vpop.f32.mrf.mxu0
    %v656 = vadd.f32 0.0, %v655
    %657 = vmatmul.f32.gmra.mxu0 %v630
    %v658 = vpop.f32.mrf.mxu0
    %v659 = vadd.f32 0.0, %v658
    %660 = vmatmul.f32.gmra.mxu0 %v633
    %v661 = vpop.f32.mrf.mxu0
    %v662 = vadd.f32 0.0, %v661
    %663 = vmatmul.f32.gmra.mxu0 %v636
    %v664 = vpop.f32.mrf.mxu0
    %v665 = vadd.f32 0.0, %v664
    %666 = vdwg.mxu0
    %v668 = vsel %vm38, %v610, 0
    %v671 = vsel %vm38, %v611, 0
    %v674 = vsel %vm38, %v612, 0
    %v677 = vsel %vm38, %v613, 0
    %679 = vmatpush.msra.mxu0 0.0
    %680 = vmatpush.msra.mxu0 0.0
    %681 = vmatpush.msra.mxu0 0.0
    %682 = vmatpush.msra.mxu0 0.0
    %683 = vmatpush.msra.mxu0 0.0
    %684 = vmatpush.msra.mxu0 0.0
    %685 = vmatpush.msra.mxu0 0.0
    %686 = vmatpush.msra.mxu0 0.0
    %687 = vmatpush.msra.mxu0 0.0
    %688 = vmatpush.msra.mxu0 0.0
    %689 = vmatpush.msra.mxu0 0.0
    %690 = vmatpush.msra.mxu0 0.0
    %691 = vmatpush.msra.mxu0 %v617
    %692 = vmatpush.msra.mxu0 %v616
    %693 = vmatpush.msra.mxu0 %v615
    %694 = vmatpush.msra.mxu0 %v614
    %695 = vmatmul.f32.gmra.mxu0 %v668
    %v696 = vpop.f32.mrf.mxu0
    %v697 = vadd.f32 %v656, %v696
    %698 = vmatmul.f32.gmra.mxu0 %v671
    %v699 = vpop.f32.mrf.mxu0
    %v700 = vadd.f32 %v659, %v699
    %701 = vmatmul.f32.gmra.mxu0 %v674
    %v702 = vpop.f32.mrf.mxu0
    %v703 = vadd.f32 %v662, %v702
    %704 = vmatmul.f32.gmra.mxu0 %v677
    %v705 = vpop.f32.mrf.mxu0
    %v706 = vadd.f32 %v665, %v705
    %707 = vdwg.mxu0
    %v708 = vld [vmem:[#allocation3 + $0x20] sm:$0xff]
    %v709 = vld [vmem:[#allocation3 + $0x28] sm:$0xff]
    %v710 = vld [vmem:[#allocation3 + $0x30] sm:$0xff]
    %v711 = vld [vmem:[#allocation3 + $0x38] sm:$0xff]
    %v712 = vld [vmem:[%s1 + $0x160] sm:$0xff]
    %v713 = vld [vmem:[%s1 + $0x168] sm:$0xff]
    %v714 = vld [vmem:[%s1 + $0x170] sm:$0xff]
    %v715 = vld [vmem:[%s1 + $0x178] sm:$0xff]
    %v717 = vsel %vm38, %v708, 0
    %v720 = vsel %vm38, %v709, 0
    %v723 = vsel %vm38, %v710, 0
    %v726 = vsel %vm38, %v711, 0
    %728 = vmatpush.msra.mxu0 0.0
    %729 = vmatpush.msra.mxu0 0.0
    %730 = vmatpush.msra.mxu0 0.0
    %731 = vmatpush.msra.mxu0 0.0
    %732 = vmatpush.msra.mxu0 0.0
    %733 = vmatpush.msra.mxu0 0.0
    %734 = vmatpush.msra.mxu0 0.0
    %735 = vmatpush.msra.mxu0 0.0
    %736 = vmatpush.msra.mxu0 0.0
    %737 = vmatpush.msra.mxu0 0.0
    %738 = vmatpush.msra.mxu0 0.0
    %739 = vmatpush.msra.mxu0 0.0
    %740 = vmatpush.msra.mxu0 %v715
    %741 = vmatpush.msra.mxu0 %v714
    %742 = vmatpush.msra.mxu0 %v713
    %743 = vmatpush.msra.mxu0 %v712
    %744 = vmatmul.f32.gmra.mxu0 %v717
    %v745 = vpop.f32.mrf.mxu0
    %v746 = vadd.f32 0.0, %v745
    %747 = vmatmul.f32.gmra.mxu0 %v720
    %v748 = vpop.f32.mrf.mxu0
    %v749 = vadd.f32 0.0, %v748
    %750 = vmatmul.f32.gmra.mxu0 %v723
    %v751 = vpop.f32.mrf.mxu0
    %v752 = vadd.f32 0.0, %v751
    %753 = vmatmul.f32.gmra.mxu0 %v726
    %v754 = vpop.f32.mrf.mxu0
    %v755 = vadd.f32 0.0, %v754
    %756 = vdwg.mxu0
    %v757 = vadd.f32 %v697, %v746
    %v758 = vadd.f32 %v700, %v749
    %v759 = vadd.f32 %v703, %v752
    %v760 = vadd.f32 %v706, %v755
    %v761 = vld [vmem:[%s1 + $0x180] sm:$0x1]
    %v762 = vperm.slane %v761, 0
    %v763 = vadd.f32 %v757, %v762
    %v764 = vadd.f32 %v758, %v762
    %v765 = vadd.f32 %v759, %v762
    %v766 = vadd.f32 %v760, %v762
    %v767 = vmax.f32 %v763, 0.0
    %v768 = vmax.f32 %v764, 0.0
    %v769 = vmax.f32 %v765, 0.0
    %v770 = vmax.f32 %v766, 0.0
    %v771 = vadd.f32 %v767, %v437
    %v772 = vadd.f32 %v768, %v438
    %v773 = vadd.f32 %v769, %v439
    %v774 = vadd.f32 %v770, %v440
    %v775 = vmax.f32 %v771, 0.0
    %v776 = vmax.f32 %v772, 0.0
    %v777 = vmax.f32 %v773, 0.0
    %v778 = vmax.f32 %v774, 0.0
    %779 = vst.msk [vmem:[#allocation3 + $0x20] sm:$0xff] %vm38, %v775
    %780 = vst.msk [vmem:[#allocation3 + $0x28] sm:$0xff] %vm38, %v776
    %781 = vst.msk [vmem:[#allocation3 + $0x30] sm:$0xff] %vm38, %v777
    %782 = vst.msk [vmem:[#allocation3 + $0x38] sm:$0xff] %vm38, %v778
    %v783 = vld [vmem:[#allocation3 + $0x10] sm:$0xff]
    %v784 = vld [vmem:[#allocation3 + $0x18] sm:$0xff]
    %v785 = vld [vmem:[#allocation3 + $0x20] sm:$0xff]
    %v786 = vld [vmem:[#allocation3 + $0x28] sm:$0xff]
    %v787 = vld [vmem:[%s1 + $0x188] sm:$0xff]
    %v788 = vld [vmem:[%s1 + $0x190] sm:$0xff]
    %v789 = vld [vmem:[%s1 + $0x198] sm:$0xff]
    %v790 = vld [vmem:[%s1 + $0x1a0] sm:$0xff]
    %v791 = vld [vmem:[#allocation3 + $0x30] sm:$0xff]
    %v792 = vld [vmem:[%s1 + $0x1a8] sm:$0xff]
    %v793 = vld [vmem:[%s1 + $0x1b0] sm:$0xff]
    %v794 = vld [vmem:[%s1 + $0x1b8] sm:$0xff]
    %v795 = vld [vmem:[%s1 + $0x1c0] sm:$0xff]
    %v797 = vsel %vm38, %v784, 0
    %v800 = vsel %vm38, %v785, 0
    %v803 = vsel %vm38, %v786, 0
    %v806 = vsel %vm38, %v791, 0
    %808 = vmatpush.msra.mxu0 0.0
    %809 = vmatpush.msra.mxu0 0.0
    %810 = vmatpush.msra.mxu0 0.0
    %811 = vmatpush.msra.mxu0 0.0
    %812 = vmatpush.msra.mxu0 0.0
    %813 = vmatpush.msra.mxu0 0.0
    %814 = vmatpush.msra.mxu0 0.0
    %815 = vmatpush.msra.mxu0 0.0
    %816 = vmatpush.msra.mxu0 0.0
    %817 = vmatpush.msra.mxu0 0.0
    %818 = vmatpush.msra.mxu0 0.0
    %819 = vmatpush.msra.mxu0 0.0
    %820 = vmatpush.msra.mxu0 %v795
    %821 = vmatpush.msra.mxu0 %v794
    %822 = vmatpush.msra.mxu0 %v793
    %823 = vmatpush.msra.mxu0 %v792
    %824 = vmatmul.f32.gmra.mxu0 %v797
    %v825 = vpop.f32.mrf.mxu0
    %v826 = vadd.f32 0.0, %v825
    %827 = vmatmul.f32.gmra.mxu0 %v800
    %v828 = vpop.f32.mrf.mxu0
    %v829 = vadd.f32 0.0, %v828
    %830 = vmatmul.f32.gmra.mxu0 %v803
    %v831 = vpop.f32.mrf.mxu0
    %v832 = vadd.f32 0.0, %v831
    %833 = vmatmul.f32.gmra.mxu0 %v806
    %v834 = vpop.f32.mrf.mxu0
    %v835 = vadd.f32 0.0, %v834
    %836 = vdwg.mxu0
    %v838 = vsel %vm38, %v783, 0
    %840 = vmatpush.msra.mxu0 0.0
    %841 = vmatpush.msra.mxu0 0.0
    %842 = vmatpush.msra.mxu0 0.0
    %843 = vmatpush.msra.mxu0 0.0
    %844 = vmatpush.msra.mxu0 0.0
    %845 = vmatpush.msra.mxu0 0.0
    %846 = vmatpush.msra.mxu0 0.0
    %847 = vmatpush.msra.mxu0 0.0
    %848 = vmatpush.msra.mxu0 0.0
    %849 = vmatpush.msra.mxu0 0.0
    %850 = vmatpush.msra.mxu0 0.0
    %851 = vmatpush.msra.mxu0 0.0
    %852 = vmatpush.msra.mxu0 %v790
    %853 = vmatpush.msra.mxu0 %v789
    %854 = vmatpush.msra.mxu0 %v788
    %855 = vmatpush.msra.mxu0 %v787
    %856 = vmatmul.f32.gmra.mxu0 %v838
    %v857 = vpop.f32.mrf.mxu0
    %v858 = vadd.f32 %v826, %v857
    %859 = vmatmul.f32.gmra.mxu0 %v797
    %v860 = vpop.f32.mrf.mxu0
    %v861 = vadd.f32 %v829, %v860
    %862 = vmatmul.f32.gmra.mxu0 %v800
    %v863 = vpop.f32.mrf.mxu0
    %v864 = vadd.f32 %v832, %v863
    %865 = vmatmul.f32.gmra.mxu0 %v803
    %v866 = vpop.f32.mrf.mxu0
    %v867 = vadd.f32 %v835, %v866
    %868 = vdwg.mxu0
    %v869 = vld [vmem:[#allocation3 + $0x20] sm:$0xff]
    %v870 = vld [vmem:[#allocation3 + $0x28] sm:$0xff]
    %v871 = vld [vmem:[#allocation3 + $0x30] sm:$0xff]
    %v872 = vld [vmem:[#allocation3 + $0x38] sm:$0xff]
    %v873 = vld [vmem:[%s1 + $0x1c8] sm:$0xff]
    %v874 = vld [vmem:[%s1 + $0x1d0] sm:$0xff]
    %v875 = vld [vmem:[%s1 + $0x1d8] sm:$0xff]
    %v876 = vld [vmem:[%s1 + $0x1e0] sm:$0xff]
    %v878 = vsel %vm38, %v869, 0
    %v881 = vsel %vm38, %v870, 0
    %v884 = vsel %vm38, %v871, 0
    %v887 = vsel %vm38, %v872, 0
    %889 = vmatpush.msra.mxu0 0.0
    %890 = vmatpush.msra.mxu0 0.0
    %891 = vmatpush.msra.mxu0 0.0
    %892 = vmatpush.msra.mxu0 0.0
    %893 = vmatpush.msra.mxu0 0.0
    %894 = vmatpush.msra.mxu0 0.0
    %895 = vmatpush.msra.mxu0 0.0
    %896 = vmatpush.msra.mxu0 0.0
    %897 = vmatpush.msra.mxu0 0.0
    %898 = vmatpush.msra.mxu0 0.0
    %899 = vmatpush.msra.mxu0 0.0
    %900 = vmatpush.msra.mxu0 0.0
    %901 = vmatpush.msra.mxu0 %v876
    %902 = vmatpush.msra.mxu0 %v875
    %903 = vmatpush.msra.mxu0 %v874
    %904 = vmatpush.msra.mxu0 %v873
    %905 = vmatmul.f32.gmra.mxu0 %v878
    %v906 = vpop.f32.mrf.mxu0
    %v907 = vadd.f32 0.0, %v906
    %908 = vmatmul.f32.gmra.mxu0 %v881
    %v909 = vpop.f32.mrf.mxu0
    %v910 = vadd.f32 0.0, %v909
    %911 = vmatmul.f32.gmra.mxu0 %v884
    %v912 = vpop.f32.mrf.mxu0
    %v913 = vadd.f32 0.0, %v912
    %914 = vmatmul.f32.gmra.mxu0 %v887
    %v915 = vpop.f32.mrf.mxu0
    %v916 = vadd.f32 0.0, %v915
    %917 = vdwg.mxu0
    %v918 = vadd.f32 %v858, %v907
    %v919 = vadd.f32 %v861, %v910
    %v920 = vadd.f32 %v864, %v913
    %v921 = vadd.f32 %v867, %v916
    %v922 = vld [vmem:[%s1 + $0x1e8] sm:$0x1]
    %v923 = vperm.slane %v922, 0
    %v924 = vadd.f32 %v918, %v923
    %v925 = vadd.f32 %v919, %v923
    %v926 = vadd.f32 %v920, %v923
    %v927 = vadd.f32 %v921, %v923
    %v928 = vmax.f32 %v924, 0.0
    %v929 = vmax.f32 %v925, 0.0
    %v930 = vmax.f32 %v926, 0.0
    %v931 = vmax.f32 %v927, 0.0
    %932 = vst.msk [vmem:[#allocation3 + $0x20] sm:$0xff] %vm38, %v928
    %933 = vst.msk [vmem:[#allocation3 + $0x28] sm:$0xff] %vm38, %v929
    %934 = vst.msk [vmem:[#allocation3 + $0x30] sm:$0xff] %vm38, %v930
    %935 = vst.msk [vmem:[#allocation3 + $0x38] sm:$0xff] %vm38, %v931
    %v936 = vld [vmem:[#allocation3 + $0x10] sm:$0xff]
    %v937 = vld [vmem:[#allocation3 + $0x18] sm:$0xff]
    %v938 = vld [vmem:[#allocation3 + $0x20] sm:$0xff]
    %v939 = vld [vmem:[#allocation3 + $0x28] sm:$0xff]
    %v940 = vld [vmem:[%s1 + $0x1f0] sm:$0xff]
    %v941 = vld [vmem:[%s1 + $0x1f8] sm:$0xff]
    %v942 = vld [vmem:[%s1 + $0x200] sm:$0xff]
    %v943 = vld [vmem:[%s1 + $0x208] sm:$0xff]
    %v944 = vld [vmem:[#allocation3 + $0x30] sm:$0xff]
    %v945 = vld [vmem:[%s1 + $0x210] sm:$0xff]
    %v946 = vld [vmem:[%s1 + $0x218] sm:$0xff]
    %v947 = vld [vmem:[%s1 + $0x220] sm:$0xff]
    %v948 = vld [vmem:[%s1 + $0x228] sm:$0xff]
    %v950 = vsel %vm38, %v937, 0
    %v953 = vsel %vm38, %v938, 0
    %v956 = vsel %vm38, %v939, 0
    %v959 = vsel %vm38, %v944, 0
    %961 = vmatpush.msra.mxu0 0.0
    %962 = vmatpush.msra.mxu0 0.0
    %963 = vmatpush.msra.mxu0 0.0
    %964 = vmatpush.msra.mxu0 0.0
    %965 = vmatpush.msra.mxu0 0.0
    %966 = vmatpush.msra.mxu0 0.0
    %967 = vmatpush.msra.mxu0 0.0
    %968 = vmatpush.msra.mxu0 0.0
    %969 = vmatpush.msra.mxu0 0.0
    %970 = vmatpush.msra.mxu0 0.0
    %971 = vmatpush.msra.mxu0 0.0
    %972 = vmatpush.msra.mxu0 0.0
    %973 = vmatpush.msra.mxu0 %v948
    %974 = vmatpush.msra.mxu0 %v947
    %975 = vmatpush.msra.mxu0 %v946
    %976 = vmatpush.msra.mxu0 %v945
    %977 = vmatmul.f32.gmra.mxu0 %v950
    %v978 = vpop.f32.mrf.mxu0
    %v979 = vadd.f32 0.0, %v978
    %980 = vmatmul.f32.gmra.mxu0 %v953
    %v981 = vpop.f32.mrf.mxu0
    %v982 = vadd.f32 0.0, %v981
    %983 = vmatmul.f32.gmra.mxu0 %v956
    %v984 = vpop.f32.mrf.mxu0
    %v985 = vadd.f32 0.0, %v984
    %986 = vmatmul.f32.gmra.mxu0 %v959
    %v987 = vpop.f32.mrf.mxu0
    %v988 = vadd.f32 0.0, %v987
    %989 = vdwg.mxu0
    %v991 = vsel %vm38, %v936, 0
    %993 = vmatpush.msra.mxu0 0.0
    %994 = vmatpush.msra.mxu0 0.0
    %995 = vmatpush.msra.mxu0 0.0
    %996 = vmatpush.msra.mxu0 0.0
    %997 = vmatpush.msra.mxu0 0.0
    %998 = vmatpush.msra.mxu0 0.0
    %999 = vmatpush.msra.mxu0 0.0
    %1000 = vmatpush.msra.mxu0 0.0
    %1001 = vmatpush.msra.mxu0 0.0
    %1002 = vmatpush.msra.mxu0 0.0
    %1003 = vmatpush.msra.mxu0 0.0
    %1004 = vmatpush.msra.mxu0 0.0
    %1005 = vmatpush.msra.mxu0 %v943
    %1006 = vmatpush.msra.mxu0 %v942
    %1007 = vmatpush.msra.mxu0 %v941
    %1008 = vmatpush.msra.mxu0 %v940
    %1009 = vmatmul.f32.gmra.mxu0 %v991
    %v1010 = vpop.f32.mrf.mxu0
    %v1011 = vadd.f32 %v979, %v1010
    %1012 = vmatmul.f32.gmra.mxu0 %v950
    %v1013 = vpop.f32.mrf.mxu0
    %v1014 = vadd.f32 %v982, %v1013
    %1015 = vmatmul.f32.gmra.mxu0 %v953
    %v1016 = vpop.f32.mrf.mxu0
    %v1017 = vadd.f32 %v985, %v1016
    %1018 = vmatmul.f32.gmra.mxu0 %v956
    %v1019 = vpop.f32.mrf.mxu0
    %v1020 = vadd.f32 %v988, %v1019
    %1021 = vdwg.mxu0
    %v1022 = vld [vmem:[#allocation3 + $0x20] sm:$0xff]
    %v1023 = vld [vmem:[#allocation3 + $0x28] sm:$0xff]
    %v1024 = vld [vmem:[#allocation3 + $0x30] sm:$0xff]
    %v1025 = vld [vmem:[#allocation3 + $0x38] sm:$0xff]
    %v1026 = vld [vmem:[%s1 + $0x230] sm:$0xff]
    %v1027 = vld [vmem:[%s1 + $0x238] sm:$0xff]
    %v1028 = vld [vmem:[%s1 + $0x240] sm:$0xff]
    %v1029 = vld [vmem:[%s1 + $0x248] sm:$0xff]
    %v1031 = vsel %vm38, %v1022, 0
    %v1034 = vsel %vm38, %v1023, 0
    %v1037 = vsel %vm38, %v1024, 0
    %v1040 = vsel %vm38, %v1025, 0
    %1042 = vmatpush.msra.mxu0 0.0
    %1043 = vmatpush.msra.mxu0 0.0
    %1044 = vmatpush.msra.mxu0 0.0
    %1045 = vmatpush.msra.mxu0 0.0
    %1046 = vmatpush.msra.mxu0 0.0
    %1047 = vmatpush.msra.mxu0 0.0
    %1048 = vmatpush.msra.mxu0 0.0
    %1049 = vmatpush.msra.mxu0 0.0
    %1050 = vmatpush.msra.mxu0 0.0
    %1051 = vmatpush.msra.mxu0 0.0
    %1052 = vmatpush.msra.mxu0 0.0
    %1053 = vmatpush.msra.mxu0 0.0
    %1054 = vmatpush.msra.mxu0 %v1029
    %1055 = vmatpush.msra.mxu0 %v1028
    %1056 = vmatpush.msra.mxu0 %v1027
    %1057 = vmatpush.msra.mxu0 %v1026
    %1058 = vmatmul.f32.gmra.mxu0 %v1031
    %v1059 = vpop.f32.mrf.mxu0
    %v1060 = vadd.f32 0.0, %v1059
    %1061 = vmatmul.f32.gmra.mxu0 %v1034
    %v1062 = vpop.f32.mrf.mxu0
    %v1063 = vadd.f32 0.0, %v1062
    %1064 = vmatmul.f32.gmra.mxu0 %v1037
    %v1065 = vpop.f32.mrf.mxu0
    %v1066 = vadd.f32 0.0, %v1065
    %1067 = vmatmul.f32.gmra.mxu0 %v1040
    %v1068 = vpop.f32.mrf.mxu0
    %v1069 = vadd.f32 0.0, %v1068
    %1070 = vdwg.mxu0
    %v1071 = vadd.f32 %v1011, %v1060
    %v1072 = vadd.f32 %v1014, %v1063
    %v1073 = vadd.f32 %v1017, %v1066
    %v1074 = vadd.f32 %v1020, %v1069
    %v1075 = vld [vmem:[%s1 + $0x250] sm:$0x1]
    %v1076 = vperm.slane %v1075, 0
    %v1077 = vadd.f32 %v1071, %v1076
    %v1078 = vadd.f32 %v1072, %v1076
    %v1079 = vadd.f32 %v1073, %v1076
    %v1080 = vadd.f32 %v1074, %v1076
    %v1081 = vmax.f32 %v1077, 0.0
    %v1082 = vmax.f32 %v1078, 0.0
    %v1083 = vmax.f32 %v1079, 0.0
    %v1084 = vmax.f32 %v1080, 0.0
    %v1085 = vadd.f32 %v1081, %v775
    %v1086 = vadd.f32 %v1082, %v776
    %v1087 = vadd.f32 %v1083, %v777
    %v1088 = vadd.f32 %v1084, %v778
    %v1089 = vmax.f32 %v1085, 0.0
    %v1090 = vmax.f32 %v1086, 0.0
    %v1091 = vmax.f32 %v1087, 0.0
    %v1092 = vmax.f32 %v1088, 0.0
    %1093 = vst.msk [vmem:[#allocation3 + $0x20] sm:$0xff] %vm38, %v1089
    %1094 = vst.msk [vmem:[#allocation3 + $0x28] sm:$0xff] %vm38, %v1090
    %1095 = vst.msk [vmem:[#allocation3 + $0x30] sm:$0xff] %vm38, %v1091
    %1096 = vst.msk [vmem:[#allocation3 + $0x38] sm:$0xff] %vm38, %v1092
    %v1097 = vld [vmem:[#allocation3 + $0x10] sm:$0xff]
    %v1098 = vld [vmem:[#allocation3 + $0x18] sm:$0xff]
    %v1099 = vld [vmem:[#allocation3 + $0x20] sm:$0xff]
    %v1100 = vld [vmem:[#allocation3 + $0x28] sm:$0xff]
    %v1101 = vld [vmem:[%s1 + $0x278] sm:$0xff]
    %v1102 = vld [vmem:[%s1 + $0x280] sm:$0xff]
    %v1103 = vld [vmem:[%s1 + $0x288] sm:$0xff]
    %v1104 = vld [vmem:[%s1 + $0x290] sm:$0xff]
    %v1105 = vld [vmem:[#allocation3 + $0x30] sm:$0xff]
    %v1106 = vld [vmem:[#allocation3 + $0x38] sm:$0xff]
    %v1107 = vld [vmem:[%s1 + $0x298] sm:$0xff]
    %v1108 = vld [vmem:[%s1 + $0x2a0] sm:$0xff]
    %v1109 = vld [vmem:[%s1 + $0x2a8] sm:$0xff]
    %v1110 = vld [vmem:[%s1 + $0x2b0] sm:$0xff]
    %v1112 = vsel %vm38, %v1099, 0
    %v1115 = vsel %vm38, %v1100, 0
    %v1118 = vsel %vm38, %v1105, 0
    %v1121 = vsel %vm38, %v1106, 0
    %1123 = vmatpush.msra.mxu0 0.0
    %1124 = vmatpush.msra.mxu0 0.0
    %1125 = vmatpush.msra.mxu0 0.0
    %1126 = vmatpush.msra.mxu0 0.0
    %1127 = vmatpush.msra.mxu0 0.0
    %1128 = vmatpush.msra.mxu0 0.0
    %1129 = vmatpush.msra.mxu0 0.0
    %1130 = vmatpush.msra.mxu0 0.0
    %1131 = vmatpush.msra.mxu0 0.0
    %1132 = vmatpush.msra.mxu0 0.0
    %1133 = vmatpush.msra.mxu0 0.0
    %1134 = vmatpush.msra.mxu0 0.0
    %1135 = vmatpush.msra.mxu0 %v1110
    %1136 = vmatpush.msra.mxu0 %v1109
    %1137 = vmatpush.msra.mxu0 %v1108
    %1138 = vmatpush.msra.mxu0 %v1107
    %1139 = vmatmul.f32.gmra.mxu0 %v1112
    %v1140 = vpop.f32.mrf.mxu0
    %v1141 = vadd.f32 0.0, %v1140
    %1142 = vmatmul.f32.gmra.mxu0 %v1115
    %v1143 = vpop.f32.mrf.mxu0
    %v1144 = vadd.f32 0.0, %v1143
    %1145 = vmatmul.f32.gmra.mxu0 %v1118
    %v1146 = vpop.f32.mrf.mxu0
    %v1147 = vadd.f32 0.0, %v1146
    %1148 = vmatmul.f32.gmra.mxu0 %v1121
    %v1149 = vpop.f32.mrf.mxu0
    %v1150 = vadd.f32 0.0, %v1149
    %1151 = vdwg.mxu0
    %v1153 = vsel %vm38, %v1097, 0
    %v1156 = vsel %vm38, %v1098, 0
    %1158 = vmatpush.msra.mxu0 0.0
    %1159 = vmatpush.msra.mxu0 0.0
    %1160 = vmatpush.msra.mxu0 0.0
    %1161 = vmatpush.msra.mxu0 0.0
    %1162 = vmatpush.msra.mxu0 0.0
    %1163 = vmatpush.msra.mxu0 0.0
    %1164 = vmatpush.msra.mxu0 0.0
    %1165 = vmatpush.msra.mxu0 0.0
    %1166 = vmatpush.msra.mxu0 0.0
    %1167 = vmatpush.msra.mxu0 0.0
    %1168 = vmatpush.msra.mxu0 0.0
    %1169 = vmatpush.msra.mxu0 0.0
    %1170 = vmatpush.msra.mxu0 %v1104
    %1171 = vmatpush.msra.mxu0 %v1103
    %1172 = vmatpush.msra.mxu0 %v1102
    %1173 = vmatpush.msra.mxu0 %v1101
    %1174 = vmatmul.f32.gmra.mxu0 %v1153
    %v1175 = vpop.f32.mrf.mxu0
    %v1176 = vadd.f32 %v1141, %v1175
    %1177 = vmatmul.f32.gmra.mxu0 %v1156
    %v1178 = vpop.f32.mrf.mxu0
    %v1179 = vadd.f32 %v1144, %v1178
    %1180 = vmatmul.f32.gmra.mxu0 %v1112
    %v1181 = vpop.f32.mrf.mxu0
    %v1182 = vadd.f32 %v1147, %v1181
    %1183 = vmatmul.f32.gmra.mxu0 %v1115
    %v1184 = vpop.f32.mrf.mxu0
    %v1185 = vadd.f32 %v1150, %v1184
    %1186 = vdwg.mxu0
    %v1187 = vld [vmem:[%s1 + $0x2b8] sm:$0x1]
    %v1188 = vperm.slane %v1187, 0
    %v1189 = vadd.f32 %v1176, %v1188
    %v1190 = vadd.f32 %v1179, %v1188
    %v1191 = vadd.f32 %v1182, %v1188
    %v1192 = vadd.f32 %v1185, %v1188
    %v1193 = vmax.f32 %v1189, 0.0
    %v1194 = vmax.f32 %v1190, 0.0
    %v1195 = vmax.f32 %v1191, 0.0
    %v1196 = vmax.f32 %v1192, 0.0
    %1197 = vst.msk [vmem:[#allocation3 + $0x20] sm:$0xff] %vm38, %v1193
    %1198 = vst.msk [vmem:[#allocation3 + $0x28] sm:$0xff] %vm38, %v1194
    %1199 = vst.msk [vmem:[#allocation3 + $0x30] sm:$0xff] %vm38, %v1195
    %1200 = vst.msk [vmem:[#allocation3 + $0x38] sm:$0xff] %vm38, %v1196
    %v1201 = vld [vmem:[#allocation3 + $0x10] sm:$0xff]
    %v1202 = vld [vmem:[#allocation3 + $0x18] sm:$0xff]
    %v1203 = vld [vmem:[#allocation3 + $0x20] sm:$0xff]
    %v1204 = vld [vmem:[#allocation3 + $0x28] sm:$0xff]
    %v1205 = vld [vmem:[%s1 + $0x2e0] sm:$0xff]
    %v1206 = vld [vmem:[%s1 + $0x2e8] sm:$0xff]
    %v1207 = vld [vmem:[%s1 + $0x2f0] sm:$0xff]
    %v1208 = vld [vmem:[%s1 + $0x2f8] sm:$0xff]
    %v1209 = vld [vmem:[#allocation3 + $0x30] sm:$0xff]
    %v1210 = vld [vmem:[#allocation3 + $0x38] sm:$0xff]
    %v1211 = vld [vmem:[%s1 + $0x300] sm:$0xff]
    %v1212 = vld [vmem:[%s1 + $0x308] sm:$0xff]
    %v1213 = vld [vmem:[%s1 + $0x310] sm:$0xff]
    %v1214 = vld [vmem:[%s1 + $0x318] sm:$0xff]
    %v1216 = vsel %vm38, %v1203, 0
    %v1219 = vsel %vm38, %v1204, 0
    %v1222 = vsel %vm38, %v1209, 0
    %v1225 = vsel %vm38, %v1210, 0
    %1227 = vmatpush.msra.mxu0 0.0
    %1228 = vmatpush.msra.mxu0 0.0
    %1229 = vmatpush.msra.mxu0 0.0
    %1230 = vmatpush.msra.mxu0 0.0
    %1231 = vmatpush.msra.mxu0 0.0
    %1232 = vmatpush.msra.mxu0 0.0
    %1233 = vmatpush.msra.mxu0 0.0
    %1234 = vmatpush.msra.mxu0 0.0
    %1235 = vmatpush.msra.mxu0 0.0
    %1236 = vmatpush.msra.mxu0 0.0
    %1237 = vmatpush.msra.mxu0 0.0
    %1238 = vmatpush.msra.mxu0 0.0
    %1239 = vmatpush.msra.mxu0 %v1214
    %1240 = vmatpush.msra.mxu0 %v1213
    %1241 = vmatpush.msra.mxu0 %v1212
    %1242 = vmatpush.msra.mxu0 %v1211
    %1243 = vmatmul.f32.gmra.mxu0 %v1216
    %v1244 = vpop.f32.mrf.mxu0
    %v1245 = vadd.f32 0.0, %v1244
    %1246 = vmatmul.f32.gmra.mxu0 %v1219
    %v1247 = vpop.f32.mrf.mxu0
    %v1248 = vadd.f32 0.0, %v1247
    %1249 = vmatmul.f32.gmra.mxu0 %v1222
    %v1250 = vpop.f32.mrf.mxu0
    %v1251 = vadd.f32 0.0, %v1250
    %1252 = vmatmul.f32.gmra.mxu0 %v1225
    %v1253 = vpop.f32.mrf.mxu0
    %v1254 = vadd.f32 0.0, %v1253
    %1255 = vdwg.mxu0
    %v1257 = vsel %vm38, %v1201, 0
    %v1260 = vsel %vm38, %v1202, 0
    %1262 = vmatpush.msra.mxu0 0.0
    %1263 = vmatpush.msra.mxu0 0.0
    %1264 = vmatpush.msra.mxu0 0.0
    %1265 = vmatpush.msra.mxu0 0.0
    %1266 = vmatpush.msra.mxu0 0.0
    %1267 = vmatpush.msra.mxu0 0.0
    %1268 = vmatpush.msra.mxu0 0.0
    %1269 = vmatpush.msra.mxu0 0.0
    %1270 = vmatpush.msra.mxu0 0.0
    %1271 = vmatpush.msra.mxu0 0.0
    %1272 = vmatpush.msra.mxu0 0.0
    %1273 = vmatpush.msra.mxu0 0.0
    %1274 = vmatpush.msra.mxu0 %v1208
    %1275 = vmatpush.msra.mxu0 %v1207
    %1276 = vmatpush.msra.mxu0 %v1206
    %1277 = vmatpush.msra.mxu0 %v1205
    %1278 = vmatmul.f32.gmra.mxu0 %v1257
    %v1279 = vpop.f32.mrf.mxu0
    %v1280 = vadd.f32 %v1245, %v1279
    %1281 = vmatmul.f32.gmra.mxu0 %v1260
    %v1282 = vpop.f32.mrf.mxu0
    %v1283 = vadd.f32 %v1248, %v1282
    %1284 = vmatmul.f32.gmra.mxu0 %v1216
    %v1285 = vpop.f32.mrf.mxu0
    %v1286 = vadd.f32 %v1251, %v1285
    %1287 = vmatmul.f32.gmra.mxu0 %v1219
    %v1288 = vpop.f32.mrf.mxu0
    %v1289 = vadd.f32 %v1254, %v1288
    %1290 = vdwg.mxu0
    %v1291 = vld [vmem:[%s1 + $0x320] sm:$0x1]
    %v1292 = vperm.slane %v1291, 0
    %v1293 = vadd.f32 %v1280, %v1292
    %v1294 = vadd.f32 %v1283, %v1292
    %v1295 = vadd.f32 %v1286, %v1292
    %v1296 = vadd.f32 %v1289, %v1292
    %v1297 = vmax.f32 %v1293, 0.0
    %v1298 = vmax.f32 %v1294, 0.0
    %v1299 = vmax.f32 %v1295, 0.0
    %v1300 = vmax.f32 %v1296, 0.0
    %v1301 = vadd.f32 %v1297, %v1089
    %v1302 = vadd.f32 %v1298, %v1090
    %v1303 = vadd.f32 %v1299, %v1091
    %v1304 = vadd.f32 %v1300, %v1092
    %v1305 = vmax.f32 %v1301, 0.0
    %v1306 = vmax.f32 %v1302, 0.0
    %v1307 = vmax.f32 %v1303, 0.0
    %v1308 = vmax.f32 %v1304, 0.0
    %1309 = vst.msk [vmem:[#allocation2 + $0x20] sm:$0xff] %vm29, %v47
    %1310 = vst.msk [vmem:[#allocation2 + $0x28] sm:$0xff] %vm29, %v48
    %1311 = vst.msk [vmem:[#allocation2 + $0x30] sm:$0xff] %vm29, %v49
    %1312 = vst.msk [vmem:[#allocation2 + $0x38] sm:$0xff] %vm29, %v50
    %v1313 = vld [vmem:[#allocation2 + $0x1c] sm:$0xff]
    %v1314 = vld [vmem:[#allocation2 + $0x24] sm:$0xff]
    %v1315 = vld [vmem:[#allocation2 + $0x2c] sm:$0xff]
    %v1316 = vld [vmem:[#allocation2 + $0x34] sm:$0xff]
    %v1317 = vld [vmem:[%s2] sm:$0xff]
    %v1318 = vld [vmem:[%s2 + $0x8] sm:$0xf]
    %v1319 = vld [vmem:[#allocation2 + $0x1e] sm:$0xff]
    %v1320 = vld [vmem:[#allocation2 + $0x26] sm:$0xff]
    %v1321 = vld [vmem:[#allocation2 + $0x2e] sm:$0xff]
    %v1322 = vld [vmem:[#allocation2 + $0x36] sm:$0xff]
    %v1323 = vld [vmem:[%s2 + $0x10] sm:$0xff]
    %v1324 = vld [vmem:[%s2 + $0x18] sm:$0xf]
    %v1326 = vsel %vm29, %v1319, 0
    %v1329 = vsel %vm29, %v1320, 0
    %v1332 = vsel %vm29, %v1321, 0
    %v1335 = vsel %vm29, %v1322, 0
    %v1338 = vsel %vm79, %v1324, 0
    %1340 = vmatpush.msra.mxu0 0.0
    %1341 = vmatpush.msra.mxu0 0.0
    %1342 = vmatpush.msra.mxu0 0.0
    %1343 = vmatpush.msra.mxu0 0.0
    %1344 = vmatpush.msra.mxu0 0.0
    %1345 = vmatpush.msra.mxu0 0.0
    %1346 = vmatpush.msra.mxu0 0.0
    %1347 = vmatpush.msra.mxu0 0.0
    %1348 = vmatpush.msra.mxu0 0.0
    %1349 = vmatpush.msra.mxu0 0.0
    %1350 = vmatpush.msra.mxu0 0.0
    %1351 = vmatpush.msra.mxu0 0.0
    %1352 = vmatpush.msra.mxu0 0.0
    %1353 = vmatpush.msra.mxu0 0.0
    %1354 = vmatpush.msra.mxu0 %v1338
    %1355 = vmatpush.msra.mxu0 %v1323
    %1356 = vmatmul.f32.gmra.mxu0 %v1326
    %v1357 = vpop.f32.mrf.mxu0
    %v1358 = vadd.f32 0.0, %v1357
    %1359 = vmatmul.f32.gmra.mxu0 %v1329
    %v1360 = vpop.f32.mrf.mxu0
    %v1361 = vadd.f32 0.0, %v1360
    %1362 = vmatmul.f32.gmra.mxu0 %v1332
    %v1363 = vpop.f32.mrf.mxu0
    %v1364 = vadd.f32 0.0, %v1363
    %1365 = vmatmul.f32.gmra.mxu0 %v1335
    %v1366 = vpop.f32.mrf.mxu0
    %v1367 = vadd.f32 0.0, %v1366
    %1368 = vdwg.mxu0
    %v1370 = vsel %vm29, %v1313, 0
    %v1373 = vsel %vm29, %v1314, 0
    %v1376 = vsel %vm29, %v1315, 0
    %v1379 = vsel %vm29, %v1316, 0
    %v1382 = vsel %vm79, %v1318, 0
    %1384 = vmatpush.msra.mxu0 0.0
    %1385 = vmatpush.msra.mxu0 0.0
    %1386 = vmatpush.msra.mxu0 0.0
    %1387 = vmatpush.msra.mxu0 0.0
    %1388 = vmatpush.msra.mxu0 0.0
    %1389 = vmatpush.msra.mxu0 0.0
    %1390 = vmatpush.msra.mxu0 0.0
    %1391 = vmatpush.msra.mxu0 0.0
    %1392 = vmatpush.msra.mxu0 0.0
    %1393 = vmatpush.msra.mxu0 0.0
    %1394 = vmatpush.msra.mxu0 0.0
    %1395 = vmatpush.msra.mxu0 0.0
    %1396 = vmatpush.msra.mxu0 0.0
    %1397 = vmatpush.msra.mxu0 0.0
    %1398 = vmatpush.msra.mxu0 %v1382
    %1399 = vmatpush.msra.mxu0 %v1317
    %1400 = vmatmul.f32.gmra.mxu0 %v1370
    %v1401 = vpop.f32.mrf.mxu0
    %v1402 = vadd.f32 %v1358, %v1401
    %1403 = vmatmul.f32.gmra.mxu0 %v1373
    %v1404 = vpop.f32.mrf.mxu0
    %v1405 = vadd.f32 %v1361, %v1404
    %1406 = vmatmul.f32.gmra.mxu0 %v1376
    %v1407 = vpop.f32.mrf.mxu0
    %v1408 = vadd.f32 %v1364, %v1407
    %1409 = vmatmul.f32.gmra.mxu0 %v1379
    %v1410 = vpop.f32.mrf.mxu0
    %v1411 = vadd.f32 %v1367, %v1410
    %1412 = vdwg.mxu0
    %v1413 = vld [vmem:[#allocation2 + $0x20] sm:$0xff]
    %v1414 = vld [vmem:[#allocation2 + $0x28] sm:$0xff]
    %v1415 = vld [vmem:[#allocation2 + $0x30] sm:$0xff]
    %v1416 = vld [vmem:[#allocation2 + $0x38] sm:$0xff]
    %v1417 = vld [vmem:[%s2 + $0x20] sm:$0xff]
    %v1418 = vld [vmem:[%s2 + $0x28] sm:$0xf]
    %v1420 = vsel %vm29, %v1413, 0
    %v1423 = vsel %vm29, %v1414, 0
    %v1426 = vsel %vm29, %v1415, 0
    %v1429 = vsel %vm29, %v1416, 0
    %v1432 = vsel %vm79, %v1418, 0
    %1434 = vmatpush.msra.mxu0 0.0
    %1435 = vmatpush.msra.mxu0 0.0
    %1436 = vmatpush.msra.mxu0 0.0
    %1437 = vmatpush.msra.mxu0 0.0
    %1438 = vmatpush.msra.mxu0 0.0
    %1439 = vmatpush.msra.mxu0 0.0
    %1440 = vmatpush.msra.mxu0 0.0
    %1441 = vmatpush.msra.mxu0 0.0
    %1442 = vmatpush.msra.mxu0 0.0
    %1443 = vmatpush.msra.mxu0 0.0
    %1444 = vmatpush.msra.mxu0 0.0
    %1445 = vmatpush.msra.mxu0 0.0
    %1446 = vmatpush.msra.mxu0 0.0
    %1447 = vmatpush.msra.mxu0 0.0
    %1448 = vmatpush.msra.mxu0 %v1432
    %1449 = vmatpush.msra.mxu0 %v1417
    %1450 = vmatmul.f32.gmra.mxu0 %v1420
    %v1451 = vpop.f32.mrf.mxu0
    %v1452 = vadd.f32 0.0, %v1451
    %1453 = vmatmul.f32.gmra.mxu0 %v1423
    %v1454 = vpop.f32.mrf.mxu0
    %v1455 = vadd.f32 0.0, %v1454
    %1456 = vmatmul.f32.gmra.mxu0 %v1426
    %v1457 = vpop.f32.mrf.mxu0
    %v1458 = vadd.f32 0.0, %v1457
    %1459 = vmatmul.f32.gmra.mxu0 %v1429
    %v1460 = vpop.f32.mrf.mxu0
    %v1461 = vadd.f32 0.0, %v1460
    %1462 = vdwg.mxu0
    %v1463 = vadd.f32 %v1402, %v1452
    %v1464 = vadd.f32 %v1405, %v1455
    %v1465 = vadd.f32 %v1408, %v1458
    %v1466 = vadd.f32 %v1411, %v1461
    %v1467 = vld [vmem:[%s2 + $0x30] sm:$0x1]
    %v1468 = vperm.slane %v1467, 0
    %v1469 = vadd.f32 %v1463, %v1468
    %v1470 = vadd.f32 %v1464, %v1468
    %v1471 = vadd.f32 %v1465, %v1468
    %v1472 = vadd.f32 %v1466, %v1468
    %v1473 = vmax.f32 %v1469, 0.0
    %v1474 = vmax.f32 %v1470, 0.0
    %v1475 = vmax.f32 %v1471, 0.0
    %v1476 = vmax.f32 %v1472, 0.0
    %1477 = vst.msk [vmem:[#allocation3 + $0x20] sm:$0xff] %vm38, %v1473
    %1478 = vst.msk [vmem:[#allocation3 + $0x28] sm:$0xff] %vm38, %v1474
    %1479 = vst.msk [vmem:[#allocation3 + $0x30] sm:$0xff] %vm38, %v1475
    %1480 = vst.msk [vmem:[#allocation3 + $0x38] sm:$0xff] %vm38, %v1476
    %v1481 = vld [vmem:[#allocation3 + $0x1c] sm:$0xff]
    %v1482 = vld [vmem:[#allocation3 + $0x24] sm:$0xff]
    %v1483 = vld [vmem:[#allocation3 + $0x2c] sm:$0xff]
    %v1484 = vld [vmem:[#allocation3 + $0x34] sm:$0xff]
    %v1485 = vld [vmem:[%s2 + $0x38] sm:$0xff]
    %v1486 = vld [vmem:[%s2 + $0x40] sm:$0xff]
    %v1487 = vld [vmem:[%s2 + $0x48] sm:$0xff]
    %v1488 = vld [vmem:[%s2 + $0x50] sm:$0xff]
    %v1489 = vld [vmem:[#allocation3 + $0x1e] sm:$0xff]
    %v1490 = vld [vmem:[#allocation3 + $0x26] sm:$0xff]
    %v1491 = vld [vmem:[#allocation3 + $0x2e] sm:$0xff]
    %v1492 = vld [vmem:[#allocation3 + $0x36] sm:$0xff]
    %v1493 = vld [vmem:[%s2 + $0x58] sm:$0xff]
    %v1494 = vld [vmem:[%s2 + $0x60] sm:$0xff]
    %v1495 = vld [vmem:[%s2 + $0x68] sm:$0xff]
    %v1496 = vld [vmem:[%s2 + $0x70] sm:$0xff]
    %v1498 = vsel %vm38, %v1489, 0
    %v1501 = vsel %vm38, %v1490, 0
    %v1504 = vsel %vm38, %v1491, 0
    %v1507 = vsel %vm38, %v1492, 0
    %1509 = vmatpush.msra.mxu0 0.0
    %1510 = vmatpush.msra.mxu0 0.0
    %1511 = vmatpush.msra.mxu0 0.0
    %1512 = vmatpush.msra.mxu0 0.0
    %1513 = vmatpush.msra.mxu0 0.0
    %1514 = vmatpush.msra.mxu0 0.0
    %1515 = vmatpush.msra.mxu0 0.0
    %1516 = vmatpush.msra.mxu0 0.0
    %1517 = vmatpush.msra.mxu0 0.0
    %1518 = vmatpush.msra.mxu0 0.0
    %1519 = vmatpush.msra.mxu0 0.0
    %1520 = vmatpush.msra.mxu0 0.0
    %1521 = vmatpush.msra.mxu0 %v1496
    %1522 = vmatpush.msra.mxu0 %v1495
    %1523 = vmatpush.msra.mxu0 %v1494
    %1524 = vmatpush.msra.mxu0 %v1493
    %1525 = vmatmul.f32.gmra.mxu0 %v1498
    %v1526 = vpop.f32.mrf.mxu0
    %v1527 = vadd.f32 0.0, %v1526
    %1528 = vmatmul.f32.gmra.mxu0 %v1501
    %v1529 = vpop.f32.mrf.mxu0
    %v1530 = vadd.f32 0.0, %v1529
    %1531 = vmatmul.f32.gmra.mxu0 %v1504
    %v1532 = vpop.f32.mrf.mxu0
    %v1533 = vadd.f32 0.0, %v1532
    %1534 = vmatmul.f32.gmra.mxu0 %v1507
    %v1535 = vpop.f32.mrf.mxu0
    %v1536 = vadd.f32 0.0, %v1535
    %1537 = vdwg.mxu0
    %v1539 = vsel %vm38, %v1481, 0
    %v1542 = vsel %vm38, %v1482, 0
    %v1545 = vsel %vm38, %v1483, 0
    %v1548 = vsel %vm38, %v1484, 0
    %1550 = vmatpush.msra.mxu0 0.0
    %1551 = vmatpush.msra.mxu0 0.0
    %1552 = vmatpush.msra.mxu0 0.0
    %1553 = vmatpush.msra.mxu0 0.0
    %1554 = vmatpush.msra.mxu0 0.0
    %1555 = vmatpush.msra.mxu0 0.0
    %1556 = vmatpush.msra.mxu0 0.0
    %1557 = vmatpush.msra.mxu0 0.0
    %1558 = vmatpush.msra.mxu0 0.0
    %1559 = vmatpush.msra.mxu0 0.0
    %1560 = vmatpush.msra.mxu0 0.0
    %1561 = vmatpush.msra.mxu0 0.0
    %1562 = vmatpush.msra.mxu0 %v1488
    %1563 = vmatpush.msra.mxu0 %v1487
    %1564 = vmatpush.msra.mxu0 %v1486
    %1565 = vmatpush.msra.mxu0 %v1485
    %1566 = vmatmul.f32.gmra.mxu0 %v1539
    %v1567 = vpop.f32.mrf.mxu0
    %v1568 = vadd.f32 %v1527, %v1567
    %1569 = vmatmul.f32.gmra.mxu0 %v1542
    %v1570 = vpop.f32.mrf.mxu0
    %v1571 = vadd.f32 %v1530, %v1570
    %1572 = vmatmul.f32.gmra.mxu0 %v1545
    %v1573 = vpop.f32.mrf.mxu0
    %v1574 = vadd.f32 %v1533, %v1573
    %1575 = vmatmul.f32.gmra.mxu0 %v1548
    %v1576 = vpop.f32.mrf.mxu0
    %v1577 = vadd.f32 %v1536, %v1576
    %1578 = vdwg.mxu0
    %v1579 = vld [vmem:[#allocation3 + $0x20] sm:$0xff]
    %v1580 = vld [vmem:[#allocation3 + $0x28] sm:$0xff]
    %v1581 = vld [vmem:[#allocation3 + $0x30] sm:$0xff]
    %v1582 = vld [vmem:[#allocation3 + $0x38] sm:$0xff]
    %v1583 = vld [vmem:[%s2 + $0x78] sm:$0xff]
    %v1584 = vld [vmem:[%s2 + $0x80] sm:$0xff]
    %v1585 = vld [vmem:[%s2 + $0x88] sm:$0xff]
    %v1586 = vld [vmem:[%s2 + $0x90] sm:$0xff]
    %v1588 = vsel %vm38, %v1579, 0
    %v1591 = vsel %vm38, %v1580, 0
    %v1594 = vsel %vm38, %v1581, 0
    %v1597 = vsel %vm38, %v1582, 0
    %1599 = vmatpush.msra.mxu0 0.0
    %1600 = vmatpush.msra.mxu0 0.0
    %1601 = vmatpush.msra.mxu0 0.0
    %1602 = vmatpush.msra.mxu0 0.0
    %1603 = vmatpush.msra.mxu0 0.0
    %1604 = vmatpush.msra.mxu0 0.0
    %1605 = vmatpush.msra.mxu0 0.0
    %1606 = vmatpush.msra.mxu0 0.0
    %1607 = vmatpush.msra.mxu0 0.0
    %1608 = vmatpush.msra.mxu0 0.0
    %1609 = vmatpush.msra.mxu0 0.0
    %1610 = vmatpush.msra.mxu0 0.0
    %1611 = vmatpush.msra.mxu0 %v1586
    %1612 = vmatpush.msra.mxu0 %v1585
    %1613 = vmatpush.msra.mxu0 %v1584
    %1614 = vmatpush.msra.mxu0 %v1583
    %1615 = vmatmul.f32.gmra.mxu0 %v1588
    %v1616 = vpop.f32.mrf.mxu0
    %v1617 = vadd.f32 0.0, %v1616
    %1618 = vmatmul.f32.gmra.mxu0 %v1591
    %v1619 = vpop.f32.mrf.mxu0
    %v1620 = vadd.f32 0.0, %v1619
    %1621 = vmatmul.f32.gmra.mxu0 %v1594
    %v1622 = vpop.f32.mrf.mxu0
    %v1623 = vadd.f32 0.0, %v1622
    %1624 = vmatmul.f32.gmra.mxu0 %v1597
    %v1625 = vpop.f32.mrf.mxu0
    %v1626 = vadd.f32 0.0, %v1625
    %1627 = vdwg.mxu0
    %v1628 = vadd.f32 %v1568, %v1617
    %v1629 = vadd.f32 %v1571, %v1620
    %v1630 = vadd.f32 %v1574, %v1623
    %v1631 = vadd.f32 %v1577, %v1626
    %v1632 = vld [vmem:[%s2 + $0x98] sm:$0x1]
    %v1633 = vperm.slane %v1632, 0
    %v1634 = vadd.f32 %v1628, %v1633
    %v1635 = vadd.f32 %v1629, %v1633
    %v1636 = vadd.f32 %v1630, %v1633
    %v1637 = vadd.f32 %v1631, %v1633
    %v1638 = vmax.f32 %v1634, 0.0
    %v1639 = vmax.f32 %v1635, 0.0
    %v1640 = vmax.f32 %v1636, 0.0
    %v1641 = vmax.f32 %v1637, 0.0
    %v1642 = vld [vmem:[%s2 + $0xa0] sm:$0xff]
    %v1643 = vld [vmem:[%s2 + $0xa8] sm:$0xf]
    %v1644 = vld [vmem:[%s2 + $0xb0] sm:$0x1]
    %v1645 = vperm.slane %v1644, 0
    %v1647 = vsel %vm79, %v1643, 0
    %1649 = vmatpush.msra.mxu0 0.0
    %1650 = vmatpush.msra.mxu0 0.0
    %1651 = vmatpush.msra.mxu0 0.0
    %1652 = vmatpush.msra.mxu0 0.0
    %1653 = vmatpush.msra.mxu0 0.0
    %1654 = vmatpush.msra.mxu0 0.0
    %1655 = vmatpush.msra.mxu0 0.0
    %1656 = vmatpush.msra.mxu0 0.0
    %1657 = vmatpush.msra.mxu0 0.0
    %1658 = vmatpush.msra.mxu0 0.0
    %1659 = vmatpush.msra.mxu0 0.0
    %1660 = vmatpush.msra.mxu0 0.0
    %1661 = vmatpush.msra.mxu0 0.0
    %1662 = vmatpush.msra.mxu0 0.0
    %1663 = vmatpush.msra.mxu0 %v1647
    %1664 = vmatpush.msra.mxu0 %v1642
    %1665 = vmatmul.f32.gmra.mxu0 %v390
    %v1666 = vpop.f32.mrf.mxu0
    %v1667 = vadd.f32 %v1645, %v1666
    %1668 = vmatmul.f32.gmra.mxu0 %v393
    %v1669 = vpop.f32.mrf.mxu0
    %v1670 = vadd.f32 %v1645, %v1669
    %1671 = vmatmul.f32.gmra.mxu0 %v396
    %v1672 = vpop.f32.mrf.mxu0
    %v1673 = vadd.f32 %v1645, %v1672
    %1674 = vmatmul.f32.gmra.mxu0 %v399
    %v1675 = vpop.f32.mrf.mxu0
    %v1676 = vadd.f32 %v1645, %v1675
    %1677 = vdwg.mxu0
    %v1678 = vadd.f32 %v1638, %v1667
    %v1679 = vadd.f32 %v1639, %v1670
    %v1680 = vadd.f32 %v1640, %v1673
    %v1681 = vadd.f32 %v1641, %v1676
    %v1682 = vmax.f32 %v1678, 0.0
    %v1683 = vmax.f32 %v1679, 0.0
    %v1684 = vmax.f32 %v1680, 0.0
    %v1685 = vmax.f32 %v1681, 0.0
    %1686 = vst.msk [vmem:[#allocation3 + $0x20] sm:$0xff] %vm38, %v1682
    %1687 = vst.msk [vmem:[#allocation3 + $0x28] sm:$0xff] %vm38, %v1683
    %1688 = vst.msk [vmem:[#allocation3 + $0x30] sm:$0xff] %vm38, %v1684
    %1689 = vst.msk [vmem:[#allocation3 + $0x38] sm:$0xff] %vm38, %v1685
    %v1690 = vld [vmem:[#allocation3 + $0x18] sm:$0xff]
    %v1691 = vld [vmem:[#allocation3 + $0x20] sm:$0xff]
    %v1692 = vld [vmem:[#allocation3 + $0x28] sm:$0xff]
    %v1693 = vld [vmem:[#allocation3 + $0x30] sm:$0xff]
    %v1694 = vld [vmem:[%s2 + $0xb8] sm:$0xff]
    %v1695 = vld [vmem:[%s2 + $0xc0] sm:$0xff]
    %v1696 = vld [vmem:[%s2 + $0xc8] sm:$0xff]
    %v1697 = vld [vmem:[%s2 + $0xd0] sm:$0xff]
    %v1698 = vld [vmem:[#allocation3 + $0x1c] sm:$0xff]
    %v1699 = vld [vmem:[#allocation3 + $0x24] sm:$0xff]
    %v1700 = vld [vmem:[#allocation3 + $0x2c] sm:$0xff]
    %v1701 = vld [vmem:[#allocation3 + $0x34] sm:$0xff]
    %v1702 = vld [vmem:[%s2 + $0xd8] sm:$0xff]
    %v1703 = vld [vmem:[%s2 + $0xe0] sm:$0xff]
    %v1704 = vld [vmem:[%s2 + $0xe8] sm:$0xff]
    %v1705 = vld [vmem:[%s2 + $0xf0] sm:$0xff]
    %v1707 = vsel %vm38, %v1698, 0
    %v1710 = vsel %vm38, %v1699, 0
    %v1713 = vsel %vm38, %v1700, 0
    %v1716 = vsel %vm38, %v1701, 0
    %1718 = vmatpush.msra.mxu0 0.0
    %1719 = vmatpush.msra.mxu0 0.0
    %1720 = vmatpush.msra.mxu0 0.0
    %1721 = vmatpush.msra.mxu0 0.0
    %1722 = vmatpush.msra.mxu0 0.0
    %1723 = vmatpush.msra.mxu0 0.0
    %1724 = vmatpush.msra.mxu0 0.0
    %1725 = vmatpush.msra.mxu0 0.0
    %1726 = vmatpush.msra.mxu0 0.0
    %1727 = vmatpush.msra.mxu0 0.0
    %1728 = vmatpush.msra.mxu0 0.0
    %1729 = vmatpush.msra.mxu0 0.0
    %1730 = vmatpush.msra.mxu0 %v1705
    %1731 = vmatpush.msra.mxu0 %v1704
    %1732 = vmatpush.msra.mxu0 %v1703
    %1733 = vmatpush.msra.mxu0 %v1702
    %1734 = vmatmul.f32.gmra.mxu0 %v1707
    %v1735 = vpop.f32.mrf.mxu0
    %v1736 = vadd.f32 0.0, %v1735
    %1737 = vmatmul.f32.gmra.mxu0 %v1710
    %v1738 = vpop.f32.mrf.mxu0
    %v1739 = vadd.f32 0.0, %v1738
    %1740 = vmatmul.f32.gmra.mxu0 %v1713
    %v1741 = vpop.f32.mrf.mxu0
    %v1742 = vadd.f32 0.0, %v1741
    %1743 = vmatmul.f32.gmra.mxu0 %v1716
    %v1744 = vpop.f32.mrf.mxu0
    %v1745 = vadd.f32 0.0, %v1744
    %1746 = vdwg.mxu0
    %v1748 = vsel %vm38, %v1690, 0
    %v1751 = vsel %vm38, %v1691, 0
    %v1754 = vsel %vm38, %v1692, 0
    %v1757 = vsel %vm38, %v1693, 0
    %1759 = vmatpush.msra.mxu0 0.0
    %1760 = vmatpush.msra.mxu0 0.0
    %1761 = vmatpush.msra.mxu0 0.0
    %1762 = vmatpush.msra.mxu0 0.0
    %1763 = vmatpush.msra.mxu0 0.0
    %1764 = vmatpush.msra.mxu0 0.0
    %1765 = vmatpush.msra.mxu0 0.0
    %1766 = vmatpush.msra.mxu0 0.0
    %1767 = vmatpush.msra.mxu0 0.0
    %1768 = vmatpush.msra.mxu0 0.0
    %1769 = vmatpush.msra.mxu0 0.0
    %1770 = vmatpush.msra.mxu0 0.0
    %1771 = vmatpush.msra.mxu0 %v1697
    %1772 = vmatpush.msra.mxu0 %v1696
    %1773 = vmatpush.msra.mxu0 %v1695
    %1774 = vmatpush.msra.mxu0 %v1694
    %1775 = vmatmul.f32.gmra.mxu0 %v1748
    %v1776 = vpop.f32.mrf.mxu0
    %v1777 = vadd.f32 %v1736, %v1776
    %1778 = vmatmul.f32.gmra.mxu0 %v1751
    %v1779 = vpop.f32.mrf.mxu0
    %v1780 = vadd.f32 %v1739, %v1779
    %1781 = vmatmul.f32.gmra.mxu0 %v1754
    %v1782 = vpop.f32.mrf.mxu0
    %v1783 = vadd.f32 %v1742, %v1782
    %1784 = vmatmul.f32.gmra.mxu0 %v1757
    %v1785 = vpop.f32.mrf.mxu0
    %v1786 = vadd.f32 %v1745, %v1785
    %1787 = vdwg.mxu0
    %v1788 = vld [vmem:[#allocation3 + $0x20] sm:$0xff]
    %v1789 = vld [vmem:[#allocation3 + $0x28] sm:$0xff]
    %v1790 = vld [vmem:[#allocation3 + $0x30] sm:$0xff]
    %v1791 = vld [vmem:[#allocation3 + $0x38] sm:$0xff]
    %v1792 = vld [vmem:[%s2 + $0xf8] sm:$0xff]
    %v1793 = vld [vmem:[%s2 + $0x100] sm:$0xff]
    %v1794 = vld [vmem:[%s2 + $0x108] sm:$0xff]
    %v1795 = vld [vmem:[%s2 + $0x110] sm:$0xff]
    %v1797 = vsel %vm38, %v1788, 0
    %v1800 = vsel %vm38, %v1789, 0
    %v1803 = vsel %vm38, %v1790, 0
    %v1806 = vsel %vm38, %v1791, 0
    %1808 = vmatpush.msra.mxu0 0.0
    %1809 = vmatpush.msra.mxu0 0.0
    %1810 = vmatpush.msra.mxu0 0.0
    %1811 = vmatpush.msra.mxu0 0.0
    %1812 = vmatpush.msra.mxu0 0.0
    %1813 = vmatpush.msra.mxu0 0.0
    %1814 = vmatpush.msra.mxu0 0.0
    %1815 = vmatpush.msra.mxu0 0.0
    %1816 = vmatpush.msra.mxu0 0.0
    %1817 = vmatpush.msra.mxu0 0.0
    %1818 = vmatpush.msra.mxu0 0.0
    %1819 = vmatpush.msra.mxu0 0.0
    %1820 = vmatpush.msra.mxu0 %v1795
    %1821 = vmatpush.msra.mxu0 %v1794
    %1822 = vmatpush.msra.mxu0 %v1793
    %1823 = vmatpush.msra.mxu0 %v1792
    %1824 = vmatmul.f32.gmra.mxu0 %v1797
    %v1825 = vpop.f32.mrf.mxu0
    %v1826 = vadd.f32 0.0, %v1825
    %1827 = vmatmul.f32.gmra.mxu0 %v1800
    %v1828 = vpop.f32.mrf.mxu0
    %v1829 = vadd.f32 0.0, %v1828
    %1830 = vmatmul.f32.gmra.mxu0 %v1803
    %v1831 = vpop.f32.mrf.mxu0
    %v1832 = vadd.f32 0.0, %v1831
    %1833 = vmatmul.f32.gmra.mxu0 %v1806
    %v1834 = vpop.f32.mrf.mxu0
    %v1835 = vadd.f32 0.0, %v1834
    %1836 = vdwg.mxu0
    %v1837 = vadd.f32 %v1777, %v1826
    %v1838 = vadd.f32 %v1780, %v1829
    %v1839 = vadd.f32 %v1783, %v1832
    %v1840 = vadd.f32 %v1786, %v1835
    %v1841 = vld [vmem:[%s2 + $0x118] sm:$0x1]
    %v1842 = vperm.slane %v1841, 0
    %v1843 = vadd.f32 %v1837, %v1842
    %v1844 = vadd.f32 %v1838, %v1842
    %v1845 = vadd.f32 %v1839, %v1842
    %v1846 = vadd.f32 %v1840, %v1842
    %v1847 = vmax.f32 %v1843, 0.0
    %v1848 = vmax.f32 %v1844, 0.0
    %v1849 = vmax.f32 %v1845, 0.0
    %v1850 = vmax.f32 %v1846, 0.0
    %1851 = vst.msk [vmem:[#allocation3 + $0x20] sm:$0xff] %vm38, %v1847
    %1852 = vst.msk [vmem:[#allocation3 + $0x28] sm:$0xff] %vm38, %v1848
    %1853 = vst.msk [vmem:[#allocation3 + $0x30] sm:$0xff] %vm38, %v1849
    %1854 = vst.msk [vmem:[#allocation3 + $0x38] sm:$0xff] %vm38, %v1850
    %v1855 = vld [vmem:[#allocation3 + $0x18] sm:$0xff]
    %v1856 = vld [vmem:[#allocation3 + $0x20] sm:$0xff]
    %v1857 = vld [vmem:[#allocation3 + $0x28] sm:$0xff]
    %v1858 = vld [vmem:[#allocation3 + $0x30] sm:$0xff]
    %v1859 = vld [vmem:[%s2 + $0x120] sm:$0xff]
    %v1860 = vld [vmem:[%s2 + $0x128] sm:$0xff]
    %v1861 = vld [vmem:[%s2 + $0x130] sm:$0xff]
    %v1862 = vld [vmem:[%s2 + $0x138] sm:$0xff]
    %v1863 = vld [vmem:[#allocation3 + $0x1c] sm:$0xff]
    %v1864 = vld [vmem:[#allocation3 + $0x24] sm:$0xff]
    %v1865 = vld [vmem:[#allocation3 + $0x2c] sm:$0xff]
    %v1866 = vld [vmem:[#allocation3 + $0x34] sm:$0xff]
    %v1867 = vld [vmem:[%s2 + $0x140] sm:$0xff]
    %v1868 = vld [vmem:[%s2 + $0x148] sm:$0xff]
    %v1869 = vld [vmem:[%s2 + $0x150] sm:$0xff]
    %v1870 = vld [vmem:[%s2 + $0x158] sm:$0xff]
    %v1872 = vsel %vm38, %v1863, 0
    %v1875 = vsel %vm38, %v1864, 0
    %v1878 = vsel %vm38, %v1865, 0
    %v1881 = vsel %vm38, %v1866, 0
    %1883 = vmatpush.msra.mxu0 0.0
    %1884 = vmatpush.msra.mxu0 0.0
    %1885 = vmatpush.msra.mxu0 0.0
    %1886 = vmatpush.msra.mxu0 0.0
    %1887 = vmatpush.msra.mxu0 0.0
    %1888 = vmatpush.msra.mxu0 0.0
    %1889 = vmatpush.msra.mxu0 0.0
    %1890 = vmatpush.msra.mxu0 0.0
    %1891 = vmatpush.msra.mxu0 0.0
    %1892 = vmatpush.msra.mxu0 0.0
    %1893 = vmatpush.msra.mxu0 0.0
    %1894 = vmatpush.msra.mxu0 0.0
    %1895 = vmatpush.msra.mxu0 %v1870
    %1896 = vmatpush.msra.mxu0 %v1869
    %1897 = vmatpush.msra.mxu0 %v1868
    %1898 = vmatpush.msra.mxu0 %v1867
    %1899 = vmatmul.f32.gmra.mxu0 %v1872
    %v1900 = vpop.f32.mrf.mxu0
    %v1901 = vadd.f32 0.0, %v1900
    %1902 = vmatmul.f32.gmra.mxu0 %v1875
    %v1903 = vpop.f32.mrf.mxu0
    %v1904 = vadd.f32 0.0, %v1903
    %1905 = vmatmul.f32.gmra.mxu0 %v1878
    %v1906 = vpop.f32.mrf.mxu0
    %v1907 = vadd.f32 0.0, %v1906
    %1908 = vmatmul.f32.gmra.mxu0 %v1881
    %v1909 = vpop.f32.mrf.mxu0
    %v1910 = vadd.f32 0.0, %v1909
    %1911 = vdwg.mxu0
    %v1913 = vsel %vm38, %v1855, 0
    %v1916 = vsel %vm38, %v1856, 0
    %v1919 = vsel %vm38, %v1857, 0
    %v1922 = vsel %vm38, %v1858, 0
    %1924 = vmatpush.msra.mxu0 0.0
    %1925 = vmatpush.msra.mxu0 0.0
    %1926 = vmatpush.msra.mxu0 0.0
    %1927 = vmatpush.msra.mxu0 0.0
    %1928 = vmatpush.msra.mxu0 0.0
    %1929 = vmatpush.msra.mxu0 0.0
    %1930 = vmatpush.msra.mxu0 0.0
    %1931 = vmatpush.msra.mxu0 0.0
    %1932 = vmatpush.msra.mxu0 0.0
    %1933 = vmatpush.msra.mxu0 0.0
    %1934 = vmatpush.msra.mxu0 0.0
    %1935 = vmatpush.msra.mxu0 0.0
    %1936 = vmatpush.msra.mxu0 %v1862
    %1937 = vmatpush.msra.mxu0 %v1861
    %1938 = vmatpush.msra.mxu0 %v1860
    %1939 = vmatpush.msra.mxu0 %v1859
    %1940 = vmatmul.f32.gmra.mxu0 %v1913
    %v1941 = vpop.f32.mrf.mxu0
    %v1942 = vadd.f32 %v1901, %v1941
    %1943 = vmatmul.f32.gmra.mxu0 %v1916
    %v1944 = vpop.f32.mrf.mxu0
    %v1945 = vadd.f32 %v1904, %v1944
    %1946 = vmatmul.f32.gmra.mxu0 %v1919
    %v1947 = vpop.f32.mrf.mxu0
    %v1948 = vadd.f32 %v1907, %v1947
    %1949 = vmatmul.f32.gmra.mxu0 %v1922
    %v1950 = vpop.f32.mrf.mxu0
    %v1951 = vadd.f32 %v1910, %v1950
    %1952 = vdwg.mxu0
    %v1953 = vld [vmem:[#allocation3 + $0x20] sm:$0xff]
    %v1954 = vld [vmem:[#allocation3 + $0x28] sm:$0xff]
    %v1955 = vld [vmem:[#allocation3 + $0x30] sm:$0xff]
    %v1956 = vld [vmem:[#allocation3 + $0x38] sm:$0xff]
    %v1957 = vld [vmem:[%s2 + $0x160] sm:$0xff]
    %v1958 = vld [vmem:[%s2 + $0x168] sm:$0xff]
    %v1959 = vld [vmem:[%s2 + $0x170] sm:$0xff]
    %v1960 = vld [vmem:[%s2 + $0x178] sm:$0xff]
    %v1962 = vsel %vm38, %v1953, 0
    %v1965 = vsel %vm38, %v1954, 0
    %v1968 = vsel %vm38, %v1955, 0
    %v1971 = vsel %vm38, %v1956, 0
    %1973 = vmatpush.msra.mxu0 0.0
    %1974 = vmatpush.msra.mxu0 0.0
    %1975 = vmatpush.msra.mxu0 0.0
    %1976 = vmatpush.msra.mxu0 0.0
    %1977 = vmatpush.msra.mxu0 0.0
    %1978 = vmatpush.msra.mxu0 0.0
    %1979 = vmatpush.msra.mxu0 0.0
    %1980 = vmatpush.msra.mxu0 0.0
    %1981 = vmatpush.msra.mxu0 0.0
    %1982 = vmatpush.msra.mxu0 0.0
    %1983 = vmatpush.msra.mxu0 0.0
    %1984 = vmatpush.msra.mxu0 0.0
    %1985 = vmatpush.msra.mxu0 %v1960
    %1986 = vmatpush.msra.mxu0 %v1959
    %1987 = vmatpush.msra.mxu0 %v1958
    %1988 = vmatpush.msra.mxu0 %v1957
    %1989 = vmatmul.f32.gmra.mxu0 %v1962
    %v1990 = vpop.f32.mrf.mxu0
    %v1991 = vadd.f32 0.0, %v1990
    %1992 = vmatmul.f32.gmra.mxu0 %v1965
    %v1993 = vpop.f32.mrf.mxu0
    %v1994 = vadd.f32 0.0, %v1993
    %1995 = vmatmul.f32.gmra.mxu0 %v1968
    %v1996 = vpop.f32.mrf.mxu0
    %v1997 = vadd.f32 0.0, %v1996
    %1998 = vmatmul.f32.gmra.mxu0 %v1971
    %v1999 = vpop.f32.mrf.mxu0
    %v2000 = vadd.f32 0.0, %v1999
    %2001 = vdwg.mxu0
    %v2002 = vadd.f32 %v1942, %v1991
    %v2003 = vadd.f32 %v1945, %v1994
    %v2004 = vadd.f32 %v1948, %v1997
    %v2005 = vadd.f32 %v1951, %v2000
    %v2006 = vld [vmem:[%s2 + $0x180] sm:$0x1]
    %v2007 = vperm.slane %v2006, 0
    %v2008 = vadd.f32 %v2002, %v2007
    %v2009 = vadd.f32 %v2003, %v2007
    %v2010 = vadd.f32 %v2004, %v2007
    %v2011 = vadd.f32 %v2005, %v2007
    %v2012 = vmax.f32 %v2008, 0.0
    %v2013 = vmax.f32 %v2009, 0.0
    %v2014 = vmax.f32 %v2010, 0.0
    %v2015 = vmax.f32 %v2011, 0.0
    %v2016 = vadd.f32 %v2012, %v1682
    %v2017 = vadd.f32 %v2013, %v1683
    %v2018 = vadd.f32 %v2014, %v1684
    %v2019 = vadd.f32 %v2015, %v1685
    %v2020 = vmax.f32 %v2016, 0.0
    %v2021 = vmax.f32 %v2017, 0.0
    %v2022 = vmax.f32 %v2018, 0.0
    %v2023 = vmax.f32 %v2019, 0.0
    %2024 = vst.msk [vmem:[#allocation3 + $0x20] sm:$0xff] %vm38, %v2020
    %2025 = vst.msk [vmem:[#allocation3 + $0x28] sm:$0xff] %vm38, %v2021
    %2026 = vst.msk [vmem:[#allocation3 + $0x30] sm:$0xff] %vm38, %v2022
    %2027 = vst.msk [vmem:[#allocation3 + $0x38] sm:$0xff] %vm38, %v2023
    %v2028 = vld [vmem:[#allocation3 + $0x10] sm:$0xff]
    %v2029 = vld [vmem:[#allocation3 + $0x18] sm:$0xff]
    %v2030 = vld [vmem:[#allocation3 + $0x20] sm:$0xff]
    %v2031 = vld [vmem:[#allocation3 + $0x28] sm:$0xff]
    %v2032 = vld [vmem:[%s2 + $0x188] sm:$0xff]
    %v2033 = vld [vmem:[%s2 + $0x190] sm:$0xff]
    %v2034 = vld [vmem:[%s2 + $0x198] sm:$0xff]
    %v2035 = vld [vmem:[%s2 + $0x1a0] sm:$0xff]
    %v2036 = vld [vmem:[#allocation3 + $0x30] sm:$0xff]
    %v2037 = vld [vmem:[%s2 + $0x1a8] sm:$0xff]
    %v2038 = vld [vmem:[%s2 + $0x1b0] sm:$0xff]
    %v2039 = vld [vmem:[%s2 + $0x1b8] sm:$0xff]
    %v2040 = vld [vmem:[%s2 + $0x1c0] sm:$0xff]
    %v2042 = vsel %vm38, %v2029, 0
    %v2045 = vsel %vm38, %v2030, 0
    %v2048 = vsel %vm38, %v2031, 0
    %v2051 = vsel %vm38, %v2036, 0
    %2053 = vmatpush.msra.mxu0 0.0
    %2054 = vmatpush.msra.mxu0 0.0
    %2055 = vmatpush.msra.mxu0 0.0
    %2056 = vmatpush.msra.mxu0 0.0
    %2057 = vmatpush.msra.mxu0 0.0
    %2058 = vmatpush.msra.mxu0 0.0
    %2059 = vmatpush.msra.mxu0 0.0
    %2060 = vmatpush.msra.mxu0 0.0
    %2061 = vmatpush.msra.mxu0 0.0
    %2062 = vmatpush.msra.mxu0 0.0
    %2063 = vmatpush.msra.mxu0 0.0
    %2064 = vmatpush.msra.mxu0 0.0
    %2065 = vmatpush.msra.mxu0 %v2040
    %2066 = vmatpush.msra.mxu0 %v2039
    %2067 = vmatpush.msra.mxu0 %v2038
    %2068 = vmatpush.msra.mxu0 %v2037
    %2069 = vmatmul.f32.gmra.mxu0 %v2042
    %v2070 = vpop.f32.mrf.mxu0
    %v2071 = vadd.f32 0.0, %v2070
    %2072 = vmatmul.f32.gmra.mxu0 %v2045
    %v2073 = vpop.f32.mrf.mxu0
    %v2074 = vadd.f32 0.0, %v2073
    %2075 = vmatmul.f32.gmra.mxu0 %v2048
    %v2076 = vpop.f32.mrf.mxu0
    %v2077 = vadd.f32 0.0, %v2076
    %2078 = vmatmul.f32.gmra.mxu0 %v2051
    %v2079 = vpop.f32.mrf.mxu0
    %v2080 = vadd.f32 0.0, %v2079
    %2081 = vdwg.mxu0
    %v2083 = vsel %vm38, %v2028, 0
    %2085 = vmatpush.msra.mxu0 0.0
    %2086 = vmatpush.msra.mxu0 0.0
    %2087 = vmatpush.msra.mxu0 0.0
    %2088 = vmatpush.msra.mxu0 0.0
    %2089 = vmatpush.msra.mxu0 0.0
    %2090 = vmatpush.msra.mxu0 0.0
    %2091 = vmatpush.msra.mxu0 0.0
    %2092 = vmatpush.msra.mxu0 0.0
    %2093 = vmatpush.msra.mxu0 0.0
    %2094 = vmatpush.msra.mxu0 0.0
    %2095 = vmatpush.msra.mxu0 0.0
    %2096 = vmatpush.msra.mxu0 0.0
    %2097 = vmatpush.msra.mxu0 %v2035
    %2098 = vmatpush.msra.mxu0 %v2034
    %2099 = vmatpush.msra.mxu0 %v2033
    %2100 = vmatpush.msra.mxu0 %v2032
    %2101 = vmatmul.f32.gmra.mxu0 %v2083
    %v2102 = vpop.f32.mrf.mxu0
    %v2103 = vadd.f32 %v2071, %v2102
    %2104 = vmatmul.f32.gmra.mxu0 %v2042
    %v2105 = vpop.f32.mrf.mxu0
    %v2106 = vadd.f32 %v2074, %v2105
    %2107 = vmatmul.f32.gmra.mxu0 %v2045
    %v2108 = vpop.f32.mrf.mxu0
    %v2109 = vadd.f32 %v2077, %v2108
    %2110 = vmatmul.f32.gmra.mxu0 %v2048
    %v2111 = vpop.f32.mrf.mxu0
    %v2112 = vadd.f32 %v2080, %v2111
    %2113 = vdwg.mxu0
    %v2114 = vld [vmem:[#allocation3 + $0x20] sm:$0xff]
    %v2115 = vld [vmem:[#allocation3 + $0x28] sm:$0xff]
    %v2116 = vld [vmem:[#allocation3 + $0x30] sm:$0xff]
    %v2117 = vld [vmem:[#allocation3 + $0x38] sm:$0xff]
    %v2118 = vld [vmem:[%s2 + $0x1c8] sm:$0xff]
    %v2119 = vld [vmem:[%s2 + $0x1d0] sm:$0xff]
    %v2120 = vld [vmem:[%s2 + $0x1d8] sm:$0xff]
    %v2121 = vld [vmem:[%s2 + $0x1e0] sm:$0xff]
    %v2123 = vsel %vm38, %v2114, 0
    %v2126 = vsel %vm38, %v2115, 0
    %v2129 = vsel %vm38, %v2116, 0
    %v2132 = vsel %vm38, %v2117, 0
    %2134 = vmatpush.msra.mxu0 0.0
    %2135 = vmatpush.msra.mxu0 0.0
    %2136 = vmatpush.msra.mxu0 0.0
    %2137 = vmatpush.msra.mxu0 0.0
    %2138 = vmatpush.msra.mxu0 0.0
    %2139 = vmatpush.msra.mxu0 0.0
    %2140 = vmatpush.msra.mxu0 0.0
    %2141 = vmatpush.msra.mxu0 0.0
    %2142 = vmatpush.msra.mxu0 0.0
    %2143 = vmatpush.msra.mxu0 0.0
    %2144 = vmatpush.msra.mxu0 0.0
    %2145 = vmatpush.msra.mxu0 0.0
    %2146 = vmatpush.msra.mxu0 %v2121
    %2147 = vmatpush.msra.mxu0 %v2120
    %2148 = vmatpush.msra.mxu0 %v2119
    %2149 = vmatpush.msra.mxu0 %v2118
    %2150 = vmatmul.f32.gmra.mxu0 %v2123
    %v2151 = vpop.f32.mrf.mxu0
    %v2152 = vadd.f32 0.0, %v2151
    %2153 = vmatmul.f32.gmra.mxu0 %v2126
    %v2154 = vpop.f32.mrf.mxu0
    %v2155 = vadd.f32 0.0, %v2154
    %2156 = vmatmul.f32.gmra.mxu0 %v2129
    %v2157 = vpop.f32.mrf.mxu0
    %v2158 = vadd.f32 0.0, %v2157
    %2159 = vmatmul.f32.gmra.mxu0 %v2132
    %v2160 = vpop.f32.mrf.mxu0
    %v2161 = vadd.f32 0.0, %v2160
    %2162 = vdwg.mxu0
    %v2163 = vadd.f32 %v2103, %v2152
    %v2164 = vadd.f32 %v2106, %v2155
    %v2165 = vadd.f32 %v2109, %v2158
    %v2166 = vadd.f32 %v2112, %v2161
    %v2167 = vld [vmem:[%s2 + $0x1e8] sm:$0x1]
    %v2168 = vperm.slane %v2167, 0
    %v2169 = vadd.f32 %v2163, %v2168
    %v2170 = vadd.f32 %v2164, %v2168
    %v2171 = vadd.f32 %v2165, %v2168
    %v2172 = vadd.f32 %v2166, %v2168
    %v2173 = vmax.f32 %v2169, 0.0
    %v2174 = vmax.f32 %v2170, 0.0
    %v2175 = vmax.f32 %v2171, 0.0
    %v2176 = vmax.f32 %v2172, 0.0
    %2177 = vst.msk [vmem:[#allocation3 + $0x20] sm:$0xff] %vm38, %v2173
    %2178 = vst.msk [vmem:[#allocation3 + $0x28] sm:$0xff] %vm38, %v2174
    %2179 = vst.msk [vmem:[#allocation3 + $0x30] sm:$0xff] %vm38, %v2175
    %2180 = vst.msk [vmem:[#allocation3 + $0x38] sm:$0xff] %vm38, %v2176
    %v2181 = vld [vmem:[#allocation3 + $0x10] sm:$0xff]
    %v2182 = vld [vmem:[#allocation3 + $0x18] sm:$0xff]
    %v2183 = vld [vmem:[#allocation3 + $0x20] sm:$0xff]
    %v2184 = vld [vmem:[#allocation3 + $0x28] sm:$0xff]
    %v2185 = vld [vmem:[%s2 + $0x1f0] sm:$0xff]
    %v2186 = vld [vmem:[%s2 + $0x1f8] sm:$0xff]
    %v2187 = vld [vmem:[%s2 + $0x200] sm:$0xff]
    %v2188 = vld [vmem:[%s2 + $0x208] sm:$0xff]
    %v2189 = vld [vmem:[#allocation3 + $0x30] sm:$0xff]
    %v2190 = vld [vmem:[%s2 + $0x210] sm:$0xff]
    %v2191 = vld [vmem:[%s2 + $0x218] sm:$0xff]
    %v2192 = vld [vmem:[%s2 + $0x220] sm:$0xff]
    %v2193 = vld [vmem:[%s2 + $0x228] sm:$0xff]
    %v2195 = vsel %vm38, %v2182, 0
    %v2198 = vsel %vm38, %v2183, 0
    %v2201 = vsel %vm38, %v2184, 0
    %v2204 = vsel %vm38, %v2189, 0
    %2206 = vmatpush.msra.mxu0 0.0
    %2207 = vmatpush.msra.mxu0 0.0
    %2208 = vmatpush.msra.mxu0 0.0
    %2209 = vmatpush.msra.mxu0 0.0
    %2210 = vmatpush.msra.mxu0 0.0
    %2211 = vmatpush.msra.mxu0 0.0
    %2212 = vmatpush.msra.mxu0 0.0
    %2213 = vmatpush.msra.mxu0 0.0
    %2214 = vmatpush.msra.mxu0 0.0
    %2215 = vmatpush.msra.mxu0 0.0
    %2216 = vmatpush.msra.mxu0 0.0
    %2217 = vmatpush.msra.mxu0 0.0
    %2218 = vmatpush.msra.mxu0 %v2193
    %2219 = vmatpush.msra.mxu0 %v2192
    %2220 = vmatpush.msra.mxu0 %v2191
    %2221 = vmatpush.msra.mxu0 %v2190
    %2222 = vmatmul.f32.gmra.mxu0 %v2195
    %v2223 = vpop.f32.mrf.mxu0
    %v2224 = vadd.f32 0.0, %v2223
    %2225 = vmatmul.f32.gmra.mxu0 %v2198
    %v2226 = vpop.f32.mrf.mxu0
    %v2227 = vadd.f32 0.0, %v2226
    %2228 = vmatmul.f32.gmra.mxu0 %v2201
    %v2229 = vpop.f32.mrf.mxu0
    %v2230 = vadd.f32 0.0, %v2229
    %2231 = vmatmul.f32.gmra.mxu0 %v2204
    %v2232 = vpop.f32.mrf.mxu0
    %v2233 = vadd.f32 0.0, %v2232
    %2234 = vdwg.mxu0
    %v2236 = vsel %vm38, %v2181, 0
    %2238 = vmatpush.msra.mxu0 0.0
    %2239 = vmatpush.msra.mxu0 0.0
    %2240 = vmatpush.msra.mxu0 0.0
    %2241 = vmatpush.msra.mxu0 0.0
    %2242 = vmatpush.msra.mxu0 0.0
    %2243 = vmatpush.msra.mxu0 0.0
    %2244 = vmatpush.msra.mxu0 0.0
    %2245 = vmatpush.msra.mxu0 0.0
    %2246 = vmatpush.msra.mxu0 0.0
    %2247 = vmatpush.msra.mxu0 0.0
    %2248 = vmatpush.msra.mxu0 0.0
    %2249 = vmatpush.msra.mxu0 0.0
    %2250 = vmatpush.msra.mxu0 %v2188
    %2251 = vmatpush.msra.mxu0 %v2187
    %2252 = vmatpush.msra.mxu0 %v2186
    %2253 = vmatpush.msra.mxu0 %v2185
    %2254 = vmatmul.f32.gmra.mxu0 %v2236
    %v2255 = vpop.f32.mrf.mxu0
    %v2256 = vadd.f32 %v2224, %v2255
    %2257 = vmatmul.f32.gmra.mxu0 %v2195
    %v2258 = vpop.f32.mrf.mxu0
    %v2259 = vadd.f32 %v2227, %v2258
    %2260 = vmatmul.f32.gmra.mxu0 %v2198
    %v2261 = vpop.f32.mrf.mxu0
    %v2262 = vadd.f32 %v2230, %v2261
    %2263 = vmatmul.f32.gmra.mxu0 %v2201
    %v2264 = vpop.f32.mrf.mxu0
    %v2265 = vadd.f32 %v2233, %v2264
    %2266 = vdwg.mxu0
    %v2267 = vld [vmem:[#allocation3 + $0x20] sm:$0xff]
    %v2268 = vld [vmem:[#allocation3 + $0x28] sm:$0xff]
    %v2269 = vld [vmem:[#allocation3 + $0x30] sm:$0xff]
    %v2270 = vld [vmem:[#allocation3 + $0x38] sm:$0xff]
    %v2271 = vld [vmem:[%s2 + $0x230] sm:$0xff]
    %v2272 = vld [vmem:[%s2 + $0x238] sm:$0xff]
    %v2273 = vld [vmem:[%s2 + $0x240] sm:$0xff]
    %v2274 = vld [vmem:[%s2 + $0x248] sm:$0xff]
    %v2276 = vsel %vm38, %v2267, 0
    %v2279 = vsel %vm38, %v2268, 0
    %v2282 = vsel %vm38, %v2269, 0
    %v2285 = vsel %vm38, %v2270, 0
    %2287 = vmatpush.msra.mxu0 0.0
    %2288 = vmatpush.msra.mxu0 0.0
    %2289 = vmatpush.msra.mxu0 0.0
    %2290 = vmatpush.msra.mxu0 0.0
    %2291 = vmatpush.msra.mxu0 0.0
    %2292 = vmatpush.msra.mxu0 0.0
    %2293 = vmatpush.msra.mxu0 0.0
    %2294 = vmatpush.msra.mxu0 0.0
    %2295 = vmatpush.msra.mxu0 0.0
    %2296 = vmatpush.msra.mxu0 0.0
    %2297 = vmatpush.msra.mxu0 0.0
    %2298 = vmatpush.msra.mxu0 0.0
    %2299 = vmatpush.msra.mxu0 %v2274
    %2300 = vmatpush.msra.mxu0 %v2273
    %2301 = vmatpush.msra.mxu0 %v2272
    %2302 = vmatpush.msra.mxu0 %v2271
    %2303 = vmatmul.f32.gmra.mxu0 %v2276
    %v2304 = vpop.f32.mrf.mxu0
    %v2305 = vadd.f32 0.0, %v2304
    %2306 = vmatmul.f32.gmra.mxu0 %v2279
    %v2307 = vpop.f32.mrf.mxu0
    %v2308 = vadd.f32 0.0, %v2307
    %2309 = vmatmul.f32.gmra.mxu0 %v2282
    %v2310 = vpop.f32.mrf.mxu0
    %v2311 = vadd.f32 0.0, %v2310
    %2312 = vmatmul.f32.gmra.mxu0 %v2285
    %v2313 = vpop.f32.mrf.mxu0
    %v2314 = vadd.f32 0.0, %v2313
    %2315 = vdwg.mxu0
    %v2316 = vadd.f32 %v2256, %v2305
    %v2317 = vadd.f32 %v2259, %v2308
    %v2318 = vadd.f32 %v2262, %v2311
    %v2319 = vadd.f32 %v2265, %v2314
    %v2320 = vld [vmem:[%s2 + $0x250] sm:$0x1]
    %v2321 = vperm.slane %v2320, 0
    %v2322 = vadd.f32 %v2316, %v2321
    %v2323 = vadd.f32 %v2317, %v2321
    %v2324 = vadd.f32 %v2318, %v2321
    %v2325 = vadd.f32 %v2319, %v2321
    %v2326 = vmax.f32 %v2322, 0.0
    %v2327 = vmax.f32 %v2323, 0.0
    %v2328 = vmax.f32 %v2324, 0.0
    %v2329 = vmax.f32 %v2325, 0.0
    %v2330 = vadd.f32 %v2326, %v2020
    %v2331 = vadd.f32 %v2327, %v2021
    %v2332 = vadd.f32 %v2328, %v2022
    %v2333 = vadd.f32 %v2329, %v2023
    %v2334 = vmax.f32 %v2330, 0.0
    %v2335 = vmax.f32 %v2331, 0.0
    %v2336 = vmax.f32 %v2332, 0.0
    %v2337 = vmax.f32 %v2333, 0.0
    %2338 = vst.msk [vmem:[#allocation3 + $0x20] sm:$0xff] %vm38, %v2334
    %2339 = vst.msk [vmem:[#allocation3 + $0x28] sm:$0xff] %vm38, %v2335
    %2340 = vst.msk [vmem:[#allocation3 + $0x30] sm:$0xff] %vm38, %v2336
    %2341 = vst.msk [vmem:[#allocation3 + $0x38] sm:$0xff] %vm38, %v2337
    %v2342 = vld [vmem:[#allocation3 + $0x10] sm:$0xff]
    %v2343 = vld [vmem:[#allocation3 + $0x18] sm:$0xff]
    %v2344 = vld [vmem:[#allocation3 + $0x20] sm:$0xff]
    %v2345 = vld [vmem:[#allocation3 + $0x28] sm:$0xff]
    %v2346 = vld [vmem:[%s2 + $0x278] sm:$0xff]
    %v2347 = vld [vmem:[%s2 + $0x280] sm:$0xff]
    %v2348 = vld [vmem:[%s2 + $0x288] sm:$0xff]
    %v2349 = vld [vmem:[%s2 + $0x290] sm:$0xff]
    %v2350 = vld [vmem:[#allocation3 + $0x30] sm:$0xff]
    %v2351 = vld [vmem:[#allocation3 + $0x38] sm:$0xff]
    %v2352 = vld [vmem:[%s2 + $0x298] sm:$0xff]
    %v2353 = vld [vmem:[%s2 + $0x2a0] sm:$0xff]
    %v2354 = vld [vmem:[%s2 + $0x2a8] sm:$0xff]
    %v2355 = vld [vmem:[%s2 + $0x2b0] sm:$0xff]
    %v2357 = vsel %vm38, %v2344, 0
    %v2360 = vsel %vm38, %v2345, 0
    %v2363 = vsel %vm38, %v2350, 0
    %v2366 = vsel %vm38, %v2351, 0
    %2368 = vmatpush.msra.mxu0 0.0
    %2369 = vmatpush.msra.mxu0 0.0
    %2370 = vmatpush.msra.mxu0 0.0
    %2371 = vmatpush.msra.mxu0 0.0
    %2372 = vmatpush.msra.mxu0 0.0
    %2373 = vmatpush.msra.mxu0 0.0
    %2374 = vmatpush.msra.mxu0 0.0
    %2375 = vmatpush.msra.mxu0 0.0
    %2376 = vmatpush.msra.mxu0 0.0
    %2377 = vmatpush.msra.mxu0 0.0
    %2378 = vmatpush.msra.mxu0 0.0
    %2379 = vmatpush.msra.mxu0 0.0
    %2380 = vmatpush.msra.mxu0 %v2355
    %2381 = vmatpush.msra.mxu0 %v2354
    %2382 = vmatpush.msra.mxu0 %v2353
    %2383 = vmatpush.msra.mxu0 %v2352
    %2384 = vmatmul.f32.gmra.mxu0 %v2357
    %v2385 = vpop.f32.mrf.mxu0
    %v2386 = vadd.f32 0.0, %v2385
    %2387 = vmatmul.f32.gmra.mxu0 %v2360
    %v2388 = vpop.f32.mrf.mxu0
    %v2389 = vadd.f32 0.0, %v2388
    %2390 = vmatmul.f32.gmra.mxu0 %v2363
    %v2391 = vpop.f32.mrf.mxu0
    %v2392 = vadd.f32 0.0, %v2391
    %2393 = vmatmul.f32.gmra.mxu0 %v2366
    %v2394 = vpop.f32.mrf.mxu0
    %v2395 = vadd.f32 0.0, %v2394
    %2396 = vdwg.mxu0
    %v2398 = vsel %vm38, %v2342, 0
    %v2401 = vsel %vm38, %v2343, 0
    %2403 = vmatpush.msra.mxu0 0.0
    %2404 = vmatpush.msra.mxu0 0.0
    %2405 = vmatpush.msra.mxu0 0.0
    %2406 = vmatpush.msra.mxu0 0.0
    %2407 = vmatpush.msra.mxu0 0.0
    %2408 = vmatpush.msra.mxu0 0.0
    %2409 = vmatpush.msra.mxu0 0.0
    %2410 = vmatpush.msra.mxu0 0.0
    %2411 = vmatpush.msra.mxu0 0.0
    %2412 = vmatpush.msra.mxu0 0.0
    %2413 = vmatpush.msra.mxu0 0.0
    %2414 = vmatpush.msra.mxu0 0.0
    %2415 = vmatpush.msra.mxu0 %v2349
    %2416 = vmatpush.msra.mxu0 %v2348
    %2417 = vmatpush.msra.mxu0 %v2347
    %2418 = vmatpush.msra.mxu0 %v2346
    %2419 = vmatmul.f32.gmra.mxu0 %v2398
    %v2420 = vpop.f32.mrf.mxu0
    %v2421 = vadd.f32 %v2386, %v2420
    %2422 = vmatmul.f32.gmra.mxu0 %v2401
    %v2423 = vpop.f32.mrf.mxu0
    %v2424 = vadd.f32 %v2389, %v2423
    %2425 = vmatmul.f32.gmra.mxu0 %v2357
    %v2426 = vpop.f32.mrf.mxu0
    %v2427 = vadd.f32 %v2392, %v2426
    %2428 = vmatmul.f32.gmra.mxu0 %v2360
    %v2429 = vpop.f32.mrf.mxu0
    %v2430 = vadd.f32 %v2395, %v2429
    %2431 = vdwg.mxu0
    %v2432 = vld [vmem:[%s2 + $0x2b8] sm:$0x1]
    %v2433 = vperm.slane %v2432, 0
    %v2434 = vadd.f32 %v2421, %v2433
    %v2435 = vadd.f32 %v2424, %v2433
    %v2436 = vadd.f32 %v2427, %v2433
    %v2437 = vadd.f32 %v2430, %v2433
    %v2438 = vmax.f32 %v2434, 0.0
    %v2439 = vmax.f32 %v2435, 0.0
    %v2440 = vmax.f32 %v2436, 0.0
    %v2441 = vmax.f32 %v2437, 0.0
    %2442 = vst.msk [vmem:[#allocation3 + $0x20] sm:$0xff] %vm38, %v2438
    %2443 = vst.msk [vmem:[#allocation3 + $0x28] sm:$0xff] %vm38, %v2439
    %2444 = vst.msk [vmem:[#allocation3 + $0x30] sm:$0xff] %vm38, %v2440
    %2445 = vst.msk [vmem:[#allocation3 + $0x38] sm:$0xff] %vm38, %v2441
    %v2446 = vld [vmem:[#allocation3 + $0x10] sm:$0xff]
    %v2447 = vld [vmem:[#allocation3 + $0x18] sm:$0xff]
    %v2448 = vld [vmem:[#allocation3 + $0x20] sm:$0xff]
    %v2449 = vld [vmem:[#allocation3 + $0x28] sm:$0xff]
    %v2450 = vld [vmem:[%s2 + $0x2e0] sm:$0xff]
    %v2451 = vld [vmem:[%s2 + $0x2e8] sm:$0xff]
    %v2452 = vld [vmem:[%s2 + $0x2f0] sm:$0xff]
    %v2453 = vld [vmem:[%s2 + $0x2f8] sm:$0xff]
    %v2454 = vld [vmem:[#allocation3 + $0x30] sm:$0xff]
    %v2455 = vld [vmem:[#allocation3 + $0x38] sm:$0xff]
    %v2456 = vld [vmem:[%s2 + $0x300] sm:$0xff]
    %v2457 = vld [vmem:[%s2 + $0x308] sm:$0xff]
    %v2458 = vld [vmem:[%s2 + $0x310] sm:$0xff]
    %v2459 = vld [vmem:[%s2 + $0x318] sm:$0xff]
    %v2461 = vsel %vm38, %v2448, 0
    %v2464 = vsel %vm38, %v2449, 0
    %v2467 = vsel %vm38, %v2454, 0
    %v2470 = vsel %vm38, %v2455, 0
    %2472 = vmatpush.msra.mxu0 0.0
    %2473 = vmatpush.msra.mxu0 0.0
    %2474 = vmatpush.msra.mxu0 0.0
    %2475 = vmatpush.msra.mxu0 0.0
    %2476 = vmatpush.msra.mxu0 0.0
    %2477 = vmatpush.msra.mxu0 0.0
    %2478 = vmatpush.msra.mxu0 0.0
    %2479 = vmatpush.msra.mxu0 0.0
    %2480 = vmatpush.msra.mxu0 0.0
    %2481 = vmatpush.msra.mxu0 0.0
    %2482 = vmatpush.msra.mxu0 0.0
    %2483 = vmatpush.msra.mxu0 0.0
    %2484 = vmatpush.msra.mxu0 %v2459
    %2485 = vmatpush.msra.mxu0 %v2458
    %2486 = vmatpush.msra.mxu0 %v2457
    %2487 = vmatpush.msra.mxu0 %v2456
    %2488 = vmatmul.f32.gmra.mxu0 %v2461
    %v2489 = vpop.f32.mrf.mxu0
    %v2490 = vadd.f32 0.0, %v2489
    %2491 = vmatmul.f32.gmra.mxu0 %v2464
    %v2492 = vpop.f32.mrf.mxu0
    %v2493 = vadd.f32 0.0, %v2492
    %2494 = vmatmul.f32.gmra.mxu0 %v2467
    %v2495 = vpop.f32.mrf.mxu0
    %v2496 = vadd.f32 0.0, %v2495
    %2497 = vmatmul.f32.gmra.mxu0 %v2470
    %v2498 = vpop.f32.mrf.mxu0
    %v2499 = vadd.f32 0.0, %v2498
    %2500 = vdwg.mxu0
    %v2502 = vsel %vm38, %v2446, 0
    %v2505 = vsel %vm38, %v2447, 0
    %2507 = vmatpush.msra.mxu0 0.0
    %2508 = vmatpush.msra.mxu0 0.0
    %2509 = vmatpush.msra.mxu0 0.0
    %2510 = vmatpush.msra.mxu0 0.0
    %2511 = vmatpush.msra.mxu0 0.0
    %2512 = vmatpush.msra.mxu0 0.0
    %2513 = vmatpush.msra.mxu0 0.0
    %2514 = vmatpush.msra.mxu0 0.0
    %2515 = vmatpush.msra.mxu0 0.0
    %2516 = vmatpush.msra.mxu0 0.0
    %2517 = vmatpush.msra.mxu0 0.0
    %2518 = vmatpush.msra.mxu0 0.0
    %2519 = vmatpush.msra.mxu0 %v2453
    %2520 = vmatpush.msra.mxu0 %v2452
    %2521 = vmatpush.msra.mxu0 %v2451
    %2522 = vmatpush.msra.mxu0 %v2450
    %2523 = vmatmul.f32.gmra.mxu0 %v2502
    %v2524 = vpop.f32.mrf.mxu0
    %v2525 = vadd.f32 %v2490, %v2524
    %2526 = vmatmul.f32.gmra.mxu0 %v2505
    %v2527 = vpop.f32.mrf.mxu0
    %v2528 = vadd.f32 %v2493, %v2527
    %2529 = vmatmul.f32.gmra.mxu0 %v2461
    %v2530 = vpop.f32.mrf.mxu0
    %v2531 = vadd.f32 %v2496, %v2530
    %2532 = vmatmul.f32.gmra.mxu0 %v2464
    %v2533 = vpop.f32.mrf.mxu0
    %v2534 = vadd.f32 %v2499, %v2533
    %2535 = vdwg.mxu0
    %v2536 = vld [vmem:[%s2 + $0x320] sm:$0x1]
    %v2537 = vperm.slane %v2536, 0
    %v2538 = vadd.f32 %v2525, %v2537
    %v2539 = vadd.f32 %v2528, %v2537
    %v2540 = vadd.f32 %v2531, %v2537
    %v2541 = vadd.f32 %v2534, %v2537
    %v2542 = vmax.f32 %v2538, 0.0
    %v2543 = vmax.f32 %v2539, 0.0
    %v2544 = vmax.f32 %v2540, 0.0
    %v2545 = vmax.f32 %v2541, 0.0
    %v2546 = vadd.f32 %v2542, %v2334
    %v2547 = vadd.f32 %v2543, %v2335
    %v2548 = vadd.f32 %v2544, %v2336
    %v2549 = vadd.f32 %v2545, %v2337
    %v2550 = vmax.f32 %v2546, 0.0
    %v2551 = vmax.f32 %v2547, 0.0
    %v2552 = vmax.f32 %v2548, 0.0
    %v2553 = vmax.f32 %v2549, 0.0
    %v2554 = vld [vmem:[%s5] sm:$0xff]
    %v2555 = vld [vmem:[%s5 + $0x10] sm:$0xff]
    %v2556 = vld [vmem:[%s5 + $0x20] sm:$0xff]
    %v2557 = vld [vmem:[%s5 + $0x30] sm:$0xff]
    %v2558 = vld [vmem:[%s5 + $0x40] ss:$0 sm:$0xff]
    %v2560 = vsel %vm38, %v1305, 0
    %v2563 = vsel %vm38, %v1306, 0
    %v2566 = vsel %vm38, %v1307, 0
    %v2569 = vsel %vm38, %v1308, 0
    %2571 = vmatpush.msra.mxu0 0.0
    %2572 = vmatpush.msra.mxu0 0.0
    %2573 = vmatpush.msra.mxu0 0.0
    %2574 = vmatpush.msra.mxu0 0.0
    %2575 = vmatpush.msra.mxu0 0.0
    %2576 = vmatpush.msra.mxu0 0.0
    %2577 = vmatpush.msra.mxu0 0.0
    %2578 = vmatpush.msra.mxu0 0.0
    %2579 = vmatpush.msra.mxu0 0.0
    %2580 = vmatpush.msra.mxu0 0.0
    %2581 = vmatpush.msra.mxu0 0.0
    %2582 = vmatpush.msra.mxu0 0.0
    %2583 = vmatpush.msra.mxu0 %v2557
    %2584 = vmatpush.msra.mxu0 %v2556
    %2585 = vmatpush.msra.mxu0 %v2555
    %2586 = vmatpush.msra.mxu0 %v2554
    %2587 = vmatmul.f32.gmra.mxu0 %v2560
    %v2588 = vpop.f32.mrf.mxu0
    %v2589 = vadd.f32 %v2558, %v2588
    %2590 = vmatmul.f32.gmra.mxu0 %v2563
    %v2591 = vpop.f32.mrf.mxu0
    %v2592 = vadd.f32 %v2558, %v2591
    %2593 = vmatmul.f32.gmra.mxu0 %v2566
    %v2594 = vpop.f32.mrf.mxu0
    %v2595 = vadd.f32 %v2558, %v2594
    %2596 = vmatmul.f32.gmra.mxu0 %v2569
    %v2597 = vpop.f32.mrf.mxu0
    %v2598 = vadd.f32 %v2558, %v2597
    %2599 = vdwg.mxu0
    %v2600 = vmul.f32 %v2589, 0.70710677
    %v2601 = vmul.f32 %v2592, 0.70710677
    %v2602 = vmul.f32 %v2595, 0.70710677
    %v2603 = vmul.f32 %v2598, 0.70710677
    %v2604 = vand.u32 2147483647, %v2600
    %v2605 = vand.u32 2147483647, %v2601
    %v2606 = vand.u32 2147483647, %v2602
    %v2607 = vand.u32 2147483647, %v2603
    %v2608 = vmul.f32 %v2604, 0.3275911
    %v2609 = vmul.f32 %v2605, 0.3275911
    %v2610 = vmul.f32 %v2606, 0.3275911
    %v2611 = vmul.f32 %v2607, 0.3275911
    %v2612 = vadd.f32 %v2608, 1.0
    %v2613 = vadd.f32 %v2609, 1.0
    %v2614 = vadd.f32 %v2610, 1.0
    %v2615 = vadd.f32 %v2611, 1.0
    %v2616 = vrcp.pop %v2612
    %v2617 = vmul.f32 %v2612, %v2616
    %v2618 = vsub.f32 1.0, %v2617
    %v2619 = vmul.f32 %v2616, %v2618
    %v2620 = vadd.f32 %v2616, %v2619
    %vm2621 = vweird.f32 %v2612
    %vm2622 = vweird.f32 %v2616
    %vm2623 = vmor %vm2621, %vm2622
    %v2624 = vsel %vm2623, %v2616, %v2620
    %v2625 = vand.u32 2147483647, %v2612
    %vm2626 = vcmp.eq.f32.partialorder %v2625, 8.507059e+37
    %v2627 = vand.u32 %v2612, 2147483648
    %v2628 = vor.u32 1.1754944e-38, %v2627
    %v2629 = vsel %vm2626, %v2628, %v2624
    %v2630 = vrcp.pop %v2613
    %v2631 = vmul.f32 %v2613, %v2630
    %v2632 = vsub.f32 1.0, %v2631
    %v2633 = vmul.f32 %v2630, %v2632
    %v2634 = vadd.f32 %v2630, %v2633
    %vm2635 = vweird.f32 %v2613
    %vm2636 = vweird.f32 %v2630
    %vm2637 = vmor %vm2635, %vm2636
    %v2638 = vsel %vm2637, %v2630, %v2634
    %v2639 = vand.u32 2147483647, %v2613
    %vm2640 = vcmp.eq.f32.partialorder %v2639, 8.507059e+37
    %v2641 = vand.u32 %v2613, 2147483648
    %v2642 = vor.u32 1.1754944e-38, %v2641
    %v2643 = vsel %vm2640, %v2642, %v2638
    %v2644 = vrcp.pop %v2614
    %v2645 = vmul.f32 %v2614, %v2644
    %v2646 = vsub.f32 1.0, %v2645
    %v2647 = vmul.f32 %v2644, %v2646
    %v2648 = vadd.f32 %v2644, %v2647
    %vm2649 = vweird.f32 %v2614
    %vm2650 = vweird.f32 %v2644
    %vm2651 = vmor %vm2649, %vm2650
    %v2652 = vsel %vm2651, %v2644, %v2648
    %v2653 = vand.u32 2147483647, %v2614
    %vm2654 = vcmp.eq.f32.partialorder %v2653, 8.507059e+37
    %v2655 = vand.u32 %v2614, 2147483648
    %v2656 = vor.u32 1.1754944e-38, %v2655
    %v2657 = vsel %vm2654, %v2656, %v2652
    %v2658 = vrcp.pop %v2615
    %v2659 = vmul.f32 %v2615, %v2658
    %v2660 = vsub.f32 1.0, %v2659
    %v2661 = vmul.f32 %v2658, %v2660
    %v2662 = vadd.f32 %v2658, %v2661
    %vm2663 = vweird.f32 %v2615
    %vm2664 = vweird.f32 %v2658
    %vm2665 = vmor %vm2663, %vm2664
    %v2666 = vsel %vm2665, %v2658, %v2662
    %v2667 = vand.u32 2147483647, %v2615
    %vm2668 = vcmp.eq.f32.partialorder %v2667, 8.507059e+37
    %v2669 = vand.u32 %v2615, 2147483648
    %v2670 = vor.u32 1.1754944e-38, %v2669
    %v2671 = vsel %vm2668, %v2670, %v2666
    %v2672 = vmul.f32 %v2629, 1.0614054
    %v2673 = vmul.f32 %v2643, 1.0614054
    %v2674 = vmul.f32 %v2657, 1.0614054
    %v2675 = vmul.f32 %v2671, 1.0614054
    %v2676 = vadd.f32 %v2672, -1.4531521
    %v2677 = vadd.f32 %v2673, -1.4531521
    %v2678 = vadd.f32 %v2674, -1.4531521
    %v2679 = vadd.f32 %v2675, -1.4531521
    %v2680 = vmul.f32 %v2676, %v2629
    %v2681 = vmul.f32 %v2677, %v2643
    %v2682 = vmul.f32 %v2678, %v2657
    %v2683 = vmul.f32 %v2679, %v2671
    %v2684 = vadd.f32 %v2680, 1.4214138
    %v2685 = vadd.f32 %v2681, 1.4214138
    %v2686 = vadd.f32 %v2682, 1.4214138
    %v2687 = vadd.f32 %v2683, 1.4214138
    %v2688 = vmul.f32 %v2684, %v2629
    %v2689 = vmul.f32 %v2685, %v2643
    %v2690 = vmul.f32 %v2686, %v2657
    %v2691 = vmul.f32 %v2687, %v2671
    %v2692 = vadd.f32 %v2688, -0.28449672
    %v2693 = vadd.f32 %v2689, -0.28449672
    %v2694 = vadd.f32 %v2690, -0.28449672
    %v2695 = vadd.f32 %v2691, -0.28449672
    %v2696 = vmul.f32 %v2692, %v2629
    %v2697 = vmul.f32 %v2693, %v2643
    %v2698 = vmul.f32 %v2694, %v2657
    %v2699 = vmul.f32 %v2695, %v2671
    %v2700 = vadd.f32 %v2696, 0.2548296
    %v2701 = vadd.f32 %v2697, 0.2548296
    %v2702 = vadd.f32 %v2698, 0.2548296
    %v2703 = vadd.f32 %v2699, 0.2548296
    %v2704 = vmul.f32 %v2700, %v2629
    %v2705 = vmul.f32 %v2701, %v2643
    %v2706 = vmul.f32 %v2702, %v2657
    %v2707 = vmul.f32 %v2703, %v2671
    %vm2708 = vcmp.ge.f32.partialorder %v2600, 0.0
    %vm2709 = vcmp.ge.f32.partialorder %v2601, 0.0
    %vm2710 = vcmp.ge.f32.partialorder %v2602, 0.0
    %vm2711 = vcmp.ge.f32.partialorder %v2603, 0.0
    %v2712 = vsel %vm2708, 1.0, -1.0
    %v2713 = vsel %vm2709, 1.0, -1.0
    %v2714 = vsel %vm2710, 1.0, -1.0
    %v2715 = vsel %vm2711, 1.0, -1.0
    %v2716 = vsub.f32 0.0, %v2604
    %v2717 = vsub.f32 0.0, %v2605
    %v2718 = vsub.f32 0.0, %v2606
    %v2719 = vsub.f32 0.0, %v2607
    %v2720 = vmul.f32 %v2716, %v2604
    %v2721 = vmul.f32 %v2717, %v2605
    %v2722 = vmul.f32 %v2718, %v2606
    %v2723 = vmul.f32 %v2719, %v2607
    %v2724 = vmul.f32 %v2720, 1.442695
    %v2725 = vpow.pop %v2724
    %v2726 = vmul.f32 %v2721, 1.442695
    %v2727 = vpow.pop %v2726
    %v2728 = vmul.f32 %v2722, 1.442695
    %v2729 = vpow.pop %v2728
    %v2730 = vmul.f32 %v2723, 1.442695
    %v2731 = vpow.pop %v2730
    %v2732 = vmul.f32 %v2704, %v2725
    %v2733 = vmul.f32 %v2705, %v2727
    %v2734 = vmul.f32 %v2706, %v2729
    %v2735 = vmul.f32 %v2707, %v2731
    %v2736 = vsub.f32 1.0, %v2732
    %v2737 = vsub.f32 1.0, %v2733
    %v2738 = vsub.f32 1.0, %v2734
    %v2739 = vsub.f32 1.0, %v2735
    %v2740 = vmul.f32 %v2712, %v2736
    %v2741 = vmul.f32 %v2713, %v2737
    %v2742 = vmul.f32 %v2714, %v2738
    %v2743 = vmul.f32 %v2715, %v2739
    %v2744 = vmul.f32 %v2589, 0.5
    %v2745 = vmul.f32 %v2592, 0.5
    %v2746 = vmul.f32 %v2595, 0.5
    %v2747 = vmul.f32 %v2598, 0.5
    %v2748 = vadd.f32 %v2740, 1.0
    %v2749 = vadd.f32 %v2741, 1.0
    %v2750 = vadd.f32 %v2742, 1.0
    %v2751 = vadd.f32 %v2743, 1.0
    %v2752 = vmul.f32 %v2744, %v2748
    %v2753 = vmul.f32 %v2745, %v2749
    %v2754 = vmul.f32 %v2746, %v2750
    %v2755 = vmul.f32 %v2747, %v2751
    %v2756 = vld [vmem:[%s5 + $0x50] sm:$0xff]
    %v2757 = vld [vmem:[%s5 + $0x60] sm:$0xff]
    %v2758 = vld [vmem:[%s5 + $0x70] sm:$0xff]
    %v2759 = vld [vmem:[%s5 + $0x80] sm:$0xff]
    %v2760 = vld [vmem:[%s5 + $0x90] sm:$0xff]
    %v2761 = vld [vmem:[%s5 + $0xa0] sm:$0xff]
    %v2762 = vld [vmem:[%s5 + $0xb0] sm:$0xff]
    %v2763 = vld [vmem:[%s5 + $0xc0] sm:$0xff]
    %v2764 = vld [vmem:[%s5 + $0xd0] ss:$0 sm:$0xff]
    %vm2765 = vcmask 523264
    %v2767 = vsel %vm2765, %v2752, 0
    %v2770 = vsel %vm2765, %v2753, 0
    %v2773 = vsel %vm2765, %v2754, 0
    %v2776 = vsel %vm2765, %v2755, 0
    %2778 = vmatpush.msra.mxu0 0.0
    %2779 = vmatpush.msra.mxu0 0.0
    %2780 = vmatpush.msra.mxu0 0.0
    %2781 = vmatpush.msra.mxu0 0.0
    %2782 = vmatpush.msra.mxu0 0.0
    %2783 = vmatpush.msra.mxu0 0.0
    %2784 = vmatpush.msra.mxu0 0.0
    %2785 = vmatpush.msra.mxu0 0.0
    %2786 = vmatpush.msra.mxu0 %v2763
    %2787 = vmatpush.msra.mxu0 %v2762
    %2788 = vmatpush.msra.mxu0 %v2761
    %2789 = vmatpush.msra.mxu0 %v2760
    %2790 = vmatpush.msra.mxu0 %v2759
    %2791 = vmatpush.msra.mxu0 %v2758
    %2792 = vmatpush.msra.mxu0 %v2757
    %2793 = vmatpush.msra.mxu0 %v2756
    %2794 = vmatmul.f32.gmra.mxu0 %v2767
    %v2795 = vpop.f32.mrf.mxu0
    %v2796 = vadd.f32 %v2764, %v2795
    %2797 = vmatmul.f32.gmra.mxu0 %v2770
    %v2798 = vpop.f32.mrf.mxu0
    %v2799 = vadd.f32 %v2764, %v2798
    %2800 = vmatmul.f32.gmra.mxu0 %v2773
    %v2801 = vpop.f32.mrf.mxu0
    %v2802 = vadd.f32 %v2764, %v2801
    %2803 = vmatmul.f32.gmra.mxu0 %v2776
    %v2804 = vpop.f32.mrf.mxu0
    %v2805 = vadd.f32 %v2764, %v2804
    %2806 = vdwg.mxu0
    %v2807 = vld [vmem:[%s5 + $0xe0] sm:$0xff]
    %v2808 = vld [vmem:[%s5 + $0xf0] sm:$0xff]
    %v2809 = vld [vmem:[%s5 + $0x100] sm:$0xff]
    %v2810 = vld [vmem:[%s5 + $0x110] sm:$0xff]
    %v2811 = vld [vmem:[%s5 + $0x120] ss:$0 sm:$0xff]
    %v2813 = vsel %vm38, %v2550, 0
    %v2816 = vsel %vm38, %v2551, 0
    %v2819 = vsel %vm38, %v2552, 0
    %v2822 = vsel %vm38, %v2553, 0
    %2824 = vmatpush.msra.mxu0 0.0
    %2825 = vmatpush.msra.mxu0 0.0
    %2826 = vmatpush.msra.mxu0 0.0
    %2827 = vmatpush.msra.mxu0 0.0
    %2828 = vmatpush.msra.mxu0 0.0
    %2829 = vmatpush.msra.mxu0 0.0
    %2830 = vmatpush.msra.mxu0 0.0
    %2831 = vmatpush.msra.mxu0 0.0
    %2832 = vmatpush.msra.mxu0 0.0
    %2833 = vmatpush.msra.mxu0 0.0
    %2834 = vmatpush.msra.mxu0 0.0
    %2835 = vmatpush.msra.mxu0 0.0
    %2836 = vmatpush.msra.mxu0 %v2810
    %2837 = vmatpush.msra.mxu0 %v2809
    %2838 = vmatpush.msra.mxu0 %v2808
    %2839 = vmatpush.msra.mxu0 %v2807
    %2840 = vmatmul.f32.gmra.mxu0 %v2813
    %v2841 = vpop.f32.mrf.mxu0
    %v2842 = vadd.f32 %v2811, %v2841
    %2843 = vmatmul.f32.gmra.mxu0 %v2816
    %v2844 = vpop.f32.mrf.mxu0
    %v2845 = vadd.f32 %v2811, %v2844
    %2846 = vmatmul.f32.gmra.mxu0 %v2819
    %v2847 = vpop.f32.mrf.mxu0
    %v2848 = vadd.f32 %v2811, %v2847
    %2849 = vmatmul.f32.gmra.mxu0 %v2822
    %v2850 = vpop.f32.mrf.mxu0
    %v2851 = vadd.f32 %v2811, %v2850
    %2852 = vdwg.mxu0
    %v2853 = vmul.f32 %v2842, 0.70710677
    %v2854 = vmul.f32 %v2845, 0.70710677
    %v2855 = vmul.f32 %v2848, 0.70710677
    %v2856 = vmul.f32 %v2851, 0.70710677
    %v2857 = vand.u32 2147483647, %v2853
    %v2858 = vand.u32 2147483647, %v2854
    %v2859 = vand.u32 2147483647, %v2855
    %v2860 = vand.u32 2147483647, %v2856
    %v2861 = vmul.f32 %v2857, 0.3275911
    %v2862 = vmul.f32 %v2858, 0.3275911
    %v2863 = vmul.f32 %v2859, 0.3275911
    %v2864 = vmul.f32 %v2860, 0.3275911
    %v2865 = vadd.f32 %v2861, 1.0
    %v2866 = vadd.f32 %v2862, 1.0
    %v2867 = vadd.f32 %v2863, 1.0
    %v2868 = vadd.f32 %v2864, 1.0
    %v2869 = vrcp.pop %v2865
    %v2870 = vmul.f32 %v2865, %v2869
    %v2871 = vsub.f32 1.0, %v2870
    %v2872 = vmul.f32 %v2869, %v2871
    %v2873 = vadd.f32 %v2869, %v2872
    %vm2874 = vweird.f32 %v2865
    %vm2875 = vweird.f32 %v2869
    %vm2876 = vmor %vm2874, %vm2875
    %v2877 = vsel %vm2876, %v2869, %v2873
    %v2878 = vand.u32 2147483647, %v2865
    %vm2879 = vcmp.eq.f32.partialorder %v2878, 8.507059e+37
    %v2880 = vand.u32 %v2865, 2147483648
    %v2881 = vor.u32 1.1754944e-38, %v2880
    %v2882 = vsel %vm2879, %v2881, %v2877
    %v2883 = vrcp.pop %v2866
    %v2884 = vmul.f32 %v2866, %v2883
    %v2885 = vsub.f32 1.0, %v2884
    %v2886 = vmul.f32 %v2883, %v2885
    %v2887 = vadd.f32 %v2883, %v2886
    %vm2888 = vweird.f32 %v2866
    %vm2889 = vweird.f32 %v2883
    %vm2890 = vmor %vm2888, %vm2889
    %v2891 = vsel %vm2890, %v2883, %v2887
    %v2892 = vand.u32 2147483647, %v2866
    %vm2893 = vcmp.eq.f32.partialorder %v2892, 8.507059e+37
    %v2894 = vand.u32 %v2866, 2147483648
    %v2895 = vor.u32 1.1754944e-38, %v2894
    %v2896 = vsel %vm2893, %v2895, %v2891
    %v2897 = vrcp.pop %v2867
    %v2898 = vmul.f32 %v2867, %v2897
    %v2899 = vsub.f32 1.0, %v2898
    %v2900 = vmul.f32 %v2897, %v2899
    %v2901 = vadd.f32 %v2897, %v2900
    %vm2902 = vweird.f32 %v2867
    %vm2903 = vweird.f32 %v2897
    %vm2904 = vmor %vm2902, %vm2903
    %v2905 = vsel %vm2904, %v2897, %v2901
    %v2906 = vand.u32 2147483647, %v2867
    %vm2907 = vcmp.eq.f32.partialorder %v2906, 8.507059e+37
    %v2908 = vand.u32 %v2867, 2147483648
    %v2909 = vor.u32 1.1754944e-38, %v2908
    %v2910 = vsel %vm2907, %v2909, %v2905
    %v2911 = vrcp.pop %v2868
    %v2912 = vmul.f32 %v2868, %v2911
    %v2913 = vsub.f32 1.0, %v2912
    %v2914 = vmul.f32 %v2911, %v2913
    %v2915 = vadd.f32 %v2911, %v2914
    %vm2916 = vweird.f32 %v2868
    %vm2917 = vweird.f32 %v2911
    %vm2918 = vmor %vm2916, %vm2917
    %v2919 = vsel %vm2918, %v2911, %v2915
    %v2920 = vand.u32 2147483647, %v2868
    %vm2921 = vcmp.eq.f32.partialorder %v2920, 8.507059e+37
    %v2922 = vand.u32 %v2868, 2147483648
    %v2923 = vor.u32 1.1754944e-38, %v2922
    %v2924 = vsel %vm2921, %v2923, %v2919
    %v2925 = vmul.f32 %v2882, 1.0614054
    %v2926 = vmul.f32 %v2896, 1.0614054
    %v2927 = vmul.f32 %v2910, 1.0614054
    %v2928 = vmul.f32 %v2924, 1.0614054
    %v2929 = vadd.f32 %v2925, -1.4531521
    %v2930 = vadd.f32 %v2926, -1.4531521
    %v2931 = vadd.f32 %v2927, -1.4531521
    %v2932 = vadd.f32 %v2928, -1.4531521
    %v2933 = vmul.f32 %v2929, %v2882
    %v2934 = vmul.f32 %v2930, %v2896
    %v2935 = vmul.f32 %v2931, %v2910
    %v2936 = vmul.f32 %v2932, %v2924
    %v2937 = vadd.f32 %v2933, 1.4214138
    %v2938 = vadd.f32 %v2934, 1.4214138
    %v2939 = vadd.f32 %v2935, 1.4214138
    %v2940 = vadd.f32 %v2936, 1.4214138
    %v2941 = vmul.f32 %v2937, %v2882
    %v2942 = vmul.f32 %v2938, %v2896
    %v2943 = vmul.f32 %v2939, %v2910
    %v2944 = vmul.f32 %v2940, %v2924
    %v2945 = vadd.f32 %v2941, -0.28449672
    %v2946 = vadd.f32 %v2942, -0.28449672
    %v2947 = vadd.f32 %v2943, -0.28449672
    %v2948 = vadd.f32 %v2944, -0.28449672
    %v2949 = vmul.f32 %v2945, %v2882
    %v2950 = vmul.f32 %v2946, %v2896
    %v2951 = vmul.f32 %v2947, %v2910
    %v2952 = vmul.f32 %v2948, %v2924
    %v2953 = vadd.f32 %v2949, 0.2548296
    %v2954 = vadd.f32 %v2950, 0.2548296
    %v2955 = vadd.f32 %v2951, 0.2548296
    %v2956 = vadd.f32 %v2952, 0.2548296
    %v2957 = vmul.f32 %v2953, %v2882
    %v2958 = vmul.f32 %v2954, %v2896
    %v2959 = vmul.f32 %v2955, %v2910
    %v2960 = vmul.f32 %v2956, %v2924
    %vm2961 = vcmp.ge.f32.partialorder %v2853, 0.0
    %vm2962 = vcmp.ge.f32.partialorder %v2854, 0.0
    %vm2963 = vcmp.ge.f32.partialorder %v2855, 0.0
    %vm2964 = vcmp.ge.f32.partialorder %v2856, 0.0
    %v2965 = vsel %vm2961, 1.0, -1.0
    %v2966 = vsel %vm2962, 1.0, -1.0
    %v2967 = vsel %vm2963, 1.0, -1.0
    %v2968 = vsel %vm2964, 1.0, -1.0
    %v2969 = vsub.f32 0.0, %v2857
    %v2970 = vsub.f32 0.0, %v2858
    %v2971 = vsub.f32 0.0, %v2859
    %v2972 = vsub.f32 0.0, %v2860
    %v2973 = vmul.f32 %v2969, %v2857
    %v2974 = vmul.f32 %v2970, %v2858
    %v2975 = vmul.f32 %v2971, %v2859
    %v2976 = vmul.f32 %v2972, %v2860
    %v2977 = vmul.f32 %v2973, 1.442695
    %v2978 = vpow.pop %v2977
    %v2979 = vmul.f32 %v2974, 1.442695
    %v2980 = vpow.pop %v2979
    %v2981 = vmul.f32 %v2975, 1.442695
    %v2982 = vpow.pop %v2981
    %v2983 = vmul.f32 %v2976, 1.442695
    %v2984 = vpow.pop %v2983
    %v2985 = vmul.f32 %v2957, %v2978
    %v2986 = vmul.f32 %v2958, %v2980
    %v2987 = vmul.f32 %v2959, %v2982
    %v2988 = vmul.f32 %v2960, %v2984
    %v2989 = vsub.f32 1.0, %v2985
    %v2990 = vsub.f32 1.0, %v2986
    %v2991 = vsub.f32 1.0, %v2987
    %v2992 = vsub.f32 1.0, %v2988
    %v2993 = vmul.f32 %v2965, %v2989
    %v2994 = vmul.f32 %v2966, %v2990
    %v2995 = vmul.f32 %v2967, %v2991
    %v2996 = vmul.f32 %v2968, %v2992
    %v2997 = vmul.f32 %v2842, 0.5
    %v2998 = vmul.f32 %v2845, 0.5
    %v2999 = vmul.f32 %v2848, 0.5
    %v3000 = vmul.f32 %v2851, 0.5
    %v3001 = vadd.f32 %v2993, 1.0
    %v3002 = vadd.f32 %v2994, 1.0
    %v3003 = vadd.f32 %v2995, 1.0
    %v3004 = vadd.f32 %v2996, 1.0
    %v3005 = vmul.f32 %v2997, %v3001
    %v3006 = vmul.f32 %v2998, %v3002
    %v3007 = vmul.f32 %v2999, %v3003
    %v3008 = vmul.f32 %v3000, %v3004
    %v3009 = vld [vmem:[%s5 + $0x130] sm:$0xff]
    %v3010 = vld [vmem:[%s5 + $0x140] sm:$0xff]
    %v3011 = vld [vmem:[%s5 + $0x150] ss:$0 sm:$0xff]
    %vm3012 = vcmask 130048
    %v3014 = vsel %vm3012, %v3005, 0
    %v3017 = vsel %vm3012, %v3006, 0
    %v3020 = vsel %vm3012, %v3007, 0
    %v3023 = vsel %vm3012, %v3008, 0
    %3025 = vmatpush.msra.mxu0 0.0
    %3026 = vmatpush.msra.mxu0 0.0
    %3027 = vmatpush.msra.mxu0 0.0
    %3028 = vmatpush.msra.mxu0 0.0
    %3029 = vmatpush.msra.mxu0 0.0
    %3030 = vmatpush.msra.mxu0 0.0
    %3031 = vmatpush.msra.mxu0 0.0
    %3032 = vmatpush.msra.mxu0 0.0
    %3033 = vmatpush.msra.mxu0 0.0
    %3034 = vmatpush.msra.mxu0 0.0
    %3035 = vmatpush.msra.mxu0 0.0
    %3036 = vmatpush.msra.mxu0 0.0
    %3037 = vmatpush.msra.mxu0 0.0
    %3038 = vmatpush.msra.mxu0 0.0
    %3039 = vmatpush.msra.mxu0 %v3010
    %3040 = vmatpush.msra.mxu0 %v3009
    %3041 = vmatmul.f32.gmra.mxu0 %v3014
    %v3042 = vpop.f32.mrf.mxu0
    %v3043 = vadd.f32 %v3011, %v3042
    %3044 = vmatmul.f32.gmra.mxu0 %v3017
    %v3045 = vpop.f32.mrf.mxu0
    %v3046 = vadd.f32 %v3011, %v3045
    %3047 = vmatmul.f32.gmra.mxu0 %v3020
    %v3048 = vpop.f32.mrf.mxu0
    %v3049 = vadd.f32 %v3011, %v3048
    %3050 = vmatmul.f32.gmra.mxu0 %v3023
    %v3051 = vpop.f32.mrf.mxu0
    %v3052 = vadd.f32 %v3011, %v3051
    %3053 = vdwg.mxu0
    %v3054 = vadd.f32 %v2550, %v3043
    %v3055 = vadd.f32 %v2551, %v3046
    %v3056 = vadd.f32 %v2552, %v3049
    %v3057 = vadd.f32 %v2553, %v3052
    %v3058 = vld [vmem:[%s5 + $0x230] sm:$0xff]
    %v3059 = vld [vmem:[%s5 + $0x240] sm:$0xff]
    %v3060 = vld [vmem:[%s5 + $0x250] sm:$0xff]
    %v3061 = vld [vmem:[%s5 + $0x260] sm:$0xff]
    %v3063 = vsel %vm38, %v3054, 0
    %v3066 = vsel %vm38, %v3055, 0
    %v3069 = vsel %vm38, %v3056, 0
    %v3072 = vsel %vm38, %v3057, 0
    %3074 = vmatpush.msra.mxu0 0.0
    %3075 = vmatpush.msra.mxu0 0.0
    %3076 = vmatpush.msra.mxu0 0.0
    %3077 = vmatpush.msra.mxu0 0.0
    %3078 = vmatpush.msra.mxu0 0.0
    %3079 = vmatpush.msra.mxu0 0.0
    %3080 = vmatpush.msra.mxu0 0.0
    %3081 = vmatpush.msra.mxu0 0.0
    %3082 = vmatpush.msra.mxu0 0.0
    %3083 = vmatpush.msra.mxu0 0.0
    %3084 = vmatpush.msra.mxu0 0.0
    %3085 = vmatpush.msra.mxu0 0.0
    %3086 = vmatpush.msra.mxu0 %v3061
    %3087 = vmatpush.msra.mxu0 %v3060
    %3088 = vmatpush.msra.mxu0 %v3059
    %3089 = vmatpush.msra.mxu0 %v3058
    %3090 = vmatmul.f32.gmra.mxu0 %v3063
    %v3091 = vpop.f32.mrf.mxu0
    %v3092 = vadd.f32 0.0, %v3091
    %3093 = vmatmul.f32.gmra.mxu0 %v3066
    %v3094 = vpop.f32.mrf.mxu0
    %v3095 = vadd.f32 0.0, %v3094
    %3096 = vmatmul.f32.gmra.mxu0 %v3069
    %v3097 = vpop.f32.mrf.mxu0
    %v3098 = vadd.f32 0.0, %v3097
    %3099 = vmatmul.f32.gmra.mxu0 %v3072
    %v3100 = vpop.f32.mrf.mxu0
    %v3101 = vadd.f32 0.0, %v3100
    %3102 = vdwg.mxu0
    %v3103 = vld [vmem:[%s5 + $0x280] sm:$0xff]
    %v3104 = vld [vmem:[%s5 + $0x290] sm:$0xff]
    %v3105 = vld [vmem:[%s5 + $0x2a0] sm:$0xff]
    %v3106 = vld [vmem:[%s5 + $0x2b0] sm:$0xff]
    %v3107 = vmul.f32 %v3092, %v3103
    %v3108 = vmul.f32 %v3095, %v3104
    %v3109 = vmul.f32 %v3098, %v3105
    %v3110 = vmul.f32 %v3101, %v3106
    %v3111 = vld [vmem:[%s5 + $0x2c0] sm:$0xff]
    %v3112 = vld [vmem:[%s5 + $0x2d0] sm:$0xff]
    %v3113 = vld [vmem:[%s5 + $0x2e0] sm:$0xff]
    %v3114 = vld [vmem:[%s5 + $0x2f0] sm:$0xff]
    %v3115 = vld [vmem:[%s5 + $0x300] sm:$0xff]
    %v3116 = vld [vmem:[%s5 + $0x310] sm:$0xff]
    %v3117 = vld [vmem:[%s5 + $0x320] sm:$0xff]
    %v3118 = vld [vmem:[%s5 + $0x330] sm:$0xff]
    %v3120 = vsel %vm2765, %v3107, 0
    %v3123 = vsel %vm2765, %v3108, 0
    %v3126 = vsel %vm2765, %v3109, 0
    %v3129 = vsel %vm2765, %v3110, 0
    %3131 = vmatpush.msra.mxu0 0.0
    %3132 = vmatpush.msra.mxu0 0.0
    %3133 = vmatpush.msra.mxu0 0.0
    %3134 = vmatpush.msra.mxu0 0.0
    %3135 = vmatpush.msra.mxu0 0.0
    %3136 = vmatpush.msra.mxu0 0.0
    %3137 = vmatpush.msra.mxu0 0.0
    %3138 = vmatpush.msra.mxu0 0.0
    %3139 = vmatpush.msra.mxu0 %v3118
    %3140 = vmatpush.msra.mxu0 %v3117
    %3141 = vmatpush.msra.mxu0 %v3116
    %3142 = vmatpush.msra.mxu0 %v3115
    %3143 = vmatpush.msra.mxu0 %v3114
    %3144 = vmatpush.msra.mxu0 %v3113
    %3145 = vmatpush.msra.mxu0 %v3112
    %3146 = vmatpush.msra.mxu0 %v3111
    %3147 = vmatmul.f32.gmra.mxu0 %v3120
    %v3148 = vpop.f32.mrf.mxu0
    %v3149 = vadd.f32 0.0, %v3148
    %3150 = vmatmul.f32.gmra.mxu0 %v3123
    %v3151 = vpop.f32.mrf.mxu0
    %v3152 = vadd.f32 0.0, %v3151
    %3153 = vmatmul.f32.gmra.mxu0 %v3126
    %v3154 = vpop.f32.mrf.mxu0
    %v3155 = vadd.f32 0.0, %v3154
    %3156 = vmatmul.f32.gmra.mxu0 %v3129
    %v3157 = vpop.f32.mrf.mxu0
    %v3158 = vadd.f32 0.0, %v3157
    %3159 = vdwg.mxu0
    %v3160 = vld [vmem:[%s5 + $0x1e0] sm:$0x3]
    %v3161 = vld [vmem:[%s5 + $0x270] ss:$0 sm:$0xff]
    %v3163 = vsel %vm38, %v3160, 0
    %3165 = vmatpush.msra.mxu0 0.0
    %3166 = vmatpush.msra.mxu0 0.0
    %3167 = vmatpush.msra.mxu0 0.0
    %3168 = vmatpush.msra.mxu0 0.0
    %3169 = vmatpush.msra.mxu0 0.0
    %3170 = vmatpush.msra.mxu0 0.0
    %3171 = vmatpush.msra.mxu0 0.0
    %3172 = vmatpush.msra.mxu0 0.0
    %3173 = vmatpush.msra.mxu0 0.0
    %3174 = vmatpush.msra.mxu0 0.0
    %3175 = vmatpush.msra.mxu0 0.0
    %3176 = vmatpush.msra.mxu0 0.0
    %3177 = vmatpush.msra.mxu0 %v3158
    %3178 = vmatpush.msra.mxu0 %v3155
    %3179 = vmatpush.msra.mxu0 %v3152
    %3180 = vmatpush.msra.mxu0 %v3149
    %3181 = vmatmul.f32.gmra.mxu0 %v3163
    %v3182 = vpop.f32.mrf.mxu0
    %v3183 = vadd.f32 %v3161, %v3182
    %3184 = vdwg.mxu0
    %vm3185 = vcmask 25600
    %v3186 = vsel %vm3185, %v3183, -inf
    %3187 = vmax.xlane.f32.xlu0 %v3186
    %v3188 = vpop.xlane.xlu0 %3187
    %v3189 = vsub.f32 %v3183, %v3188
    %v3190 = vmul.f32 %v3189, 1.442695
    %v3191 = vpow.pop %v3190
    %v3192 = vsel %vm3185, %v3191, 0.0
    %3193 = vadd.xlane.f32.xlu0 %v3192
    %v3194 = vpop.xlane.xlu0 %3193
    %v3195 = vrcp.pop %v3194
    %v3196 = vmul.f32 %v3194, %v3195
    %v3197 = vsub.f32 1.0, %v3196
    %v3198 = vmul.f32 %v3195, %v3197
    %v3199 = vadd.f32 %v3195, %v3198
    %vm3200 = vweird.f32 %v3194
    %vm3201 = vweird.f32 %v3195
    %vm3202 = vmor %vm3200, %vm3201
    %v3203 = vsel %vm3202, %v3195, %v3199
    %v3204 = vand.u32 2147483647, %v3194
    %vm3205 = vcmp.eq.f32.partialorder %v3204, 8.507059e+37
    %v3206 = vand.u32 %v3194, 2147483648
    %v3207 = vor.u32 1.1754944e-38, %v3206
    %v3208 = vsel %vm3205, %v3207, %v3203
    %v3209 = vmul.f32 %v3191, %v3208
    %3210 = vst.msk [vmem:[#allocation6] sm:$0x3] %vm3185, %v3209
    %v3211 = vld [vmem:[%s5 + $0x1f0] sm:$0xff]
    %v3212 = vld [vmem:[%s5 + $0x200] sm:$0xff]
    %v3213 = vld [vmem:[%s5 + $0x210] sm:$0xff]
    %v3214 = vld [vmem:[%s5 + $0x220] sm:$0xff]
    %vm3215 = vcmask 15360
    %v3217 = vsel %vm3215, %v3211, 0
    %v3220 = vsel %vm3215, %v3212, 0
    %v3223 = vsel %vm3215, %v3213, 0
    %v3226 = vsel %vm3215, %v3214, 0
    %vm3228 = vcmask 1041408
    %v3230 = vsel %vm3228, %v3209, 0
    %3232 = vmatpush.msra.mxu0 0.0
    %3233 = vmatpush.msra.mxu0 0.0
    %3234 = vmatpush.msra.mxu0 0.0
    %3235 = vmatpush.msra.mxu0 0.0
    %3236 = vmatpush.msra.mxu0 0.0
    %3237 = vmatpush.msra.mxu0 0.0
    %3238 = vmatpush.msra.mxu0 0.0
    %3239 = vmatpush.msra.mxu0 0.0
    %3240 = vmatpush.msra.mxu0 0.0
    %3241 = vmatpush.msra.mxu0 0.0
    %3242 = vmatpush.msra.mxu0 0.0
    %3243 = vmatpush.msra.mxu0 0.0
    %3244 = vmatpush.msra.mxu0 0.0
    %3245 = vmatpush.msra.mxu0 0.0
    %3246 = vmatpush.msra.mxu0 0.0
    %3247 = vmatpush.msra.mxu0 %v3230
    %3248 = vmatmul.f32.gmra.mxu0 %v3217
    %v3249 = vpop.f32.mrf.mxu0
    %v3250 = vadd.f32 0.0, %v3249
    %3251 = vmatmul.f32.gmra.mxu0 %v3220
    %v3252 = vpop.f32.mrf.mxu0
    %v3253 = vadd.f32 0.0, %v3252
    %3254 = vmatmul.f32.gmra.mxu0 %v3223
    %v3255 = vpop.f32.mrf.mxu0
    %v3256 = vadd.f32 0.0, %v3255
    %3257 = vmatmul.f32.gmra.mxu0 %v3226
    %v3258 = vpop.f32.mrf.mxu0
    %v3259 = vadd.f32 0.0, %v3258
    %3260 = vdwg.mxu0
    %vm3261 = vcmask 31744
    %v3262 = vsel %vm3261, %v3250, 0.0
    %3263 = vadd.xlane.f32.xlu0 %v3262
    %v3264 = vpop.xlane.xlu0 %3263
    %v3265 = vsel %vm3261, %v3253, 0.0
    %3266 = vadd.xlane.f32.xlu0 %v3265
    %v3267 = vpop.xlane.xlu0 %3266
    %v3268 = vsel %vm3261, %v3256, 0.0
    %3269 = vadd.xlane.f32.xlu0 %v3268
    %v3270 = vpop.xlane.xlu0 %3269
    %v3271 = vsel %vm3261, %v3259, 0.0
    %3272 = vadd.xlane.f32.xlu0 %v3271
    %v3273 = vpop.xlane.xlu0 %3272
    %v3274 = vmul.f32 %v1305, %v3264
    %v3275 = vmul.f32 %v1306, %v3267
    %v3276 = vmul.f32 %v1307, %v3270
    %v3277 = vmul.f32 %v1308, %v3273
    %3279 = vset.pattern.permute.xlu0 0
    %3280 = vperm.xlu0 %3279, %v3250
    %v3281 = vpop.permute.xlu0 %3280
    %3284 = vset.pattern.permute.xlu0 0
    %3285 = vperm.xlu0 %3284, %v3253
    %v3286 = vpop.permute.xlu0 %3285
    %3289 = vset.pattern.permute.xlu0 0
    %3290 = vperm.xlu0 %3289, %v3256
    %v3291 = vpop.permute.xlu0 %3290
    %3294 = vset.pattern.permute.xlu0 0
    %3295 = vperm.xlu0 %3294, %v3259
    %v3296 = vpop.permute.xlu0 %3295
    %v3298 = vmul.f32 %v3281, %v2796
    %v3299 = vmul.f32 %v3286, %v2799
    %v3300 = vmul.f32 %v3291, %v2802
    %v3301 = vmul.f32 %v3296, %v2805
    %v3302 = vadd.f32 %v3274, %v3298
    %v3303 = vadd.f32 %v3275, %v3299
    %v3304 = vadd.f32 %v3276, %v3300
    %v3305 = vadd.f32 %v3277, %v3301
    %3306 = vset.pattern.permute.xlu0 1
    %3307 = vperm.xlu0 %3306, %v3250
    %v3308 = vpop.permute.xlu0 %3307
    %3310 = vset.pattern.permute.xlu0 1
    %3311 = vperm.xlu0 %3310, %v3253
    %v3312 = vpop.permute.xlu0 %3311
    %3314 = vset.pattern.permute.xlu0 1
    %3315 = vperm.xlu0 %3314, %v3256
    %v3316 = vpop.permute.xlu0 %3315
    %3318 = vset.pattern.permute.xlu0 1
    %3319 = vperm.xlu0 %3318, %v3259
    %v3320 = vpop.permute.xlu0 %3319
    %v3322 = vmul.f32 %v3308, %v2796
    %v3323 = vmul.f32 %v3312, %v2799
    %v3324 = vmul.f32 %v3316, %v2802
    %v3325 = vmul.f32 %v3320, %v2805
    %3330 = vrot.lane.b32.xlu0 %v3322, 96
    %v3331 = vpop.permute.xlu0 %3330
    %3332 = vrot.lane.b32.xlu0 %v3323, 96
    %v3333 = vpop.permute.xlu0 %3332
    %3334 = vrot.lane.b32.xlu0 %v3324, 96
    %v3335 = vpop.permute.xlu0 %3334
    %3336 = vrot.lane.b32.xlu0 %v3325, 96
    %v3337 = vpop.permute.xlu0 %3336
    %v3342 = vadd.f32 %v3302, %v3331
    %v3343 = vadd.f32 %v3303, %v3333
    %v3344 = vadd.f32 %v3304, %v3335
    %v3345 = vadd.f32 %v3305, %v3337
    %3346 = vset.pattern.permute.xlu0 2
    %3347 = vperm.xlu0 %3346, %v3250
    %v3348 = vpop.permute.xlu0 %3347
    %3350 = vset.pattern.permute.xlu0 2
    %3351 = vperm.xlu0 %3350, %v3253
    %v3352 = vpop.permute.xlu0 %3351
    %3354 = vset.pattern.permute.xlu0 2
    %3355 = vperm.xlu0 %3354, %v3256
    %v3356 = vpop.permute.xlu0 %3355
    %3358 = vset.pattern.permute.xlu0 2
    %3359 = vperm.xlu0 %3358, %v3259
    %v3360 = vpop.permute.xlu0 %3359
    %v3362 = vmul.f32 %v3348, %v2796
    %v3363 = vmul.f32 %v3352, %v2799
    %v3364 = vmul.f32 %v3356, %v2802
    %v3365 = vmul.f32 %v3360, %v2805
    %3370 = vrot.lane.b32.xlu0 %v3362, 64
    %v3371 = vpop.permute.xlu0 %3370
    %3372 = vrot.lane.b32.xlu0 %v3363, 64
    %v3373 = vpop.permute.xlu0 %3372
    %3374 = vrot.lane.b32.xlu0 %v3364, 64
    %v3375 = vpop.permute.xlu0 %3374
    %3376 = vrot.lane.b32.xlu0 %v3365, 64
    %v3377 = vpop.permute.xlu0 %3376
    %v3382 = vadd.f32 %v3342, %v3371
    %v3383 = vadd.f32 %v3343, %v3373
    %v3384 = vadd.f32 %v3344, %v3375
    %v3385 = vadd.f32 %v3345, %v3377
    %3386 = vset.pattern.permute.xlu0 3
    %3387 = vperm.xlu0 %3386, %v3250
    %v3388 = vpop.permute.xlu0 %3387
    %3390 = vset.pattern.permute.xlu0 3
    %3391 = vperm.xlu0 %3390, %v3253
    %v3392 = vpop.permute.xlu0 %3391
    %3394 = vset.pattern.permute.xlu0 3
    %3395 = vperm.xlu0 %3394, %v3256
    %v3396 = vpop.permute.xlu0 %3395
    %3398 = vset.pattern.permute.xlu0 3
    %3399 = vperm.xlu0 %3398, %v3259
    %v3400 = vpop.permute.xlu0 %3399
    %v3402 = vmul.f32 %v3388, %v2796
    %v3403 = vmul.f32 %v3392, %v2799
    %v3404 = vmul.f32 %v3396, %v2802
    %v3405 = vmul.f32 %v3400, %v2805
    %3410 = vrot.lane.b32.xlu0 %v3402, 32
    %v3411 = vpop.permute.xlu0 %3410
    %3412 = vrot.lane.b32.xlu0 %v3403, 32
    %v3413 = vpop.permute.xlu0 %3412
    %3414 = vrot.lane.b32.xlu0 %v3404, 32
    %v3415 = vpop.permute.xlu0 %3414
    %3416 = vrot.lane.b32.xlu0 %v3405, 32
    %v3417 = vpop.permute.xlu0 %3416
    %v3422 = vadd.f32 %v3382, %v3411
    %v3423 = vadd.f32 %v3383, %v3413
    %v3424 = vadd.f32 %v3384, %v3415
    %v3425 = vadd.f32 %v3385, %v3417
    %v3426 = vld [vmem:[%s5 + $0x160] sm:$0xff]
    %v3427 = vld [vmem:[%s5 + $0x170] sm:$0xff]
    %v3428 = vld [vmem:[%s5 + $0x180] sm:$0xff]
    %v3429 = vld [vmem:[%s5 + $0x190] sm:$0xff]
    %v3430 = vld [vmem:[%s5 + $0x1a0] ss:$0 sm:$0xff]
    %v3432 = vsel %vm38, %v3422, 0
    %v3435 = vsel %vm38, %v3423, 0
    %v3438 = vsel %vm38, %v3424, 0
    %v3441 = vsel %vm38, %v3425, 0
    %3443 = vmatpush.msra.mxu0 0.0
    %3444 = vmatpush.msra.mxu0 0.0
    %3445 = vmatpush.msra.mxu0 0.0
    %3446 = vmatpush.msra.mxu0 0.0
    %3447 = vmatpush.msra.mxu0 0.0
    %3448 = vmatpush.msra.mxu0 0.0
    %3449 = vmatpush.msra.mxu0 0.0
    %3450 = vmatpush.msra.mxu0 0.0
    %3451 = vmatpush.msra.mxu0 0.0
    %3452 = vmatpush.msra.mxu0 0.0
    %3453 = vmatpush.msra.mxu0 0.0
    %3454 = vmatpush.msra.mxu0 0.0
    %3455 = vmatpush.msra.mxu0 %v3429
    %3456 = vmatpush.msra.mxu0 %v3428
    %3457 = vmatpush.msra.mxu0 %v3427
    %3458 = vmatpush.msra.mxu0 %v3426
    %3459 = vmatmul.f32.gmra.mxu0 %v3432
    %v3460 = vpop.f32.mrf.mxu0
    %v3461 = vadd.f32 %v3430, %v3460
    %3462 = vmatmul.f32.gmra.mxu0 %v3435
    %v3463 = vpop.f32.mrf.mxu0
    %v3464 = vadd.f32 %v3430, %v3463
    %3465 = vmatmul.f32.gmra.mxu0 %v3438
    %v3466 = vpop.f32.mrf.mxu0
    %v3467 = vadd.f32 %v3430, %v3466
    %3468 = vmatmul.f32.gmra.mxu0 %v3441
    %v3469 = vpop.f32.mrf.mxu0
    %v3470 = vadd.f32 %v3430, %v3469
    %3471 = vdwg.mxu0
    %v3472 = vmul.f32 %v3461, 0.70710677
    %v3473 = vmul.f32 %v3464, 0.70710677
    %v3474 = vmul.f32 %v3467, 0.70710677
    %v3475 = vmul.f32 %v3470, 0.70710677
    %v3476 = vand.u32 2147483647, %v3472
    %v3477 = vand.u32 2147483647, %v3473
    %v3478 = vand.u32 2147483647, %v3474
    %v3479 = vand.u32 2147483647, %v3475
    %v3480 = vmul.f32 %v3476, 0.3275911
    %v3481 = vmul.f32 %v3477, 0.3275911
    %v3482 = vmul.f32 %v3478, 0.3275911
    %v3483 = vmul.f32 %v3479, 0.3275911
    %v3484 = vadd.f32 %v3480, 1.0
    %v3485 = vadd.f32 %v3481, 1.0
    %v3486 = vadd.f32 %v3482, 1.0
    %v3487 = vadd.f32 %v3483, 1.0
    %v3488 = vrcp.pop %v3484
    %v3489 = vmul.f32 %v3484, %v3488
    %v3490 = vsub.f32 1.0, %v3489
    %v3491 = vmul.f32 %v3488, %v3490
    %v3492 = vadd.f32 %v3488, %v3491
    %vm3493 = vweird.f32 %v3484
    %vm3494 = vweird.f32 %v3488
    %vm3495 = vmor %vm3493, %vm3494
    %v3496 = vsel %vm3495, %v3488, %v3492
    %v3497 = vand.u32 2147483647, %v3484
    %vm3498 = vcmp.eq.f32.partialorder %v3497, 8.507059e+37
    %v3499 = vand.u32 %v3484, 2147483648
    %v3500 = vor.u32 1.1754944e-38, %v3499
    %v3501 = vsel %vm3498, %v3500, %v3496
    %v3502 = vrcp.pop %v3485
    %v3503 = vmul.f32 %v3485, %v3502
    %v3504 = vsub.f32 1.0, %v3503
    %v3505 = vmul.f32 %v3502, %v3504
    %v3506 = vadd.f32 %v3502, %v3505
    %vm3507 = vweird.f32 %v3485
    %vm3508 = vweird.f32 %v3502
    %vm3509 = vmor %vm3507, %vm3508
    %v3510 = vsel %vm3509, %v3502, %v3506
    %v3511 = vand.u32 2147483647, %v3485
    %vm3512 = vcmp.eq.f32.partialorder %v3511, 8.507059e+37
    %v3513 = vand.u32 %v3485, 2147483648
    %v3514 = vor.u32 1.1754944e-38, %v3513
    %v3515 = vsel %vm3512, %v3514, %v3510
    %v3516 = vrcp.pop %v3486
    %v3517 = vmul.f32 %v3486, %v3516
    %v3518 = vsub.f32 1.0, %v3517
    %v3519 = vmul.f32 %v3516, %v3518
    %v3520 = vadd.f32 %v3516, %v3519
    %vm3521 = vweird.f32 %v3486
    %vm3522 = vweird.f32 %v3516
    %vm3523 = vmor %vm3521, %vm3522
    %v3524 = vsel %vm3523, %v3516, %v3520
    %v3525 = vand.u32 2147483647, %v3486
    %vm3526 = vcmp.eq.f32.partialorder %v3525, 8.507059e+37
    %v3527 = vand.u32 %v3486, 2147483648
    %v3528 = vor.u32 1.1754944e-38, %v3527
    %v3529 = vsel %vm3526, %v3528, %v3524
    %v3530 = vrcp.pop %v3487
    %v3531 = vmul.f32 %v3487, %v3530
    %v3532 = vsub.f32 1.0, %v3531
    %v3533 = vmul.f32 %v3530, %v3532
    %v3534 = vadd.f32 %v3530, %v3533
    %vm3535 = vweird.f32 %v3487
    %vm3536 = vweird.f32 %v3530
    %vm3537 = vmor %vm3535, %vm3536
    %v3538 = vsel %vm3537, %v3530, %v3534
    %v3539 = vand.u32 2147483647, %v3487
    %vm3540 = vcmp.eq.f32.partialorder %v3539, 8.507059e+37
    %v3541 = vand.u32 %v3487, 2147483648
    %v3542 = vor.u32 1.1754944e-38, %v3541
    %v3543 = vsel %vm3540, %v3542, %v3538
    %v3544 = vmul.f32 %v3501, 1.0614054
    %v3545 = vmul.f32 %v3515, 1.0614054
    %v3546 = vmul.f32 %v3529, 1.0614054
    %v3547 = vmul.f32 %v3543, 1.0614054
    %v3548 = vadd.f32 %v3544, -1.4531521
    %v3549 = vadd.f32 %v3545, -1.4531521
    %v3550 = vadd.f32 %v3546, -1.4531521
    %v3551 = vadd.f32 %v3547, -1.4531521
    %v3552 = vmul.f32 %v3548, %v3501
    %v3553 = vmul.f32 %v3549, %v3515
    %v3554 = vmul.f32 %v3550, %v3529
    %v3555 = vmul.f32 %v3551, %v3543
    %v3556 = vadd.f32 %v3552, 1.4214138
    %v3557 = vadd.f32 %v3553, 1.4214138
    %v3558 = vadd.f32 %v3554, 1.4214138
    %v3559 = vadd.f32 %v3555, 1.4214138
    %v3560 = vmul.f32 %v3556, %v3501
    %v3561 = vmul.f32 %v3557, %v3515
    %v3562 = vmul.f32 %v3558, %v3529
    %v3563 = vmul.f32 %v3559, %v3543
    %v3564 = vadd.f32 %v3560, -0.28449672
    %v3565 = vadd.f32 %v3561, -0.28449672
    %v3566 = vadd.f32 %v3562, -0.28449672
    %v3567 = vadd.f32 %v3563, -0.28449672
    %v3568 = vmul.f32 %v3564, %v3501
    %v3569 = vmul.f32 %v3565, %v3515
    %v3570 = vmul.f32 %v3566, %v3529
    %v3571 = vmul.f32 %v3567, %v3543
    %v3572 = vadd.f32 %v3568, 0.2548296
    %v3573 = vadd.f32 %v3569, 0.2548296
    %v3574 = vadd.f32 %v3570, 0.2548296
    %v3575 = vadd.f32 %v3571, 0.2548296
    %v3576 = vmul.f32 %v3572, %v3501
    %v3577 = vmul.f32 %v3573, %v3515
    %v3578 = vmul.f32 %v3574, %v3529
    %v3579 = vmul.f32 %v3575, %v3543
    %vm3580 = vcmp.ge.f32.partialorder %v3472, 0.0
    %vm3581 = vcmp.ge.f32.partialorder %v3473, 0.0
    %vm3582 = vcmp.ge.f32.partialorder %v3474, 0.0
    %vm3583 = vcmp.ge.f32.partialorder %v3475, 0.0
    %v3584 = vsel %vm3580, 1.0, -1.0
    %v3585 = vsel %vm3581, 1.0, -1.0
    %v3586 = vsel %vm3582, 1.0, -1.0
    %v3587 = vsel %vm3583, 1.0, -1.0
    %v3588 = vsub.f32 0.0, %v3476
    %v3589 = vsub.f32 0.0, %v3477
    %v3590 = vsub.f32 0.0, %v3478
    %v3591 = vsub.f32 0.0, %v3479
    %v3592 = vmul.f32 %v3588, %v3476
    %v3593 = vmul.f32 %v3589, %v3477
    %v3594 = vmul.f32 %v3590, %v3478
    %v3595 = vmul.f32 %v3591, %v3479
    %v3596 = vmul.f32 %v3592, 1.442695
    %v3597 = vpow.pop %v3596
    %v3598 = vmul.f32 %v3593, 1.442695
    %v3599 = vpow.pop %v3598
    %v3600 = vmul.f32 %v3594, 1.442695
    %v3601 = vpow.pop %v3600
    %v3602 = vmul.f32 %v3595, 1.442695
    %v3603 = vpow.pop %v3602
    %v3604 = vmul.f32 %v3576, %v3597
    %v3605 = vmul.f32 %v3577, %v3599
    %v3606 = vmul.f32 %v3578, %v3601
    %v3607 = vmul.f32 %v3579, %v3603
    %v3608 = vsub.f32 1.0, %v3604
    %v3609 = vsub.f32 1.0, %v3605
    %v3610 = vsub.f32 1.0, %v3606
    %v3611 = vsub.f32 1.0, %v3607
    %v3612 = vmul.f32 %v3584, %v3608
    %v3613 = vmul.f32 %v3585, %v3609
    %v3614 = vmul.f32 %v3586, %v3610
    %v3615 = vmul.f32 %v3587, %v3611
    %v3616 = vmul.f32 %v3461, 0.5
    %v3617 = vmul.f32 %v3464, 0.5
    %v3618 = vmul.f32 %v3467, 0.5
    %v3619 = vmul.f32 %v3470, 0.5
    %v3620 = vadd.f32 %v3612, 1.0
    %v3621 = vadd.f32 %v3613, 1.0
    %v3622 = vadd.f32 %v3614, 1.0
    %v3623 = vadd.f32 %v3615, 1.0
    %v3624 = vmul.f32 %v3616, %v3620
    %v3625 = vmul.f32 %v3617, %v3621
    %v3626 = vmul.f32 %v3618, %v3622
    %v3627 = vmul.f32 %v3619, %v3623
    %v3628 = vld [vmem:[%s5 + $0x1b0] sm:$0xff]
    %v3629 = vld [vmem:[%s5 + $0x1c0] sm:$0xff]
    %v3630 = vld [vmem:[%s5 + $0x1d0] ss:$0 sm:$0xff]
    %v3632 = vsel %vm3012, %v3624, 0
    %v3635 = vsel %vm3012, %v3625, 0
    %v3638 = vsel %vm3012, %v3626, 0
    %v3641 = vsel %vm3012, %v3627, 0
    %3643 = vmatpush.msra.mxu0 0.0
    %3644 = vmatpush.msra.mxu0 0.0
    %3645 = vmatpush.msra.mxu0 0.0
    %3646 = vmatpush.msra.mxu0 0.0
    %3647 = vmatpush.msra.mxu0 0.0
    %3648 = vmatpush.msra.mxu0 0.0
    %3649 = vmatpush.msra.mxu0 0.0
    %3650 = vmatpush.msra.mxu0 0.0
    %3651 = vmatpush.msra.mxu0 0.0
    %3652 = vmatpush.msra.mxu0 0.0
    %3653 = vmatpush.msra.mxu0 0.0
    %3654 = vmatpush.msra.mxu0 0.0
    %3655 = vmatpush.msra.mxu0 0.0
    %3656 = vmatpush.msra.mxu0 0.0
    %3657 = vmatpush.msra.mxu0 %v3629
    %3658 = vmatpush.msra.mxu0 %v3628
    %3659 = vmatmul.f32.gmra.mxu0 %v3632
    %v3660 = vpop.f32.mrf.mxu0
    %v3661 = vadd.f32 %v3630, %v3660
    %3662 = vmatmul.f32.gmra.mxu0 %v3635
    %v3663 = vpop.f32.mrf.mxu0
    %v3664 = vadd.f32 %v3630, %v3663
    %3665 = vmatmul.f32.gmra.mxu0 %v3638
    %v3666 = vpop.f32.mrf.mxu0
    %v3667 = vadd.f32 %v3630, %v3666
    %3668 = vmatmul.f32.gmra.mxu0 %v3641
    %v3669 = vpop.f32.mrf.mxu0
    %v3670 = vadd.f32 %v3630, %v3669
    %3671 = vdwg.mxu0
    %v3672 = vadd.f32 %v3422, %v3661
    %v3673 = vadd.f32 %v3423, %v3664
    %v3674 = vadd.f32 %v3424, %v3667
    %v3675 = vadd.f32 %v3425, %v3670
    %v3676 = vld [vmem:[%s5 + $0x340] sm:$0xff]
    %v3677 = vld [vmem:[%s5 + $0x348] sm:$0xff]
    %v3678 = vld [vmem:[%s5 + $0x350] sm:$0xff]
    %v3679 = vld [vmem:[%s5 + $0x358] sm:$0xff]
    %v3680 = vld [vmem:[%s5 + $0x360] sm:$0xff]
    %v3681 = vld [vmem:[%s5 + $0x368] sm:$0xff]
    %v3682 = vld [vmem:[%s5 + $0x370] sm:$0xff]
    %v3683 = vld [vmem:[%s5 + $0x378] sm:$0xff]
    %v3685 = vsel %vm38, %v3672, 0
    %v3688 = vsel %vm38, %v3673, 0
    %v3691 = vsel %vm38, %v3674, 0
    %v3694 = vsel %vm38, %v3675, 0
    %3696 = vmatpush.msra.mxu0 0.0
    %3697 = vmatpush.msra.mxu0 0.0
    %3698 = vmatpush.msra.mxu0 0.0
    %3699 = vmatpush.msra.mxu0 0.0
    %3700 = vmatpush.msra.mxu0 0.0
    %3701 = vmatpush.msra.mxu0 0.0
    %3702 = vmatpush.msra.mxu0 0.0
    %3703 = vmatpush.msra.mxu0 0.0
    %3704 = vmatpush.msra.mxu0 0.0
    %3705 = vmatpush.msra.mxu0 0.0
    %3706 = vmatpush.msra.mxu0 0.0
    %3707 = vmatpush.msra.mxu0 0.0
    %3708 = vmatpush.msra.mxu0 %v3682
    %3709 = vmatpush.msra.mxu0 %v3680
    %3710 = vmatpush.msra.mxu0 %v3678
    %3711 = vmatpush.msra.mxu0 %v3676
    %3712 = vmatmul.f32.gmra.mxu0 %v3685
    %v3713 = vpop.f32.mrf.mxu0
    %v3714 = vadd.f32 0.0, %v3713
    %3715 = vmatmul.f32.gmra.mxu0 %v3688
    %v3716 = vpop.f32.mrf.mxu0
    %v3717 = vadd.f32 0.0, %v3716
    %3718 = vmatmul.f32.gmra.mxu0 %v3691
    %v3719 = vpop.f32.mrf.mxu0
    %v3720 = vadd.f32 0.0, %v3719
    %3721 = vmatmul.f32.gmra.mxu0 %v3694
    %v3722 = vpop.f32.mrf.mxu0
    %v3723 = vadd.f32 0.0, %v3722
    %3724 = vdwg.mxu0
    %3725 = vmatpush.msra.mxu0 0.0
    %3726 = vmatpush.msra.mxu0 0.0
    %3727 = vmatpush.msra.mxu0 0.0
    %3728 = vmatpush.msra.mxu0 0.0
    %3729 = vmatpush.msra.mxu0 0.0
    %3730 = vmatpush.msra.mxu0 0.0
    %3731 = vmatpush.msra.mxu0 0.0
    %3732 = vmatpush.msra.mxu0 0.0
    %3733 = vmatpush.msra.mxu0 0.0
    %3734 = vmatpush.msra.mxu0 0.0
    %3735 = vmatpush.msra.mxu0 0.0
    %3736 = vmatpush.msra.mxu0 0.0
    %3737 = vmatpush.msra.mxu0 %v3683
    %3738 = vmatpush.msra.mxu0 %v3681
    %3739 = vmatpush.msra.mxu0 %v3679
    %3740 = vmatpush.msra.mxu0 %v3677
    %3741 = vmatmul.f32.gmra.mxu0 %v3685
    %v3742 = vpop.f32.mrf.mxu0
    %v3743 = vadd.f32 0.0, %v3742
    %3744 = vmatmul.f32.gmra.mxu0 %v3688
    %v3745 = vpop.f32.mrf.mxu0
    %v3746 = vadd.f32 0.0, %v3745
    %3747 = vmatmul.f32.gmra.mxu0 %v3691
    %v3748 = vpop.f32.mrf.mxu0
    %v3749 = vadd.f32 0.0, %v3748
    %3750 = vmatmul.f32.gmra.mxu0 %v3694
    %v3751 = vpop.f32.mrf.mxu0
    %v3752 = vadd.f32 0.0, %v3751
    %3753 = vdwg.mxu0
    %v3754 = vld [vmem:[%s5 + $0x390] sm:$0xff]
    %v3755 = vld [vmem:[%s5 + $0x398] sm:$0xff]
    %v3756 = vld [vmem:[%s5 + $0x3a0] sm:$0xff]
    %v3757 = vld [vmem:[%s5 + $0x3a8] sm:$0xff]
    %v3758 = vld [vmem:[%s5 + $0x3b0] sm:$0xff]
    %v3759 = vld [vmem:[%s5 + $0x3b8] sm:$0xff]
    %v3760 = vld [vmem:[%s5 + $0x3c0] sm:$0xff]
    %v3761 = vld [vmem:[%s5 + $0x3c8] sm:$0xff]
    %v3762 = vmul.f32 %v3714, %v3754
    %v3763 = vmul.f32 %v3743, %v3755
    %v3764 = vmul.f32 %v3717, %v3756
    %v3765 = vmul.f32 %v3746, %v3757
    %v3766 = vmul.f32 %v3720, %v3758
    %v3767 = vmul.f32 %v3749, %v3759
    %v3768 = vmul.f32 %v3723, %v3760
    %v3769 = vmul.f32 %v3752, %v3761
    %v3770 = vld [vmem:[%s5 + $0x3d0] sm:$0xff]
    %v3771 = vld [vmem:[%s5 + $0x3e0] sm:$0xff]
    %v3772 = vld [vmem:[%s5 + $0x3f0] sm:$0xff]
    %v3773 = vld [vmem:[%s5 + $0x400] sm:$0xff]
    %v3774 = vld [vmem:[%s5 + $0x410] sm:$0xff]
    %v3775 = vld [vmem:[%s5 + $0x420] sm:$0xff]
    %v3776 = vld [vmem:[%s5 + $0x430] sm:$0xff]
    %v3777 = vld [vmem:[%s5 + $0x440] sm:$0xff]
    %v3778 = vld [vmem:[%s5 + $0x450] sm:$0xff]
    %v3779 = vld [vmem:[%s5 + $0x460] sm:$0xff]
    %v3780 = vld [vmem:[%s5 + $0x470] sm:$0xff]
    %v3781 = vld [vmem:[%s5 + $0x480] sm:$0xff]
    %v3782 = vld [vmem:[%s5 + $0x490] sm:$0xff]
    %v3783 = vld [vmem:[%s5 + $0x4a0] sm:$0xff]
    %v3784 = vld [vmem:[%s5 + $0x4b0] sm:$0xff]
    %v3785 = vld [vmem:[%s5 + $0x4c0] sm:$0xff]
    %v3786 = vld [vmem:[%s5 + $0x4d0] sm:$0xff]
    %v3787 = vld [vmem:[%s5 + $0x4e0] sm:$0xff]
    %v3788 = vld [vmem:[%s5 + $0x4f0] sm:$0xff]
    %v3789 = vld [vmem:[%s5 + $0x500] sm:$0xff]
    %v3791 = vsel %vm38, %v3763, 0
    %v3794 = vsel %vm38, %v3765, 0
    %v3797 = vsel %vm38, %v3767, 0
    %v3800 = vsel %vm38, %v3769, 0
    %3802 = vmatpush.msra.mxu0 %v3785
    %3803 = vmatpush.msra.mxu0 %v3784
    %3804 = vmatpush.msra.mxu0 %v3783
    %3805 = vmatpush.msra.mxu0 %v3782
    %3806 = vmatpush.msra.mxu0 %v3781
    %3807 = vmatpush.msra.mxu0 %v3780
    %3808 = vmatpush.msra.mxu0 %v3779
    %3809 = vmatpush.msra.mxu0 %v3778
    %3810 = vmatpush.msra.mxu0 %v3777
    %3811 = vmatpush.msra.mxu0 %v3776
    %3812 = vmatpush.msra.mxu0 %v3775
    %3813 = vmatpush.msra.mxu0 %v3774
    %3814 = vmatpush.msra.mxu0 %v3773
    %3815 = vmatpush.msra.mxu0 %v3772
    %3816 = vmatpush.msra.mxu0 %v3771
    %3817 = vmatpush.msra.mxu0 %v3770
    %3818 = vmatmul.f32.gmra.mxu0 %v3762
    %v3819 = vpop.f32.mrf.mxu0
    %v3820 = vadd.f32 0.0, %v3819
    %3821 = vmatmul.f32.gmra.mxu0 %v3764
    %v3822 = vpop.f32.mrf.mxu0
    %v3823 = vadd.f32 0.0, %v3822
    %3824 = vmatmul.f32.gmra.mxu0 %v3766
    %v3825 = vpop.f32.mrf.mxu0
    %v3826 = vadd.f32 0.0, %v3825
    %3827 = vmatmul.f32.gmra.mxu0 %v3768
    %v3828 = vpop.f32.mrf.mxu0
    %v3829 = vadd.f32 0.0, %v3828
    %3830 = vdwg.mxu0
    %3831 = vmatpush.msra.mxu0 0.0
    %3832 = vmatpush.msra.mxu0 0.0
    %3833 = vmatpush.msra.mxu0 0.0
    %3834 = vmatpush.msra.mxu0 0.0
    %3835 = vmatpush.msra.mxu0 0.0
    %3836 = vmatpush.msra.mxu0 0.0
    %3837 = vmatpush.msra.mxu0 0.0
    %3838 = vmatpush.msra.mxu0 0.0
    %3839 = vmatpush.msra.mxu0 0.0
    %3840 = vmatpush.msra.mxu0 0.0
    %3841 = vmatpush.msra.mxu0 0.0
    %3842 = vmatpush.msra.mxu0 0.0
    %3843 = vmatpush.msra.mxu0 %v3789
    %3844 = vmatpush.msra.mxu0 %v3788
    %3845 = vmatpush.msra.mxu0 %v3787
    %3846 = vmatpush.msra.mxu0 %v3786
    %3847 = vmatmul.f32.gmra.mxu0 %v3791
    %v3848 = vpop.f32.mrf.mxu0
    %v3849 = vadd.f32 %v3820, %v3848
    %3850 = vmatmul.f32.gmra.mxu0 %v3794
    %v3851 = vpop.f32.mrf.mxu0
    %v3852 = vadd.f32 %v3823, %v3851
    %3853 = vmatmul.f32.gmra.mxu0 %v3797
    %v3854 = vpop.f32.mrf.mxu0
    %v3855 = vadd.f32 %v3826, %v3854
    %3856 = vmatmul.f32.gmra.mxu0 %v3800
    %v3857 = vpop.f32.mrf.mxu0
    %v3858 = vadd.f32 %v3829, %v3857
    %3859 = vdwg.mxu0
    %v3860 = vld [vmem:[%s5 + $0x1e0] sm:$0x3]
    %v3861 = vld [vmem:[%s5 + $0x380] ss:$0 sm:$0xff]
    %v3863 = vsel %vm38, %v3860, 0
    %3865 = vmatpush.msra.mxu0 0.0
    %3866 = vmatpush.msra.mxu0 0.0
    %3867 = vmatpush.msra.mxu0 0.0
    %3868 = vmatpush.msra.mxu0 0.0
    %3869 = vmatpush.msra.mxu0 0.0
    %3870 = vmatpush.msra.mxu0 0.0
    %3871 = vmatpush.msra.mxu0 0.0
    %3872 = vmatpush.msra.mxu0 0.0
    %3873 = vmatpush.msra.mxu0 0.0
    %3874 = vmatpush.msra.mxu0 0.0
    %3875 = vmatpush.msra.mxu0 0.0
    %3876 = vmatpush.msra.mxu0 0.0
    %3877 = vmatpush.msra.mxu0 %v3858
    %3878 = vmatpush.msra.mxu0 %v3855
    %3879 = vmatpush.msra.mxu0 %v3852
    %3880 = vmatpush.msra.mxu0 %v3849
    %3881 = vmatmul.f32.gmra.mxu0 %v3863
    %v3882 = vpop.f32.mrf.mxu0
    %v3883 = vadd.f32 %v3861, %v3882
    %3884 = vdwg.mxu0
    %vm3885 = vcmask 74752
    %3886 = vst.msk [vmem:[#allocation4] sm:$0x3] %vm3885, %v3883
    %3887 = vst.msk [vmem:[#allocation3 + $0x20] sm:$0xff] %vm38, %v3422
    %3888 = vst.msk [vmem:[#allocation3 + $0x28] sm:$0xff] %vm38, %v3423
    %3889 = vst.msk [vmem:[#allocation3 + $0x30] sm:$0xff] %vm38, %v3424
    %3890 = vst.msk [vmem:[#allocation3 + $0x38] sm:$0xff] %vm38, %v3425
    %v3891 = vld [vmem:[#allocation3 + $0x1c] sm:$0xff]
    %v3892 = vld [vmem:[#allocation3 + $0x24] sm:$0xff]
    %v3893 = vld [vmem:[#allocation3 + $0x2c] sm:$0xff]
    %v3894 = vld [vmem:[#allocation3 + $0x34] sm:$0xff]
    %v3895 = vld [vmem:[%s3] sm:$0xff]
    %v3896 = vld [vmem:[%s3 + $0x8] sm:$0xff]
    %v3897 = vld [vmem:[%s3 + $0x10] sm:$0xff]
    %v3898 = vld [vmem:[%s3 + $0x18] sm:$0xff]
    %v3899 = vld [vmem:[#allocation3 + $0x1e] sm:$0xff]
    %v3900 = vld [vmem:[#allocation3 + $0x26] sm:$0xff]
    %v3901 = vld [vmem:[#allocation3 + $0x2e] sm:$0xff]
    %v3902 = vld [vmem:[#allocation3 + $0x36] sm:$0xff]
    %v3903 = vld [vmem:[%s3 + $0x20] sm:$0xff]
    %v3904 = vld [vmem:[%s3 + $0x28] sm:$0xff]
    %v3905 = vld [vmem:[%s3 + $0x30] sm:$0xff]
    %v3906 = vld [vmem:[%s3 + $0x38] sm:$0xff]
    %v3908 = vsel %vm38, %v3899, 0
    %v3911 = vsel %vm38, %v3900, 0
    %v3914 = vsel %vm38, %v3901, 0
    %v3917 = vsel %vm38, %v3902, 0
    %3919 = vmatpush.msra.mxu0 0.0
    %3920 = vmatpush.msra.mxu0 0.0
    %3921 = vmatpush.msra.mxu0 0.0
    %3922 = vmatpush.msra.mxu0 0.0
    %3923 = vmatpush.msra.mxu0 0.0
    %3924 = vmatpush.msra.mxu0 0.0
    %3925 = vmatpush.msra.mxu0 0.0
    %3926 = vmatpush.msra.mxu0 0.0
    %3927 = vmatpush.msra.mxu0 0.0
    %3928 = vmatpush.msra.mxu0 0.0
    %3929 = vmatpush.msra.mxu0 0.0
    %3930 = vmatpush.msra.mxu0 0.0
    %3931 = vmatpush.msra.mxu0 %v3906
    %3932 = vmatpush.msra.mxu0 %v3905
    %3933 = vmatpush.msra.mxu0 %v3904
    %3934 = vmatpush.msra.mxu0 %v3903
    %3935 = vmatmul.f32.gmra.mxu0 %v3908
    %v3936 = vpop.f32.mrf.mxu0
    %v3937 = vadd.f32 0.0, %v3936
    %3938 = vmatmul.f32.gmra.mxu0 %v3911
    %v3939 = vpop.f32.mrf.mxu0
    %v3940 = vadd.f32 0.0, %v3939
    %3941 = vmatmul.f32.gmra.mxu0 %v3914
    %v3942 = vpop.f32.mrf.mxu0
    %v3943 = vadd.f32 0.0, %v3942
    %3944 = vmatmul.f32.gmra.mxu0 %v3917
    %v3945 = vpop.f32.mrf.mxu0
    %v3946 = vadd.f32 0.0, %v3945
    %3947 = vdwg.mxu0
    %v3949 = vsel %vm38, %v3891, 0
    %v3952 = vsel %vm38, %v3892, 0
    %v3955 = vsel %vm38, %v3893, 0
    %v3958 = vsel %vm38, %v3894, 0
    %3960 = vmatpush.msra.mxu0 0.0
    %3961 = vmatpush.msra.mxu0 0.0
    %3962 = vmatpush.msra.mxu0 0.0
    %3963 = vmatpush.msra.mxu0 0.0
    %3964 = vmatpush.msra.mxu0 0.0
    %3965 = vmatpush.msra.mxu0 0.0
    %3966 = vmatpush.msra.mxu0 0.0
    %3967 = vmatpush.msra.mxu0 0.0
    %3968 = vmatpush.msra.mxu0 0.0
    %3969 = vmatpush.msra.mxu0 0.0
    %3970 = vmatpush.msra.mxu0 0.0
    %3971 = vmatpush.msra.mxu0 0.0
    %3972 = vmatpush.msra.mxu0 %v3898
    %3973 = vmatpush.msra.mxu0 %v3897
    %3974 = vmatpush.msra.mxu0 %v3896
    %3975 = vmatpush.msra.mxu0 %v3895
    %3976 = vmatmul.f32.gmra.mxu0 %v3949
    %v3977 = vpop.f32.mrf.mxu0
    %v3978 = vadd.f32 %v3937, %v3977
    %3979 = vmatmul.f32.gmra.mxu0 %v3952
    %v3980 = vpop.f32.mrf.mxu0
    %v3981 = vadd.f32 %v3940, %v3980
    %3982 = vmatmul.f32.gmra.mxu0 %v3955
    %v3983 = vpop.f32.mrf.mxu0
    %v3984 = vadd.f32 %v3943, %v3983
    %3985 = vmatmul.f32.gmra.mxu0 %v3958
    %v3986 = vpop.f32.mrf.mxu0
    %v3987 = vadd.f32 %v3946, %v3986
    %3988 = vdwg.mxu0
    %v3989 = vld [vmem:[#allocation3 + $0x20] sm:$0xff]
    %v3990 = vld [vmem:[#allocation3 + $0x28] sm:$0xff]
    %v3991 = vld [vmem:[#allocation3 + $0x30] sm:$0xff]
    %v3992 = vld [vmem:[#allocation3 + $0x38] sm:$0xff]
    %v3993 = vld [vmem:[%s3 + $0x40] sm:$0xff]
    %v3994 = vld [vmem:[%s3 + $0x48] sm:$0xff]
    %v3995 = vld [vmem:[%s3 + $0x50] sm:$0xff]
    %v3996 = vld [vmem:[%s3 + $0x58] sm:$0xff]
    %v3998 = vsel %vm38, %v3989, 0
    %v4001 = vsel %vm38, %v3990, 0
    %v4004 = vsel %vm38, %v3991, 0
    %v4007 = vsel %vm38, %v3992, 0
    %4009 = vmatpush.msra.mxu0 0.0
    %4010 = vmatpush.msra.mxu0 0.0
    %4011 = vmatpush.msra.mxu0 0.0
    %4012 = vmatpush.msra.mxu0 0.0
    %4013 = vmatpush.msra.mxu0 0.0
    %4014 = vmatpush.msra.mxu0 0.0
    %4015 = vmatpush.msra.mxu0 0.0
    %4016 = vmatpush.msra.mxu0 0.0
    %4017 = vmatpush.msra.mxu0 0.0
    %4018 = vmatpush.msra.mxu0 0.0
    %4019 = vmatpush.msra.mxu0 0.0
    %4020 = vmatpush.msra.mxu0 0.0
    %4021 = vmatpush.msra.mxu0 %v3996
    %4022 = vmatpush.msra.mxu0 %v3995
    %4023 = vmatpush.msra.mxu0 %v3994
    %4024 = vmatpush.msra.mxu0 %v3993
    %4025 = vmatmul.f32.gmra.mxu0 %v3998
    %v4026 = vpop.f32.mrf.mxu0
    %v4027 = vadd.f32 0.0, %v4026
    %4028 = vmatmul.f32.gmra.mxu0 %v4001
    %v4029 = vpop.f32.mrf.mxu0
    %v4030 = vadd.f32 0.0, %v4029
    %4031 = vmatmul.f32.gmra.mxu0 %v4004
    %v4032 = vpop.f32.mrf.mxu0
    %v4033 = vadd.f32 0.0, %v4032
    %4034 = vmatmul.f32.gmra.mxu0 %v4007
    %v4035 = vpop.f32.mrf.mxu0
    %v4036 = vadd.f32 0.0, %v4035
    %4037 = vdwg.mxu0
    %v4038 = vadd.f32 %v3978, %v4027
    %v4039 = vadd.f32 %v3981, %v4030
    %v4040 = vadd.f32 %v3984, %v4033
    %v4041 = vadd.f32 %v3987, %v4036
    %v4042 = vld [vmem:[%s3 + $0x60] sm:$0x1]
    %v4043 = vperm.slane %v4042, 0
    %v4044 = vadd.f32 %v4038, %v4043
    %v4045 = vadd.f32 %v4039, %v4043
    %v4046 = vadd.f32 %v4040, %v4043
    %v4047 = vadd.f32 %v4041, %v4043
    %v4048 = vmax.f32 %v4044, 0.0
    %v4049 = vmax.f32 %v4045, 0.0
    %v4050 = vmax.f32 %v4046, 0.0
    %v4051 = vmax.f32 %v4047, 0.0
    %4052 = vst.msk [vmem:[#allocation2 + $0x20] sm:$0xff] %vm29, %v4048
    %4053 = vst.msk [vmem:[#allocation2 + $0x28] sm:$0xff] %vm29, %v4049
    %4054 = vst.msk [vmem:[#allocation2 + $0x30] sm:$0xff] %vm29, %v4050
    %4055 = vst.msk [vmem:[#allocation2 + $0x38] sm:$0xff] %vm29, %v4051
    %v4056 = vld [vmem:[#allocation2 + $0x1c] sm:$0xff]
    %v4057 = vld [vmem:[#allocation2 + $0x24] sm:$0xff]
    %v4058 = vld [vmem:[#allocation2 + $0x2c] sm:$0xff]
    %v4059 = vld [vmem:[#allocation2 + $0x34] sm:$0xff]
    %v4060 = vld [vmem:[%s3 + $0x68] sm:$0xff]
    %v4061 = vld [vmem:[%s3 + $0x70] sm:$0xf]
    %v4062 = vld [vmem:[#allocation2 + $0x1e] sm:$0xff]
    %v4063 = vld [vmem:[#allocation2 + $0x26] sm:$0xff]
    %v4064 = vld [vmem:[#allocation2 + $0x2e] sm:$0xff]
    %v4065 = vld [vmem:[#allocation2 + $0x36] sm:$0xff]
    %v4066 = vld [vmem:[%s3 + $0x78] sm:$0xff]
    %v4067 = vld [vmem:[%s3 + $0x80] sm:$0xf]
    %v4069 = vsel %vm29, %v4062, 0
    %v4072 = vsel %vm29, %v4063, 0
    %v4075 = vsel %vm29, %v4064, 0
    %v4078 = vsel %vm29, %v4065, 0
    %v4081 = vsel %vm79, %v4067, 0
    %4083 = vmatpush.msra.mxu0 0.0
    %4084 = vmatpush.msra.mxu0 0.0
    %4085 = vmatpush.msra.mxu0 0.0
    %4086 = vmatpush.msra.mxu0 0.0
    %4087 = vmatpush.msra.mxu0 0.0
    %4088 = vmatpush.msra.mxu0 0.0
    %4089 = vmatpush.msra.mxu0 0.0
    %4090 = vmatpush.msra.mxu0 0.0
    %4091 = vmatpush.msra.mxu0 0.0
    %4092 = vmatpush.msra.mxu0 0.0
    %4093 = vmatpush.msra.mxu0 0.0
    %4094 = vmatpush.msra.mxu0 0.0
    %4095 = vmatpush.msra.mxu0 0.0
    %4096 = vmatpush.msra.mxu0 0.0
    %4097 = vmatpush.msra.mxu0 %v4081
    %4098 = vmatpush.msra.mxu0 %v4066
    %4099 = vmatmul.f32.gmra.mxu0 %v4069
    %v4100 = vpop.f32.mrf.mxu0
    %v4101 = vadd.f32 0.0, %v4100
    %4102 = vmatmul.f32.gmra.mxu0 %v4072
    %v4103 = vpop.f32.mrf.mxu0
    %v4104 = vadd.f32 0.0, %v4103
    %4105 = vmatmul.f32.gmra.mxu0 %v4075
    %v4106 = vpop.f32.mrf.mxu0
    %v4107 = vadd.f32 0.0, %v4106
    %4108 = vmatmul.f32.gmra.mxu0 %v4078
    %v4109 = vpop.f32.mrf.mxu0
    %v4110 = vadd.f32 0.0, %v4109
    %4111 = vdwg.mxu0
    %v4113 = vsel %vm29, %v4056, 0
    %v4116 = vsel %vm29, %v4057, 0
    %v4119 = vsel %vm29, %v4058, 0
    %v4122 = vsel %vm29, %v4059, 0
    %v4125 = vsel %vm79, %v4061, 0
    %4127 = vmatpush.msra.mxu0 0.0
    %4128 = vmatpush.msra.mxu0 0.0
    %4129 = vmatpush.msra.mxu0 0.0
    %4130 = vmatpush.msra.mxu0 0.0
    %4131 = vmatpush.msra.mxu0 0.0
    %4132 = vmatpush.msra.mxu0 0.0
    %4133 = vmatpush.msra.mxu0 0.0
    %4134 = vmatpush.msra.mxu0 0.0
    %4135 = vmatpush.msra.mxu0 0.0
    %4136 = vmatpush.msra.mxu0 0.0
    %4137 = vmatpush.msra.mxu0 0.0
    %4138 = vmatpush.msra.mxu0 0.0
    %4139 = vmatpush.msra.mxu0 0.0
    %4140 = vmatpush.msra.mxu0 0.0
    %4141 = vmatpush.msra.mxu0 %v4125
    %4142 = vmatpush.msra.mxu0 %v4060
    %4143 = vmatmul.f32.gmra.mxu0 %v4113
    %v4144 = vpop.f32.mrf.mxu0
    %v4145 = vadd.f32 %v4101, %v4144
    %4146 = vmatmul.f32.gmra.mxu0 %v4116
    %v4147 = vpop.f32.mrf.mxu0
    %v4148 = vadd.f32 %v4104, %v4147
    %4149 = vmatmul.f32.gmra.mxu0 %v4119
    %v4150 = vpop.f32.mrf.mxu0
    %v4151 = vadd.f32 %v4107, %v4150
    %4152 = vmatmul.f32.gmra.mxu0 %v4122
    %v4153 = vpop.f32.mrf.mxu0
    %v4154 = vadd.f32 %v4110, %v4153
    %4155 = vdwg.mxu0
    %v4156 = vld [vmem:[#allocation2 + $0x20] sm:$0xff]
    %v4157 = vld [vmem:[#allocation2 + $0x28] sm:$0xff]
    %v4158 = vld [vmem:[#allocation2 + $0x30] sm:$0xff]
    %v4159 = vld [vmem:[#allocation2 + $0x38] sm:$0xff]
    %v4160 = vld [vmem:[%s3 + $0x88] sm:$0xff]
    %v4161 = vld [vmem:[%s3 + $0x90] sm:$0xf]
    %v4163 = vsel %vm29, %v4156, 0
    %v4166 = vsel %vm29, %v4157, 0
    %v4169 = vsel %vm29, %v4158, 0
    %v4172 = vsel %vm29, %v4159, 0
    %v4175 = vsel %vm79, %v4161, 0
    %4177 = vmatpush.msra.mxu0 0.0
    %4178 = vmatpush.msra.mxu0 0.0
    %4179 = vmatpush.msra.mxu0 0.0
    %4180 = vmatpush.msra.mxu0 0.0
    %4181 = vmatpush.msra.mxu0 0.0
    %4182 = vmatpush.msra.mxu0 0.0
    %4183 = vmatpush.msra.mxu0 0.0
    %4184 = vmatpush.msra.mxu0 0.0
    %4185 = vmatpush.msra.mxu0 0.0
    %4186 = vmatpush.msra.mxu0 0.0
    %4187 = vmatpush.msra.mxu0 0.0
    %4188 = vmatpush.msra.mxu0 0.0
    %4189 = vmatpush.msra.mxu0 0.0
    %4190 = vmatpush.msra.mxu0 0.0
    %4191 = vmatpush.msra.mxu0 %v4175
    %4192 = vmatpush.msra.mxu0 %v4160
    %4193 = vmatmul.f32.gmra.mxu0 %v4163
    %v4194 = vpop.f32.mrf.mxu0
    %v4195 = vadd.f32 0.0, %v4194
    %4196 = vmatmul.f32.gmra.mxu0 %v4166
    %v4197 = vpop.f32.mrf.mxu0
    %v4198 = vadd.f32 0.0, %v4197
    %4199 = vmatmul.f32.gmra.mxu0 %v4169
    %v4200 = vpop.f32.mrf.mxu0
    %v4201 = vadd.f32 0.0, %v4200
    %4202 = vmatmul.f32.gmra.mxu0 %v4172
    %v4203 = vpop.f32.mrf.mxu0
    %v4204 = vadd.f32 0.0, %v4203
    %4205 = vdwg.mxu0
    %v4206 = vadd.f32 %v4145, %v4195
    %v4207 = vadd.f32 %v4148, %v4198
    %v4208 = vadd.f32 %v4151, %v4201
    %v4209 = vadd.f32 %v4154, %v4204
    %v4210 = vld [vmem:[%s3 + $0x98] sm:$0x1]
    %v4211 = vperm.slane %v4210, 0
    %v4212 = vadd.f32 %v4206, %v4211
    %v4213 = vadd.f32 %v4207, %v4211
    %v4214 = vadd.f32 %v4208, %v4211
    %v4215 = vadd.f32 %v4209, %v4211
    %v4216 = vmax.f32 %v4212, 0.0
    %v4217 = vmax.f32 %v4213, 0.0
    %v4218 = vmax.f32 %v4214, 0.0
    %v4219 = vmax.f32 %v4215, 0.0
    %v4220 = vld [vmem:[%s3 + $0xa0] sm:$0xff]
    %v4221 = vld [vmem:[%s3 + $0xa8] sm:$0xff]
    %v4222 = vld [vmem:[%s3 + $0xb0] sm:$0xff]
    %v4223 = vld [vmem:[%s3 + $0xb8] sm:$0xff]
    %v4224 = vld [vmem:[%s3 + $0xc0] sm:$0x1]
    %v4225 = vperm.slane %v4224, 0
    %4226 = vmatpush.msra.mxu0 0.0
    %4227 = vmatpush.msra.mxu0 0.0
    %4228 = vmatpush.msra.mxu0 0.0
    %4229 = vmatpush.msra.mxu0 0.0
    %4230 = vmatpush.msra.mxu0 0.0
    %4231 = vmatpush.msra.mxu0 0.0
    %4232 = vmatpush.msra.mxu0 0.0
    %4233 = vmatpush.msra.mxu0 0.0
    %4234 = vmatpush.msra.mxu0 0.0
    %4235 = vmatpush.msra.mxu0 0.0
    %4236 = vmatpush.msra.mxu0 0.0
    %4237 = vmatpush.msra.mxu0 0.0
    %4238 = vmatpush.msra.mxu0 %v4223
    %4239 = vmatpush.msra.mxu0 %v4222
    %4240 = vmatpush.msra.mxu0 %v4221
    %4241 = vmatpush.msra.mxu0 %v4220
    %4242 = vmatmul.f32.gmra.mxu0 %v3432
    %v4243 = vpop.f32.mrf.mxu0
    %v4244 = vadd.f32 %v4225, %v4243
    %4245 = vmatmul.f32.gmra.mxu0 %v3435
    %v4246 = vpop.f32.mrf.mxu0
    %v4247 = vadd.f32 %v4225, %v4246
    %4248 = vmatmul.f32.gmra.mxu0 %v3438
    %v4249 = vpop.f32.mrf.mxu0
    %v4250 = vadd.f32 %v4225, %v4249
    %4251 = vmatmul.f32.gmra.mxu0 %v3441
    %v4252 = vpop.f32.mrf.mxu0
    %v4253 = vadd.f32 %v4225, %v4252
    %4254 = vdwg.mxu0
    %v4255 = vadd.f32 %v4216, %v4244
    %v4256 = vadd.f32 %v4217, %v4247
    %v4257 = vadd.f32 %v4218, %v4250
    %v4258 = vadd.f32 %v4219, %v4253
    %v4259 = vmax.f32 %v4255, 0.0
    %v4260 = vmax.f32 %v4256, 0.0
    %v4261 = vmax.f32 %v4257, 0.0
    %v4262 = vmax.f32 %v4258, 0.0
    %4263 = vst.msk [vmem:[#allocation2 + $0x20] sm:$0xff] %vm29, %v4259
    %4264 = vst.msk [vmem:[#allocation2 + $0x28] sm:$0xff] %vm29, %v4260
    %4265 = vst.msk [vmem:[#allocation2 + $0x30] sm:$0xff] %vm29, %v4261
    %4266 = vst.msk [vmem:[#allocation2 + $0x38] sm:$0xff] %vm29, %v4262
    %v4267 = vld [vmem:[#allocation2 + $0x18] sm:$0xff]
    %v4268 = vld [vmem:[#allocation2 + $0x20] sm:$0xff]
    %v4269 = vld [vmem:[#allocation2 + $0x28] sm:$0xff]
    %v4270 = vld [vmem:[#allocation2 + $0x30] sm:$0xff]
    %v4271 = vld [vmem:[%s3 + $0xc8] sm:$0xff]
    %v4272 = vld [vmem:[%s3 + $0xd0] sm:$0xf]
    %v4273 = vld [vmem:[#allocation2 + $0x1c] sm:$0xff]
    %v4274 = vld [vmem:[#allocation2 + $0x24] sm:$0xff]
    %v4275 = vld [vmem:[#allocation2 + $0x2c] sm:$0xff]
    %v4276 = vld [vmem:[#allocation2 + $0x34] sm:$0xff]
    %v4277 = vld [vmem:[%s3 + $0xd8] sm:$0xff]
    %v4278 = vld [vmem:[%s3 + $0xe0] sm:$0xf]
    %v4280 = vsel %vm29, %v4273, 0
    %v4283 = vsel %vm29, %v4274, 0
    %v4286 = vsel %vm29, %v4275, 0
    %v4289 = vsel %vm29, %v4276, 0
    %v4292 = vsel %vm79, %v4278, 0
    %4294 = vmatpush.msra.mxu0 0.0
    %4295 = vmatpush.msra.mxu0 0.0
    %4296 = vmatpush.msra.mxu0 0.0
    %4297 = vmatpush.msra.mxu0 0.0
    %4298 = vmatpush.msra.mxu0 0.0
    %4299 = vmatpush.msra.mxu0 0.0
    %4300 = vmatpush.msra.mxu0 0.0
    %4301 = vmatpush.msra.mxu0 0.0
    %4302 = vmatpush.msra.mxu0 0.0
    %4303 = vmatpush.msra.mxu0 0.0
    %4304 = vmatpush.msra.mxu0 0.0
    %4305 = vmatpush.msra.mxu0 0.0
    %4306 = vmatpush.msra.mxu0 0.0
    %4307 = vmatpush.msra.mxu0 0.0
    %4308 = vmatpush.msra.mxu0 %v4292
    %4309 = vmatpush.msra.mxu0 %v4277
    %4310 = vmatmul.f32.gmra.mxu0 %v4280
    %v4311 = vpop.f32.mrf.mxu0
    %v4312 = vadd.f32 0.0, %v4311
    %4313 = vmatmul.f32.gmra.mxu0 %v4283
    %v4314 = vpop.f32.mrf.mxu0
    %v4315 = vadd.f32 0.0, %v4314
    %4316 = vmatmul.f32.gmra.mxu0 %v4286
    %v4317 = vpop.f32.mrf.mxu0
    %v4318 = vadd.f32 0.0, %v4317
    %4319 = vmatmul.f32.gmra.mxu0 %v4289
    %v4320 = vpop.f32.mrf.mxu0
    %v4321 = vadd.f32 0.0, %v4320
    %4322 = vdwg.mxu0
    %v4324 = vsel %vm29, %v4267, 0
    %v4327 = vsel %vm29, %v4268, 0
    %v4330 = vsel %vm29, %v4269, 0
    %v4333 = vsel %vm29, %v4270, 0
    %v4336 = vsel %vm79, %v4272, 0
    %4338 = vmatpush.msra.mxu0 0.0
    %4339 = vmatpush.msra.mxu0 0.0
    %4340 = vmatpush.msra.mxu0 0.0
    %4341 = vmatpush.msra.mxu0 0.0
    %4342 = vmatpush.msra.mxu0 0.0
    %4343 = vmatpush.msra.mxu0 0.0
    %4344 = vmatpush.msra.mxu0 0.0
    %4345 = vmatpush.msra.mxu0 0.0
    %4346 = vmatpush.msra.mxu0 0.0
    %4347 = vmatpush.msra.mxu0 0.0
    %4348 = vmatpush.msra.mxu0 0.0
    %4349 = vmatpush.msra.mxu0 0.0
    %4350 = vmatpush.msra.mxu0 0.0
    %4351 = vmatpush.msra.mxu0 0.0
    %4352 = vmatpush.msra.mxu0 %v4336
    %4353 = vmatpush.msra.mxu0 %v4271
    %4354 = vmatmul.f32.gmra.mxu0 %v4324
    %v4355 = vpop.f32.mrf.mxu0
    %v4356 = vadd.f32 %v4312, %v4355
    %4357 = vmatmul.f32.gmra.mxu0 %v4327
    %v4358 = vpop.f32.mrf.mxu0
    %v4359 = vadd.f32 %v4315, %v4358
    %4360 = vmatmul.f32.gmra.mxu0 %v4330
    %v4361 = vpop.f32.mrf.mxu0
    %v4362 = vadd.f32 %v4318, %v4361
    %4363 = vmatmul.f32.gmra.mxu0 %v4333
    %v4364 = vpop.f32.mrf.mxu0
    %v4365 = vadd.f32 %v4321, %v4364
    %4366 = vdwg.mxu0
    %v4367 = vld [vmem:[#allocation2 + $0x20] sm:$0xff]
    %v4368 = vld [vmem:[#allocation2 + $0x28] sm:$0xff]
    %v4369 = vld [vmem:[#allocation2 + $0x30] sm:$0xff]
    %v4370 = vld [vmem:[#allocation2 + $0x38] sm:$0xff]
    %v4371 = vld [vmem:[%s3 + $0xe8] sm:$0xff]
    %v4372 = vld [vmem:[%s3 + $0xf0] sm:$0xf]
    %v4374 = vsel %vm29, %v4367, 0
    %v4377 = vsel %vm29, %v4368, 0
    %v4380 = vsel %vm29, %v4369, 0
    %v4383 = vsel %vm29, %v4370, 0
    %v4386 = vsel %vm79, %v4372, 0
    %4388 = vmatpush.msra.mxu0 0.0
    %4389 = vmatpush.msra.mxu0 0.0
    %4390 = vmatpush.msra.mxu0 0.0
    %4391 = vmatpush.msra.mxu0 0.0
    %4392 = vmatpush.msra.mxu0 0.0
    %4393 = vmatpush.msra.mxu0 0.0
    %4394 = vmatpush.msra.mxu0 0.0
    %4395 = vmatpush.msra.mxu0 0.0
    %4396 = vmatpush.msra.mxu0 0.0
    %4397 = vmatpush.msra.mxu0 0.0
    %4398 = vmatpush.msra.mxu0 0.0
    %4399 = vmatpush.msra.mxu0 0.0
    %4400 = vmatpush.msra.mxu0 0.0
    %4401 = vmatpush.msra.mxu0 0.0
    %4402 = vmatpush.msra.mxu0 %v4386
    %4403 = vmatpush.msra.mxu0 %v4371
    %4404 = vmatmul.f32.gmra.mxu0 %v4374
    %v4405 = vpop.f32.mrf.mxu0
    %v4406 = vadd.f32 0.0, %v4405
    %4407 = vmatmul.f32.gmra.mxu0 %v4377
    %v4408 = vpop.f32.mrf.mxu0
    %v4409 = vadd.f32 0.0, %v4408
    %4410 = vmatmul.f32.gmra.mxu0 %v4380
    %v4411 = vpop.f32.mrf.mxu0
    %v4412 = vadd.f32 0.0, %v4411
    %4413 = vmatmul.f32.gmra.mxu0 %v4383
    %v4414 = vpop.f32.mrf.mxu0
    %v4415 = vadd.f32 0.0, %v4414
    %4416 = vdwg.mxu0
    %v4417 = vadd.f32 %v4356, %v4406
    %v4418 = vadd.f32 %v4359, %v4409
    %v4419 = vadd.f32 %v4362, %v4412
    %v4420 = vadd.f32 %v4365, %v4415
    %v4421 = vld [vmem:[%s3 + $0xf8] sm:$0x1]
    %v4422 = vperm.slane %v4421, 0
    %v4423 = vadd.f32 %v4417, %v4422
    %v4424 = vadd.f32 %v4418, %v4422
    %v4425 = vadd.f32 %v4419, %v4422
    %v4426 = vadd.f32 %v4420, %v4422
    %v4427 = vmax.f32 %v4423, 0.0
    %v4428 = vmax.f32 %v4424, 0.0
    %v4429 = vmax.f32 %v4425, 0.0
    %v4430 = vmax.f32 %v4426, 0.0
    %4431 = vst.msk [vmem:[#allocation2 + $0x20] sm:$0xff] %vm29, %v4427
    %4432 = vst.msk [vmem:[#allocation2 + $0x28] sm:$0xff] %vm29, %v4428
    %4433 = vst.msk [vmem:[#allocation2 + $0x30] sm:$0xff] %vm29, %v4429
    %4434 = vst.msk [vmem:[#allocation2 + $0x38] sm:$0xff] %vm29, %v4430
    %v4435 = vld [vmem:[#allocation2 + $0x18] sm:$0xff]
    %v4436 = vld [vmem:[#allocation2 + $0x20] sm:$0xff]
    %v4437 = vld [vmem:[#allocation2 + $0x28] sm:$0xff]
    %v4438 = vld [vmem:[#allocation2 + $0x30] sm:$0xff]
    %v4439 = vld [vmem:[%s3 + $0x100] sm:$0xff]
    %v4440 = vld [vmem:[%s3 + $0x108] sm:$0xf]
    %v4441 = vld [vmem:[#allocation2 + $0x1c] sm:$0xff]
    %v4442 = vld [vmem:[#allocation2 + $0x24] sm:$0xff]
    %v4443 = vld [vmem:[#allocation2 + $0x2c] sm:$0xff]
    %v4444 = vld [vmem:[#allocation2 + $0x34] sm:$0xff]
    %v4445 = vld [vmem:[%s3 + $0x110] sm:$0xff]
    %v4446 = vld [vmem:[%s3 + $0x118] sm:$0xf]
    %v4448 = vsel %vm29, %v4441, 0
    %v4451 = vsel %vm29, %v4442, 0
    %v4454 = vsel %vm29, %v4443, 0
    %v4457 = vsel %vm29, %v4444, 0
    %v4460 = vsel %vm79, %v4446, 0
    %4462 = vmatpush.msra.mxu0 0.0
    %4463 = vmatpush.msra.mxu0 0.0
    %4464 = vmatpush.msra.mxu0 0.0
    %4465 = vmatpush.msra.mxu0 0.0
    %4466 = vmatpush.msra.mxu0 0.0
    %4467 = vmatpush.msra.mxu0 0.0
    %4468 = vmatpush.msra.mxu0 0.0
    %4469 = vmatpush.msra.mxu0 0.0
    %4470 = vmatpush.msra.mxu0 0.0
    %4471 = vmatpush.msra.mxu0 0.0
    %4472 = vmatpush.msra.mxu0 0.0
    %4473 = vmatpush.msra.mxu0 0.0
    %4474 = vmatpush.msra.mxu0 0.0
    %4475 = vmatpush.msra.mxu0 0.0
    %4476 = vmatpush.msra.mxu0 %v4460
    %4477 = vmatpush.msra.mxu0 %v4445
    %4478 = vmatmul.f32.gmra.mxu0 %v4448
    %v4479 = vpop.f32.mrf.mxu0
    %v4480 = vadd.f32 0.0, %v4479
    %4481 = vmatmul.f32.gmra.mxu0 %v4451
    %v4482 = vpop.f32.mrf.mxu0
    %v4483 = vadd.f32 0.0, %v4482
    %4484 = vmatmul.f32.gmra.mxu0 %v4454
    %v4485 = vpop.f32.mrf.mxu0
    %v4486 = vadd.f32 0.0, %v4485
    %4487 = vmatmul.f32.gmra.mxu0 %v4457
    %v4488 = vpop.f32.mrf.mxu0
    %v4489 = vadd.f32 0.0, %v4488
    %4490 = vdwg.mxu0
    %v4492 = vsel %vm29, %v4435, 0
    %v4495 = vsel %vm29, %v4436, 0
    %v4498 = vsel %vm29, %v4437, 0
    %v4501 = vsel %vm29, %v4438, 0
    %v4504 = vsel %vm79, %v4440, 0
    %4506 = vmatpush.msra.mxu0 0.0
    %4507 = vmatpush.msra.mxu0 0.0
    %4508 = vmatpush.msra.mxu0 0.0
    %4509 = vmatpush.msra.mxu0 0.0
    %4510 = vmatpush.msra.mxu0 0.0
    %4511 = vmatpush.msra.mxu0 0.0
    %4512 = vmatpush.msra.mxu0 0.0
    %4513 = vmatpush.msra.mxu0 0.0
    %4514 = vmatpush.msra.mxu0 0.0
    %4515 = vmatpush.msra.mxu0 0.0
    %4516 = vmatpush.msra.mxu0 0.0
    %4517 = vmatpush.msra.mxu0 0.0
    %4518 = vmatpush.msra.mxu0 0.0
    %4519 = vmatpush.msra.mxu0 0.0
    %4520 = vmatpush.msra.mxu0 %v4504
    %4521 = vmatpush.msra.mxu0 %v4439
    %4522 = vmatmul.f32.gmra.mxu0 %v4492
    %v4523 = vpop.f32.mrf.mxu0
    %v4524 = vadd.f32 %v4480, %v4523
    %4525 = vmatmul.f32.gmra.mxu0 %v4495
    %v4526 = vpop.f32.mrf.mxu0
    %v4527 = vadd.f32 %v4483, %v4526
    %4528 = vmatmul.f32.gmra.mxu0 %v4498
    %v4529 = vpop.f32.mrf.mxu0
    %v4530 = vadd.f32 %v4486, %v4529
    %4531 = vmatmul.f32.gmra.mxu0 %v4501
    %v4532 = vpop.f32.mrf.mxu0
    %v4533 = vadd.f32 %v4489, %v4532
    %4534 = vdwg.mxu0
    %v4535 = vld [vmem:[#allocation2 + $0x20] sm:$0xff]
    %v4536 = vld [vmem:[#allocation2 + $0x28] sm:$0xff]
    %v4537 = vld [vmem:[#allocation2 + $0x30] sm:$0xff]
    %v4538 = vld [vmem:[#allocation2 + $0x38] sm:$0xff]
    %v4539 = vld [vmem:[%s3 + $0x120] sm:$0xff]
    %v4540 = vld [vmem:[%s3 + $0x128] sm:$0xf]
    %v4542 = vsel %vm29, %v4535, 0
    %v4545 = vsel %vm29, %v4536, 0
    %v4548 = vsel %vm29, %v4537, 0
    %v4551 = vsel %vm29, %v4538, 0
    %v4554 = vsel %vm79, %v4540, 0
    %4556 = vmatpush.msra.mxu0 0.0
    %4557 = vmatpush.msra.mxu0 0.0
    %4558 = vmatpush.msra.mxu0 0.0
    %4559 = vmatpush.msra.mxu0 0.0
    %4560 = vmatpush.msra.mxu0 0.0
    %4561 = vmatpush.msra.mxu0 0.0
    %4562 = vmatpush.msra.mxu0 0.0
    %4563 = vmatpush.msra.mxu0 0.0
    %4564 = vmatpush.msra.mxu0 0.0
    %4565 = vmatpush.msra.mxu0 0.0
    %4566 = vmatpush.msra.mxu0 0.0
    %4567 = vmatpush.msra.mxu0 0.0
    %4568 = vmatpush.msra.mxu0 0.0
    %4569 = vmatpush.msra.mxu0 0.0
    %4570 = vmatpush.msra.mxu0 %v4554
    %4571 = vmatpush.msra.mxu0 %v4539
    %4572 = vmatmul.f32.gmra.mxu0 %v4542
    %v4573 = vpop.f32.mrf.mxu0
    %v4574 = vadd.f32 0.0, %v4573
    %4575 = vmatmul.f32.gmra.mxu0 %v4545
    %v4576 = vpop.f32.mrf.mxu0
    %v4577 = vadd.f32 0.0, %v4576
    %4578 = vmatmul.f32.gmra.mxu0 %v4548
    %v4579 = vpop.f32.mrf.mxu0
    %v4580 = vadd.f32 0.0, %v4579
    %4581 = vmatmul.f32.gmra.mxu0 %v4551
    %v4582 = vpop.f32.mrf.mxu0
    %v4583 = vadd.f32 0.0, %v4582
    %4584 = vdwg.mxu0
    %v4585 = vadd.f32 %v4524, %v4574
    %v4586 = vadd.f32 %v4527, %v4577
    %v4587 = vadd.f32 %v4530, %v4580
    %v4588 = vadd.f32 %v4533, %v4583
    %v4589 = vld [vmem:[%s3 + $0x130] sm:$0x1]
    %v4590 = vperm.slane %v4589, 0
    %v4591 = vadd.f32 %v4585, %v4590
    %v4592 = vadd.f32 %v4586, %v4590
    %v4593 = vadd.f32 %v4587, %v4590
    %v4594 = vadd.f32 %v4588, %v4590
    %v4595 = vmax.f32 %v4591, 0.0
    %v4596 = vmax.f32 %v4592, 0.0
    %v4597 = vmax.f32 %v4593, 0.0
    %v4598 = vmax.f32 %v4594, 0.0
    %v4599 = vadd.f32 %v4595, %v4259
    %v4600 = vadd.f32 %v4596, %v4260
    %v4601 = vadd.f32 %v4597, %v4261
    %v4602 = vadd.f32 %v4598, %v4262
    %v4603 = vmax.f32 %v4599, 0.0
    %v4604 = vmax.f32 %v4600, 0.0
    %v4605 = vmax.f32 %v4601, 0.0
    %v4606 = vmax.f32 %v4602, 0.0
    %4607 = vst.msk [vmem:[#allocation2 + $0x20] sm:$0xff] %vm29, %v4603
    %4608 = vst.msk [vmem:[#allocation2 + $0x28] sm:$0xff] %vm29, %v4604
    %4609 = vst.msk [vmem:[#allocation2 + $0x30] sm:$0xff] %vm29, %v4605
    %4610 = vst.msk [vmem:[#allocation2 + $0x38] sm:$0xff] %vm29, %v4606
    %v4611 = vld [vmem:[#allocation2 + $0x10] sm:$0xff]
    %v4612 = vld [vmem:[#allocation2 + $0x18] sm:$0xff]
    %v4613 = vld [vmem:[#allocation2 + $0x20] sm:$0xff]
    %v4614 = vld [vmem:[#allocation2 + $0x28] sm:$0xff]
    %v4615 = vld [vmem:[%s3 + $0x138] sm:$0xff]
    %v4616 = vld [vmem:[%s3 + $0x140] sm:$0xf]
    %v4617 = vld [vmem:[#allocation2 + $0x30] sm:$0xff]
    %v4618 = vld [vmem:[%s3 + $0x148] sm:$0xff]
    %v4619 = vld [vmem:[%s3 + $0x150] sm:$0xf]
    %v4621 = vsel %vm29, %v4612, 0
    %v4624 = vsel %vm29, %v4613, 0
    %v4627 = vsel %vm29, %v4614, 0
    %v4630 = vsel %vm29, %v4617, 0
    %v4633 = vsel %vm79, %v4619, 0
    %4635 = vmatpush.msra.mxu0 0.0
    %4636 = vmatpush.msra.mxu0 0.0
    %4637 = vmatpush.msra.mxu0 0.0
    %4638 = vmatpush.msra.mxu0 0.0
    %4639 = vmatpush.msra.mxu0 0.0
    %4640 = vmatpush.msra.mxu0 0.0
    %4641 = vmatpush.msra.mxu0 0.0
    %4642 = vmatpush.msra.mxu0 0.0
    %4643 = vmatpush.msra.mxu0 0.0
    %4644 = vmatpush.msra.mxu0 0.0
    %4645 = vmatpush.msra.mxu0 0.0
    %4646 = vmatpush.msra.mxu0 0.0
    %4647 = vmatpush.msra.mxu0 0.0
    %4648 = vmatpush.msra.mxu0 0.0
    %4649 = vmatpush.msra.mxu0 %v4633
    %4650 = vmatpush.msra.mxu0 %v4618
    %4651 = vmatmul.f32.gmra.mxu0 %v4621
    %v4652 = vpop.f32.mrf.mxu0
    %v4653 = vadd.f32 0.0, %v4652
    %4654 = vmatmul.f32.gmra.mxu0 %v4624
    %v4655 = vpop.f32.mrf.mxu0
    %v4656 = vadd.f32 0.0, %v4655
    %4657 = vmatmul.f32.gmra.mxu0 %v4627
    %v4658 = vpop.f32.mrf.mxu0
    %v4659 = vadd.f32 0.0, %v4658
    %4660 = vmatmul.f32.gmra.mxu0 %v4630
    %v4661 = vpop.f32.mrf.mxu0
    %v4662 = vadd.f32 0.0, %v4661
    %4663 = vdwg.mxu0
    %v4665 = vsel %vm29, %v4611, 0
    %v4668 = vsel %vm79, %v4616, 0
    %4670 = vmatpush.msra.mxu0 0.0
    %4671 = vmatpush.msra.mxu0 0.0
    %4672 = vmatpush.msra.mxu0 0.0
    %4673 = vmatpush.msra.mxu0 0.0
    %4674 = vmatpush.msra.mxu0 0.0
    %4675 = vmatpush.msra.mxu0 0.0
    %4676 = vmatpush.msra.mxu0 0.0
    %4677 = vmatpush.msra.mxu0 0.0
    %4678 = vmatpush.msra.mxu0 0.0
    %4679 = vmatpush.msra.mxu0 0.0
    %4680 = vmatpush.msra.mxu0 0.0
    %4681 = vmatpush.msra.mxu0 0.0
    %4682 = vmatpush.msra.mxu0 0.0
    %4683 = vmatpush.msra.mxu0 0.0
    %4684 = vmatpush.msra.mxu0 %v4668
    %4685 = vmatpush.msra.mxu0 %v4615
    %4686 = vmatmul.f32.gmra.mxu0 %v4665
    %v4687 = vpop.f32.mrf.mxu0
    %v4688 = vadd.f32 %v4653, %v4687
    %4689 = vmatmul.f32.gmra.mxu0 %v4621
    %v4690 = vpop.f32.mrf.mxu0
    %v4691 = vadd.f32 %v4656, %v4690
    %4692 = vmatmul.f32.gmra.mxu0 %v4624
    %v4693 = vpop.f32.mrf.mxu0
    %v4694 = vadd.f32 %v4659, %v4693
    %4695 = vmatmul.f32.gmra.mxu0 %v4627
    %v4696 = vpop.f32.mrf.mxu0
    %v4697 = vadd.f32 %v4662, %v4696
    %4698 = vdwg.mxu0
    %v4699 = vld [vmem:[#allocation2 + $0x20] sm:$0xff]
    %v4700 = vld [vmem:[#allocation2 + $0x28] sm:$0xff]
    %v4701 = vld [vmem:[#allocation2 + $0x30] sm:$0xff]
    %v4702 = vld [vmem:[#allocation2 + $0x38] sm:$0xff]
    %v4703 = vld [vmem:[%s3 + $0x158] sm:$0xff]
    %v4704 = vld [vmem:[%s3 + $0x160] sm:$0xf]
    %v4706 = vsel %vm29, %v4699, 0
    %v4709 = vsel %vm29, %v4700, 0
    %v4712 = vsel %vm29, %v4701, 0
    %v4715 = vsel %vm29, %v4702, 0
    %v4718 = vsel %vm79, %v4704, 0
    %4720 = vmatpush.msra.mxu0 0.0
    %4721 = vmatpush.msra.mxu0 0.0
    %4722 = vmatpush.msra.mxu0 0.0
    %4723 = vmatpush.msra.mxu0 0.0
    %4724 = vmatpush.msra.mxu0 0.0
    %4725 = vmatpush.msra.mxu0 0.0
    %4726 = vmatpush.msra.mxu0 0.0
    %4727 = vmatpush.msra.mxu0 0.0
    %4728 = vmatpush.msra.mxu0 0.0
    %4729 = vmatpush.msra.mxu0 0.0
    %4730 = vmatpush.msra.mxu0 0.0
    %4731 = vmatpush.msra.mxu0 0.0
    %4732 = vmatpush.msra.mxu0 0.0
    %4733 = vmatpush.msra.mxu0 0.0
    %4734 = vmatpush.msra.mxu0 %v4718
    %4735 = vmatpush.msra.mxu0 %v4703
    %4736 = vmatmul.f32.gmra.mxu0 %v4706
    %v4737 = vpop.f32.mrf.mxu0
    %v4738 = vadd.f32 0.0, %v4737
    %4739 = vmatmul.f32.gmra.mxu0 %v4709
    %v4740 = vpop.f32.mrf.mxu0
    %v4741 = vadd.f32 0.0, %v4740
    %4742 = vmatmul.f32.gmra.mxu0 %v4712
    %v4743 = vpop.f32.mrf.mxu0
    %v4744 = vadd.f32 0.0, %v4743
    %4745 = vmatmul.f32.gmra.mxu0 %v4715
    %v4746 = vpop.f32.mrf.mxu0
    %v4747 = vadd.f32 0.0, %v4746
    %4748 = vdwg.mxu0
    %v4749 = vadd.f32 %v4688, %v4738
    %v4750 = vadd.f32 %v4691, %v4741
    %v4751 = vadd.f32 %v4694, %v4744
    %v4752 = vadd.f32 %v4697, %v4747
    %v4753 = vld [vmem:[%s3 + $0x168] sm:$0x1]
    %v4754 = vperm.slane %v4753, 0
    %v4755 = vadd.f32 %v4749, %v4754
    %v4756 = vadd.f32 %v4750, %v4754
    %v4757 = vadd.f32 %v4751, %v4754
    %v4758 = vadd.f32 %v4752, %v4754
    %v4759 = vmax.f32 %v4755, 0.0
    %v4760 = vmax.f32 %v4756, 0.0
    %v4761 = vmax.f32 %v4757, 0.0
    %v4762 = vmax.f32 %v4758, 0.0
    %4763 = vst.msk [vmem:[#allocation2 + $0x20] sm:$0xff] %vm29, %v4759
    %4764 = vst.msk [vmem:[#allocation2 + $0x28] sm:$0xff] %vm29, %v4760
    %4765 = vst.msk [vmem:[#allocation2 + $0x30] sm:$0xff] %vm29, %v4761
    %4766 = vst.msk [vmem:[#allocation2 + $0x38] sm:$0xff] %vm29, %v4762
    %v4767 = vld [vmem:[#allocation2 + $0x10] sm:$0xff]
    %v4768 = vld [vmem:[#allocation2 + $0x18] sm:$0xff]
    %v4769 = vld [vmem:[#allocation2 + $0x20] sm:$0xff]
    %v4770 = vld [vmem:[#allocation2 + $0x28] sm:$0xff]
    %v4771 = vld [vmem:[%s3 + $0x170] sm:$0xff]
    %v4772 = vld [vmem:[%s3 + $0x178] sm:$0xf]
    %v4773 = vld [vmem:[#allocation2 + $0x30] sm:$0xff]
    %v4774 = vld [vmem:[%s3 + $0x180] sm:$0xff]
    %v4775 = vld [vmem:[%s3 + $0x188] sm:$0xf]
    %v4777 = vsel %vm29, %v4768, 0
    %v4780 = vsel %vm29, %v4769, 0
    %v4783 = vsel %vm29, %v4770, 0
    %v4786 = vsel %vm29, %v4773, 0
    %v4789 = vsel %vm79, %v4775, 0
    %4791 = vmatpush.msra.mxu0 0.0
    %4792 = vmatpush.msra.mxu0 0.0
    %4793 = vmatpush.msra.mxu0 0.0
    %4794 = vmatpush.msra.mxu0 0.0
    %4795 = vmatpush.msra.mxu0 0.0
    %4796 = vmatpush.msra.mxu0 0.0
    %4797 = vmatpush.msra.mxu0 0.0
    %4798 = vmatpush.msra.mxu0 0.0
    %4799 = vmatpush.msra.mxu0 0.0
    %4800 = vmatpush.msra.mxu0 0.0
    %4801 = vmatpush.msra.mxu0 0.0
    %4802 = vmatpush.msra.mxu0 0.0
    %4803 = vmatpush.msra.mxu0 0.0
    %4804 = vmatpush.msra.mxu0 0.0
    %4805 = vmatpush.msra.mxu0 %v4789
    %4806 = vmatpush.msra.mxu0 %v4774
    %4807 = vmatmul.f32.gmra.mxu0 %v4777
    %v4808 = vpop.f32.mrf.mxu0
    %v4809 = vadd.f32 0.0, %v4808
    %4810 = vmatmul.f32.gmra.mxu0 %v4780
    %v4811 = vpop.f32.mrf.mxu0
    %v4812 = vadd.f32 0.0, %v4811
    %4813 = vmatmul.f32.gmra.mxu0 %v4783
    %v4814 = vpop.f32.mrf.mxu0
    %v4815 = vadd.f32 0.0, %v4814
    %4816 = vmatmul.f32.gmra.mxu0 %v4786
    %v4817 = vpop.f32.mrf.mxu0
    %v4818 = vadd.f32 0.0, %v4817
    %4819 = vdwg.mxu0
    %v4821 = vsel %vm29, %v4767, 0
    %v4824 = vsel %vm79, %v4772, 0
    %4826 = vmatpush.msra.mxu0 0.0
    %4827 = vmatpush.msra.mxu0 0.0
    %4828 = vmatpush.msra.mxu0 0.0
    %4829 = vmatpush.msra.mxu0 0.0
    %4830 = vmatpush.msra.mxu0 0.0
    %4831 = vmatpush.msra.mxu0 0.0
    %4832 = vmatpush.msra.mxu0 0.0
    %4833 = vmatpush.msra.mxu0 0.0
    %4834 = vmatpush.msra.mxu0 0.0
    %4835 = vmatpush.msra.mxu0 0.0
    %4836 = vmatpush.msra.mxu0 0.0
    %4837 = vmatpush.msra.mxu0 0.0
    %4838 = vmatpush.msra.mxu0 0.0
    %4839 = vmatpush.msra.mxu0 0.0
    %4840 = vmatpush.msra.mxu0 %v4824
    %4841 = vmatpush.msra.mxu0 %v4771
    %4842 = vmatmul.f32.gmra.mxu0 %v4821
    %v4843 = vpop.f32.mrf.mxu0
    %v4844 = vadd.f32 %v4809, %v4843
    %4845 = vmatmul.f32.gmra.mxu0 %v4777
    %v4846 = vpop.f32.mrf.mxu0
    %v4847 = vadd.f32 %v4812, %v4846
    %4848 = vmatmul.f32.gmra.mxu0 %v4780
    %v4849 = vpop.f32.mrf.mxu0
    %v4850 = vadd.f32 %v4815, %v4849
    %4851 = vmatmul.f32.gmra.mxu0 %v4783
    %v4852 = vpop.f32.mrf.mxu0
    %v4853 = vadd.f32 %v4818, %v4852
    %4854 = vdwg.mxu0
    %v4855 = vld [vmem:[#allocation2 + $0x20] sm:$0xff]
    %v4856 = vld [vmem:[#allocation2 + $0x28] sm:$0xff]
    %v4857 = vld [vmem:[#allocation2 + $0x30] sm:$0xff]
    %v4858 = vld [vmem:[#allocation2 + $0x38] sm:$0xff]
    %v4859 = vld [vmem:[%s3 + $0x190] sm:$0xff]
    %v4860 = vld [vmem:[%s3 + $0x198] sm:$0xf]
    %v4862 = vsel %vm29, %v4855, 0
    %v4865 = vsel %vm29, %v4856, 0
    %v4868 = vsel %vm29, %v4857, 0
    %v4871 = vsel %vm29, %v4858, 0
    %v4874 = vsel %vm79, %v4860, 0
    %4876 = vmatpush.msra.mxu0 0.0
    %4877 = vmatpush.msra.mxu0 0.0
    %4878 = vmatpush.msra.mxu0 0.0
    %4879 = vmatpush.msra.mxu0 0.0
    %4880 = vmatpush.msra.mxu0 0.0
    %4881 = vmatpush.msra.mxu0 0.0
    %4882 = vmatpush.msra.mxu0 0.0
    %4883 = vmatpush.msra.mxu0 0.0
    %4884 = vmatpush.msra.mxu0 0.0
    %4885 = vmatpush.msra.mxu0 0.0
    %4886 = vmatpush.msra.mxu0 0.0
    %4887 = vmatpush.msra.mxu0 0.0
    %4888 = vmatpush.msra.mxu0 0.0
    %4889 = vmatpush.msra.mxu0 0.0
    %4890 = vmatpush.msra.mxu0 %v4874
    %4891 = vmatpush.msra.mxu0 %v4859
    %4892 = vmatmul.f32.gmra.mxu0 %v4862
    %v4893 = vpop.f32.mrf.mxu0
    %v4894 = vadd.f32 0.0, %v4893
    %4895 = vmatmul.f32.gmra.mxu0 %v4865
    %v4896 = vpop.f32.mrf.mxu0
    %v4897 = vadd.f32 0.0, %v4896
    %4898 = vmatmul.f32.gmra.mxu0 %v4868
    %v4899 = vpop.f32.mrf.mxu0
    %v4900 = vadd.f32 0.0, %v4899
    %4901 = vmatmul.f32.gmra.mxu0 %v4871
    %v4902 = vpop.f32.mrf.mxu0
    %v4903 = vadd.f32 0.0, %v4902
    %4904 = vdwg.mxu0
    %v4905 = vadd.f32 %v4844, %v4894
    %v4906 = vadd.f32 %v4847, %v4897
    %v4907 = vadd.f32 %v4850, %v4900
    %v4908 = vadd.f32 %v4853, %v4903
    %v4909 = vld [vmem:[%s3 + $0x1a0] sm:$0x1]
    %v4910 = vperm.slane %v4909, 0
    %v4911 = vadd.f32 %v4905, %v4910
    %v4912 = vadd.f32 %v4906, %v4910
    %v4913 = vadd.f32 %v4907, %v4910
    %v4914 = vadd.f32 %v4908, %v4910
    %v4915 = vmax.f32 %v4911, 0.0
    %v4916 = vmax.f32 %v4912, 0.0
    %v4917 = vmax.f32 %v4913, 0.0
    %v4918 = vmax.f32 %v4914, 0.0
    %v4919 = vadd.f32 %v4915, %v4603
    %v4920 = vadd.f32 %v4916, %v4604
    %v4921 = vadd.f32 %v4917, %v4605
    %v4922 = vadd.f32 %v4918, %v4606
    %v4923 = vmax.f32 %v4919, 0.0
    %v4924 = vmax.f32 %v4920, 0.0
    %v4925 = vmax.f32 %v4921, 0.0
    %v4926 = vmax.f32 %v4922, 0.0
    %4927 = vst.msk [vmem:[#allocation2 + $0x20] sm:$0xff] %vm29, %v4923
    %4928 = vst.msk [vmem:[#allocation2 + $0x28] sm:$0xff] %vm29, %v4924
    %4929 = vst.msk [vmem:[#allocation2 + $0x30] sm:$0xff] %vm29, %v4925
    %4930 = vst.msk [vmem:[#allocation2 + $0x38] sm:$0xff] %vm29, %v4926
    %v4931 = vld [vmem:[#allocation2 + $0x10] sm:$0xff]
    %v4932 = vld [vmem:[#allocation2 + $0x18] sm:$0xff]
    %v4933 = vld [vmem:[#allocation2 + $0x20] sm:$0xff]
    %v4934 = vld [vmem:[#allocation2 + $0x28] sm:$0xff]
    %v4935 = vld [vmem:[%s3 + $0x1b8] sm:$0xff]
    %v4936 = vld [vmem:[%s3 + $0x1c0] sm:$0xf]
    %v4937 = vld [vmem:[#allocation2 + $0x30] sm:$0xff]
    %v4938 = vld [vmem:[#allocation2 + $0x38] sm:$0xff]
    %v4939 = vld [vmem:[%s3 + $0x1c8] sm:$0xff]
    %v4940 = vld [vmem:[%s3 + $0x1d0] sm:$0xf]
    %v4942 = vsel %vm29, %v4933, 0
    %v4945 = vsel %vm29, %v4934, 0
    %v4948 = vsel %vm29, %v4937, 0
    %v4951 = vsel %vm29, %v4938, 0
    %v4954 = vsel %vm79, %v4940, 0
    %4956 = vmatpush.msra.mxu0 0.0
    %4957 = vmatpush.msra.mxu0 0.0
    %4958 = vmatpush.msra.mxu0 0.0
    %4959 = vmatpush.msra.mxu0 0.0
    %4960 = vmatpush.msra.mxu0 0.0
    %4961 = vmatpush.msra.mxu0 0.0
    %4962 = vmatpush.msra.mxu0 0.0
    %4963 = vmatpush.msra.mxu0 0.0
    %4964 = vmatpush.msra.mxu0 0.0
    %4965 = vmatpush.msra.mxu0 0.0
    %4966 = vmatpush.msra.mxu0 0.0
    %4967 = vmatpush.msra.mxu0 0.0
    %4968 = vmatpush.msra.mxu0 0.0
    %4969 = vmatpush.msra.mxu0 0.0
    %4970 = vmatpush.msra.mxu0 %v4954
    %4971 = vmatpush.msra.mxu0 %v4939
    %4972 = vmatmul.f32.gmra.mxu0 %v4942
    %v4973 = vpop.f32.mrf.mxu0
    %v4974 = vadd.f32 0.0, %v4973
    %4975 = vmatmul.f32.gmra.mxu0 %v4945
    %v4976 = vpop.f32.mrf.mxu0
    %v4977 = vadd.f32 0.0, %v4976
    %4978 = vmatmul.f32.gmra.mxu0 %v4948
    %v4979 = vpop.f32.mrf.mxu0
    %v4980 = vadd.f32 0.0, %v4979
    %4981 = vmatmul.f32.gmra.mxu0 %v4951
    %v4982 = vpop.f32.mrf.mxu0
    %v4983 = vadd.f32 0.0, %v4982
    %4984 = vdwg.mxu0
    %v4986 = vsel %vm29, %v4931, 0
    %v4989 = vsel %vm29, %v4932, 0
    %v4992 = vsel %vm79, %v4936, 0
    %4994 = vmatpush.msra.mxu0 0.0
    %4995 = vmatpush.msra.mxu0 0.0
    %4996 = vmatpush.msra.mxu0 0.0
    %4997 = vmatpush.msra.mxu0 0.0
    %4998 = vmatpush.msra.mxu0 0.0
    %4999 = vmatpush.msra.mxu0 0.0
    %5000 = vmatpush.msra.mxu0 0.0
    %5001 = vmatpush.msra.mxu0 0.0
    %5002 = vmatpush.msra.mxu0 0.0
    %5003 = vmatpush.msra.mxu0 0.0
    %5004 = vmatpush.msra.mxu0 0.0
    %5005 = vmatpush.msra.mxu0 0.0
    %5006 = vmatpush.msra.mxu0 0.0
    %5007 = vmatpush.msra.mxu0 0.0
    %5008 = vmatpush.msra.mxu0 %v4992
    %5009 = vmatpush.msra.mxu0 %v4935
    %5010 = vmatmul.f32.gmra.mxu0 %v4986
    %v5011 = vpop.f32.mrf.mxu0
    %v5012 = vadd.f32 %v4974, %v5011
    %5013 = vmatmul.f32.gmra.mxu0 %v4989
    %v5014 = vpop.f32.mrf.mxu0
    %v5015 = vadd.f32 %v4977, %v5014
    %5016 = vmatmul.f32.gmra.mxu0 %v4942
    %v5017 = vpop.f32.mrf.mxu0
    %v5018 = vadd.f32 %v4980, %v5017
    %5019 = vmatmul.f32.gmra.mxu0 %v4945
    %v5020 = vpop.f32.mrf.mxu0
    %v5021 = vadd.f32 %v4983, %v5020
    %5022 = vdwg.mxu0
    %v5023 = vld [vmem:[%s3 + $0x1d8] sm:$0x1]
    %v5024 = vperm.slane %v5023, 0
    %v5025 = vadd.f32 %v5012, %v5024
    %v5026 = vadd.f32 %v5015, %v5024
    %v5027 = vadd.f32 %v5018, %v5024
    %v5028 = vadd.f32 %v5021, %v5024
    %v5029 = vmax.f32 %v5025, 0.0
    %v5030 = vmax.f32 %v5026, 0.0
    %v5031 = vmax.f32 %v5027, 0.0
    %v5032 = vmax.f32 %v5028, 0.0
    %5033 = vst.msk [vmem:[#allocation2 + $0x20] sm:$0xff] %vm29, %v5029
    %5034 = vst.msk [vmem:[#allocation2 + $0x28] sm:$0xff] %vm29, %v5030
    %5035 = vst.msk [vmem:[#allocation2 + $0x30] sm:$0xff] %vm29, %v5031
    %5036 = vst.msk [vmem:[#allocation2 + $0x38] sm:$0xff] %vm29, %v5032
    %v5037 = vld [vmem:[#allocation2 + $0x10] sm:$0xff]
    %v5038 = vld [vmem:[#allocation2 + $0x18] sm:$0xff]
    %v5039 = vld [vmem:[#allocation2 + $0x20] sm:$0xff]
    %v5040 = vld [vmem:[#allocation2 + $0x28] sm:$0xff]
    %v5041 = vld [vmem:[%s3 + $0x1f0] sm:$0xff]
    %v5042 = vld [vmem:[%s3 + $0x1f8] sm:$0xf]
    %v5043 = vld [vmem:[#allocation2 + $0x30] sm:$0xff]
    %v5044 = vld [vmem:[#allocation2 + $0x38] sm:$0xff]
    %v5045 = vld [vmem:[%s3 + $0x200] sm:$0xff]
    %v5046 = vld [vmem:[%s3 + $0x208] sm:$0xf]
    %v5048 = vsel %vm29, %v5039, 0
    %v5051 = vsel %vm29, %v5040, 0
    %v5054 = vsel %vm29, %v5043, 0
    %v5057 = vsel %vm29, %v5044, 0
    %v5060 = vsel %vm79, %v5046, 0
    %5062 = vmatpush.msra.mxu0 0.0
    %5063 = vmatpush.msra.mxu0 0.0
    %5064 = vmatpush.msra.mxu0 0.0
    %5065 = vmatpush.msra.mxu0 0.0
    %5066 = vmatpush.msra.mxu0 0.0
    %5067 = vmatpush.msra.mxu0 0.0
    %5068 = vmatpush.msra.mxu0 0.0
    %5069 = vmatpush.msra.mxu0 0.0
    %5070 = vmatpush.msra.mxu0 0.0
    %5071 = vmatpush.msra.mxu0 0.0
    %5072 = vmatpush.msra.mxu0 0.0
    %5073 = vmatpush.msra.mxu0 0.0
    %5074 = vmatpush.msra.mxu0 0.0
    %5075 = vmatpush.msra.mxu0 0.0
    %5076 = vmatpush.msra.mxu0 %v5060
    %5077 = vmatpush.msra.mxu0 %v5045
    %5078 = vmatmul.f32.gmra.mxu0 %v5048
    %v5079 = vpop.f32.mrf.mxu0
    %v5080 = vadd.f32 0.0, %v5079
    %5081 = vmatmul.f32.gmra.mxu0 %v5051
    %v5082 = vpop.f32.mrf.mxu0
    %v5083 = vadd.f32 0.0, %v5082
    %5084 = vmatmul.f32.gmra.mxu0 %v5054
    %v5085 = vpop.f32.mrf.mxu0
    %v5086 = vadd.f32 0.0, %v5085
    %5087 = vmatmul.f32.gmra.mxu0 %v5057
    %v5088 = vpop.f32.mrf.mxu0
    %v5089 = vadd.f32 0.0, %v5088
    %5090 = vdwg.mxu0
    %v5092 = vsel %vm29, %v5037, 0
    %v5095 = vsel %vm29, %v5038, 0
    %v5098 = vsel %vm79, %v5042, 0
    %5100 = vmatpush.msra.mxu0 0.0
    %5101 = vmatpush.msra.mxu0 0.0
    %5102 = vmatpush.msra.mxu0 0.0
    %5103 = vmatpush.msra.mxu0 0.0
    %5104 = vmatpush.msra.mxu0 0.0
    %5105 = vmatpush.msra.mxu0 0.0
    %5106 = vmatpush.msra.mxu0 0.0
    %5107 = vmatpush.msra.mxu0 0.0
    %5108 = vmatpush.msra.mxu0 0.0
    %5109 = vmatpush.msra.mxu0 0.0
    %5110 = vmatpush.msra.mxu0 0.0
    %5111 = vmatpush.msra.mxu0 0.0
    %5112 = vmatpush.msra.mxu0 0.0
    %5113 = vmatpush.msra.mxu0 0.0
    %5114 = vmatpush.msra.mxu0 %v5098
    %5115 = vmatpush.msra.mxu0 %v5041
    %5116 = vmatmul.f32.gmra.mxu0 %v5092
    %v5117 = vpop.f32.mrf.mxu0
    %v5118 = vadd.f32 %v5080, %v5117
    %5119 = vmatmul.f32.gmra.mxu0 %v5095
    %v5120 = vpop.f32.mrf.mxu0
    %v5121 = vadd.f32 %v5083, %v5120
    %5122 = vmatmul.f32.gmra.mxu0 %v5048
    %v5123 = vpop.f32.mrf.mxu0
    %v5124 = vadd.f32 %v5086, %v5123
    %5125 = vmatmul.f32.gmra.mxu0 %v5051
    %v5126 = vpop.f32.mrf.mxu0
    %v5127 = vadd.f32 %v5089, %v5126
    %5128 = vdwg.mxu0
    %v5129 = vld [vmem:[%s3 + $0x210] sm:$0x1]
    %v5130 = vperm.slane %v5129, 0
    %v5131 = vadd.f32 %v5118, %v5130
    %v5132 = vadd.f32 %v5121, %v5130
    %v5133 = vadd.f32 %v5124, %v5130
    %v5134 = vadd.f32 %v5127, %v5130
    %v5135 = vmax.f32 %v5131, 0.0
    %v5136 = vmax.f32 %v5132, 0.0
    %v5137 = vmax.f32 %v5133, 0.0
    %v5138 = vmax.f32 %v5134, 0.0
    %v5139 = vadd.f32 %v5135, %v4923
    %v5140 = vadd.f32 %v5136, %v4924
    %v5141 = vadd.f32 %v5137, %v4925
    %v5142 = vadd.f32 %v5138, %v4926
    %v5143 = vmax.f32 %v5139, 0.0
    %v5144 = vmax.f32 %v5140, 0.0
    %v5145 = vmax.f32 %v5141, 0.0
    %v5146 = vmax.f32 %v5142, 0.0
    %5147 = vst.msk [vmem:[%s8] sm:$0xff] %vm29, %v5143
    %5148 = vst.msk [vmem:[%s8 + $0x8] sm:$0xff] %vm29, %v5144
    %5149 = vst.msk [vmem:[%s8 + $0x10] sm:$0xff] %vm29, %v5145
    %5150 = vst.msk [vmem:[%s8 + $0x18] sm:$0xff] %vm29, %v5146
    %5151 = vst.msk [vmem:[#allocation3 + $0x20] sm:$0xff] %vm38, %v2550
    %5152 = vst.msk [vmem:[#allocation3 + $0x28] sm:$0xff] %vm38, %v2551
    %5153 = vst.msk [vmem:[#allocation3 + $0x30] sm:$0xff] %vm38, %v2552
    %5154 = vst.msk [vmem:[#allocation3 + $0x38] sm:$0xff] %vm38, %v2553
    %v5155 = vld [vmem:[#allocation3 + $0x1c] sm:$0xff]
    %v5156 = vld [vmem:[#allocation3 + $0x24] sm:$0xff]
    %v5157 = vld [vmem:[#allocation3 + $0x2c] sm:$0xff]
    %v5158 = vld [vmem:[#allocation3 + $0x34] sm:$0xff]
    %v5159 = vld [vmem:[%s4] sm:$0xff]
    %v5160 = vld [vmem:[%s4 + $0x8] sm:$0xff]
    %v5161 = vld [vmem:[%s4 + $0x10] sm:$0xff]
    %v5162 = vld [vmem:[%s4 + $0x18] sm:$0xff]
    %v5163 = vld [vmem:[#allocation3 + $0x1e] sm:$0xff]
    %v5164 = vld [vmem:[#allocation3 + $0x26] sm:$0xff]
    %v5165 = vld [vmem:[#allocation3 + $0x2e] sm:$0xff]
    %v5166 = vld [vmem:[#allocation3 + $0x36] sm:$0xff]
    %v5167 = vld [vmem:[%s4 + $0x20] sm:$0xff]
    %v5168 = vld [vmem:[%s4 + $0x28] sm:$0xff]
    %v5169 = vld [vmem:[%s4 + $0x30] sm:$0xff]
    %v5170 = vld [vmem:[%s4 + $0x38] sm:$0xff]
    %v5172 = vsel %vm38, %v5163, 0
    %v5175 = vsel %vm38, %v5164, 0
    %v5178 = vsel %vm38, %v5165, 0
    %v5181 = vsel %vm38, %v5166, 0
    %5183 = vmatpush.msra.mxu0 0.0
    %5184 = vmatpush.msra.mxu0 0.0
    %5185 = vmatpush.msra.mxu0 0.0
    %5186 = vmatpush.msra.mxu0 0.0
    %5187 = vmatpush.msra.mxu0 0.0
    %5188 = vmatpush.msra.mxu0 0.0
    %5189 = vmatpush.msra.mxu0 0.0
    %5190 = vmatpush.msra.mxu0 0.0
    %5191 = vmatpush.msra.mxu0 0.0
    %5192 = vmatpush.msra.mxu0 0.0
    %5193 = vmatpush.msra.mxu0 0.0
    %5194 = vmatpush.msra.mxu0 0.0
    %5195 = vmatpush.msra.mxu0 %v5170
    %5196 = vmatpush.msra.mxu0 %v5169
    %5197 = vmatpush.msra.mxu0 %v5168
    %5198 = vmatpush.msra.mxu0 %v5167
    %5199 = vmatmul.f32.gmra.mxu0 %v5172
    %v5200 = vpop.f32.mrf.mxu0
    %v5201 = vadd.f32 0.0, %v5200
    %5202 = vmatmul.f32.gmra.mxu0 %v5175
    %v5203 = vpop.f32.mrf.mxu0
    %v5204 = vadd.f32 0.0, %v5203
    %5205 = vmatmul.f32.gmra.mxu0 %v5178
    %v5206 = vpop.f32.mrf.mxu0
    %v5207 = vadd.f32 0.0, %v5206
    %5208 = vmatmul.f32.gmra.mxu0 %v5181
    %v5209 = vpop.f32.mrf.mxu0
    %v5210 = vadd.f32 0.0, %v5209
    %5211 = vdwg.mxu0
    %v5213 = vsel %vm38, %v5155, 0
    %v5216 = vsel %vm38, %v5156, 0
    %v5219 = vsel %vm38, %v5157, 0
    %v5222 = vsel %vm38, %v5158, 0
    %5224 = vmatpush.msra.mxu0 0.0
    %5225 = vmatpush.msra.mxu0 0.0
    %5226 = vmatpush.msra.mxu0 0.0
    %5227 = vmatpush.msra.mxu0 0.0
    %5228 = vmatpush.msra.mxu0 0.0
    %5229 = vmatpush.msra.mxu0 0.0
    %5230 = vmatpush.msra.mxu0 0.0
    %5231 = vmatpush.msra.mxu0 0.0
    %5232 = vmatpush.msra.mxu0 0.0
    %5233 = vmatpush.msra.mxu0 0.0
    %5234 = vmatpush.msra.mxu0 0.0
    %5235 = vmatpush.msra.mxu0 0.0
    %5236 = vmatpush.msra.mxu0 %v5162
    %5237 = vmatpush.msra.mxu0 %v5161
    %5238 = vmatpush.msra.mxu0 %v5160
    %5239 = vmatpush.msra.mxu0 %v5159
    %5240 = vmatmul.f32.gmra.mxu0 %v5213
    %v5241 = vpop.f32.mrf.mxu0
    %v5242 = vadd.f32 %v5201, %v5241
    %5243 = vmatmul.f32.gmra.mxu0 %v5216
    %v5244 = vpop.f32.mrf.mxu0
    %v5245 = vadd.f32 %v5204, %v5244
    %5246 = vmatmul.f32.gmra.mxu0 %v5219
    %v5247 = vpop.f32.mrf.mxu0
    %v5248 = vadd.f32 %v5207, %v5247
    %5249 = vmatmul.f32.gmra.mxu0 %v5222
    %v5250 = vpop.f32.mrf.mxu0
    %v5251 = vadd.f32 %v5210, %v5250
    %5252 = vdwg.mxu0
    %v5253 = vld [vmem:[#allocation3 + $0x20] sm:$0xff]
    %v5254 = vld [vmem:[#allocation3 + $0x28] sm:$0xff]
    %v5255 = vld [vmem:[#allocation3 + $0x30] sm:$0xff]
    %v5256 = vld [vmem:[#allocation3 + $0x38] sm:$0xff]
    %v5257 = vld [vmem:[%s4 + $0x40] sm:$0xff]
    %v5258 = vld [vmem:[%s4 + $0x48] sm:$0xff]
    %v5259 = vld [vmem:[%s4 + $0x50] sm:$0xff]
    %v5260 = vld [vmem:[%s4 + $0x58] sm:$0xff]
    %v5262 = vsel %vm38, %v5253, 0
    %v5265 = vsel %vm38, %v5254, 0
    %v5268 = vsel %vm38, %v5255, 0
    %v5271 = vsel %vm38, %v5256, 0
    %5273 = vmatpush.msra.mxu0 0.0
    %5274 = vmatpush.msra.mxu0 0.0
    %5275 = vmatpush.msra.mxu0 0.0
    %5276 = vmatpush.msra.mxu0 0.0
    %5277 = vmatpush.msra.mxu0 0.0
    %5278 = vmatpush.msra.mxu0 0.0
    %5279 = vmatpush.msra.mxu0 0.0
    %5280 = vmatpush.msra.mxu0 0.0
    %5281 = vmatpush.msra.mxu0 0.0
    %5282 = vmatpush.msra.mxu0 0.0
    %5283 = vmatpush.msra.mxu0 0.0
    %5284 = vmatpush.msra.mxu0 0.0
    %5285 = vmatpush.msra.mxu0 %v5260
    %5286 = vmatpush.msra.mxu0 %v5259
    %5287 = vmatpush.msra.mxu0 %v5258
    %5288 = vmatpush.msra.mxu0 %v5257
    %5289 = vmatmul.f32.gmra.mxu0 %v5262
    %v5290 = vpop.f32.mrf.mxu0
    %v5291 = vadd.f32 0.0, %v5290
    %5292 = vmatmul.f32.gmra.mxu0 %v5265
    %v5293 = vpop.f32.mrf.mxu0
    %v5294 = vadd.f32 0.0, %v5293
    %5295 = vmatmul.f32.gmra.mxu0 %v5268
    %v5296 = vpop.f32.mrf.mxu0
    %v5297 = vadd.f32 0.0, %v5296
    %5298 = vmatmul.f32.gmra.mxu0 %v5271
    %v5299 = vpop.f32.mrf.mxu0
    %v5300 = vadd.f32 0.0, %v5299
    %5301 = vdwg.mxu0
    %v5302 = vadd.f32 %v5242, %v5291
    %v5303 = vadd.f32 %v5245, %v5294
    %v5304 = vadd.f32 %v5248, %v5297
    %v5305 = vadd.f32 %v5251, %v5300
    %v5306 = vld [vmem:[%s4 + $0x60] sm:$0x1]
    %v5307 = vperm.slane %v5306, 0
    %v5308 = vadd.f32 %v5302, %v5307
    %v5309 = vadd.f32 %v5303, %v5307
    %v5310 = vadd.f32 %v5304, %v5307
    %v5311 = vadd.f32 %v5305, %v5307
    %v5312 = vmax.f32 %v5308, 0.0
    %v5313 = vmax.f32 %v5309, 0.0
    %v5314 = vmax.f32 %v5310, 0.0
    %v5315 = vmax.f32 %v5311, 0.0
    %5316 = vst.msk [vmem:[#allocation2 + $0x20] sm:$0xff] %vm29, %v5312
    %5317 = vst.msk [vmem:[#allocation2 + $0x28] sm:$0xff] %vm29, %v5313
    %5318 = vst.msk [vmem:[#allocation2 + $0x30] sm:$0xff] %vm29, %v5314
    %5319 = vst.msk [vmem:[#allocation2 + $0x38] sm:$0xff] %vm29, %v5315
    %v5320 = vld [vmem:[#allocation2 + $0x1c] sm:$0xff]
    %v5321 = vld [vmem:[#allocation2 + $0x24] sm:$0xff]
    %v5322 = vld [vmem:[#allocation2 + $0x2c] sm:$0xff]
    %v5323 = vld [vmem:[#allocation2 + $0x34] sm:$0xff]
    %v5324 = vld [vmem:[%s4 + $0x68] sm:$0xff]
    %v5325 = vld [vmem:[%s4 + $0x70] sm:$0xf]
    %v5326 = vld [vmem:[#allocation2 + $0x1e] sm:$0xff]
    %v5327 = vld [vmem:[#allocation2 + $0x26] sm:$0xff]
    %v5328 = vld [vmem:[#allocation2 + $0x2e] sm:$0xff]
    %v5329 = vld [vmem:[#allocation2 + $0x36] sm:$0xff]
    %v5330 = vld [vmem:[%s4 + $0x78] sm:$0xff]
    %v5331 = vld [vmem:[%s4 + $0x80] sm:$0xf]
    %v5333 = vsel %vm29, %v5326, 0
    %v5336 = vsel %vm29, %v5327, 0
    %v5339 = vsel %vm29, %v5328, 0
    %v5342 = vsel %vm29, %v5329, 0
    %v5345 = vsel %vm79, %v5331, 0
    %5347 = vmatpush.msra.mxu0 0.0
    %5348 = vmatpush.msra.mxu0 0.0
    %5349 = vmatpush.msra.mxu0 0.0
    %5350 = vmatpush.msra.mxu0 0.0
    %5351 = vmatpush.msra.mxu0 0.0
    %5352 = vmatpush.msra.mxu0 0.0
    %5353 = vmatpush.msra.mxu0 0.0
    %5354 = vmatpush.msra.mxu0 0.0
    %5355 = vmatpush.msra.mxu0 0.0
    %5356 = vmatpush.msra.mxu0 0.0
    %5357 = vmatpush.msra.mxu0 0.0
    %5358 = vmatpush.msra.mxu0 0.0
    %5359 = vmatpush.msra.mxu0 0.0
    %5360 = vmatpush.msra.mxu0 0.0
    %5361 = vmatpush.msra.mxu0 %v5345
    %5362 = vmatpush.msra.mxu0 %v5330
    %5363 = vmatmul.f32.gmra.mxu0 %v5333
    %v5364 = vpop.f32.mrf.mxu0
    %v5365 = vadd.f32 0.0, %v5364
    %5366 = vmatmul.f32.gmra.mxu0 %v5336
    %v5367 = vpop.f32.mrf.mxu0
    %v5368 = vadd.f32 0.0, %v5367
    %5369 = vmatmul.f32.gmra.mxu0 %v5339
    %v5370 = vpop.f32.mrf.mxu0
    %v5371 = vadd.f32 0.0, %v5370
    %5372 = vmatmul.f32.gmra.mxu0 %v5342
    %v5373 = vpop.f32.mrf.mxu0
    %v5374 = vadd.f32 0.0, %v5373
    %5375 = vdwg.mxu0
    %v5377 = vsel %vm29, %v5320, 0
    %v5380 = vsel %vm29, %v5321, 0
    %v5383 = vsel %vm29, %v5322, 0
    %v5386 = vsel %vm29, %v5323, 0
    %v5389 = vsel %vm79, %v5325, 0
    %5391 = vmatpush.msra.mxu0 0.0
    %5392 = vmatpush.msra.mxu0 0.0
    %5393 = vmatpush.msra.mxu0 0.0
    %5394 = vmatpush.msra.mxu0 0.0
    %5395 = vmatpush.msra.mxu0 0.0
    %5396 = vmatpush.msra.mxu0 0.0
    %5397 = vmatpush.msra.mxu0 0.0
    %5398 = vmatpush.msra.mxu0 0.0
    %5399 = vmatpush.msra.mxu0 0.0
    %5400 = vmatpush.msra.mxu0 0.0
    %5401 = vmatpush.msra.mxu0 0.0
    %5402 = vmatpush.msra.mxu0 0.0
    %5403 = vmatpush.msra.mxu0 0.0
    %5404 = vmatpush.msra.mxu0 0.0
    %5405 = vmatpush.msra.mxu0 %v5389
    %5406 = vmatpush.msra.mxu0 %v5324
    %5407 = vmatmul.f32.gmra.mxu0 %v5377
    %v5408 = vpop.f32.mrf.mxu0
    %v5409 = vadd.f32 %v5365, %v5408
    %5410 = vmatmul.f32.gmra.mxu0 %v5380
    %v5411 = vpop.f32.mrf.mxu0
    %v5412 = vadd.f32 %v5368, %v5411
    %5413 = vmatmul.f32.gmra.mxu0 %v5383
    %v5414 = vpop.f32.mrf.mxu0
    %v5415 = vadd.f32 %v5371, %v5414
    %5416 = vmatmul.f32.gmra.mxu0 %v5386
    %v5417 = vpop.f32.mrf.mxu0
    %v5418 = vadd.f32 %v5374, %v5417
    %5419 = vdwg.mxu0
    %v5420 = vld [vmem:[#allocation2 + $0x20] sm:$0xff]
    %v5421 = vld [vmem:[#allocation2 + $0x28] sm:$0xff]
    %v5422 = vld [vmem:[#allocation2 + $0x30] sm:$0xff]
    %v5423 = vld [vmem:[#allocation2 + $0x38] sm:$0xff]
    %v5424 = vld [vmem:[%s4 + $0x88] sm:$0xff]
    %v5425 = vld [vmem:[%s4 + $0x90] sm:$0xf]
    %v5427 = vsel %vm29, %v5420, 0
    %v5430 = vsel %vm29, %v5421, 0
    %v5433 = vsel %vm29, %v5422, 0
    %v5436 = vsel %vm29, %v5423, 0
    %v5439 = vsel %vm79, %v5425, 0
    %5441 = vmatpush.msra.mxu0 0.0
    %5442 = vmatpush.msra.mxu0 0.0
    %5443 = vmatpush.msra.mxu0 0.0
    %5444 = vmatpush.msra.mxu0 0.0
    %5445 = vmatpush.msra.mxu0 0.0
    %5446 = vmatpush.msra.mxu0 0.0
    %5447 = vmatpush.msra.mxu0 0.0
    %5448 = vmatpush.msra.mxu0 0.0
    %5449 = vmatpush.msra.mxu0 0.0
    %5450 = vmatpush.msra.mxu0 0.0
    %5451 = vmatpush.msra.mxu0 0.0
    %5452 = vmatpush.msra.mxu0 0.0
    %5453 = vmatpush.msra.mxu0 0.0
    %5454 = vmatpush.msra.mxu0 0.0
    %5455 = vmatpush.msra.mxu0 %v5439
    %5456 = vmatpush.msra.mxu0 %v5424
    %5457 = vmatmul.f32.gmra.mxu0 %v5427
    %v5458 = vpop.f32.mrf.mxu0
    %v5459 = vadd.f32 0.0, %v5458
    %5460 = vmatmul.f32.gmra.mxu0 %v5430
    %v5461 = vpop.f32.mrf.mxu0
    %v5462 = vadd.f32 0.0, %v5461
    %5463 = vmatmul.f32.gmra.mxu0 %v5433
    %v5464 = vpop.f32.mrf.mxu0
    %v5465 = vadd.f32 0.0, %v5464
    %5466 = vmatmul.f32.gmra.mxu0 %v5436
    %v5467 = vpop.f32.mrf.mxu0
    %v5468 = vadd.f32 0.0, %v5467
    %5469 = vdwg.mxu0
    %v5470 = vadd.f32 %v5409, %v5459
    %v5471 = vadd.f32 %v5412, %v5462
    %v5472 = vadd.f32 %v5415, %v5465
    %v5473 = vadd.f32 %v5418, %v5468
    %v5474 = vld [vmem:[%s4 + $0x98] sm:$0x1]
    %v5475 = vperm.slane %v5474, 0
    %v5476 = vadd.f32 %v5470, %v5475
    %v5477 = vadd.f32 %v5471, %v5475
    %v5478 = vadd.f32 %v5472, %v5475
    %v5479 = vadd.f32 %v5473, %v5475
    %v5480 = vmax.f32 %v5476, 0.0
    %v5481 = vmax.f32 %v5477, 0.0
    %v5482 = vmax.f32 %v5478, 0.0
    %v5483 = vmax.f32 %v5479, 0.0
    %v5484 = vld [vmem:[%s4 + $0xa0] sm:$0xff]
    %v5485 = vld [vmem:[%s4 + $0xa8] sm:$0xff]
    %v5486 = vld [vmem:[%s4 + $0xb0] sm:$0xff]
    %v5487 = vld [vmem:[%s4 + $0xb8] sm:$0xff]
    %v5488 = vld [vmem:[%s4 + $0xc0] sm:$0x1]
    %v5489 = vperm.slane %v5488, 0
    %5490 = vmatpush.msra.mxu0 0.0
    %5491 = vmatpush.msra.mxu0 0.0
    %5492 = vmatpush.msra.mxu0 0.0
    %5493 = vmatpush.msra.mxu0 0.0
    %5494 = vmatpush.msra.mxu0 0.0
    %5495 = vmatpush.msra.mxu0 0.0
    %5496 = vmatpush.msra.mxu0 0.0
    %5497 = vmatpush.msra.mxu0 0.0
    %5498 = vmatpush.msra.mxu0 0.0
    %5499 = vmatpush.msra.mxu0 0.0
    %5500 = vmatpush.msra.mxu0 0.0
    %5501 = vmatpush.msra.mxu0 0.0
    %5502 = vmatpush.msra.mxu0 %v5487
    %5503 = vmatpush.msra.mxu0 %v5486
    %5504 = vmatpush.msra.mxu0 %v5485
    %5505 = vmatpush.msra.mxu0 %v5484
    %5506 = vmatmul.f32.gmra.mxu0 %v2813
    %v5507 = vpop.f32.mrf.mxu0
    %v5508 = vadd.f32 %v5489, %v5507
    %5509 = vmatmul.f32.gmra.mxu0 %v2816
    %v5510 = vpop.f32.mrf.mxu0
    %v5511 = vadd.f32 %v5489, %v5510
    %5512 = vmatmul.f32.gmra.mxu0 %v2819
    %v5513 = vpop.f32.mrf.mxu0
    %v5514 = vadd.f32 %v5489, %v5513
    %5515 = vmatmul.f32.gmra.mxu0 %v2822
    %v5516 = vpop.f32.mrf.mxu0
    %v5517 = vadd.f32 %v5489, %v5516
    %5518 = vdwg.mxu0
    %v5519 = vadd.f32 %v5480, %v5508
    %v5520 = vadd.f32 %v5481, %v5511
    %v5521 = vadd.f32 %v5482, %v5514
    %v5522 = vadd.f32 %v5483, %v5517
    %v5523 = vmax.f32 %v5519, 0.0
    %v5524 = vmax.f32 %v5520, 0.0
    %v5525 = vmax.f32 %v5521, 0.0
    %v5526 = vmax.f32 %v5522, 0.0
    %5527 = vst.msk [vmem:[#allocation2 + $0x20] sm:$0xff] %vm29, %v5523
    %5528 = vst.msk [vmem:[#allocation2 + $0x28] sm:$0xff] %vm29, %v5524
    %5529 = vst.msk [vmem:[#allocation2 + $0x30] sm:$0xff] %vm29, %v5525
    %5530 = vst.msk [vmem:[#allocation2 + $0x38] sm:$0xff] %vm29, %v5526
    %v5531 = vld [vmem:[#allocation2 + $0x18] sm:$0xff]
    %v5532 = vld [vmem:[#allocation2 + $0x20] sm:$0xff]
    %v5533 = vld [vmem:[#allocation2 + $0x28] sm:$0xff]
    %v5534 = vld [vmem:[#allocation2 + $0x30] sm:$0xff]
    %v5535 = vld [vmem:[%s4 + $0xc8] sm:$0xff]
    %v5536 = vld [vmem:[%s4 + $0xd0] sm:$0xf]
    %v5537 = vld [vmem:[#allocation2 + $0x1c] sm:$0xff]
    %v5538 = vld [vmem:[#allocation2 + $0x24] sm:$0xff]
    %v5539 = vld [vmem:[#allocation2 + $0x2c] sm:$0xff]
    %v5540 = vld [vmem:[#allocation2 + $0x34] sm:$0xff]
    %v5541 = vld [vmem:[%s4 + $0xd8] sm:$0xff]
    %v5542 = vld [vmem:[%s4 + $0xe0] sm:$0xf]
    %v5544 = vsel %vm29, %v5537, 0
    %v5547 = vsel %vm29, %v5538, 0
    %v5550 = vsel %vm29, %v5539, 0
    %v5553 = vsel %vm29, %v5540, 0
    %v5556 = vsel %vm79, %v5542, 0
    %5558 = vmatpush.msra.mxu0 0.0
    %5559 = vmatpush.msra.mxu0 0.0
    %5560 = vmatpush.msra.mxu0 0.0
    %5561 = vmatpush.msra.mxu0 0.0
    %5562 = vmatpush.msra.mxu0 0.0
    %5563 = vmatpush.msra.mxu0 0.0
    %5564 = vmatpush.msra.mxu0 0.0
    %5565 = vmatpush.msra.mxu0 0.0
    %5566 = vmatpush.msra.mxu0 0.0
    %5567 = vmatpush.msra.mxu0 0.0
    %5568 = vmatpush.msra.mxu0 0.0
    %5569 = vmatpush.msra.mxu0 0.0
    %5570 = vmatpush.msra.mxu0 0.0
    %5571 = vmatpush.msra.mxu0 0.0
    %5572 = vmatpush.msra.mxu0 %v5556
    %5573 = vmatpush.msra.mxu0 %v5541
    %5574 = vmatmul.f32.gmra.mxu0 %v5544
    %v5575 = vpop.f32.mrf.mxu0
    %v5576 = vadd.f32 0.0, %v5575
    %5577 = vmatmul.f32.gmra.mxu0 %v5547
    %v5578 = vpop.f32.mrf.mxu0
    %v5579 = vadd.f32 0.0, %v5578
    %5580 = vmatmul.f32.gmra.mxu0 %v5550
    %v5581 = vpop.f32.mrf.mxu0
    %v5582 = vadd.f32 0.0, %v5581
    %5583 = vmatmul.f32.gmra.mxu0 %v5553
    %v5584 = vpop.f32.mrf.mxu0
    %v5585 = vadd.f32 0.0, %v5584
    %5586 = vdwg.mxu0
    %v5588 = vsel %vm29, %v5531, 0
    %v5591 = vsel %vm29, %v5532, 0
    %v5594 = vsel %vm29, %v5533, 0
    %v5597 = vsel %vm29, %v5534, 0
    %v5600 = vsel %vm79, %v5536, 0
    %5602 = vmatpush.msra.mxu0 0.0
    %5603 = vmatpush.msra.mxu0 0.0
    %5604 = vmatpush.msra.mxu0 0.0
    %5605 = vmatpush.msra.mxu0 0.0
    %5606 = vmatpush.msra.mxu0 0.0
    %5607 = vmatpush.msra.mxu0 0.0
    %5608 = vmatpush.msra.mxu0 0.0
    %5609 = vmatpush.msra.mxu0 0.0
    %5610 = vmatpush.msra.mxu0 0.0
    %5611 = vmatpush.msra.mxu0 0.0
    %5612 = vmatpush.msra.mxu0 0.0
    %5613 = vmatpush.msra.mxu0 0.0
    %5614 = vmatpush.msra.mxu0 0.0
    %5615 = vmatpush.msra.mxu0 0.0
    %5616 = vmatpush.msra.mxu0 %v5600
    %5617 = vmatpush.msra.mxu0 %v5535
    %5618 = vmatmul.f32.gmra.mxu0 %v5588
    %v5619 = vpop.f32.mrf.mxu0
    %v5620 = vadd.f32 %v5576, %v5619
    %5621 = vmatmul.f32.gmra.mxu0 %v5591
    %v5622 = vpop.f32.mrf.mxu0
    %v5623 = vadd.f32 %v5579, %v5622
    %5624 = vmatmul.f32.gmra.mxu0 %v5594
    %v5625 = vpop.f32.mrf.mxu0
    %v5626 = vadd.f32 %v5582, %v5625
    %5627 = vmatmul.f32.gmra.mxu0 %v5597
    %v5628 = vpop.f32.mrf.mxu0
    %v5629 = vadd.f32 %v5585, %v5628
    %5630 = vdwg.mxu0
    %v5631 = vld [vmem:[#allocation2 + $0x20] sm:$0xff]
    %v5632 = vld [vmem:[#allocation2 + $0x28] sm:$0xff]
    %v5633 = vld [vmem:[#allocation2 + $0x30] sm:$0xff]
    %v5634 = vld [vmem:[#allocation2 + $0x38] sm:$0xff]
    %v5635 = vld [vmem:[%s4 + $0xe8] sm:$0xff]
    %v5636 = vld [vmem:[%s4 + $0xf0] sm:$0xf]
    %v5638 = vsel %vm29, %v5631, 0
    %v5641 = vsel %vm29, %v5632, 0
    %v5644 = vsel %vm29, %v5633, 0
    %v5647 = vsel %vm29, %v5634, 0
    %v5650 = vsel %vm79, %v5636, 0
    %5652 = vmatpush.msra.mxu0 0.0
    %5653 = vmatpush.msra.mxu0 0.0
    %5654 = vmatpush.msra.mxu0 0.0
    %5655 = vmatpush.msra.mxu0 0.0
    %5656 = vmatpush.msra.mxu0 0.0
    %5657 = vmatpush.msra.mxu0 0.0
    %5658 = vmatpush.msra.mxu0 0.0
    %5659 = vmatpush.msra.mxu0 0.0
    %5660 = vmatpush.msra.mxu0 0.0
    %5661 = vmatpush.msra.mxu0 0.0
    %5662 = vmatpush.msra.mxu0 0.0
    %5663 = vmatpush.msra.mxu0 0.0
    %5664 = vmatpush.msra.mxu0 0.0
    %5665 = vmatpush.msra.mxu0 0.0
    %5666 = vmatpush.msra.mxu0 %v5650
    %5667 = vmatpush.msra.mxu0 %v5635
    %5668 = vmatmul.f32.gmra.mxu0 %v5638
    %v5669 = vpop.f32.mrf.mxu0
    %v5670 = vadd.f32 0.0, %v5669
    %5671 = vmatmul.f32.gmra.mxu0 %v5641
    %v5672 = vpop.f32.mrf.mxu0
    %v5673 = vadd.f32 0.0, %v5672
    %5674 = vmatmul.f32.gmra.mxu0 %v5644
    %v5675 = vpop.f32.mrf.mxu0
    %v5676 = vadd.f32 0.0, %v5675
    %5677 = vmatmul.f32.gmra.mxu0 %v5647
    %v5678 = vpop.f32.mrf.mxu0
    %v5679 = vadd.f32 0.0, %v5678
    %5680 = vdwg.mxu0
    %v5681 = vadd.f32 %v5620, %v5670
    %v5682 = vadd.f32 %v5623, %v5673
    %v5683 = vadd.f32 %v5626, %v5676
    %v5684 = vadd.f32 %v5629, %v5679
    %v5685 = vld [vmem:[%s4 + $0xf8] sm:$0x1]
    %v5686 = vperm.slane %v5685, 0
    %v5687 = vadd.f32 %v5681, %v5686
    %v5688 = vadd.f32 %v5682, %v5686
    %v5689 = vadd.f32 %v5683, %v5686
    %v5690 = vadd.f32 %v5684, %v5686
    %v5691 = vmax.f32 %v5687, 0.0
    %v5692 = vmax.f32 %v5688, 0.0
    %v5693 = vmax.f32 %v5689, 0.0
    %v5694 = vmax.f32 %v5690, 0.0
    %5695 = vst.msk [vmem:[#allocation2 + $0x20] sm:$0xff] %vm29, %v5691
    %5696 = vst.msk [vmem:[#allocation2 + $0x28] sm:$0xff] %vm29, %v5692
    %5697 = vst.msk [vmem:[#allocation2 + $0x30] sm:$0xff] %vm29, %v5693
    %5698 = vst.msk [vmem:[#allocation2 + $0x38] sm:$0xff] %vm29, %v5694
    %v5699 = vld [vmem:[#allocation2 + $0x18] sm:$0xff]
    %v5700 = vld [vmem:[#allocation2 + $0x20] sm:$0xff]
    %v5701 = vld [vmem:[#allocation2 + $0x28] sm:$0xff]
    %v5702 = vld [vmem:[#allocation2 + $0x30] sm:$0xff]
    %v5703 = vld [vmem:[%s4 + $0x100] sm:$0xff]
    %v5704 = vld [vmem:[%s4 + $0x108] sm:$0xf]
    %v5705 = vld [vmem:[#allocation2 + $0x1c] sm:$0xff]
    %v5706 = vld [vmem:[#allocation2 + $0x24] sm:$0xff]
    %v5707 = vld [vmem:[#allocation2 + $0x2c] sm:$0xff]
    %v5708 = vld [vmem:[#allocation2 + $0x34] sm:$0xff]
    %v5709 = vld [vmem:[%s4 + $0x110] sm:$0xff]
    %v5710 = vld [vmem:[%s4 + $0x118] sm:$0xf]
    %v5712 = vsel %vm29, %v5705, 0
    %v5715 = vsel %vm29, %v5706, 0
    %v5718 = vsel %vm29, %v5707, 0
    %v5721 = vsel %vm29, %v5708, 0
    %v5724 = vsel %vm79, %v5710, 0
    %5726 = vmatpush.msra.mxu0 0.0
    %5727 = vmatpush.msra.mxu0 0.0
    %5728 = vmatpush.msra.mxu0 0.0
    %5729 = vmatpush.msra.mxu0 0.0
    %5730 = vmatpush.msra.mxu0 0.0
    %5731 = vmatpush.msra.mxu0 0.0
    %5732 = vmatpush.msra.mxu0 0.0
    %5733 = vmatpush.msra.mxu0 0.0
    %5734 = vmatpush.msra.mxu0 0.0
    %5735 = vmatpush.msra.mxu0 0.0
    %5736 = vmatpush.msra.mxu0 0.0
    %5737 = vmatpush.msra.mxu0 0.0
    %5738 = vmatpush.msra.mxu0 0.0
    %5739 = vmatpush.msra.mxu0 0.0
    %5740 = vmatpush.msra.mxu0 %v5724
    %5741 = vmatpush.msra.mxu0 %v5709
    %5742 = vmatmul.f32.gmra.mxu0 %v5712
    %v5743 = vpop.f32.mrf.mxu0
    %v5744 = vadd.f32 0.0, %v5743
    %5745 = vmatmul.f32.gmra.mxu0 %v5715
    %v5746 = vpop.f32.mrf.mxu0
    %v5747 = vadd.f32 0.0, %v5746
    %5748 = vmatmul.f32.gmra.mxu0 %v5718
    %v5749 = vpop.f32.mrf.mxu0
    %v5750 = vadd.f32 0.0, %v5749
    %5751 = vmatmul.f32.gmra.mxu0 %v5721
    %v5752 = vpop.f32.mrf.mxu0
    %v5753 = vadd.f32 0.0, %v5752
    %5754 = vdwg.mxu0
    %v5756 = vsel %vm29, %v5699, 0
    %v5759 = vsel %vm29, %v5700, 0
    %v5762 = vsel %vm29, %v5701, 0
    %v5765 = vsel %vm29, %v5702, 0
    %v5768 = vsel %vm79, %v5704, 0
    %5770 = vmatpush.msra.mxu0 0.0
    %5771 = vmatpush.msra.mxu0 0.0
    %5772 = vmatpush.msra.mxu0 0.0
    %5773 = vmatpush.msra.mxu0 0.0
    %5774 = vmatpush.msra.mxu0 0.0
    %5775 = vmatpush.msra.mxu0 0.0
    %5776 = vmatpush.msra.mxu0 0.0
    %5777 = vmatpush.msra.mxu0 0.0
    %5778 = vmatpush.msra.mxu0 0.0
    %5779 = vmatpush.msra.mxu0 0.0
    %5780 = vmatpush.msra.mxu0 0.0
    %5781 = vmatpush.msra.mxu0 0.0
    %5782 = vmatpush.msra.mxu0 0.0
    %5783 = vmatpush.msra.mxu0 0.0
    %5784 = vmatpush.msra.mxu0 %v5768
    %5785 = vmatpush.msra.mxu0 %v5703
    %5786 = vmatmul.f32.gmra.mxu0 %v5756
    %v5787 = vpop.f32.mrf.mxu0
    %v5788 = vadd.f32 %v5744, %v5787
    %5789 = vmatmul.f32.gmra.mxu0 %v5759
    %v5790 = vpop.f32.mrf.mxu0
    %v5791 = vadd.f32 %v5747, %v5790
    %5792 = vmatmul.f32.gmra.mxu0 %v5762
    %v5793 = vpop.f32.mrf.mxu0
    %v5794 = vadd.f32 %v5750, %v5793
    %5795 = vmatmul.f32.gmra.mxu0 %v5765
    %v5796 = vpop.f32.mrf.mxu0
    %v5797 = vadd.f32 %v5753, %v5796
    %5798 = vdwg.mxu0
    %v5799 = vld [vmem:[#allocation2 + $0x20] sm:$0xff]
    %v5800 = vld [vmem:[#allocation2 + $0x28] sm:$0xff]
    %v5801 = vld [vmem:[#allocation2 + $0x30] sm:$0xff]
    %v5802 = vld [vmem:[#allocation2 + $0x38] sm:$0xff]
    %v5803 = vld [vmem:[%s4 + $0x120] sm:$0xff]
    %v5804 = vld [vmem:[%s4 + $0x128] sm:$0xf]
    %v5806 = vsel %vm29, %v5799, 0
    %v5809 = vsel %vm29, %v5800, 0
    %v5812 = vsel %vm29, %v5801, 0
    %v5815 = vsel %vm29, %v5802, 0
    %v5818 = vsel %vm79, %v5804, 0
    %5820 = vmatpush.msra.mxu0 0.0
    %5821 = vmatpush.msra.mxu0 0.0
    %5822 = vmatpush.msra.mxu0 0.0
    %5823 = vmatpush.msra.mxu0 0.0
    %5824 = vmatpush.msra.mxu0 0.0
    %5825 = vmatpush.msra.mxu0 0.0
    %5826 = vmatpush.msra.mxu0 0.0
    %5827 = vmatpush.msra.mxu0 0.0
    %5828 = vmatpush.msra.mxu0 0.0
    %5829 = vmatpush.msra.mxu0 0.0
    %5830 = vmatpush.msra.mxu0 0.0
    %5831 = vmatpush.msra.mxu0 0.0
    %5832 = vmatpush.msra.mxu0 0.0
    %5833 = vmatpush.msra.mxu0 0.0
    %5834 = vmatpush.msra.mxu0 %v5818
    %5835 = vmatpush.msra.mxu0 %v5803
    %5836 = vmatmul.f32.gmra.mxu0 %v5806
    %v5837 = vpop.f32.mrf.mxu0
    %v5838 = vadd.f32 0.0, %v5837
    %5839 = vmatmul.f32.gmra.mxu0 %v5809
    %v5840 = vpop.f32.mrf.mxu0
    %v5841 = vadd.f32 0.0, %v5840
    %5842 = vmatmul.f32.gmra.mxu0 %v5812
    %v5843 = vpop.f32.mrf.mxu0
    %v5844 = vadd.f32 0.0, %v5843
    %5845 = vmatmul.f32.gmra.mxu0 %v5815
    %v5846 = vpop.f32.mrf.mxu0
    %v5847 = vadd.f32 0.0, %v5846
    %5848 = vdwg.mxu0
    %v5849 = vadd.f32 %v5788, %v5838
    %v5850 = vadd.f32 %v5791, %v5841
    %v5851 = vadd.f32 %v5794, %v5844
    %v5852 = vadd.f32 %v5797, %v5847
    %v5853 = vld [vmem:[%s4 + $0x130] sm:$0x1]
    %v5854 = vperm.slane %v5853, 0
    %v5855 = vadd.f32 %v5849, %v5854
    %v5856 = vadd.f32 %v5850, %v5854
    %v5857 = vadd.f32 %v5851, %v5854
    %v5858 = vadd.f32 %v5852, %v5854
    %v5859 = vmax.f32 %v5855, 0.0
    %v5860 = vmax.f32 %v5856, 0.0
    %v5861 = vmax.f32 %v5857, 0.0
    %v5862 = vmax.f32 %v5858, 0.0
    %v5863 = vadd.f32 %v5859, %v5523
    %v5864 = vadd.f32 %v5860, %v5524
    %v5865 = vadd.f32 %v5861, %v5525
    %v5866 = vadd.f32 %v5862, %v5526
    %v5867 = vmax.f32 %v5863, 0.0
    %v5868 = vmax.f32 %v5864, 0.0
    %v5869 = vmax.f32 %v5865, 0.0
    %v5870 = vmax.f32 %v5866, 0.0
    %5871 = vst.msk [vmem:[#allocation2 + $0x20] sm:$0xff] %vm29, %v5867
    %5872 = vst.msk [vmem:[#allocation2 + $0x28] sm:$0xff] %vm29, %v5868
    %5873 = vst.msk [vmem:[#allocation2 + $0x30] sm:$0xff] %vm29, %v5869
    %5874 = vst.msk [vmem:[#allocation2 + $0x38] sm:$0xff] %vm29, %v5870
    %v5875 = vld [vmem:[#allocation2 + $0x10] sm:$0xff]
    %v5876 = vld [vmem:[#allocation2 + $0x18] sm:$0xff]
    %v5877 = vld [vmem:[#allocation2 + $0x20] sm:$0xff]
    %v5878 = vld [vmem:[#allocation2 + $0x28] sm:$0xff]
    %v5879 = vld [vmem:[%s4 + $0x138] sm:$0xff]
    %v5880 = vld [vmem:[%s4 + $0x140] sm:$0xf]
    %v5881 = vld [vmem:[#allocation2 + $0x30] sm:$0xff]
    %v5882 = vld [vmem:[%s4 + $0x148] sm:$0xff]
    %v5883 = vld [vmem:[%s4 + $0x150] sm:$0xf]
    %v5885 = vsel %vm29, %v5876, 0
    %v5888 = vsel %vm29, %v5877, 0
    %v5891 = vsel %vm29, %v5878, 0
    %v5894 = vsel %vm29, %v5881, 0
    %v5897 = vsel %vm79, %v5883, 0
    %5899 = vmatpush.msra.mxu0 0.0
    %5900 = vmatpush.msra.mxu0 0.0
    %5901 = vmatpush.msra.mxu0 0.0
    %5902 = vmatpush.msra.mxu0 0.0
    %5903 = vmatpush.msra.mxu0 0.0
    %5904 = vmatpush.msra.mxu0 0.0
    %5905 = vmatpush.msra.mxu0 0.0
    %5906 = vmatpush.msra.mxu0 0.0
    %5907 = vmatpush.msra.mxu0 0.0
    %5908 = vmatpush.msra.mxu0 0.0
    %5909 = vmatpush.msra.mxu0 0.0
    %5910 = vmatpush.msra.mxu0 0.0
    %5911 = vmatpush.msra.mxu0 0.0
    %5912 = vmatpush.msra.mxu0 0.0
    %5913 = vmatpush.msra.mxu0 %v5897
    %5914 = vmatpush.msra.mxu0 %v5882
    %5915 = vmatmul.f32.gmra.mxu0 %v5885
    %v5916 = vpop.f32.mrf.mxu0
    %v5917 = vadd.f32 0.0, %v5916
    %5918 = vmatmul.f32.gmra.mxu0 %v5888
    %v5919 = vpop.f32.mrf.mxu0
    %v5920 = vadd.f32 0.0, %v5919
    %5921 = vmatmul.f32.gmra.mxu0 %v5891
    %v5922 = vpop.f32.mrf.mxu0
    %v5923 = vadd.f32 0.0, %v5922
    %5924 = vmatmul.f32.gmra.mxu0 %v5894
    %v5925 = vpop.f32.mrf.mxu0
    %v5926 = vadd.f32 0.0, %v5925
    %5927 = vdwg.mxu0
    %v5929 = vsel %vm29, %v5875, 0
    %v5932 = vsel %vm79, %v5880, 0
    %5934 = vmatpush.msra.mxu0 0.0
    %5935 = vmatpush.msra.mxu0 0.0
    %5936 = vmatpush.msra.mxu0 0.0
    %5937 = vmatpush.msra.mxu0 0.0
    %5938 = vmatpush.msra.mxu0 0.0
    %5939 = vmatpush.msra.mxu0 0.0
    %5940 = vmatpush.msra.mxu0 0.0
    %5941 = vmatpush.msra.mxu0 0.0
    %5942 = vmatpush.msra.mxu0 0.0
    %5943 = vmatpush.msra.mxu0 0.0
    %5944 = vmatpush.msra.mxu0 0.0
    %5945 = vmatpush.msra.mxu0 0.0
    %5946 = vmatpush.msra.mxu0 0.0
    %5947 = vmatpush.msra.mxu0 0.0
    %5948 = vmatpush.msra.mxu0 %v5932
    %5949 = vmatpush.msra.mxu0 %v5879
    %5950 = vmatmul.f32.gmra.mxu0 %v5929
    %v5951 = vpop.f32.mrf.mxu0
    %v5952 = vadd.f32 %v5917, %v5951
    %5953 = vmatmul.f32.gmra.mxu0 %v5885
    %v5954 = vpop.f32.mrf.mxu0
    %v5955 = vadd.f32 %v5920, %v5954
    %5956 = vmatmul.f32.gmra.mxu0 %v5888
    %v5957 = vpop.f32.mrf.mxu0
    %v5958 = vadd.f32 %v5923, %v5957
    %5959 = vmatmul.f32.gmra.mxu0 %v5891
    %v5960 = vpop.f32.mrf.mxu0
    %v5961 = vadd.f32 %v5926, %v5960
    %5962 = vdwg.mxu0
    %v5963 = vld [vmem:[#allocation2 + $0x20] sm:$0xff]
    %v5964 = vld [vmem:[#allocation2 + $0x28] sm:$0xff]
    %v5965 = vld [vmem:[#allocation2 + $0x30] sm:$0xff]
    %v5966 = vld [vmem:[#allocation2 + $0x38] sm:$0xff]
    %v5967 = vld [vmem:[%s4 + $0x158] sm:$0xff]
    %v5968 = vld [vmem:[%s4 + $0x160] sm:$0xf]
    %v5970 = vsel %vm29, %v5963, 0
    %v5973 = vsel %vm29, %v5964, 0
    %v5976 = vsel %vm29, %v5965, 0
    %v5979 = vsel %vm29, %v5966, 0
    %v5982 = vsel %vm79, %v5968, 0
    %5984 = vmatpush.msra.mxu0 0.0
    %5985 = vmatpush.msra.mxu0 0.0
    %5986 = vmatpush.msra.mxu0 0.0
    %5987 = vmatpush.msra.mxu0 0.0
    %5988 = vmatpush.msra.mxu0 0.0
    %5989 = vmatpush.msra.mxu0 0.0
    %5990 = vmatpush.msra.mxu0 0.0
    %5991 = vmatpush.msra.mxu0 0.0
    %5992 = vmatpush.msra.mxu0 0.0
    %5993 = vmatpush.msra.mxu0 0.0
    %5994 = vmatpush.msra.mxu0 0.0
    %5995 = vmatpush.msra.mxu0 0.0
    %5996 = vmatpush.msra.mxu0 0.0
    %5997 = vmatpush.msra.mxu0 0.0
    %5998 = vmatpush.msra.mxu0 %v5982
    %5999 = vmatpush.msra.mxu0 %v5967
    %6000 = vmatmul.f32.gmra.mxu0 %v5970
    %v6001 = vpop.f32.mrf.mxu0
    %v6002 = vadd.f32 0.0, %v6001
    %6003 = vmatmul.f32.gmra.mxu0 %v5973
    %v6004 = vpop.f32.mrf.mxu0
    %v6005 = vadd.f32 0.0, %v6004
    %6006 = vmatmul.f32.gmra.mxu0 %v5976
    %v6007 = vpop.f32.mrf.mxu0
    %v6008 = vadd.f32 0.0, %v6007
    %6009 = vmatmul.f32.gmra.mxu0 %v5979
    %v6010 = vpop.f32.mrf.mxu0
    %v6011 = vadd.f32 0.0, %v6010
    %6012 = vdwg.mxu0
    %v6013 = vadd.f32 %v5952, %v6002
    %v6014 = vadd.f32 %v5955, %v6005
    %v6015 = vadd.f32 %v5958, %v6008
    %v6016 = vadd.f32 %v5961, %v6011
    %v6017 = vld [vmem:[%s4 + $0x168] sm:$0x1]
    %v6018 = vperm.slane %v6017, 0
    %v6019 = vadd.f32 %v6013, %v6018
    %v6020 = vadd.f32 %v6014, %v6018
    %v6021 = vadd.f32 %v6015, %v6018
    %v6022 = vadd.f32 %v6016, %v6018
    %v6023 = vmax.f32 %v6019, 0.0
    %v6024 = vmax.f32 %v6020, 0.0
    %v6025 = vmax.f32 %v6021, 0.0
    %v6026 = vmax.f32 %v6022, 0.0
    %6027 = vst.msk [vmem:[#allocation2 + $0x20] sm:$0xff] %vm29, %v6023
    %6028 = vst.msk [vmem:[#allocation2 + $0x28] sm:$0xff] %vm29, %v6024
    %6029 = vst.msk [vmem:[#allocation2 + $0x30] sm:$0xff] %vm29, %v6025
    %6030 = vst.msk [vmem:[#allocation2 + $0x38] sm:$0xff] %vm29, %v6026
    %v6031 = vld [vmem:[#allocation2 + $0x10] sm:$0xff]
    %v6032 = vld [vmem:[#allocation2 + $0x18] sm:$0xff]
    %v6033 = vld [vmem:[#allocation2 + $0x20] sm:$0xff]
    %v6034 = vld [vmem:[#allocation2 + $0x28] sm:$0xff]
    %v6035 = vld [vmem:[%s4 + $0x170] sm:$0xff]
    %v6036 = vld [vmem:[%s4 + $0x178] sm:$0xf]
    %v6037 = vld [vmem:[#allocation2 + $0x30] sm:$0xff]
    %v6038 = vld [vmem:[%s4 + $0x180] sm:$0xff]
    %v6039 = vld [vmem:[%s4 + $0x188] sm:$0xf]
    %v6041 = vsel %vm29, %v6032, 0
    %v6044 = vsel %vm29, %v6033, 0
    %v6047 = vsel %vm29, %v6034, 0
    %v6050 = vsel %vm29, %v6037, 0
    %v6053 = vsel %vm79, %v6039, 0
    %6055 = vmatpush.msra.mxu0 0.0
    %6056 = vmatpush.msra.mxu0 0.0
    %6057 = vmatpush.msra.mxu0 0.0
    %6058 = vmatpush.msra.mxu0 0.0
    %6059 = vmatpush.msra.mxu0 0.0
    %6060 = vmatpush.msra.mxu0 0.0
    %6061 = vmatpush.msra.mxu0 0.0
    %6062 = vmatpush.msra.mxu0 0.0
    %6063 = vmatpush.msra.mxu0 0.0
    %6064 = vmatpush.msra.mxu0 0.0
    %6065 = vmatpush.msra.mxu0 0.0
    %6066 = vmatpush.msra.mxu0 0.0
    %6067 = vmatpush.msra.mxu0 0.0
    %6068 = vmatpush.msra.mxu0 0.0
    %6069 = vmatpush.msra.mxu0 %v6053
    %6070 = vmatpush.msra.mxu0 %v6038
    %6071 = vmatmul.f32.gmra.mxu0 %v6041
    %v6072 = vpop.f32.mrf.mxu0
    %v6073 = vadd.f32 0.0, %v6072
    %6074 = vmatmul.f32.gmra.mxu0 %v6044
    %v6075 = vpop.f32.mrf.mxu0
    %v6076 = vadd.f32 0.0, %v6075
    %6077 = vmatmul.f32.gmra.mxu0 %v6047
    %v6078 = vpop.f32.mrf.mxu0
    %v6079 = vadd.f32 0.0, %v6078
    %6080 = vmatmul.f32.gmra.mxu0 %v6050
    %v6081 = vpop.f32.mrf.mxu0
    %v6082 = vadd.f32 0.0, %v6081
    %6083 = vdwg.mxu0
    %v6085 = vsel %vm29, %v6031, 0
    %v6088 = vsel %vm79, %v6036, 0
    %6090 = vmatpush.msra.mxu0 0.0
    %6091 = vmatpush.msra.mxu0 0.0
    %6092 = vmatpush.msra.mxu0 0.0
    %6093 = vmatpush.msra.mxu0 0.0
    %6094 = vmatpush.msra.mxu0 0.0
    %6095 = vmatpush.msra.mxu0 0.0
    %6096 = vmatpush.msra.mxu0 0.0
    %6097 = vmatpush.msra.mxu0 0.0
    %6098 = vmatpush.msra.mxu0 0.0
    %6099 = vmatpush.msra.mxu0 0.0
    %6100 = vmatpush.msra.mxu0 0.0
    %6101 = vmatpush.msra.mxu0 0.0
    %6102 = vmatpush.msra.mxu0 0.0
    %6103 = vmatpush.msra.mxu0 0.0
    %6104 = vmatpush.msra.mxu0 %v6088
    %6105 = vmatpush.msra.mxu0 %v6035
    %6106 = vmatmul.f32.gmra.mxu0 %v6085
    %v6107 = vpop.f32.mrf.mxu0
    %v6108 = vadd.f32 %v6073, %v6107
    %6109 = vmatmul.f32.gmra.mxu0 %v6041
    %v6110 = vpop.f32.mrf.mxu0
    %v6111 = vadd.f32 %v6076, %v6110
    %6112 = vmatmul.f32.gmra.mxu0 %v6044
    %v6113 = vpop.f32.mrf.mxu0
    %v6114 = vadd.f32 %v6079, %v6113
    %6115 = vmatmul.f32.gmra.mxu0 %v6047
    %v6116 = vpop.f32.mrf.mxu0
    %v6117 = vadd.f32 %v6082, %v6116
    %6118 = vdwg.mxu0
    %v6119 = vld [vmem:[#allocation2 + $0x20] sm:$0xff]
    %v6120 = vld [vmem:[#allocation2 + $0x28] sm:$0xff]
    %v6121 = vld [vmem:[#allocation2 + $0x30] sm:$0xff]
    %v6122 = vld [vmem:[#allocation2 + $0x38] sm:$0xff]
    %v6123 = vld [vmem:[%s4 + $0x190] sm:$0xff]
    %v6124 = vld [vmem:[%s4 + $0x198] sm:$0xf]
    %v6126 = vsel %vm29, %v6119, 0
    %v6129 = vsel %vm29, %v6120, 0
    %v6132 = vsel %vm29, %v6121, 0
    %v6135 = vsel %vm29, %v6122, 0
    %v6138 = vsel %vm79, %v6124, 0
    %6140 = vmatpush.msra.mxu0 0.0
    %6141 = vmatpush.msra.mxu0 0.0
    %6142 = vmatpush.msra.mxu0 0.0
    %6143 = vmatpush.msra.mxu0 0.0
    %6144 = vmatpush.msra.mxu0 0.0
    %6145 = vmatpush.msra.mxu0 0.0
    %6146 = vmatpush.msra.mxu0 0.0
    %6147 = vmatpush.msra.mxu0 0.0
    %6148 = vmatpush.msra.mxu0 0.0
    %6149 = vmatpush.msra.mxu0 0.0
    %6150 = vmatpush.msra.mxu0 0.0
    %6151 = vmatpush.msra.mxu0 0.0
    %6152 = vmatpush.msra.mxu0 0.0
    %6153 = vmatpush.msra.mxu0 0.0
    %6154 = vmatpush.msra.mxu0 %v6138
    %6155 = vmatpush.msra.mxu0 %v6123
    %6156 = vmatmul.f32.gmra.mxu0 %v6126
    %v6157 = vpop.f32.mrf.mxu0
    %v6158 = vadd.f32 0.0, %v6157
    %6159 = vmatmul.f32.gmra.mxu0 %v6129
    %v6160 = vpop.f32.mrf.mxu0
    %v6161 = vadd.f32 0.0, %v6160
    %6162 = vmatmul.f32.gmra.mxu0 %v6132
    %v6163 = vpop.f32.mrf.mxu0
    %v6164 = vadd.f32 0.0, %v6163
    %6165 = vmatmul.f32.gmra.mxu0 %v6135
    %v6166 = vpop.f32.mrf.mxu0
    %v6167 = vadd.f32 0.0, %v6166
    %6168 = vdwg.mxu0
    %v6169 = vadd.f32 %v6108, %v6158
    %v6170 = vadd.f32 %v6111, %v6161
    %v6171 = vadd.f32 %v6114, %v6164
    %v6172 = vadd.f32 %v6117, %v6167
    %v6173 = vld [vmem:[%s4 + $0x1a0] sm:$0x1]
    %v6174 = vperm.slane %v6173, 0
    %v6175 = vadd.f32 %v6169, %v6174
    %v6176 = vadd.f32 %v6170, %v6174
    %v6177 = vadd.f32 %v6171, %v6174
    %v6178 = vadd.f32 %v6172, %v6174
    %v6179 = vmax.f32 %v6175, 0.0
    %v6180 = vmax.f32 %v6176, 0.0
    %v6181 = vmax.f32 %v6177, 0.0
    %v6182 = vmax.f32 %v6178, 0.0
    %v6183 = vadd.f32 %v6179, %v5867
    %v6184 = vadd.f32 %v6180, %v5868
    %v6185 = vadd.f32 %v6181, %v5869
    %v6186 = vadd.f32 %v6182, %v5870
    %v6187 = vmax.f32 %v6183, 0.0
    %v6188 = vmax.f32 %v6184, 0.0
    %v6189 = vmax.f32 %v6185, 0.0
    %v6190 = vmax.f32 %v6186, 0.0
    %6191 = vst.msk [vmem:[#allocation2 + $0x20] sm:$0xff] %vm29, %v6187
    %6192 = vst.msk [vmem:[#allocation2 + $0x28] sm:$0xff] %vm29, %v6188
    %6193 = vst.msk [vmem:[#allocation2 + $0x30] sm:$0xff] %vm29, %v6189
    %6194 = vst.msk [vmem:[#allocation2 + $0x38] sm:$0xff] %vm29, %v6190
    %v6195 = vld [vmem:[#allocation2 + $0x10] sm:$0xff]
    %v6196 = vld [vmem:[#allocation2 + $0x18] sm:$0xff]
    %v6197 = vld [vmem:[#allocation2 + $0x20] sm:$0xff]
    %v6198 = vld [vmem:[#allocation2 + $0x28] sm:$0xff]
    %v6199 = vld [vmem:[%s4 + $0x1b8] sm:$0xff]
    %v6200 = vld [vmem:[%s4 + $0x1c0] sm:$0xf]
    %v6201 = vld [vmem:[#allocation2 + $0x30] sm:$0xff]
    %v6202 = vld [vmem:[#allocation2 + $0x38] sm:$0xff]
    %v6203 = vld [vmem:[%s4 + $0x1c8] sm:$0xff]
    %v6204 = vld [vmem:[%s4 + $0x1d0] sm:$0xf]
    %v6206 = vsel %vm29, %v6197, 0
    %v6209 = vsel %vm29, %v6198, 0
    %v6212 = vsel %vm29, %v6201, 0
    %v6215 = vsel %vm29, %v6202, 0
    %v6218 = vsel %vm79, %v6204, 0
    %6220 = vmatpush.msra.mxu0 0.0
    %6221 = vmatpush.msra.mxu0 0.0
    %6222 = vmatpush.msra.mxu0 0.0
    %6223 = vmatpush.msra.mxu0 0.0
    %6224 = vmatpush.msra.mxu0 0.0
    %6225 = vmatpush.msra.mxu0 0.0
    %6226 = vmatpush.msra.mxu0 0.0
    %6227 = vmatpush.msra.mxu0 0.0
    %6228 = vmatpush.msra.mxu0 0.0
    %6229 = vmatpush.msra.mxu0 0.0
    %6230 = vmatpush.msra.mxu0 0.0
    %6231 = vmatpush.msra.mxu0 0.0
    %6232 = vmatpush.msra.mxu0 0.0
    %6233 = vmatpush.msra.mxu0 0.0
    %6234 = vmatpush.msra.mxu0 %v6218
    %6235 = vmatpush.msra.mxu0 %v6203
    %6236 = vmatmul.f32.gmra.mxu0 %v6206
    %v6237 = vpop.f32.mrf.mxu0
    %v6238 = vadd.f32 0.0, %v6237
    %6239 = vmatmul.f32.gmra.mxu0 %v6209
    %v6240 = vpop.f32.mrf.mxu0
    %v6241 = vadd.f32 0.0, %v6240
    %6242 = vmatmul.f32.gmra.mxu0 %v6212
    %v6243 = vpop.f32.mrf.mxu0
    %v6244 = vadd.f32 0.0, %v6243
    %6245 = vmatmul.f32.gmra.mxu0 %v6215
    %v6246 = vpop.f32.mrf.mxu0
    %v6247 = vadd.f32 0.0, %v6246
    %6248 = vdwg.mxu0
    %v6250 = vsel %vm29, %v6195, 0
    %v6253 = vsel %vm29, %v6196, 0
    %v6256 = vsel %vm79, %v6200, 0
    %6258 = vmatpush.msra.mxu0 0.0
    %6259 = vmatpush.msra.mxu0 0.0
    %6260 = vmatpush.msra.mxu0 0.0
    %6261 = vmatpush.msra.mxu0 0.0
    %6262 = vmatpush.msra.mxu0 0.0
    %6263 = vmatpush.msra.mxu0 0.0
    %6264 = vmatpush.msra.mxu0 0.0
    %6265 = vmatpush.msra.mxu0 0.0
    %6266 = vmatpush.msra.mxu0 0.0
    %6267 = vmatpush.msra.mxu0 0.0
    %6268 = vmatpush.msra.mxu0 0.0
    %6269 = vmatpush.msra.mxu0 0.0
    %6270 = vmatpush.msra.mxu0 0.0
    %6271 = vmatpush.msra.mxu0 0.0
    %6272 = vmatpush.msra.mxu0 %v6256
    %6273 = vmatpush.msra.mxu0 %v6199
    %6274 = vmatmul.f32.gmra.mxu0 %v6250
    %v6275 = vpop.f32.mrf.mxu0
    %v6276 = vadd.f32 %v6238, %v6275
    %6277 = vmatmul.f32.gmra.mxu0 %v6253
    %v6278 = vpop.f32.mrf.mxu0
    %v6279 = vadd.f32 %v6241, %v6278
    %6280 = vmatmul.f32.gmra.mxu0 %v6206
    %v6281 = vpop.f32.mrf.mxu0
    %v6282 = vadd.f32 %v6244, %v6281
    %6283 = vmatmul.f32.gmra.mxu0 %v6209
    %v6284 = vpop.f32.mrf.mxu0
    %v6285 = vadd.f32 %v6247, %v6284
    %6286 = vdwg.mxu0
    %v6287 = vld [vmem:[%s4 + $0x1d8] sm:$0x1]
    %v6288 = vperm.slane %v6287, 0
    %v6289 = vadd.f32 %v6276, %v6288
    %v6290 = vadd.f32 %v6279, %v6288
    %v6291 = vadd.f32 %v6282, %v6288
    %v6292 = vadd.f32 %v6285, %v6288
    %v6293 = vmax.f32 %v6289, 0.0
    %v6294 = vmax.f32 %v6290, 0.0
    %v6295 = vmax.f32 %v6291, 0.0
    %v6296 = vmax.f32 %v6292, 0.0
    %6297 = vst.msk [vmem:[#allocation2 + $0x20] sm:$0xff] %vm29, %v6293
    %6298 = vst.msk [vmem:[#allocation2 + $0x28] sm:$0xff] %vm29, %v6294
    %6299 = vst.msk [vmem:[#allocation2 + $0x30] sm:$0xff] %vm29, %v6295
    %6300 = vst.msk [vmem:[#allocation2 + $0x38] sm:$0xff] %vm29, %v6296
    %v6301 = vld [vmem:[#allocation2 + $0x10] sm:$0xff]
    %v6302 = vld [vmem:[#allocation2 + $0x18] sm:$0xff]
    %v6303 = vld [vmem:[#allocation2 + $0x20] sm:$0xff]
    %v6304 = vld [vmem:[#allocation2 + $0x28] sm:$0xff]
    %v6305 = vld [vmem:[%s4 + $0x1f0] sm:$0xff]
    %v6306 = vld [vmem:[%s4 + $0x1f8] sm:$0xf]
    %v6307 = vld [vmem:[#allocation2 + $0x30] sm:$0xff]
    %v6308 = vld [vmem:[#allocation2 + $0x38] sm:$0xff]
    %v6309 = vld [vmem:[%s4 + $0x200] sm:$0xff]
    %v6310 = vld [vmem:[%s4 + $0x208] sm:$0xf]
    %v6312 = vsel %vm29, %v6303, 0
    %v6315 = vsel %vm29, %v6304, 0
    %v6318 = vsel %vm29, %v6307, 0
    %v6321 = vsel %vm29, %v6308, 0
    %v6324 = vsel %vm79, %v6310, 0
    %6326 = vmatpush.msra.mxu0 0.0
    %6327 = vmatpush.msra.mxu0 0.0
    %6328 = vmatpush.msra.mxu0 0.0
    %6329 = vmatpush.msra.mxu0 0.0
    %6330 = vmatpush.msra.mxu0 0.0
    %6331 = vmatpush.msra.mxu0 0.0
    %6332 = vmatpush.msra.mxu0 0.0
    %6333 = vmatpush.msra.mxu0 0.0
    %6334 = vmatpush.msra.mxu0 0.0
    %6335 = vmatpush.msra.mxu0 0.0
    %6336 = vmatpush.msra.mxu0 0.0
    %6337 = vmatpush.msra.mxu0 0.0
    %6338 = vmatpush.msra.mxu0 0.0
    %6339 = vmatpush.msra.mxu0 0.0
    %6340 = vmatpush.msra.mxu0 %v6324
    %6341 = vmatpush.msra.mxu0 %v6309
    %6342 = vmatmul.f32.gmra.mxu0 %v6312
    %v6343 = vpop.f32.mrf.mxu0
    %v6344 = vadd.f32 0.0, %v6343
    %6345 = vmatmul.f32.gmra.mxu0 %v6315
    %v6346 = vpop.f32.mrf.mxu0
    %v6347 = vadd.f32 0.0, %v6346
    %6348 = vmatmul.f32.gmra.mxu0 %v6318
    %v6349 = vpop.f32.mrf.mxu0
    %v6350 = vadd.f32 0.0, %v6349
    %6351 = vmatmul.f32.gmra.mxu0 %v6321
    %v6352 = vpop.f32.mrf.mxu0
    %v6353 = vadd.f32 0.0, %v6352
    %6354 = vdwg.mxu0
    %v6356 = vsel %vm29, %v6301, 0
    %v6359 = vsel %vm29, %v6302, 0
    %v6362 = vsel %vm79, %v6306, 0
    %6364 = vmatpush.msra.mxu0 0.0
    %6365 = vmatpush.msra.mxu0 0.0
    %6366 = vmatpush.msra.mxu0 0.0
    %6367 = vmatpush.msra.mxu0 0.0
    %6368 = vmatpush.msra.mxu0 0.0
    %6369 = vmatpush.msra.mxu0 0.0
    %6370 = vmatpush.msra.mxu0 0.0
    %6371 = vmatpush.msra.mxu0 0.0
    %6372 = vmatpush.msra.mxu0 0.0
    %6373 = vmatpush.msra.mxu0 0.0
    %6374 = vmatpush.msra.mxu0 0.0
    %6375 = vmatpush.msra.mxu0 0.0
    %6376 = vmatpush.msra.mxu0 0.0
    %6377 = vmatpush.msra.mxu0 0.0
    %6378 = vmatpush.msra.mxu0 %v6362
    %6379 = vmatpush.msra.mxu0 %v6305
    %6380 = vmatmul.f32.gmra.mxu0 %v6356
    %v6381 = vpop.f32.mrf.mxu0
    %v6382 = vadd.f32 %v6344, %v6381
    %6383 = vmatmul.f32.gmra.mxu0 %v6359
    %v6384 = vpop.f32.mrf.mxu0
    %v6385 = vadd.f32 %v6347, %v6384
    %6386 = vmatmul.f32.gmra.mxu0 %v6312
    %v6387 = vpop.f32.mrf.mxu0
    %v6388 = vadd.f32 %v6350, %v6387
    %6389 = vmatmul.f32.gmra.mxu0 %v6315
    %v6390 = vpop.f32.mrf.mxu0
    %v6391 = vadd.f32 %v6353, %v6390
    %6392 = vdwg.mxu0
    %v6393 = vld [vmem:[%s4 + $0x210] sm:$0x1]
    %v6394 = vperm.slane %v6393, 0
    %v6395 = vadd.f32 %v6382, %v6394
    %v6396 = vadd.f32 %v6385, %v6394
    %v6397 = vadd.f32 %v6388, %v6394
    %v6398 = vadd.f32 %v6391, %v6394
    %v6399 = vmax.f32 %v6395, 0.0
    %v6400 = vmax.f32 %v6396, 0.0
    %v6401 = vmax.f32 %v6397, 0.0
    %v6402 = vmax.f32 %v6398, 0.0
    %v6403 = vadd.f32 %v6399, %v6187
    %v6404 = vadd.f32 %v6400, %v6188
    %v6405 = vadd.f32 %v6401, %v6189
    %v6406 = vadd.f32 %v6402, %v6190
    %v6407 = vmax.f32 %v6403, 0.0
    %v6408 = vmax.f32 %v6404, 0.0
    %v6409 = vmax.f32 %v6405, 0.0
    %v6410 = vmax.f32 %v6406, 0.0
    %6411 = vst.msk [vmem:[%s9] sm:$0xff] %vm29, %v6407
    %6412 = vst.msk [vmem:[%s9 + $0x8] sm:$0xff] %vm29, %v6408
    %6413 = vst.msk [vmem:[%s9 + $0x10] sm:$0xff] %vm29, %v6409
    %6414 = vst.msk [vmem:[%s9 + $0x18] sm:$0xff] %vm29, %v6410
    // Predicated region
    $region26: #{lcsn_forward.1} parent=1 // pred_check
      _
    $region27: #{lcsn_forward.1} parent=1 // pred_check_branch
      %6416 = sbr.rel (0) target = $region29
    $region28: #{lcsn_forward.1} parent=1 // pred_region
      %6418 = vsyncadd [#allocation5], 0
      %s6420 = sshll.u32 [#allocation4], 4
      %s6421 = int_to_ptr.vmem [resolvable:$true] %s6420
      %s6422 = sshll.u32 %s6, 4
      %s6423 = int_to_ptr.hbm [resolvable:$true] %s6422
      %6425 = dma.vmem_to_hbm [thread:$0]  %s6421, 32, %s6423, [#allocation5]
    $region29: #{lcsn_forward.1} parent=1 // pred_fallthru
      _
    // Predicated region
    $region30: #{lcsn_forward.1} parent=1 // pred_check
      _
    $region31: #{lcsn_forward.1} parent=1 // pred_check_branch
      %6427 = sbr.rel (0) target = $region33
    $region32: #{lcsn_forward.1} parent=1 // pred_region
      %6429 = vsyncadd [#allocation7], 0
      %s6431 = sshll.u32 [#allocation6], 4
      %s6432 = int_to_ptr.vmem [resolvable:$true] %s6431
      %s6433 = sshll.u32 %s7, 4
      %s6434 = int_to_ptr.hbm [resolvable:$true] %s6433
      %6436 = dma.vmem_to_hbm [thread:$0]  %s6432, 32, %s6434, [#allocation7]
    $region33: #{lcsn_forward.1} parent=1 // pred_fallthru
      _
    // Predicated region
    $region34: #{lcsn_forward.1} parent=1 // pred_check
      _
    $region35: #{lcsn_forward.1} parent=1 // pred_check_branch
      %6438 = sbr.rel (0) target = $region37
    $region36: #{lcsn_forward.1} parent=1 // pred_region
      _
    $region37: #{lcsn_forward.1} parent=1 // pred_fallthru
      _
    // Predicated region
    $region38: #{lcsn_forward.1} parent=1 // pred_check
      _
    $region39: #{lcsn_forward.1} parent=1 // pred_check_branch
      %6440 = sbr.rel (0) target = $region41
    $region40: #{lcsn_forward.1} parent=1 // pred_region
      _
    $region41: #{lcsn_forward.1} parent=1 // pred_fallthru
      _
    // Predicated region
    $region42: #{lcsn_forward.1} parent=1 // pred_check
      _
    $region43: #{lcsn_forward.1} parent=1 // pred_check_branch
      %6442 = sbr.rel (0) target = $region45
    $region44: #{lcsn_forward.1} parent=1 // pred_region
      %6444 = dma.done [#allocation5], 32
    $region45: #{lcsn_forward.1} parent=1 // pred_fallthru
      _
    // Predicated region
    $region46: #{lcsn_forward.1} parent=1 // pred_check
      _
    $region47: #{lcsn_forward.1} parent=1 // pred_check_branch
      %6446 = sbr.rel (0) target = $region49
    $region48: #{lcsn_forward.1} parent=1 // pred_region
      %6448 = dma.done [#allocation7], 32
    $region49: #{lcsn_forward.1} parent=1 // pred_fallthru
      _
    // Predicated region
    $region50: #{lcsn_forward.1} parent=1 // pred_check
      _
    $region51: #{lcsn_forward.1} parent=1 // pred_check_branch
      %6450 = sbr.rel (0) target = $region53
    $region52: #{lcsn_forward.1} parent=1 // pred_region
      _
    $region53: #{lcsn_forward.1} parent=1 // pred_fallthru
      _
    // Predicated region
    $region54: #{lcsn_forward.1} parent=1 // pred_check
      _
    $region55: #{lcsn_forward.1} parent=1 // pred_check_branch
      %6452 = sbr.rel (0) target = $region57
    $region56: #{lcsn_forward.1} parent=1 // pred_region
      _
    $region57: #{lcsn_forward.1} parent=1 // pred_fallthru
      _
    %6453 = vsyncpa [#allocation5], 1
    %6454 = vsyncpa [#allocation7], 1

</llo_original>
